<compile_context>
chip_gen: v5e
topology: v5e:2x2
jax: 0.10.0
libtpu: 0.0.40
codegen_flags: <defaults>
</compile_context>

<pallas_src>
import functools

import jax
import jax.numpy as jnp
from jax.experimental import pallas as pl
from jax.experimental.pallas import tpu as pltpu


# ----------------------------- kernel helpers ---------------------------------


def _layer1_vpu(x, w1_ref, b1_ref):
    """Layer 1 on the VPU.  x: (TB, N, D) f32 -> (TB, N, H1) f32.

    K == D (2) is far too small for the MXU, so use D lane-broadcast
    multiply-adds instead of a <2%-utilized matmul.
    """
    D = x.shape[-1]
    acc = x[:, :, 0:1] * w1_ref[0:1, :]
    for d in range(1, D):
        acc = acc + x[:, :, d:d + 1] * w1_ref[d:d + 1, :]
    return jnp.maximum(acc + b1_ref[...], 0.0)


def _mlp_tail(h1, w2_ref, b2_ref, w3_ref, b3_ref, n_points, use_bf16):
    """Layers 2-3 on the MXU + per-cloud max-pool.

    h1: (M, H1) rows with M = n_clouds * n_points.  Returns (n_clouds, E).
    Layer-3 bias + ReLU are applied AFTER the max-pool: b3 is constant over
    the point axis and ReLU is monotone, so max_n(relu(z + b3)) ==
    relu(max_n(z) + b3).  This cuts the layer-3 epilogue by a factor of
    n_points and avoids materializing a ReLU'd (M, E) slab.
    """
    dot_dt = jnp.bfloat16 if use_bf16 else jnp.float32
    h2 = jnp.dot(h1.astype(dot_dt), w2_ref[...].astype(dot_dt),
                 preferred_element_type=jnp.float32) + b2_ref[...]
    h2 = jnp.maximum(h2, 0.0)                                   # (M, H2) f32
    z = jnp.dot(h2.astype(dot_dt), w3_ref[...].astype(dot_dt),
                preferred_element_type=jnp.float32)             # (M, E)  f32
    M, E = z.shape
    pooled = jnp.max(z.reshape(M // n_points, n_points, E), axis=1)
    return jnp.maximum(pooled + b3_ref[...], 0.0)               # (n_clouds, E)


def _embed_pair_kernel(src_ref, tgt_ref, w1_ref, b1_ref, w2_ref, b2_ref,
                       w3_ref, b3_ref, state_ref, emb_tgt_ref, *, use_bf16):
    TB, N, _ = src_ref.shape
    H1 = w1_ref.shape[1]
    # Layer 1 on the VPU for both clouds, then stack rows so layers 2-3 run
    # ONE MXU pass each with M = 2*TB*N.
    h1_src = _layer1_vpu(src_ref[...], w1_ref, b1_ref).reshape(TB * N, H1)
    h1_tgt = _layer1_vpu(tgt_ref[...], w1_ref, b1_ref).reshape(TB * N, H1)
    h1 = jnp.concatenate([h1_src, h1_tgt], axis=0)              # (2*TB*N, H1)
    emb = _mlp_tail(h1, w2_ref, b2_ref, w3_ref, b3_ref, N, use_bf16)  # (2TB,E)
    emb_src = emb[:TB]
    emb_tgt = emb[TB:]
    state_ref[...] = jnp.concatenate([emb_src, emb_tgt], axis=-1)     # (TB,2E)
    emb_tgt_ref[...] = emb_tgt                                        # (TB, E)


def _embed_single_kernel(x_ref, w1_ref, b1_ref, w2_ref, b2_ref, w3_ref, b3_ref,
                         out_ref, *, use_bf16):
    TB, N, _ = x_ref.shape
    H1 = w1_ref.shape[1]
    h1 = _layer1_vpu(x_ref[...], w1_ref, b1_ref).reshape(TB * N, H1)
    out_ref[...] = _mlp_tail(h1, w2_ref, b2_ref, w3_ref, b3_ref, N, use_bf16)


# ------------------------------ wrappers --------------------------------------


def _full_spec(arr):
    nd = arr.ndim
    return pl.BlockSpec(arr.shape, lambda b, _nd=nd: (0,) * _nd)


def _pick_tb(batch, tb, max_tb):
    """Tile-batch choice.

    * Whole batch fits -> TB = B, grid=(1,), zero padding (fewest steps; on
      v7x pass tb explicitly to keep >=2 parallel steps for both TCs).
    * Otherwise TB must be a multiple of 8 so the (TB, E)/(TB, 2E) output
      blocks satisfy the (8, 128) rule; pick the one minimizing padding,
      tie-broken toward larger TB (fewer grid steps).
    """
    if tb is not None:
        return tb
    if batch <= max_tb:
        return batch
    best_t, best_key = None, None
    for t in range(8, max_tb + 1, 8):
        padded = -(-batch // t) * t
        key = (padded, -t)
        if best_key is None or key < best_key:
            best_key, best_t = key, t
    return best_t


def _pad_batch(x, tb):
    pad = (-x.shape[0]) % tb
    if pad:
        x = jnp.concatenate([x, jnp.zeros((pad,) + x.shape[1:], x.dtype)],
                            axis=0)
    return x


def _weights(params):
    return tuple(params[k] for k in ("w1", "b1", "w2", "b2", "w3", "b3"))


def _weight_bytes(ws):
    return sum(int(w.size) * w.dtype.itemsize for w in ws)


def mv_model_embed(x, params, tb=None, max_tb=16, use_bf16=True):
    """PointNet-2D encoder: (B, N, D) -> (B, emb_dims) via a Pallas kernel."""
    B, N, D = x.shape
    TB = _pick_tb(B, tb, max_tb)
    xp = _pad_batch(x.astype(jnp.float32), TB)
    Bp = xp.shape[0]
    ws = _weights(params)
    w1, b1, w2, b2, w3, b3 = ws
    H1, H2, E = w1.shape[1], w2.shape[1], w3.shape[1]

    n_rows = Bp * N
    cost = pl.CostEstimate(
        flops=int(2 * n_rows * (D * H1 + H1 * H2 + H2 * E)),
        transcendentals=0,
        bytes_accessed=int(xp.size * 4 + Bp * E * 4 + _weight_bytes(ws)))

    kernel = functools.partial(_embed_single_kernel, use_bf16=use_bf16)
    out = pl.pallas_call(
        kernel,
        out_shape=jax.ShapeDtypeStruct((Bp, E), jnp.float32),
        grid_spec=pltpu.PrefetchScalarGridSpec(
            num_scalar_prefetch=0,
            grid=(Bp // TB,),
            in_specs=[
                pl.BlockSpec((TB, N, D), lambda b: (b, 0, 0)),
                _full_spec(w1), _full_spec(b1),
                _full_spec(w2), _full_spec(b2),
                _full_spec(w3), _full_spec(b3),
            ],
            out_specs=pl.BlockSpec((TB, E), lambda b: (b, 0)),
        ),
        compiler_params=pltpu.CompilerParams(
            dimension_semantics=("parallel",)),
        cost_estimate=cost,
    )(xp, w1, b1, w2, b2, w3, b3)
    return out[:B]


def state_embed_2d(src, tgt, params, benchmark=False, tb=None, max_tb=16,
                   use_bf16=True):
    """Forward pass of StateEmbed2D.

    src: (B, N, D) point cloud.  tgt: (B, N, D) point cloud, or an already
    computed (B, E) embedding when `benchmark` is set (BENCHMARK branch).
    Returns (state, emb_tgt) with state = concat(emb_src, emb_tgt), (B, 2E).
    """
    B, N, D = src.shape

    if benchmark and tgt.ndim != 3:
        # BENCHMARK branch: tgt is already an embedding.
        emb_src = mv_model_embed(src, params, tb=tb, max_tb=max_tb,
                                 use_bf16=use_bf16)
        emb_tgt = tgt
        state = jnp.concatenate([emb_src, emb_tgt], axis=-1).reshape(B, -1)
        return state, emb_tgt

    TB = _pick_tb(B, tb, max_tb)
    srcp = _pad_batch(src.astype(jnp.float32), TB)
    tgtp = _pad_batch(tgt.astype(jnp.float32), TB)
    Bp = srcp.shape[0]
    ws = _weights(params)
    w1, b1, w2, b2, w3, b3 = ws
    H1, H2, E = w1.shape[1], w2.shape[1], w3.shape[1]

    n_rows = 2 * Bp * N
    cost = pl.CostEstimate(
        flops=int(2 * n_rows * (D * H1 + H1 * H2 + H2 * E)),
        transcendentals=0,
        bytes_accessed=int(2 * srcp.size * 4 + Bp * 3 * E * 4
                           + _weight_bytes(ws)))

    kernel = functools.partial(_embed_pair_kernel, use_bf16=use_bf16)
    point_spec = pl.BlockSpec((TB, N, D), lambda b: (b, 0, 0))
    state_p, emb_tgt_p = pl.pallas_call(
        kernel,
        out_shape=(
            jax.ShapeDtypeStruct((Bp, 2 * E), jnp.float32),
            jax.ShapeDtypeStruct((Bp, E), jnp.float32),
        ),
        grid_spec=pltpu.PrefetchScalarGridSpec(
            num_scalar_prefetch=0,
            grid=(Bp // TB,),
            in_specs=[
                point_spec,                                     # src block
                pl.BlockSpec((TB, N, D), lambda b: (b, 0, 0)),  # tgt block
                _full_spec(w1), _full_spec(b1),
                _full_spec(w2), _full_spec(b2),
                _full_spec(w3), _full_spec(b3),
            ],
            out_specs=(
                pl.BlockSpec((TB, 2 * E), lambda b: (b, 0)),
                pl.BlockSpec((TB, E), lambda b: (b, 0)),
            ),
        ),
        compiler_params=pltpu.CompilerParams(
            dimension_semantics=("parallel",)),
        cost_estimate=cost,
    )(srcp, tgtp, w1, b1, w2, b2, w3, b3)
    return state_p[:B], emb_tgt_p[:B]


# ----------------------------- Parameter init ---------------------------------


def init_params(key, in_dim=2, h1=64, h2=128, emb_dims=128):
    ks = jax.random.split(key, 6)
    scale = 0.1
    return {
        "w1": scale * jax.random.normal(ks[0], (in_dim, h1), jnp.float32),
        "b1": scale * jax.random.normal(ks[1], (1, h1), jnp.float32),
        "w2": scale * jax.random.normal(ks[2], (h1, h2), jnp.float32),
        "b2": scale * jax.random.normal(ks[3], (1, h2), jnp.float32),
        "w3": scale * jax.random.normal(ks[4], (h2, emb_dims), jnp.float32),
        "b3": scale * jax.random.normal(ks[5], (1, emb_dims), jnp.float32),
    }


# --------------------------------- Main ----------------------------------------


if __name__ == "__main__":
    key = jax.random.PRNGKey(0)
    k_src, k_tgt, k_par = jax.random.split(key, 3)

    B, N, D = 10, 128, 2          # 2D point clouds, 128 points each
    src = jax.random.normal(k_src, (B, N, D), jnp.float32)
    tgt = jax.random.normal(k_tgt, (B, N, D), jnp.float32)
    params = init_params(k_par, in_dim=D)
    E = params["w3"].shape[1]

    state, emb_tgt = state_embed_2d(src, tgt, params)
    jax.block_until_ready((state, emb_tgt))

    assert state.shape == (B, 2 * E)
    assert emb_tgt.shape == (B, E)

    # Pure-JAX f32 reference of the same assumed PointNet-2D architecture.
    def ref_embed(x):
        h = jnp.maximum(
            jnp.dot(x, params["w1"], preferred_element_type=jnp.float32)
            + params["b1"], 0.0)
        h = jnp.maximum(
            jnp.dot(h, params["w2"], preferred_element_type=jnp.float32)
            + params["b2"], 0.0)
        h = jnp.maximum(
            jnp.dot(h, params["w3"], preferred_element_type=jnp.float32)
            + params["b3"], 0.0)
        return jnp.max(h, axis=1)

    ref_src, ref_tgt = ref_embed(src), ref_embed(tgt)
    ref_state = jnp.concatenate([ref_src, ref_tgt], axis=-1)
    # bf16 MXU dots (f32 accumulation) -> compare at 1e-2.
    assert jnp.allclose(state, ref_state, atol=1e-2, rtol=1e-2)
    assert jnp.allclose(emb_tgt, ref_tgt, atol=1e-2, rtol=1e-2)

    # Exercise the multi-step (padded) path as well: TB forced to 8 -> 2 steps.
    state_ms, emb_tgt_ms = state_embed_2d(src, tgt, params, tb=8)
    jax.block_until_ready((state_ms, emb_tgt_ms))
    assert jnp.allclose(state_ms, ref_state, atol=1e-2, rtol=1e-2)

    # BENCHMARK branch: tgt is already an embedding (single-input kernel).
    state_b, emb_tgt_b = state_embed_2d(src, ref_tgt, params, benchmark=True)
    jax.block_until_ready((state_b, emb_tgt_b))
    assert state_b.shape == (B, 2 * E)
    assert jnp.allclose(state_b[:, :E], ref_src, atol=1e-2, rtol=1e-2)

    print("KERNEL_OK")
</pallas_src>

<mosaic_0001>
module attributes {stable_mosaic.version = 11 : i64} {
  func.func @_embed_pair_kernel(%arg0: i32, %arg1: memref<10x128x2xf32, #tpu.memory_space<vmem>>, %arg2: memref<10x128x2xf32, #tpu.memory_space<vmem>>, %arg3: memref<2x64xf32, #tpu.memory_space<vmem>>, %arg4: memref<1x64xf32, #tpu.memory_space<vmem>>, %arg5: memref<64x128xf32, #tpu.memory_space<vmem>>, %arg6: memref<1x128xf32, #tpu.memory_space<vmem>>, %arg7: memref<128x128xf32, #tpu.memory_space<vmem>>, %arg8: memref<1x128xf32, #tpu.memory_space<vmem>>, %arg9: memref<10x256xf32, #tpu.memory_space<vmem>>, %arg10: memref<10x128xf32, #tpu.memory_space<vmem>>) attributes {dimension_semantics = [#tpu.dimension_semantics<parallel>], iteration_bounds = array<i64: 1>, scalar_prefetch = 0 : i64, scratch_operands = 0 : i64, tpu.core_type = #tpu.core_type<tc>, window_params = [{transform_indices = @transform_0, window_bounds = array<i64: 10, 128, 2>}, {transform_indices = @transform_1, window_bounds = array<i64: 10, 128, 2>}, {pipeline_mode = #tpu.pipeline_mode<synchronous>, transform_indices = @transform_2, window_bounds = array<i64: 2, 64>}, {pipeline_mode = #tpu.pipeline_mode<synchronous>, transform_indices = @transform_3, window_bounds = array<i64: 1, 64>}, {pipeline_mode = #tpu.pipeline_mode<synchronous>, transform_indices = @transform_4, window_bounds = array<i64: 64, 128>}, {pipeline_mode = #tpu.pipeline_mode<synchronous>, transform_indices = @transform_5, window_bounds = array<i64: 1, 128>}, {pipeline_mode = #tpu.pipeline_mode<synchronous>, transform_indices = @transform_6, window_bounds = array<i64: 128, 128>}, {pipeline_mode = #tpu.pipeline_mode<synchronous>, transform_indices = @transform_7, window_bounds = array<i64: 1, 128>}, {transform_indices = @transform_8, window_bounds = array<i64: 10, 256>}, {transform_indices = @transform_9, window_bounds = array<i64: 10, 128>}]} {
    %c0 = arith.constant 0 : index
    %c0_0 = arith.constant 0 : index
    %c0_1 = arith.constant 0 : index
    %0 = vector.load %arg1[%c0, %c0_0, %c0_1] : memref<10x128x2xf32, #tpu.memory_space<vmem>>, vector<10x128x2xf32>
    %1 = vector.extract_strided_slice %0 {offsets = [0, 0, 0], sizes = [10, 128, 1], strides = [1, 1, 1]} : vector<10x128x2xf32> to vector<10x128x1xf32>
    %c0_2 = arith.constant 0 : index
    %c0_3 = arith.constant 0 : index
    %2 = vector.load %arg3[%c0_2, %c0_3] : memref<2x64xf32, #tpu.memory_space<vmem>>, vector<1x64xf32>
    %3 = vector.shape_cast %2 : vector<1x64xf32> to vector<1x1x64xf32>
    %4 = vector.broadcast %1 : vector<10x128x1xf32> to vector<10x128x64xf32>
    %5 = vector.broadcast %3 : vector<1x1x64xf32> to vector<10x128x64xf32>
    %6 = arith.mulf %4, %5 : vector<10x128x64xf32>
    %7 = vector.extract_strided_slice %0 {offsets = [0, 0, 1], sizes = [10, 128, 1], strides = [1, 1, 1]} : vector<10x128x2xf32> to vector<10x128x1xf32>
    %c1 = arith.constant 1 : index
    %c0_4 = arith.constant 0 : index
    %8 = vector.load %arg3[%c1, %c0_4] : memref<2x64xf32, #tpu.memory_space<vmem>>, vector<1x64xf32>
    %9 = vector.shape_cast %8 : vector<1x64xf32> to vector<1x1x64xf32>
    %10 = vector.broadcast %7 : vector<10x128x1xf32> to vector<10x128x64xf32>
    %11 = vector.broadcast %9 : vector<1x1x64xf32> to vector<10x128x64xf32>
    %12 = arith.mulf %10, %11 : vector<10x128x64xf32>
    %13 = arith.addf %6, %12 : vector<10x128x64xf32>
    %c0_5 = arith.constant 0 : index
    %c0_6 = arith.constant 0 : index
    %14 = vector.load %arg4[%c0_5, %c0_6] : memref<1x64xf32, #tpu.memory_space<vmem>>, vector<1x64xf32>
    %15 = vector.shape_cast %14 : vector<1x64xf32> to vector<1x1x64xf32>
    %16 = vector.broadcast %15 : vector<1x1x64xf32> to vector<10x128x64xf32>
    %17 = arith.addf %13, %16 : vector<10x128x64xf32>
    %cst = arith.constant 0.000000e+00 : f32
    %18 = vector.broadcast %cst : f32 to vector<10x128x64xf32>
    %19 = arith.maximumf %17, %18 : vector<10x128x64xf32>
    %20 = vector.shape_cast %19 : vector<10x128x64xf32> to vector<1280x64xf32>
    %c0_7 = arith.constant 0 : index
    %c0_8 = arith.constant 0 : index
    %c0_9 = arith.constant 0 : index
    %21 = vector.load %arg2[%c0_7, %c0_8, %c0_9] : memref<10x128x2xf32, #tpu.memory_space<vmem>>, vector<10x128x2xf32>
    %22 = vector.extract_strided_slice %21 {offsets = [0, 0, 0], sizes = [10, 128, 1], strides = [1, 1, 1]} : vector<10x128x2xf32> to vector<10x128x1xf32>
    %c0_10 = arith.constant 0 : index
    %c0_11 = arith.constant 0 : index
    %23 = vector.load %arg3[%c0_10, %c0_11] : memref<2x64xf32, #tpu.memory_space<vmem>>, vector<1x64xf32>
    %24 = vector.shape_cast %23 : vector<1x64xf32> to vector<1x1x64xf32>
    %25 = vector.broadcast %22 : vector<10x128x1xf32> to vector<10x128x64xf32>
    %26 = vector.broadcast %24 : vector<1x1x64xf32> to vector<10x128x64xf32>
    %27 = arith.mulf %25, %26 : vector<10x128x64xf32>
    %28 = vector.extract_strided_slice %21 {offsets = [0, 0, 1], sizes = [10, 128, 1], strides = [1, 1, 1]} : vector<10x128x2xf32> to vector<10x128x1xf32>
    %c1_12 = arith.constant 1 : index
    %c0_13 = arith.constant 0 : index
    %29 = vector.load %arg3[%c1_12, %c0_13] : memref<2x64xf32, #tpu.memory_space<vmem>>, vector<1x64xf32>
    %30 = vector.shape_cast %29 : vector<1x64xf32> to vector<1x1x64xf32>
    %31 = vector.broadcast %28 : vector<10x128x1xf32> to vector<10x128x64xf32>
    %32 = vector.broadcast %30 : vector<1x1x64xf32> to vector<10x128x64xf32>
    %33 = arith.mulf %31, %32 : vector<10x128x64xf32>
    %34 = arith.addf %27, %33 : vector<10x128x64xf32>
    %c0_14 = arith.constant 0 : index
    %c0_15 = arith.constant 0 : index
    %35 = vector.load %arg4[%c0_14, %c0_15] : memref<1x64xf32, #tpu.memory_space<vmem>>, vector<1x64xf32>
    %36 = vector.shape_cast %35 : vector<1x64xf32> to vector<1x1x64xf32>
    %37 = vector.broadcast %36 : vector<1x1x64xf32> to vector<10x128x64xf32>
    %38 = arith.addf %34, %37 : vector<10x128x64xf32>
    %cst_16 = arith.constant 0.000000e+00 : f32
    %39 = vector.broadcast %cst_16 : f32 to vector<10x128x64xf32>
    %40 = arith.maximumf %38, %39 : vector<10x128x64xf32>
    %41 = vector.shape_cast %40 : vector<10x128x64xf32> to vector<1280x64xf32>
    %42 = tpu.concatenate %20, %41 in 0 : vector<1280x64xf32>, vector<1280x64xf32> -> vector<2560x64xf32>
    %43 = arith.truncf %42 : vector<2560x64xf32> to vector<2560x64xbf16>
    %c0_17 = arith.constant 0 : index
    %c0_18 = arith.constant 0 : index
    %44 = vector.load %arg5[%c0_17, %c0_18] : memref<64x128xf32, #tpu.memory_space<vmem>>, vector<64x128xf32>
    %45 = arith.truncf %44 : vector<64x128xf32> to vector<64x128xbf16>
    %cst_19 = arith.constant dense<0.000000e+00> : vector<2560x128xf32>
    %46 = tpu.matmul %43, %45, %cst_19 {dimension_numbers = #tpu.dot_dimension_numbers<[1], [0], [0], [1], [0, 0, 1, 1], [], []>} : vector<2560x64xbf16>, vector<64x128xbf16>, vector<2560x128xf32> -> vector<2560x128xf32>
    %c0_20 = arith.constant 0 : index
    %c0_21 = arith.constant 0 : index
    %47 = vector.load %arg6[%c0_20, %c0_21] : memref<1x128xf32, #tpu.memory_space<vmem>>, vector<1x128xf32>
    %48 = vector.broadcast %47 : vector<1x128xf32> to vector<2560x128xf32>
    %49 = arith.addf %46, %48 : vector<2560x128xf32>
    %cst_22 = arith.constant 0.000000e+00 : f32
    %50 = vector.broadcast %cst_22 : f32 to vector<2560x128xf32>
    %51 = arith.maximumf %49, %50 : vector<2560x128xf32>
    %52 = arith.truncf %51 : vector<2560x128xf32> to vector<2560x128xbf16>
    %c0_23 = arith.constant 0 : index
    %c0_24 = arith.constant 0 : index
    %53 = vector.load %arg7[%c0_23, %c0_24] : memref<128x128xf32, #tpu.memory_space<vmem>>, vector<128x128xf32>
    %54 = arith.truncf %53 : vector<128x128xf32> to vector<128x128xbf16>
    %cst_25 = arith.constant dense<0.000000e+00> : vector<2560x128xf32>
    %55 = tpu.matmul %52, %54, %cst_25 {dimension_numbers = #tpu.dot_dimension_numbers<[1], [0], [0], [1], [0, 0, 1, 1], [], []>} : vector<2560x128xbf16>, vector<128x128xbf16>, vector<2560x128xf32> -> vector<2560x128xf32>
    %56 = vector.shape_cast %55 : vector<2560x128xf32> to vector<20x128x128xf32>
    %cst_26 = arith.constant dense<0xFF800000> : vector<20x128xf32>
    %57 = vector.multi_reduction <maximumf>, %56, %cst_26 [1] : vector<20x128x128xf32> to vector<20x128xf32>
    %c0_27 = arith.constant 0 : index
    %c0_28 = arith.constant 0 : index
    %58 = vector.load %arg8[%c0_27, %c0_28] : memref<1x128xf32, #tpu.memory_space<vmem>>, vector<1x128xf32>
    %59 = vector.broadcast %58 : vector<1x128xf32> to vector<20x128xf32>
    %60 = arith.addf %57, %59 : vector<20x128xf32>
    %cst_29 = arith.constant 0.000000e+00 : f32
    %61 = vector.broadcast %cst_29 : f32 to vector<20x128xf32>
    %62 = arith.maximumf %60, %61 : vector<20x128xf32>
    %63 = vector.extract_strided_slice %62 {offsets = [0, 0], sizes = [10, 128], strides = [1, 1]} : vector<20x128xf32> to vector<10x128xf32>
    %64 = vector.extract_strided_slice %62 {offsets = [10, 0], sizes = [10, 128], strides = [1, 1]} : vector<20x128xf32> to vector<10x128xf32>
    %65 = tpu.concatenate %63, %64 in 1 : vector<10x128xf32>, vector<10x128xf32> -> vector<10x256xf32>
    %c0_30 = arith.constant 0 : index
    %c0_31 = arith.constant 0 : index
    %66 = vector.load %arg9[%c0_30, %c0_31] : memref<10x256xf32, #tpu.memory_space<vmem>>, vector<10x256xf32>
    tpu.vector_store %arg9[%c0_30, %c0_31], %65 {strides = array<i32>} : memref<10x256xf32, #tpu.memory_space<vmem>>, vector<10x256xf32>,
    %c0_32 = arith.constant 0 : index
    %c0_33 = arith.constant 0 : index
    %67 = vector.load %arg10[%c0_32, %c0_33] : memref<10x128xf32, #tpu.memory_space<vmem>>, vector<10x128xf32>
    tpu.vector_store %arg10[%c0_32, %c0_33], %64 {strides = array<i32>} : memref<10x128xf32, #tpu.memory_space<vmem>>, vector<10x128xf32>,
    return
  }
  func.func @transform_0(%arg0: i32) -> (i32, i32, i32) {
    %c0_i32 = arith.constant 0 : i32
    %c0_i32_0 = arith.constant 0 : i32
    %c0_i32_1 = arith.constant 0 : i32
    return %arg0, %c0_i32, %c0_i32_0 : i32, i32, i32
  }
  func.func @transform_1(%arg0: i32) -> (i32, i32, i32) {
    %c0_i32 = arith.constant 0 : i32
    %c0_i32_0 = arith.constant 0 : i32
    %c0_i32_1 = arith.constant 0 : i32
    return %arg0, %c0_i32, %c0_i32_0 : i32, i32, i32
  }
  func.func @transform_2(%arg0: i32) -> (i32, i32) {
    %c0_i32 = arith.constant 0 : i32
    %c0_i32_0 = arith.constant 0 : i32
    %c0_i32_1 = arith.constant 0 : i32
    return %c0_i32, %c0_i32_0 : i32, i32
  }
  func.func @transform_3(%arg0: i32) -> (i32, i32) {
    %c0_i32 = arith.constant 0 : i32
    %c0_i32_0 = arith.constant 0 : i32
    %c0_i32_1 = arith.constant 0 : i32
    return %c0_i32, %c0_i32_0 : i32, i32
  }
  func.func @transform_4(%arg0: i32) -> (i32, i32) {
    %c0_i32 = arith.constant 0 : i32
    %c0_i32_0 = arith.constant 0 : i32
    %c0_i32_1 = arith.constant 0 : i32
    return %c0_i32, %c0_i32_0 : i32, i32
  }
  func.func @transform_5(%arg0: i32) -> (i32, i32) {
    %c0_i32 = arith.constant 0 : i32
    %c0_i32_0 = arith.constant 0 : i32
    %c0_i32_1 = arith.constant 0 : i32
    return %c0_i32, %c0_i32_0 : i32, i32
  }
  func.func @transform_6(%arg0: i32) -> (i32, i32) {
    %c0_i32 = arith.constant 0 : i32
    %c0_i32_0 = arith.constant 0 : i32
    %c0_i32_1 = arith.constant 0 : i32
    return %c0_i32, %c0_i32_0 : i32, i32
  }
  func.func @transform_7(%arg0: i32) -> (i32, i32) {
    %c0_i32 = arith.constant 0 : i32
    %c0_i32_0 = arith.constant 0 : i32
    %c0_i32_1 = arith.constant 0 : i32
    return %c0_i32, %c0_i32_0 : i32, i32
  }
  func.func @transform_8(%arg0: i32) -> (i32, i32) {
    %c0_i32 = arith.constant 0 : i32
    %c0_i32_0 = arith.constant 0 : i32
    return %arg0, %c0_i32 : i32, i32
  }
  func.func @transform_9(%arg0: i32) -> (i32, i32) {
    %c0_i32 = arith.constant 0 : i32
    %c0_i32_0 = arith.constant 0 : i32
    return %arg0, %c0_i32 : i32, i32
  }
}

</mosaic_0001>

<llo_original>
// kernel: tpu_custom_call.1
$region0: #{tpu_custom_call.1}
  #allocation0 [shape = 'u32[]', space=smem, size = 0x4, offset = 0x4, fixed_abs, tag = 'smem constant byte address 0x4 - core index']
  #allocation1 [shape = 'u32[72,128]{1,0:T(1,128)}', space=vmem, size = 0x9000, scoped, tag = 'internal scratch']
  %s0 = inlined_call_operand.vmem [shape: f32[10,128,2], index: 0, kind: input, shape index: {}]
  %s1 = inlined_call_operand.vmem [shape: f32[10,128,2], index: 1, kind: input, shape index: {}]
  %s2 = inlined_call_operand.vmem [shape: f32[2,64], index: 2, kind: input, shape index: {}]
  %s3 = inlined_call_operand.vmem [shape: f32[1,64], index: 3, kind: input, shape index: {}]
  %s4 = inlined_call_operand.vmem [shape: f32[64,128], index: 4, kind: input, shape index: {}]
  %s5 = inlined_call_operand.vmem [shape: f32[1,128], index: 5, kind: input, shape index: {}]
  %s6 = inlined_call_operand.vmem [shape: f32[128,128], index: 6, kind: input, shape index: {}]
  %s7 = inlined_call_operand.vmem [shape: f32[1,128], index: 7, kind: input, shape index: {}]
  %s8 = inlined_call_operand.hbm [shape: f32[10,256], index: 8, kind: output, shape index: {0}]
  %s9 = inlined_call_operand.hbm [shape: f32[10,128], index: 9, kind: output, shape index: {1}]
  %10 = xla_tuple %s8, %s9
  %s11 = sld [smem:[#allocation0]]
  $region50: #{tpu_custom_call.1} parent=0
    _
  %s13 = ssub.s32 1, %s11
  %s14 = scalar_select 0, %s13, %s11
  $region1: #{tpu_custom_call.1} parent=0
    #allocation2 [shape = 'u8[16384]{0}', space=vmem, size = 0x4000, scoped, tag = 'output window, operand 0, single buffered']
    #allocation3 [shape = 's32[1]{0}', space=sflag, size = 0x4, scoped, tag = 'scoped memory for tpu_custom_call.1']
    #allocation4 [shape = 'u8[8192]{0}', space=vmem, size = 0x2000, scoped, tag = 'output window, operand 1, single buffered']
    #allocation5 [shape = 's32[1]{0}', space=sflag, size = 0x4, scoped, tag = 'scoped memory for tpu_custom_call.1']
    %15 = vsyncpa [#allocation3], 0
    %16 = vsyncpa [#allocation5], 0
    // Predicated region
    $region2: #{tpu_custom_call.1} parent=1 // pred_check
      _
    $region3: #{tpu_custom_call.1} parent=1 // pred_check_branch
      %18 = sbr.rel (0) target = $region5
    $region4: #{tpu_custom_call.1} parent=1 // pred_region
      _
    $region5: #{tpu_custom_call.1} parent=1 // pred_fallthru
      _
    // Predicated region
    $region6: #{tpu_custom_call.1} parent=1 // pred_check
      _
    $region7: #{tpu_custom_call.1} parent=1 // pred_check_branch
      %20 = sbr.rel (0) target = $region9
    $region8: #{tpu_custom_call.1} parent=1 // pred_region
      _
    $region9: #{tpu_custom_call.1} parent=1 // pred_fallthru
      _
    // Predicated region
    $region10: #{tpu_custom_call.1} parent=1 // pred_check
      _
    $region11: #{tpu_custom_call.1} parent=1 // pred_check_branch
      %22 = sbr.rel (0) target = $region13
    $region12: #{tpu_custom_call.1} parent=1 // pred_region
      _
    $region13: #{tpu_custom_call.1} parent=1 // pred_fallthru
      _
    // Predicated region
    $region14: #{tpu_custom_call.1} parent=1 // pred_check
      _
    $region15: #{tpu_custom_call.1} parent=1 // pred_check_branch
      %24 = sbr.rel (0) target = $region17
    $region16: #{tpu_custom_call.1} parent=1 // pred_region
      _
    $region17: #{tpu_custom_call.1} parent=1 // pred_fallthru
      _
    // Predicated region
    $region18: #{tpu_custom_call.1} parent=1 // pred_check
      _
    $region19: #{tpu_custom_call.1} parent=1 // pred_check_branch
      %26 = sbr.rel (0) target = $region21
    $region20: #{tpu_custom_call.1} parent=1 // pred_region
      _
    $region21: #{tpu_custom_call.1} parent=1 // pred_fallthru
      _
    // Predicated region
    $region22: #{tpu_custom_call.1} parent=1 // pred_check
      _
    $region23: #{tpu_custom_call.1} parent=1 // pred_check_branch
      %28 = sbr.rel (0) target = $region25
    $region24: #{tpu_custom_call.1} parent=1 // pred_region
      _
    $region25: #{tpu_custom_call.1} parent=1 // pred_fallthru
      _
    // Predicated region
    $region26: #{tpu_custom_call.1} parent=1 // pred_check
      _
    $region27: #{tpu_custom_call.1} parent=1 // pred_check_branch
      %30 = sbr.rel (0) target = $region29
    $region28: #{tpu_custom_call.1} parent=1 // pred_region
      _
    $region29: #{tpu_custom_call.1} parent=1 // pred_fallthru
      _
    // Predicated region
    $region30: #{tpu_custom_call.1} parent=1 // pred_check
      _
    $region31: #{tpu_custom_call.1} parent=1 // pred_check_branch
      %32 = sbr.rel (0) target = $region33
    $region32: #{tpu_custom_call.1} parent=1 // pred_region
      _
    $region33: #{tpu_custom_call.1} parent=1 // pred_fallthru
      _
    %v34 = vld [vmem:[%s0] sm:$0xff]
    %v35 = vld [vmem:[%s0 + $0x8] sm:$0xff]
    %v36 = vld [vmem:[%s0 + $0x10] sm:$0xff]
    %v37 = vld [vmem:[%s0 + $0x18] sm:$0xff]
    %v38 = vld [vmem:[%s0 + $0x20] sm:$0xff]
    %v39 = vld [vmem:[%s0 + $0x28] sm:$0xff]
    %v40 = vld [vmem:[%s0 + $0x30] sm:$0xff]
    %v41 = vld [vmem:[%s0 + $0x38] sm:$0xff]
    %v42 = vld [vmem:[%s0 + $0x40] sm:$0xff]
    %v43 = vld [vmem:[%s0 + $0x48] sm:$0xff]
    %v44 = vld [vmem:[%s0 + $0x50] sm:$0xff]
    %v45 = vld [vmem:[%s0 + $0x58] sm:$0xff]
    %v46 = vld [vmem:[%s0 + $0x60] sm:$0xff]
    %v47 = vld [vmem:[%s0 + $0x68] sm:$0xff]
    %v48 = vld [vmem:[%s0 + $0x70] sm:$0xff]
    %v49 = vld [vmem:[%s0 + $0x78] sm:$0xff]
    %v50 = vld [vmem:[%s0 + $0x80] sm:$0xff]
    %v51 = vld [vmem:[%s0 + $0x88] sm:$0xff]
    %v52 = vld [vmem:[%s0 + $0x90] sm:$0xff]
    %v53 = vld [vmem:[%s0 + $0x98] sm:$0xff]
    %v54 = vld [vmem:[%s0 + $0xa0] sm:$0xff]
    %v55 = vld [vmem:[%s0 + $0xa8] sm:$0xff]
    %v56 = vld [vmem:[%s0 + $0xb0] sm:$0xff]
    %v57 = vld [vmem:[%s0 + $0xb8] sm:$0xff]
    %v58 = vld [vmem:[%s0 + $0xc0] sm:$0xff]
    %v59 = vld [vmem:[%s0 + $0xc8] sm:$0xff]
    %v60 = vld [vmem:[%s0 + $0xd0] sm:$0xff]
    %v61 = vld [vmem:[%s0 + $0xd8] sm:$0xff]
    %v62 = vld [vmem:[%s0 + $0xe0] sm:$0xff]
    %v63 = vld [vmem:[%s0 + $0xe8] sm:$0xff]
    %v64 = vld [vmem:[%s0 + $0xf0] sm:$0xff]
    %v65 = vld [vmem:[%s0 + $0xf8] sm:$0xff]
    %v66 = vld [vmem:[%s0 + $0x100] sm:$0xff]
    %v67 = vld [vmem:[%s0 + $0x108] sm:$0xff]
    %v68 = vld [vmem:[%s0 + $0x110] sm:$0xff]
    %v69 = vld [vmem:[%s0 + $0x118] sm:$0xff]
    %v70 = vld [vmem:[%s0 + $0x120] sm:$0xff]
    %v71 = vld [vmem:[%s0 + $0x128] sm:$0xff]
    %v72 = vld [vmem:[%s0 + $0x130] sm:$0xff]
    %v73 = vld [vmem:[%s0 + $0x138] sm:$0xff]
    %v74 = vld [vmem:[%s0 + $0x140] sm:$0xff]
    %v75 = vld [vmem:[%s0 + $0x148] sm:$0xff]
    %v76 = vld [vmem:[%s0 + $0x150] sm:$0xff]
    %v77 = vld [vmem:[%s0 + $0x158] sm:$0xff]
    %v78 = vld [vmem:[%s0 + $0x160] sm:$0xff]
    %v79 = vld [vmem:[%s0 + $0x168] sm:$0xff]
    %v80 = vld [vmem:[%s0 + $0x170] sm:$0xff]
    %v81 = vld [vmem:[%s0 + $0x178] sm:$0xff]
    %v82 = vld [vmem:[%s0 + $0x180] sm:$0xff]
    %v83 = vld [vmem:[%s0 + $0x188] sm:$0xff]
    %v84 = vld [vmem:[%s0 + $0x190] sm:$0xff]
    %v85 = vld [vmem:[%s0 + $0x198] sm:$0xff]
    %v86 = vld [vmem:[%s0 + $0x1a0] sm:$0xff]
    %v87 = vld [vmem:[%s0 + $0x1a8] sm:$0xff]
    %v88 = vld [vmem:[%s0 + $0x1b0] sm:$0xff]
    %v89 = vld [vmem:[%s0 + $0x1b8] sm:$0xff]
    %v90 = vld [vmem:[%s0 + $0x1c0] sm:$0xff]
    %v91 = vld [vmem:[%s0 + $0x1c8] sm:$0xff]
    %v92 = vld [vmem:[%s0 + $0x1d0] sm:$0xff]
    %v93 = vld [vmem:[%s0 + $0x1d8] sm:$0xff]
    %v94 = vld [vmem:[%s0 + $0x1e0] sm:$0xff]
    %v95 = vld [vmem:[%s0 + $0x1e8] sm:$0xff]
    %v96 = vld [vmem:[%s0 + $0x1f0] sm:$0xff]
    %v97 = vld [vmem:[%s0 + $0x1f8] sm:$0xff]
    %v98 = vld [vmem:[%s0 + $0x200] sm:$0xff]
    %v99 = vld [vmem:[%s0 + $0x208] sm:$0xff]
    %v100 = vld [vmem:[%s0 + $0x210] sm:$0xff]
    %v101 = vld [vmem:[%s0 + $0x218] sm:$0xff]
    %v102 = vld [vmem:[%s0 + $0x220] sm:$0xff]
    %v103 = vld [vmem:[%s0 + $0x228] sm:$0xff]
    %v104 = vld [vmem:[%s0 + $0x230] sm:$0xff]
    %v105 = vld [vmem:[%s0 + $0x238] sm:$0xff]
    %v106 = vld [vmem:[%s0 + $0x240] sm:$0xff]
    %v107 = vld [vmem:[%s0 + $0x248] sm:$0xff]
    %v108 = vld [vmem:[%s0 + $0x250] sm:$0xff]
    %v109 = vld [vmem:[%s0 + $0x258] sm:$0xff]
    %v110 = vld [vmem:[%s0 + $0x260] sm:$0xff]
    %v111 = vld [vmem:[%s0 + $0x268] sm:$0xff]
    %v112 = vld [vmem:[%s0 + $0x270] sm:$0xff]
    %v113 = vld [vmem:[%s0 + $0x278] sm:$0xff]
    %v114 = vld [vmem:[%s0 + $0x280] sm:$0xff]
    %v115 = vld [vmem:[%s0 + $0x288] sm:$0xff]
    %v116 = vld [vmem:[%s0 + $0x290] sm:$0xff]
    %v117 = vld [vmem:[%s0 + $0x298] sm:$0xff]
    %v118 = vld [vmem:[%s0 + $0x2a0] sm:$0xff]
    %v119 = vld [vmem:[%s0 + $0x2a8] sm:$0xff]
    %v120 = vld [vmem:[%s0 + $0x2b0] sm:$0xff]
    %v121 = vld [vmem:[%s0 + $0x2b8] sm:$0xff]
    %v122 = vld [vmem:[%s0 + $0x2c0] sm:$0xff]
    %v123 = vld [vmem:[%s0 + $0x2c8] sm:$0xff]
    %v124 = vld [vmem:[%s0 + $0x2d0] sm:$0xff]
    %v125 = vld [vmem:[%s0 + $0x2d8] sm:$0xff]
    %v126 = vld [vmem:[%s0 + $0x2e0] sm:$0xff]
    %v127 = vld [vmem:[%s0 + $0x2e8] sm:$0xff]
    %v128 = vld [vmem:[%s0 + $0x2f0] sm:$0xff]
    %v129 = vld [vmem:[%s0 + $0x2f8] sm:$0xff]
    %v130 = vld [vmem:[%s0 + $0x300] sm:$0xff]
    %v131 = vld [vmem:[%s0 + $0x308] sm:$0xff]
    %v132 = vld [vmem:[%s0 + $0x310] sm:$0xff]
    %v133 = vld [vmem:[%s0 + $0x318] sm:$0xff]
    %v134 = vld [vmem:[%s0 + $0x320] sm:$0xff]
    %v135 = vld [vmem:[%s0 + $0x328] sm:$0xff]
    %v136 = vld [vmem:[%s0 + $0x330] sm:$0xff]
    %v137 = vld [vmem:[%s0 + $0x338] sm:$0xff]
    %v138 = vld [vmem:[%s0 + $0x340] sm:$0xff]
    %v139 = vld [vmem:[%s0 + $0x348] sm:$0xff]
    %v140 = vld [vmem:[%s0 + $0x350] sm:$0xff]
    %v141 = vld [vmem:[%s0 + $0x358] sm:$0xff]
    %v142 = vld [vmem:[%s0 + $0x360] sm:$0xff]
    %v143 = vld [vmem:[%s0 + $0x368] sm:$0xff]
    %v144 = vld [vmem:[%s0 + $0x370] sm:$0xff]
    %v145 = vld [vmem:[%s0 + $0x378] sm:$0xff]
    %v146 = vld [vmem:[%s0 + $0x380] sm:$0xff]
    %v147 = vld [vmem:[%s0 + $0x388] sm:$0xff]
    %v148 = vld [vmem:[%s0 + $0x390] sm:$0xff]
    %v149 = vld [vmem:[%s0 + $0x398] sm:$0xff]
    %v150 = vld [vmem:[%s0 + $0x3a0] sm:$0xff]
    %v151 = vld [vmem:[%s0 + $0x3a8] sm:$0xff]
    %v152 = vld [vmem:[%s0 + $0x3b0] sm:$0xff]
    %v153 = vld [vmem:[%s0 + $0x3b8] sm:$0xff]
    %v154 = vld [vmem:[%s0 + $0x3c0] sm:$0xff]
    %v155 = vld [vmem:[%s0 + $0x3c8] sm:$0xff]
    %v156 = vld [vmem:[%s0 + $0x3d0] sm:$0xff]
    %v157 = vld [vmem:[%s0 + $0x3d8] sm:$0xff]
    %v158 = vld [vmem:[%s0 + $0x3e0] sm:$0xff]
    %v159 = vld [vmem:[%s0 + $0x3e8] sm:$0xff]
    %v160 = vld [vmem:[%s0 + $0x3f0] sm:$0xff]
    %v161 = vld [vmem:[%s0 + $0x3f8] sm:$0xff]
    %v162 = vld [vmem:[%s0 + $0x400] sm:$0xff]
    %v163 = vld [vmem:[%s0 + $0x408] sm:$0xff]
    %v164 = vld [vmem:[%s0 + $0x410] sm:$0xff]
    %v165 = vld [vmem:[%s0 + $0x418] sm:$0xff]
    %v166 = vld [vmem:[%s0 + $0x420] sm:$0xff]
    %v167 = vld [vmem:[%s0 + $0x428] sm:$0xff]
    %v168 = vld [vmem:[%s0 + $0x430] sm:$0xff]
    %v169 = vld [vmem:[%s0 + $0x438] sm:$0xff]
    %v170 = vld [vmem:[%s0 + $0x440] sm:$0xff]
    %v171 = vld [vmem:[%s0 + $0x448] sm:$0xff]
    %v172 = vld [vmem:[%s0 + $0x450] sm:$0xff]
    %v173 = vld [vmem:[%s0 + $0x458] sm:$0xff]
    %v174 = vld [vmem:[%s0 + $0x460] sm:$0xff]
    %v175 = vld [vmem:[%s0 + $0x468] sm:$0xff]
    %v176 = vld [vmem:[%s0 + $0x470] sm:$0xff]
    %v177 = vld [vmem:[%s0 + $0x478] sm:$0xff]
    %v178 = vld [vmem:[%s0 + $0x480] sm:$0xff]
    %v179 = vld [vmem:[%s0 + $0x488] sm:$0xff]
    %v180 = vld [vmem:[%s0 + $0x490] sm:$0xff]
    %v181 = vld [vmem:[%s0 + $0x498] sm:$0xff]
    %v182 = vld [vmem:[%s0 + $0x4a0] sm:$0xff]
    %v183 = vld [vmem:[%s0 + $0x4a8] sm:$0xff]
    %v184 = vld [vmem:[%s0 + $0x4b0] sm:$0xff]
    %v185 = vld [vmem:[%s0 + $0x4b8] sm:$0xff]
    %v186 = vld [vmem:[%s0 + $0x4c0] sm:$0xff]
    %v187 = vld [vmem:[%s0 + $0x4c8] sm:$0xff]
    %v188 = vld [vmem:[%s0 + $0x4d0] sm:$0xff]
    %v189 = vld [vmem:[%s0 + $0x4d8] sm:$0xff]
    %v190 = vld [vmem:[%s0 + $0x4e0] sm:$0xff]
    %v191 = vld [vmem:[%s0 + $0x4e8] sm:$0xff]
    %v192 = vld [vmem:[%s0 + $0x4f0] sm:$0xff]
    %v193 = vld [vmem:[%s0 + $0x4f8] sm:$0xff]
    %v194 = vld [vmem:[%s2] sm:$0x1]
    %196 = vset.pattern.permute.xlu0 0
    %197 = vperm.xlu0 %196, %v34
    %v198 = vpop.permute.xlu0 %197
    %201 = vset.pattern.permute.xlu0 0
    %202 = vperm.xlu0 %201, %v35
    %v203 = vpop.permute.xlu0 %202
    %206 = vset.pattern.permute.xlu0 0
    %207 = vperm.xlu0 %206, %v36
    %v208 = vpop.permute.xlu0 %207
    %211 = vset.pattern.permute.xlu0 0
    %212 = vperm.xlu0 %211, %v37
    %v213 = vpop.permute.xlu0 %212
    %216 = vset.pattern.permute.xlu0 0
    %217 = vperm.xlu0 %216, %v38
    %v218 = vpop.permute.xlu0 %217
    %221 = vset.pattern.permute.xlu0 0
    %222 = vperm.xlu0 %221, %v39
    %v223 = vpop.permute.xlu0 %222
    %226 = vset.pattern.permute.xlu0 0
    %227 = vperm.xlu0 %226, %v40
    %v228 = vpop.permute.xlu0 %227
    %231 = vset.pattern.permute.xlu0 0
    %232 = vperm.xlu0 %231, %v41
    %v233 = vpop.permute.xlu0 %232
    %236 = vset.pattern.permute.xlu0 0
    %237 = vperm.xlu0 %236, %v42
    %v238 = vpop.permute.xlu0 %237
    %241 = vset.pattern.permute.xlu0 0
    %242 = vperm.xlu0 %241, %v43
    %v243 = vpop.permute.xlu0 %242
    %246 = vset.pattern.permute.xlu0 0
    %247 = vperm.xlu0 %246, %v44
    %v248 = vpop.permute.xlu0 %247
    %251 = vset.pattern.permute.xlu0 0
    %252 = vperm.xlu0 %251, %v45
    %v253 = vpop.permute.xlu0 %252
    %256 = vset.pattern.permute.xlu0 0
    %257 = vperm.xlu0 %256, %v46
    %v258 = vpop.permute.xlu0 %257
    %261 = vset.pattern.permute.xlu0 0
    %262 = vperm.xlu0 %261, %v47
    %v263 = vpop.permute.xlu0 %262
    %266 = vset.pattern.permute.xlu0 0
    %267 = vperm.xlu0 %266, %v48
    %v268 = vpop.permute.xlu0 %267
    %271 = vset.pattern.permute.xlu0 0
    %272 = vperm.xlu0 %271, %v49
    %v273 = vpop.permute.xlu0 %272
    %276 = vset.pattern.permute.xlu0 0
    %277 = vperm.xlu0 %276, %v50
    %v278 = vpop.permute.xlu0 %277
    %281 = vset.pattern.permute.xlu0 0
    %282 = vperm.xlu0 %281, %v51
    %v283 = vpop.permute.xlu0 %282
    %286 = vset.pattern.permute.xlu0 0
    %287 = vperm.xlu0 %286, %v52
    %v288 = vpop.permute.xlu0 %287
    %291 = vset.pattern.permute.xlu0 0
    %292 = vperm.xlu0 %291, %v53
    %v293 = vpop.permute.xlu0 %292
    %296 = vset.pattern.permute.xlu0 0
    %297 = vperm.xlu0 %296, %v54
    %v298 = vpop.permute.xlu0 %297
    %301 = vset.pattern.permute.xlu0 0
    %302 = vperm.xlu0 %301, %v55
    %v303 = vpop.permute.xlu0 %302
    %306 = vset.pattern.permute.xlu0 0
    %307 = vperm.xlu0 %306, %v56
    %v308 = vpop.permute.xlu0 %307
    %311 = vset.pattern.permute.xlu0 0
    %312 = vperm.xlu0 %311, %v57
    %v313 = vpop.permute.xlu0 %312
    %316 = vset.pattern.permute.xlu0 0
    %317 = vperm.xlu0 %316, %v58
    %v318 = vpop.permute.xlu0 %317
    %321 = vset.pattern.permute.xlu0 0
    %322 = vperm.xlu0 %321, %v59
    %v323 = vpop.permute.xlu0 %322
    %326 = vset.pattern.permute.xlu0 0
    %327 = vperm.xlu0 %326, %v60
    %v328 = vpop.permute.xlu0 %327
    %331 = vset.pattern.permute.xlu0 0
    %332 = vperm.xlu0 %331, %v61
    %v333 = vpop.permute.xlu0 %332
    %336 = vset.pattern.permute.xlu0 0
    %337 = vperm.xlu0 %336, %v62
    %v338 = vpop.permute.xlu0 %337
    %341 = vset.pattern.permute.xlu0 0
    %342 = vperm.xlu0 %341, %v63
    %v343 = vpop.permute.xlu0 %342
    %346 = vset.pattern.permute.xlu0 0
    %347 = vperm.xlu0 %346, %v64
    %v348 = vpop.permute.xlu0 %347
    %351 = vset.pattern.permute.xlu0 0
    %352 = vperm.xlu0 %351, %v65
    %v353 = vpop.permute.xlu0 %352
    %356 = vset.pattern.permute.xlu0 0
    %357 = vperm.xlu0 %356, %v66
    %v358 = vpop.permute.xlu0 %357
    %361 = vset.pattern.permute.xlu0 0
    %362 = vperm.xlu0 %361, %v67
    %v363 = vpop.permute.xlu0 %362
    %366 = vset.pattern.permute.xlu0 0
    %367 = vperm.xlu0 %366, %v68
    %v368 = vpop.permute.xlu0 %367
    %371 = vset.pattern.permute.xlu0 0
    %372 = vperm.xlu0 %371, %v69
    %v373 = vpop.permute.xlu0 %372
    %376 = vset.pattern.permute.xlu0 0
    %377 = vperm.xlu0 %376, %v70
    %v378 = vpop.permute.xlu0 %377
    %381 = vset.pattern.permute.xlu0 0
    %382 = vperm.xlu0 %381, %v71
    %v383 = vpop.permute.xlu0 %382
    %386 = vset.pattern.permute.xlu0 0
    %387 = vperm.xlu0 %386, %v72
    %v388 = vpop.permute.xlu0 %387
    %391 = vset.pattern.permute.xlu0 0
    %392 = vperm.xlu0 %391, %v73
    %v393 = vpop.permute.xlu0 %392
    %396 = vset.pattern.permute.xlu0 0
    %397 = vperm.xlu0 %396, %v74
    %v398 = vpop.permute.xlu0 %397
    %401 = vset.pattern.permute.xlu0 0
    %402 = vperm.xlu0 %401, %v75
    %v403 = vpop.permute.xlu0 %402
    %406 = vset.pattern.permute.xlu0 0
    %407 = vperm.xlu0 %406, %v76
    %v408 = vpop.permute.xlu0 %407
    %411 = vset.pattern.permute.xlu0 0
    %412 = vperm.xlu0 %411, %v77
    %v413 = vpop.permute.xlu0 %412
    %416 = vset.pattern.permute.xlu0 0
    %417 = vperm.xlu0 %416, %v78
    %v418 = vpop.permute.xlu0 %417
    %421 = vset.pattern.permute.xlu0 0
    %422 = vperm.xlu0 %421, %v79
    %v423 = vpop.permute.xlu0 %422
    %426 = vset.pattern.permute.xlu0 0
    %427 = vperm.xlu0 %426, %v80
    %v428 = vpop.permute.xlu0 %427
    %431 = vset.pattern.permute.xlu0 0
    %432 = vperm.xlu0 %431, %v81
    %v433 = vpop.permute.xlu0 %432
    %436 = vset.pattern.permute.xlu0 0
    %437 = vperm.xlu0 %436, %v82
    %v438 = vpop.permute.xlu0 %437
    %441 = vset.pattern.permute.xlu0 0
    %442 = vperm.xlu0 %441, %v83
    %v443 = vpop.permute.xlu0 %442
    %446 = vset.pattern.permute.xlu0 0
    %447 = vperm.xlu0 %446, %v84
    %v448 = vpop.permute.xlu0 %447
    %451 = vset.pattern.permute.xlu0 0
    %452 = vperm.xlu0 %451, %v85
    %v453 = vpop.permute.xlu0 %452
    %456 = vset.pattern.permute.xlu0 0
    %457 = vperm.xlu0 %456, %v86
    %v458 = vpop.permute.xlu0 %457
    %461 = vset.pattern.permute.xlu0 0
    %462 = vperm.xlu0 %461, %v87
    %v463 = vpop.permute.xlu0 %462
    %466 = vset.pattern.permute.xlu0 0
    %467 = vperm.xlu0 %466, %v88
    %v468 = vpop.permute.xlu0 %467
    %471 = vset.pattern.permute.xlu0 0
    %472 = vperm.xlu0 %471, %v89
    %v473 = vpop.permute.xlu0 %472
    %476 = vset.pattern.permute.xlu0 0
    %477 = vperm.xlu0 %476, %v90
    %v478 = vpop.permute.xlu0 %477
    %481 = vset.pattern.permute.xlu0 0
    %482 = vperm.xlu0 %481, %v91
    %v483 = vpop.permute.xlu0 %482
    %486 = vset.pattern.permute.xlu0 0
    %487 = vperm.xlu0 %486, %v92
    %v488 = vpop.permute.xlu0 %487
    %491 = vset.pattern.permute.xlu0 0
    %492 = vperm.xlu0 %491, %v93
    %v493 = vpop.permute.xlu0 %492
    %496 = vset.pattern.permute.xlu0 0
    %497 = vperm.xlu0 %496, %v94
    %v498 = vpop.permute.xlu0 %497
    %501 = vset.pattern.permute.xlu0 0
    %502 = vperm.xlu0 %501, %v95
    %v503 = vpop.permute.xlu0 %502
    %506 = vset.pattern.permute.xlu0 0
    %507 = vperm.xlu0 %506, %v96
    %v508 = vpop.permute.xlu0 %507
    %511 = vset.pattern.permute.xlu0 0
    %512 = vperm.xlu0 %511, %v97
    %v513 = vpop.permute.xlu0 %512
    %516 = vset.pattern.permute.xlu0 0
    %517 = vperm.xlu0 %516, %v98
    %v518 = vpop.permute.xlu0 %517
    %521 = vset.pattern.permute.xlu0 0
    %522 = vperm.xlu0 %521, %v99
    %v523 = vpop.permute.xlu0 %522
    %526 = vset.pattern.permute.xlu0 0
    %527 = vperm.xlu0 %526, %v100
    %v528 = vpop.permute.xlu0 %527
    %531 = vset.pattern.permute.xlu0 0
    %532 = vperm.xlu0 %531, %v101
    %v533 = vpop.permute.xlu0 %532
    %536 = vset.pattern.permute.xlu0 0
    %537 = vperm.xlu0 %536, %v102
    %v538 = vpop.permute.xlu0 %537
    %541 = vset.pattern.permute.xlu0 0
    %542 = vperm.xlu0 %541, %v103
    %v543 = vpop.permute.xlu0 %542
    %546 = vset.pattern.permute.xlu0 0
    %547 = vperm.xlu0 %546, %v104
    %v548 = vpop.permute.xlu0 %547
    %551 = vset.pattern.permute.xlu0 0
    %552 = vperm.xlu0 %551, %v105
    %v553 = vpop.permute.xlu0 %552
    %556 = vset.pattern.permute.xlu0 0
    %557 = vperm.xlu0 %556, %v106
    %v558 = vpop.permute.xlu0 %557
    %561 = vset.pattern.permute.xlu0 0
    %562 = vperm.xlu0 %561, %v107
    %v563 = vpop.permute.xlu0 %562
    %566 = vset.pattern.permute.xlu0 0
    %567 = vperm.xlu0 %566, %v108
    %v568 = vpop.permute.xlu0 %567
    %571 = vset.pattern.permute.xlu0 0
    %572 = vperm.xlu0 %571, %v109
    %v573 = vpop.permute.xlu0 %572
    %576 = vset.pattern.permute.xlu0 0
    %577 = vperm.xlu0 %576, %v110
    %v578 = vpop.permute.xlu0 %577
    %581 = vset.pattern.permute.xlu0 0
    %582 = vperm.xlu0 %581, %v111
    %v583 = vpop.permute.xlu0 %582
    %586 = vset.pattern.permute.xlu0 0
    %587 = vperm.xlu0 %586, %v112
    %v588 = vpop.permute.xlu0 %587
    %591 = vset.pattern.permute.xlu0 0
    %592 = vperm.xlu0 %591, %v113
    %v593 = vpop.permute.xlu0 %592
    %596 = vset.pattern.permute.xlu0 0
    %597 = vperm.xlu0 %596, %v114
    %v598 = vpop.permute.xlu0 %597
    %601 = vset.pattern.permute.xlu0 0
    %602 = vperm.xlu0 %601, %v115
    %v603 = vpop.permute.xlu0 %602
    %606 = vset.pattern.permute.xlu0 0
    %607 = vperm.xlu0 %606, %v116
    %v608 = vpop.permute.xlu0 %607
    %611 = vset.pattern.permute.xlu0 0
    %612 = vperm.xlu0 %611, %v117
    %v613 = vpop.permute.xlu0 %612
    %616 = vset.pattern.permute.xlu0 0
    %617 = vperm.xlu0 %616, %v118
    %v618 = vpop.permute.xlu0 %617
    %621 = vset.pattern.permute.xlu0 0
    %622 = vperm.xlu0 %621, %v119
    %v623 = vpop.permute.xlu0 %622
    %626 = vset.pattern.permute.xlu0 0
    %627 = vperm.xlu0 %626, %v120
    %v628 = vpop.permute.xlu0 %627
    %631 = vset.pattern.permute.xlu0 0
    %632 = vperm.xlu0 %631, %v121
    %v633 = vpop.permute.xlu0 %632
    %636 = vset.pattern.permute.xlu0 0
    %637 = vperm.xlu0 %636, %v122
    %v638 = vpop.permute.xlu0 %637
    %641 = vset.pattern.permute.xlu0 0
    %642 = vperm.xlu0 %641, %v123
    %v643 = vpop.permute.xlu0 %642
    %646 = vset.pattern.permute.xlu0 0
    %647 = vperm.xlu0 %646, %v124
    %v648 = vpop.permute.xlu0 %647
    %651 = vset.pattern.permute.xlu0 0
    %652 = vperm.xlu0 %651, %v125
    %v653 = vpop.permute.xlu0 %652
    %656 = vset.pattern.permute.xlu0 0
    %657 = vperm.xlu0 %656, %v126
    %v658 = vpop.permute.xlu0 %657
    %661 = vset.pattern.permute.xlu0 0
    %662 = vperm.xlu0 %661, %v127
    %v663 = vpop.permute.xlu0 %662
    %666 = vset.pattern.permute.xlu0 0
    %667 = vperm.xlu0 %666, %v128
    %v668 = vpop.permute.xlu0 %667
    %671 = vset.pattern.permute.xlu0 0
    %672 = vperm.xlu0 %671, %v129
    %v673 = vpop.permute.xlu0 %672
    %676 = vset.pattern.permute.xlu0 0
    %677 = vperm.xlu0 %676, %v130
    %v678 = vpop.permute.xlu0 %677
    %681 = vset.pattern.permute.xlu0 0
    %682 = vperm.xlu0 %681, %v131
    %v683 = vpop.permute.xlu0 %682
    %686 = vset.pattern.permute.xlu0 0
    %687 = vperm.xlu0 %686, %v132
    %v688 = vpop.permute.xlu0 %687
    %691 = vset.pattern.permute.xlu0 0
    %692 = vperm.xlu0 %691, %v133
    %v693 = vpop.permute.xlu0 %692
    %696 = vset.pattern.permute.xlu0 0
    %697 = vperm.xlu0 %696, %v134
    %v698 = vpop.permute.xlu0 %697
    %701 = vset.pattern.permute.xlu0 0
    %702 = vperm.xlu0 %701, %v135
    %v703 = vpop.permute.xlu0 %702
    %706 = vset.pattern.permute.xlu0 0
    %707 = vperm.xlu0 %706, %v136
    %v708 = vpop.permute.xlu0 %707
    %711 = vset.pattern.permute.xlu0 0
    %712 = vperm.xlu0 %711, %v137
    %v713 = vpop.permute.xlu0 %712
    %716 = vset.pattern.permute.xlu0 0
    %717 = vperm.xlu0 %716, %v138
    %v718 = vpop.permute.xlu0 %717
    %721 = vset.pattern.permute.xlu0 0
    %722 = vperm.xlu0 %721, %v139
    %v723 = vpop.permute.xlu0 %722
    %726 = vset.pattern.permute.xlu0 0
    %727 = vperm.xlu0 %726, %v140
    %v728 = vpop.permute.xlu0 %727
    %731 = vset.pattern.permute.xlu0 0
    %732 = vperm.xlu0 %731, %v141
    %v733 = vpop.permute.xlu0 %732
    %736 = vset.pattern.permute.xlu0 0
    %737 = vperm.xlu0 %736, %v142
    %v738 = vpop.permute.xlu0 %737
    %741 = vset.pattern.permute.xlu0 0
    %742 = vperm.xlu0 %741, %v143
    %v743 = vpop.permute.xlu0 %742
    %746 = vset.pattern.permute.xlu0 0
    %747 = vperm.xlu0 %746, %v144
    %v748 = vpop.permute.xlu0 %747
    %751 = vset.pattern.permute.xlu0 0
    %752 = vperm.xlu0 %751, %v145
    %v753 = vpop.permute.xlu0 %752
    %756 = vset.pattern.permute.xlu0 0
    %757 = vperm.xlu0 %756, %v146
    %v758 = vpop.permute.xlu0 %757
    %761 = vset.pattern.permute.xlu0 0
    %762 = vperm.xlu0 %761, %v147
    %v763 = vpop.permute.xlu0 %762
    %766 = vset.pattern.permute.xlu0 0
    %767 = vperm.xlu0 %766, %v148
    %v768 = vpop.permute.xlu0 %767
    %771 = vset.pattern.permute.xlu0 0
    %772 = vperm.xlu0 %771, %v149
    %v773 = vpop.permute.xlu0 %772
    %776 = vset.pattern.permute.xlu0 0
    %777 = vperm.xlu0 %776, %v150
    %v778 = vpop.permute.xlu0 %777
    %781 = vset.pattern.permute.xlu0 0
    %782 = vperm.xlu0 %781, %v151
    %v783 = vpop.permute.xlu0 %782
    %786 = vset.pattern.permute.xlu0 0
    %787 = vperm.xlu0 %786, %v152
    %v788 = vpop.permute.xlu0 %787
    %791 = vset.pattern.permute.xlu0 0
    %792 = vperm.xlu0 %791, %v153
    %v793 = vpop.permute.xlu0 %792
    %796 = vset.pattern.permute.xlu0 0
    %797 = vperm.xlu0 %796, %v154
    %v798 = vpop.permute.xlu0 %797
    %801 = vset.pattern.permute.xlu0 0
    %802 = vperm.xlu0 %801, %v155
    %v803 = vpop.permute.xlu0 %802
    %806 = vset.pattern.permute.xlu0 0
    %807 = vperm.xlu0 %806, %v156
    %v808 = vpop.permute.xlu0 %807
    %811 = vset.pattern.permute.xlu0 0
    %812 = vperm.xlu0 %811, %v157
    %v813 = vpop.permute.xlu0 %812
    %816 = vset.pattern.permute.xlu0 0
    %817 = vperm.xlu0 %816, %v158
    %v818 = vpop.permute.xlu0 %817
    %821 = vset.pattern.permute.xlu0 0
    %822 = vperm.xlu0 %821, %v159
    %v823 = vpop.permute.xlu0 %822
    %826 = vset.pattern.permute.xlu0 0
    %827 = vperm.xlu0 %826, %v160
    %v828 = vpop.permute.xlu0 %827
    %831 = vset.pattern.permute.xlu0 0
    %832 = vperm.xlu0 %831, %v161
    %v833 = vpop.permute.xlu0 %832
    %836 = vset.pattern.permute.xlu0 0
    %837 = vperm.xlu0 %836, %v162
    %v838 = vpop.permute.xlu0 %837
    %841 = vset.pattern.permute.xlu0 0
    %842 = vperm.xlu0 %841, %v163
    %v843 = vpop.permute.xlu0 %842
    %846 = vset.pattern.permute.xlu0 0
    %847 = vperm.xlu0 %846, %v164
    %v848 = vpop.permute.xlu0 %847
    %851 = vset.pattern.permute.xlu0 0
    %852 = vperm.xlu0 %851, %v165
    %v853 = vpop.permute.xlu0 %852
    %856 = vset.pattern.permute.xlu0 0
    %857 = vperm.xlu0 %856, %v166
    %v858 = vpop.permute.xlu0 %857
    %861 = vset.pattern.permute.xlu0 0
    %862 = vperm.xlu0 %861, %v167
    %v863 = vpop.permute.xlu0 %862
    %866 = vset.pattern.permute.xlu0 0
    %867 = vperm.xlu0 %866, %v168
    %v868 = vpop.permute.xlu0 %867
    %871 = vset.pattern.permute.xlu0 0
    %872 = vperm.xlu0 %871, %v169
    %v873 = vpop.permute.xlu0 %872
    %876 = vset.pattern.permute.xlu0 0
    %877 = vperm.xlu0 %876, %v170
    %v878 = vpop.permute.xlu0 %877
    %881 = vset.pattern.permute.xlu0 0
    %882 = vperm.xlu0 %881, %v171
    %v883 = vpop.permute.xlu0 %882
    %886 = vset.pattern.permute.xlu0 0
    %887 = vperm.xlu0 %886, %v172
    %v888 = vpop.permute.xlu0 %887
    %891 = vset.pattern.permute.xlu0 0
    %892 = vperm.xlu0 %891, %v173
    %v893 = vpop.permute.xlu0 %892
    %896 = vset.pattern.permute.xlu0 0
    %897 = vperm.xlu0 %896, %v174
    %v898 = vpop.permute.xlu0 %897
    %901 = vset.pattern.permute.xlu0 0
    %902 = vperm.xlu0 %901, %v175
    %v903 = vpop.permute.xlu0 %902
    %906 = vset.pattern.permute.xlu0 0
    %907 = vperm.xlu0 %906, %v176
    %v908 = vpop.permute.xlu0 %907
    %911 = vset.pattern.permute.xlu0 0
    %912 = vperm.xlu0 %911, %v177
    %v913 = vpop.permute.xlu0 %912
    %916 = vset.pattern.permute.xlu0 0
    %917 = vperm.xlu0 %916, %v178
    %v918 = vpop.permute.xlu0 %917
    %921 = vset.pattern.permute.xlu0 0
    %922 = vperm.xlu0 %921, %v179
    %v923 = vpop.permute.xlu0 %922
    %926 = vset.pattern.permute.xlu0 0
    %927 = vperm.xlu0 %926, %v180
    %v928 = vpop.permute.xlu0 %927
    %931 = vset.pattern.permute.xlu0 0
    %932 = vperm.xlu0 %931, %v181
    %v933 = vpop.permute.xlu0 %932
    %936 = vset.pattern.permute.xlu0 0
    %937 = vperm.xlu0 %936, %v182
    %v938 = vpop.permute.xlu0 %937
    %941 = vset.pattern.permute.xlu0 0
    %942 = vperm.xlu0 %941, %v183
    %v943 = vpop.permute.xlu0 %942
    %946 = vset.pattern.permute.xlu0 0
    %947 = vperm.xlu0 %946, %v184
    %v948 = vpop.permute.xlu0 %947
    %951 = vset.pattern.permute.xlu0 0
    %952 = vperm.xlu0 %951, %v185
    %v953 = vpop.permute.xlu0 %952
    %956 = vset.pattern.permute.xlu0 0
    %957 = vperm.xlu0 %956, %v186
    %v958 = vpop.permute.xlu0 %957
    %961 = vset.pattern.permute.xlu0 0
    %962 = vperm.xlu0 %961, %v187
    %v963 = vpop.permute.xlu0 %962
    %966 = vset.pattern.permute.xlu0 0
    %967 = vperm.xlu0 %966, %v188
    %v968 = vpop.permute.xlu0 %967
    %971 = vset.pattern.permute.xlu0 0
    %972 = vperm.xlu0 %971, %v189
    %v973 = vpop.permute.xlu0 %972
    %976 = vset.pattern.permute.xlu0 0
    %977 = vperm.xlu0 %976, %v190
    %v978 = vpop.permute.xlu0 %977
    %981 = vset.pattern.permute.xlu0 0
    %982 = vperm.xlu0 %981, %v191
    %v983 = vpop.permute.xlu0 %982
    %986 = vset.pattern.permute.xlu0 0
    %987 = vperm.xlu0 %986, %v192
    %v988 = vpop.permute.xlu0 %987
    %991 = vset.pattern.permute.xlu0 0
    %992 = vperm.xlu0 %991, %v193
    %v993 = vpop.permute.xlu0 %992
    %v995 = vperm.slane %v194, 0
    %v996 = vmul.f32 %v198, %v995
    %v997 = vmul.f32 %v203, %v995
    %v998 = vmul.f32 %v208, %v995
    %v999 = vmul.f32 %v213, %v995
    %v1000 = vmul.f32 %v218, %v995
    %v1001 = vmul.f32 %v223, %v995
    %v1002 = vmul.f32 %v228, %v995
    %v1003 = vmul.f32 %v233, %v995
    %v1004 = vmul.f32 %v238, %v995
    %v1005 = vmul.f32 %v243, %v995
    %v1006 = vmul.f32 %v248, %v995
    %v1007 = vmul.f32 %v253, %v995
    %v1008 = vmul.f32 %v258, %v995
    %v1009 = vmul.f32 %v263, %v995
    %v1010 = vmul.f32 %v268, %v995
    %v1011 = vmul.f32 %v273, %v995
    %v1012 = vmul.f32 %v278, %v995
    %v1013 = vmul.f32 %v283, %v995
    %v1014 = vmul.f32 %v288, %v995
    %v1015 = vmul.f32 %v293, %v995
    %v1016 = vmul.f32 %v298, %v995
    %v1017 = vmul.f32 %v303, %v995
    %v1018 = vmul.f32 %v308, %v995
    %v1019 = vmul.f32 %v313, %v995
    %v1020 = vmul.f32 %v318, %v995
    %v1021 = vmul.f32 %v323, %v995
    %v1022 = vmul.f32 %v328, %v995
    %v1023 = vmul.f32 %v333, %v995
    %v1024 = vmul.f32 %v338, %v995
    %v1025 = vmul.f32 %v343, %v995
    %v1026 = vmul.f32 %v348, %v995
    %v1027 = vmul.f32 %v353, %v995
    %v1028 = vmul.f32 %v358, %v995
    %v1029 = vmul.f32 %v363, %v995
    %v1030 = vmul.f32 %v368, %v995
    %v1031 = vmul.f32 %v373, %v995
    %v1032 = vmul.f32 %v378, %v995
    %v1033 = vmul.f32 %v383, %v995
    %v1034 = vmul.f32 %v388, %v995
    %v1035 = vmul.f32 %v393, %v995
    %v1036 = vmul.f32 %v398, %v995
    %v1037 = vmul.f32 %v403, %v995
    %v1038 = vmul.f32 %v408, %v995
    %v1039 = vmul.f32 %v413, %v995
    %v1040 = vmul.f32 %v418, %v995
    %v1041 = vmul.f32 %v423, %v995
    %v1042 = vmul.f32 %v428, %v995
    %v1043 = vmul.f32 %v433, %v995
    %v1044 = vmul.f32 %v438, %v995
    %v1045 = vmul.f32 %v443, %v995
    %v1046 = vmul.f32 %v448, %v995
    %v1047 = vmul.f32 %v453, %v995
    %v1048 = vmul.f32 %v458, %v995
    %v1049 = vmul.f32 %v463, %v995
    %v1050 = vmul.f32 %v468, %v995
    %v1051 = vmul.f32 %v473, %v995
    %v1052 = vmul.f32 %v478, %v995
    %v1053 = vmul.f32 %v483, %v995
    %v1054 = vmul.f32 %v488, %v995
    %v1055 = vmul.f32 %v493, %v995
    %v1056 = vmul.f32 %v498, %v995
    %v1057 = vmul.f32 %v503, %v995
    %v1058 = vmul.f32 %v508, %v995
    %v1059 = vmul.f32 %v513, %v995
    %v1060 = vmul.f32 %v518, %v995
    %v1061 = vmul.f32 %v523, %v995
    %v1062 = vmul.f32 %v528, %v995
    %v1063 = vmul.f32 %v533, %v995
    %v1064 = vmul.f32 %v538, %v995
    %v1065 = vmul.f32 %v543, %v995
    %v1066 = vmul.f32 %v548, %v995
    %v1067 = vmul.f32 %v553, %v995
    %v1068 = vmul.f32 %v558, %v995
    %v1069 = vmul.f32 %v563, %v995
    %v1070 = vmul.f32 %v568, %v995
    %v1071 = vmul.f32 %v573, %v995
    %v1072 = vmul.f32 %v578, %v995
    %v1073 = vmul.f32 %v583, %v995
    %v1074 = vmul.f32 %v588, %v995
    %v1075 = vmul.f32 %v593, %v995
    %v1076 = vmul.f32 %v598, %v995
    %v1077 = vmul.f32 %v603, %v995
    %v1078 = vmul.f32 %v608, %v995
    %v1079 = vmul.f32 %v613, %v995
    %v1080 = vmul.f32 %v618, %v995
    %v1081 = vmul.f32 %v623, %v995
    %v1082 = vmul.f32 %v628, %v995
    %v1083 = vmul.f32 %v633, %v995
    %v1084 = vmul.f32 %v638, %v995
    %v1085 = vmul.f32 %v643, %v995
    %v1086 = vmul.f32 %v648, %v995
    %v1087 = vmul.f32 %v653, %v995
    %v1088 = vmul.f32 %v658, %v995
    %v1089 = vmul.f32 %v663, %v995
    %v1090 = vmul.f32 %v668, %v995
    %v1091 = vmul.f32 %v673, %v995
    %v1092 = vmul.f32 %v678, %v995
    %v1093 = vmul.f32 %v683, %v995
    %v1094 = vmul.f32 %v688, %v995
    %v1095 = vmul.f32 %v693, %v995
    %v1096 = vmul.f32 %v698, %v995
    %v1097 = vmul.f32 %v703, %v995
    %v1098 = vmul.f32 %v708, %v995
    %v1099 = vmul.f32 %v713, %v995
    %v1100 = vmul.f32 %v718, %v995
    %v1101 = vmul.f32 %v723, %v995
    %v1102 = vmul.f32 %v728, %v995
    %v1103 = vmul.f32 %v733, %v995
    %v1104 = vmul.f32 %v738, %v995
    %v1105 = vmul.f32 %v743, %v995
    %v1106 = vmul.f32 %v748, %v995
    %v1107 = vmul.f32 %v753, %v995
    %v1108 = vmul.f32 %v758, %v995
    %v1109 = vmul.f32 %v763, %v995
    %v1110 = vmul.f32 %v768, %v995
    %v1111 = vmul.f32 %v773, %v995
    %v1112 = vmul.f32 %v778, %v995
    %v1113 = vmul.f32 %v783, %v995
    %v1114 = vmul.f32 %v788, %v995
    %v1115 = vmul.f32 %v793, %v995
    %v1116 = vmul.f32 %v798, %v995
    %v1117 = vmul.f32 %v803, %v995
    %v1118 = vmul.f32 %v808, %v995
    %v1119 = vmul.f32 %v813, %v995
    %v1120 = vmul.f32 %v818, %v995
    %v1121 = vmul.f32 %v823, %v995
    %v1122 = vmul.f32 %v828, %v995
    %v1123 = vmul.f32 %v833, %v995
    %v1124 = vmul.f32 %v838, %v995
    %v1125 = vmul.f32 %v843, %v995
    %v1126 = vmul.f32 %v848, %v995
    %v1127 = vmul.f32 %v853, %v995
    %v1128 = vmul.f32 %v858, %v995
    %v1129 = vmul.f32 %v863, %v995
    %v1130 = vmul.f32 %v868, %v995
    %v1131 = vmul.f32 %v873, %v995
    %v1132 = vmul.f32 %v878, %v995
    %v1133 = vmul.f32 %v883, %v995
    %v1134 = vmul.f32 %v888, %v995
    %v1135 = vmul.f32 %v893, %v995
    %v1136 = vmul.f32 %v898, %v995
    %v1137 = vmul.f32 %v903, %v995
    %v1138 = vmul.f32 %v908, %v995
    %v1139 = vmul.f32 %v913, %v995
    %v1140 = vmul.f32 %v918, %v995
    %v1141 = vmul.f32 %v923, %v995
    %v1142 = vmul.f32 %v928, %v995
    %v1143 = vmul.f32 %v933, %v995
    %v1144 = vmul.f32 %v938, %v995
    %v1145 = vmul.f32 %v943, %v995
    %v1146 = vmul.f32 %v948, %v995
    %v1147 = vmul.f32 %v953, %v995
    %v1148 = vmul.f32 %v958, %v995
    %v1149 = vmul.f32 %v963, %v995
    %v1150 = vmul.f32 %v968, %v995
    %v1151 = vmul.f32 %v973, %v995
    %v1152 = vmul.f32 %v978, %v995
    %v1153 = vmul.f32 %v983, %v995
    %v1154 = vmul.f32 %v988, %v995
    %v1155 = vmul.f32 %v993, %v995
    %v1156 = vld [vmem:[%s2 + $0x1] sm:$0x1]
    %1157 = vset.pattern.permute.xlu0 1
    %1158 = vperm.xlu0 %1157, %v34
    %v1159 = vpop.permute.xlu0 %1158
    %1161 = vset.pattern.permute.xlu0 1
    %1162 = vperm.xlu0 %1161, %v35
    %v1163 = vpop.permute.xlu0 %1162
    %1165 = vset.pattern.permute.xlu0 1
    %1166 = vperm.xlu0 %1165, %v36
    %v1167 = vpop.permute.xlu0 %1166
    %1169 = vset.pattern.permute.xlu0 1
    %1170 = vperm.xlu0 %1169, %v37
    %v1171 = vpop.permute.xlu0 %1170
    %1173 = vset.pattern.permute.xlu0 1
    %1174 = vperm.xlu0 %1173, %v38
    %v1175 = vpop.permute.xlu0 %1174
    %1177 = vset.pattern.permute.xlu0 1
    %1178 = vperm.xlu0 %1177, %v39
    %v1179 = vpop.permute.xlu0 %1178
    %1181 = vset.pattern.permute.xlu0 1
    %1182 = vperm.xlu0 %1181, %v40
    %v1183 = vpop.permute.xlu0 %1182
    %1185 = vset.pattern.permute.xlu0 1
    %1186 = vperm.xlu0 %1185, %v41
    %v1187 = vpop.permute.xlu0 %1186
    %1189 = vset.pattern.permute.xlu0 1
    %1190 = vperm.xlu0 %1189, %v42
    %v1191 = vpop.permute.xlu0 %1190
    %1193 = vset.pattern.permute.xlu0 1
    %1194 = vperm.xlu0 %1193, %v43
    %v1195 = vpop.permute.xlu0 %1194
    %1197 = vset.pattern.permute.xlu0 1
    %1198 = vperm.xlu0 %1197, %v44
    %v1199 = vpop.permute.xlu0 %1198
    %1201 = vset.pattern.permute.xlu0 1
    %1202 = vperm.xlu0 %1201, %v45
    %v1203 = vpop.permute.xlu0 %1202
    %1205 = vset.pattern.permute.xlu0 1
    %1206 = vperm.xlu0 %1205, %v46
    %v1207 = vpop.permute.xlu0 %1206
    %1209 = vset.pattern.permute.xlu0 1
    %1210 = vperm.xlu0 %1209, %v47
    %v1211 = vpop.permute.xlu0 %1210
    %1213 = vset.pattern.permute.xlu0 1
    %1214 = vperm.xlu0 %1213, %v48
    %v1215 = vpop.permute.xlu0 %1214
    %1217 = vset.pattern.permute.xlu0 1
    %1218 = vperm.xlu0 %1217, %v49
    %v1219 = vpop.permute.xlu0 %1218
    %1221 = vset.pattern.permute.xlu0 1
    %1222 = vperm.xlu0 %1221, %v50
    %v1223 = vpop.permute.xlu0 %1222
    %1225 = vset.pattern.permute.xlu0 1
    %1226 = vperm.xlu0 %1225, %v51
    %v1227 = vpop.permute.xlu0 %1226
    %1229 = vset.pattern.permute.xlu0 1
    %1230 = vperm.xlu0 %1229, %v52
    %v1231 = vpop.permute.xlu0 %1230
    %1233 = vset.pattern.permute.xlu0 1
    %1234 = vperm.xlu0 %1233, %v53
    %v1235 = vpop.permute.xlu0 %1234
    %1237 = vset.pattern.permute.xlu0 1
    %1238 = vperm.xlu0 %1237, %v54
    %v1239 = vpop.permute.xlu0 %1238
    %1241 = vset.pattern.permute.xlu0 1
    %1242 = vperm.xlu0 %1241, %v55
    %v1243 = vpop.permute.xlu0 %1242
    %1245 = vset.pattern.permute.xlu0 1
    %1246 = vperm.xlu0 %1245, %v56
    %v1247 = vpop.permute.xlu0 %1246
    %1249 = vset.pattern.permute.xlu0 1
    %1250 = vperm.xlu0 %1249, %v57
    %v1251 = vpop.permute.xlu0 %1250
    %1253 = vset.pattern.permute.xlu0 1
    %1254 = vperm.xlu0 %1253, %v58
    %v1255 = vpop.permute.xlu0 %1254
    %1257 = vset.pattern.permute.xlu0 1
    %1258 = vperm.xlu0 %1257, %v59
    %v1259 = vpop.permute.xlu0 %1258
    %1261 = vset.pattern.permute.xlu0 1
    %1262 = vperm.xlu0 %1261, %v60
    %v1263 = vpop.permute.xlu0 %1262
    %1265 = vset.pattern.permute.xlu0 1
    %1266 = vperm.xlu0 %1265, %v61
    %v1267 = vpop.permute.xlu0 %1266
    %1269 = vset.pattern.permute.xlu0 1
    %1270 = vperm.xlu0 %1269, %v62
    %v1271 = vpop.permute.xlu0 %1270
    %1273 = vset.pattern.permute.xlu0 1
    %1274 = vperm.xlu0 %1273, %v63
    %v1275 = vpop.permute.xlu0 %1274
    %1277 = vset.pattern.permute.xlu0 1
    %1278 = vperm.xlu0 %1277, %v64
    %v1279 = vpop.permute.xlu0 %1278
    %1281 = vset.pattern.permute.xlu0 1
    %1282 = vperm.xlu0 %1281, %v65
    %v1283 = vpop.permute.xlu0 %1282
    %1285 = vset.pattern.permute.xlu0 1
    %1286 = vperm.xlu0 %1285, %v66
    %v1287 = vpop.permute.xlu0 %1286
    %1289 = vset.pattern.permute.xlu0 1
    %1290 = vperm.xlu0 %1289, %v67
    %v1291 = vpop.permute.xlu0 %1290
    %1293 = vset.pattern.permute.xlu0 1
    %1294 = vperm.xlu0 %1293, %v68
    %v1295 = vpop.permute.xlu0 %1294
    %1297 = vset.pattern.permute.xlu0 1
    %1298 = vperm.xlu0 %1297, %v69
    %v1299 = vpop.permute.xlu0 %1298
    %1301 = vset.pattern.permute.xlu0 1
    %1302 = vperm.xlu0 %1301, %v70
    %v1303 = vpop.permute.xlu0 %1302
    %1305 = vset.pattern.permute.xlu0 1
    %1306 = vperm.xlu0 %1305, %v71
    %v1307 = vpop.permute.xlu0 %1306
    %1309 = vset.pattern.permute.xlu0 1
    %1310 = vperm.xlu0 %1309, %v72
    %v1311 = vpop.permute.xlu0 %1310
    %1313 = vset.pattern.permute.xlu0 1
    %1314 = vperm.xlu0 %1313, %v73
    %v1315 = vpop.permute.xlu0 %1314
    %1317 = vset.pattern.permute.xlu0 1
    %1318 = vperm.xlu0 %1317, %v74
    %v1319 = vpop.permute.xlu0 %1318
    %1321 = vset.pattern.permute.xlu0 1
    %1322 = vperm.xlu0 %1321, %v75
    %v1323 = vpop.permute.xlu0 %1322
    %1325 = vset.pattern.permute.xlu0 1
    %1326 = vperm.xlu0 %1325, %v76
    %v1327 = vpop.permute.xlu0 %1326
    %1329 = vset.pattern.permute.xlu0 1
    %1330 = vperm.xlu0 %1329, %v77
    %v1331 = vpop.permute.xlu0 %1330
    %1333 = vset.pattern.permute.xlu0 1
    %1334 = vperm.xlu0 %1333, %v78
    %v1335 = vpop.permute.xlu0 %1334
    %1337 = vset.pattern.permute.xlu0 1
    %1338 = vperm.xlu0 %1337, %v79
    %v1339 = vpop.permute.xlu0 %1338
    %1341 = vset.pattern.permute.xlu0 1
    %1342 = vperm.xlu0 %1341, %v80
    %v1343 = vpop.permute.xlu0 %1342
    %1345 = vset.pattern.permute.xlu0 1
    %1346 = vperm.xlu0 %1345, %v81
    %v1347 = vpop.permute.xlu0 %1346
    %1349 = vset.pattern.permute.xlu0 1
    %1350 = vperm.xlu0 %1349, %v82
    %v1351 = vpop.permute.xlu0 %1350
    %1353 = vset.pattern.permute.xlu0 1
    %1354 = vperm.xlu0 %1353, %v83
    %v1355 = vpop.permute.xlu0 %1354
    %1357 = vset.pattern.permute.xlu0 1
    %1358 = vperm.xlu0 %1357, %v84
    %v1359 = vpop.permute.xlu0 %1358
    %1361 = vset.pattern.permute.xlu0 1
    %1362 = vperm.xlu0 %1361, %v85
    %v1363 = vpop.permute.xlu0 %1362
    %1365 = vset.pattern.permute.xlu0 1
    %1366 = vperm.xlu0 %1365, %v86
    %v1367 = vpop.permute.xlu0 %1366
    %1369 = vset.pattern.permute.xlu0 1
    %1370 = vperm.xlu0 %1369, %v87
    %v1371 = vpop.permute.xlu0 %1370
    %1373 = vset.pattern.permute.xlu0 1
    %1374 = vperm.xlu0 %1373, %v88
    %v1375 = vpop.permute.xlu0 %1374
    %1377 = vset.pattern.permute.xlu0 1
    %1378 = vperm.xlu0 %1377, %v89
    %v1379 = vpop.permute.xlu0 %1378
    %1381 = vset.pattern.permute.xlu0 1
    %1382 = vperm.xlu0 %1381, %v90
    %v1383 = vpop.permute.xlu0 %1382
    %1385 = vset.pattern.permute.xlu0 1
    %1386 = vperm.xlu0 %1385, %v91
    %v1387 = vpop.permute.xlu0 %1386
    %1389 = vset.pattern.permute.xlu0 1
    %1390 = vperm.xlu0 %1389, %v92
    %v1391 = vpop.permute.xlu0 %1390
    %1393 = vset.pattern.permute.xlu0 1
    %1394 = vperm.xlu0 %1393, %v93
    %v1395 = vpop.permute.xlu0 %1394
    %1397 = vset.pattern.permute.xlu0 1
    %1398 = vperm.xlu0 %1397, %v94
    %v1399 = vpop.permute.xlu0 %1398
    %1401 = vset.pattern.permute.xlu0 1
    %1402 = vperm.xlu0 %1401, %v95
    %v1403 = vpop.permute.xlu0 %1402
    %1405 = vset.pattern.permute.xlu0 1
    %1406 = vperm.xlu0 %1405, %v96
    %v1407 = vpop.permute.xlu0 %1406
    %1409 = vset.pattern.permute.xlu0 1
    %1410 = vperm.xlu0 %1409, %v97
    %v1411 = vpop.permute.xlu0 %1410
    %1413 = vset.pattern.permute.xlu0 1
    %1414 = vperm.xlu0 %1413, %v98
    %v1415 = vpop.permute.xlu0 %1414
    %1417 = vset.pattern.permute.xlu0 1
    %1418 = vperm.xlu0 %1417, %v99
    %v1419 = vpop.permute.xlu0 %1418
    %1421 = vset.pattern.permute.xlu0 1
    %1422 = vperm.xlu0 %1421, %v100
    %v1423 = vpop.permute.xlu0 %1422
    %1425 = vset.pattern.permute.xlu0 1
    %1426 = vperm.xlu0 %1425, %v101
    %v1427 = vpop.permute.xlu0 %1426
    %1429 = vset.pattern.permute.xlu0 1
    %1430 = vperm.xlu0 %1429, %v102
    %v1431 = vpop.permute.xlu0 %1430
    %1433 = vset.pattern.permute.xlu0 1
    %1434 = vperm.xlu0 %1433, %v103
    %v1435 = vpop.permute.xlu0 %1434
    %1437 = vset.pattern.permute.xlu0 1
    %1438 = vperm.xlu0 %1437, %v104
    %v1439 = vpop.permute.xlu0 %1438
    %1441 = vset.pattern.permute.xlu0 1
    %1442 = vperm.xlu0 %1441, %v105
    %v1443 = vpop.permute.xlu0 %1442
    %1445 = vset.pattern.permute.xlu0 1
    %1446 = vperm.xlu0 %1445, %v106
    %v1447 = vpop.permute.xlu0 %1446
    %1449 = vset.pattern.permute.xlu0 1
    %1450 = vperm.xlu0 %1449, %v107
    %v1451 = vpop.permute.xlu0 %1450
    %1453 = vset.pattern.permute.xlu0 1
    %1454 = vperm.xlu0 %1453, %v108
    %v1455 = vpop.permute.xlu0 %1454
    %1457 = vset.pattern.permute.xlu0 1
    %1458 = vperm.xlu0 %1457, %v109
    %v1459 = vpop.permute.xlu0 %1458
    %1461 = vset.pattern.permute.xlu0 1
    %1462 = vperm.xlu0 %1461, %v110
    %v1463 = vpop.permute.xlu0 %1462
    %1465 = vset.pattern.permute.xlu0 1
    %1466 = vperm.xlu0 %1465, %v111
    %v1467 = vpop.permute.xlu0 %1466
    %1469 = vset.pattern.permute.xlu0 1
    %1470 = vperm.xlu0 %1469, %v112
    %v1471 = vpop.permute.xlu0 %1470
    %1473 = vset.pattern.permute.xlu0 1
    %1474 = vperm.xlu0 %1473, %v113
    %v1475 = vpop.permute.xlu0 %1474
    %1477 = vset.pattern.permute.xlu0 1
    %1478 = vperm.xlu0 %1477, %v114
    %v1479 = vpop.permute.xlu0 %1478
    %1481 = vset.pattern.permute.xlu0 1
    %1482 = vperm.xlu0 %1481, %v115
    %v1483 = vpop.permute.xlu0 %1482
    %1485 = vset.pattern.permute.xlu0 1
    %1486 = vperm.xlu0 %1485, %v116
    %v1487 = vpop.permute.xlu0 %1486
    %1489 = vset.pattern.permute.xlu0 1
    %1490 = vperm.xlu0 %1489, %v117
    %v1491 = vpop.permute.xlu0 %1490
    %1493 = vset.pattern.permute.xlu0 1
    %1494 = vperm.xlu0 %1493, %v118
    %v1495 = vpop.permute.xlu0 %1494
    %1497 = vset.pattern.permute.xlu0 1
    %1498 = vperm.xlu0 %1497, %v119
    %v1499 = vpop.permute.xlu0 %1498
    %1501 = vset.pattern.permute.xlu0 1
    %1502 = vperm.xlu0 %1501, %v120
    %v1503 = vpop.permute.xlu0 %1502
    %1505 = vset.pattern.permute.xlu0 1
    %1506 = vperm.xlu0 %1505, %v121
    %v1507 = vpop.permute.xlu0 %1506
    %1509 = vset.pattern.permute.xlu0 1
    %1510 = vperm.xlu0 %1509, %v122
    %v1511 = vpop.permute.xlu0 %1510
    %1513 = vset.pattern.permute.xlu0 1
    %1514 = vperm.xlu0 %1513, %v123
    %v1515 = vpop.permute.xlu0 %1514
    %1517 = vset.pattern.permute.xlu0 1
    %1518 = vperm.xlu0 %1517, %v124
    %v1519 = vpop.permute.xlu0 %1518
    %1521 = vset.pattern.permute.xlu0 1
    %1522 = vperm.xlu0 %1521, %v125
    %v1523 = vpop.permute.xlu0 %1522
    %1525 = vset.pattern.permute.xlu0 1
    %1526 = vperm.xlu0 %1525, %v126
    %v1527 = vpop.permute.xlu0 %1526
    %1529 = vset.pattern.permute.xlu0 1
    %1530 = vperm.xlu0 %1529, %v127
    %v1531 = vpop.permute.xlu0 %1530
    %1533 = vset.pattern.permute.xlu0 1
    %1534 = vperm.xlu0 %1533, %v128
    %v1535 = vpop.permute.xlu0 %1534
    %1537 = vset.pattern.permute.xlu0 1
    %1538 = vperm.xlu0 %1537, %v129
    %v1539 = vpop.permute.xlu0 %1538
    %1541 = vset.pattern.permute.xlu0 1
    %1542 = vperm.xlu0 %1541, %v130
    %v1543 = vpop.permute.xlu0 %1542
    %1545 = vset.pattern.permute.xlu0 1
    %1546 = vperm.xlu0 %1545, %v131
    %v1547 = vpop.permute.xlu0 %1546
    %1549 = vset.pattern.permute.xlu0 1
    %1550 = vperm.xlu0 %1549, %v132
    %v1551 = vpop.permute.xlu0 %1550
    %1553 = vset.pattern.permute.xlu0 1
    %1554 = vperm.xlu0 %1553, %v133
    %v1555 = vpop.permute.xlu0 %1554
    %1557 = vset.pattern.permute.xlu0 1
    %1558 = vperm.xlu0 %1557, %v134
    %v1559 = vpop.permute.xlu0 %1558
    %1561 = vset.pattern.permute.xlu0 1
    %1562 = vperm.xlu0 %1561, %v135
    %v1563 = vpop.permute.xlu0 %1562
    %1565 = vset.pattern.permute.xlu0 1
    %1566 = vperm.xlu0 %1565, %v136
    %v1567 = vpop.permute.xlu0 %1566
    %1569 = vset.pattern.permute.xlu0 1
    %1570 = vperm.xlu0 %1569, %v137
    %v1571 = vpop.permute.xlu0 %1570
    %1573 = vset.pattern.permute.xlu0 1
    %1574 = vperm.xlu0 %1573, %v138
    %v1575 = vpop.permute.xlu0 %1574
    %1577 = vset.pattern.permute.xlu0 1
    %1578 = vperm.xlu0 %1577, %v139
    %v1579 = vpop.permute.xlu0 %1578
    %1581 = vset.pattern.permute.xlu0 1
    %1582 = vperm.xlu0 %1581, %v140
    %v1583 = vpop.permute.xlu0 %1582
    %1585 = vset.pattern.permute.xlu0 1
    %1586 = vperm.xlu0 %1585, %v141
    %v1587 = vpop.permute.xlu0 %1586
    %1589 = vset.pattern.permute.xlu0 1
    %1590 = vperm.xlu0 %1589, %v142
    %v1591 = vpop.permute.xlu0 %1590
    %1593 = vset.pattern.permute.xlu0 1
    %1594 = vperm.xlu0 %1593, %v143
    %v1595 = vpop.permute.xlu0 %1594
    %1597 = vset.pattern.permute.xlu0 1
    %1598 = vperm.xlu0 %1597, %v144
    %v1599 = vpop.permute.xlu0 %1598
    %1601 = vset.pattern.permute.xlu0 1
    %1602 = vperm.xlu0 %1601, %v145
    %v1603 = vpop.permute.xlu0 %1602
    %1605 = vset.pattern.permute.xlu0 1
    %1606 = vperm.xlu0 %1605, %v146
    %v1607 = vpop.permute.xlu0 %1606
    %1609 = vset.pattern.permute.xlu0 1
    %1610 = vperm.xlu0 %1609, %v147
    %v1611 = vpop.permute.xlu0 %1610
    %1613 = vset.pattern.permute.xlu0 1
    %1614 = vperm.xlu0 %1613, %v148
    %v1615 = vpop.permute.xlu0 %1614
    %1617 = vset.pattern.permute.xlu0 1
    %1618 = vperm.xlu0 %1617, %v149
    %v1619 = vpop.permute.xlu0 %1618
    %1621 = vset.pattern.permute.xlu0 1
    %1622 = vperm.xlu0 %1621, %v150
    %v1623 = vpop.permute.xlu0 %1622
    %1625 = vset.pattern.permute.xlu0 1
    %1626 = vperm.xlu0 %1625, %v151
    %v1627 = vpop.permute.xlu0 %1626
    %1629 = vset.pattern.permute.xlu0 1
    %1630 = vperm.xlu0 %1629, %v152
    %v1631 = vpop.permute.xlu0 %1630
    %1633 = vset.pattern.permute.xlu0 1
    %1634 = vperm.xlu0 %1633, %v153
    %v1635 = vpop.permute.xlu0 %1634
    %1637 = vset.pattern.permute.xlu0 1
    %1638 = vperm.xlu0 %1637, %v154
    %v1639 = vpop.permute.xlu0 %1638
    %1641 = vset.pattern.permute.xlu0 1
    %1642 = vperm.xlu0 %1641, %v155
    %v1643 = vpop.permute.xlu0 %1642
    %1645 = vset.pattern.permute.xlu0 1
    %1646 = vperm.xlu0 %1645, %v156
    %v1647 = vpop.permute.xlu0 %1646
    %1649 = vset.pattern.permute.xlu0 1
    %1650 = vperm.xlu0 %1649, %v157
    %v1651 = vpop.permute.xlu0 %1650
    %1653 = vset.pattern.permute.xlu0 1
    %1654 = vperm.xlu0 %1653, %v158
    %v1655 = vpop.permute.xlu0 %1654
    %1657 = vset.pattern.permute.xlu0 1
    %1658 = vperm.xlu0 %1657, %v159
    %v1659 = vpop.permute.xlu0 %1658
    %1661 = vset.pattern.permute.xlu0 1
    %1662 = vperm.xlu0 %1661, %v160
    %v1663 = vpop.permute.xlu0 %1662
    %1665 = vset.pattern.permute.xlu0 1
    %1666 = vperm.xlu0 %1665, %v161
    %v1667 = vpop.permute.xlu0 %1666
    %1669 = vset.pattern.permute.xlu0 1
    %1670 = vperm.xlu0 %1669, %v162
    %v1671 = vpop.permute.xlu0 %1670
    %1673 = vset.pattern.permute.xlu0 1
    %1674 = vperm.xlu0 %1673, %v163
    %v1675 = vpop.permute.xlu0 %1674
    %1677 = vset.pattern.permute.xlu0 1
    %1678 = vperm.xlu0 %1677, %v164
    %v1679 = vpop.permute.xlu0 %1678
    %1681 = vset.pattern.permute.xlu0 1
    %1682 = vperm.xlu0 %1681, %v165
    %v1683 = vpop.permute.xlu0 %1682
    %1685 = vset.pattern.permute.xlu0 1
    %1686 = vperm.xlu0 %1685, %v166
    %v1687 = vpop.permute.xlu0 %1686
    %1689 = vset.pattern.permute.xlu0 1
    %1690 = vperm.xlu0 %1689, %v167
    %v1691 = vpop.permute.xlu0 %1690
    %1693 = vset.pattern.permute.xlu0 1
    %1694 = vperm.xlu0 %1693, %v168
    %v1695 = vpop.permute.xlu0 %1694
    %1697 = vset.pattern.permute.xlu0 1
    %1698 = vperm.xlu0 %1697, %v169
    %v1699 = vpop.permute.xlu0 %1698
    %1701 = vset.pattern.permute.xlu0 1
    %1702 = vperm.xlu0 %1701, %v170
    %v1703 = vpop.permute.xlu0 %1702
    %1705 = vset.pattern.permute.xlu0 1
    %1706 = vperm.xlu0 %1705, %v171
    %v1707 = vpop.permute.xlu0 %1706
    %1709 = vset.pattern.permute.xlu0 1
    %1710 = vperm.xlu0 %1709, %v172
    %v1711 = vpop.permute.xlu0 %1710
    %1713 = vset.pattern.permute.xlu0 1
    %1714 = vperm.xlu0 %1713, %v173
    %v1715 = vpop.permute.xlu0 %1714
    %1717 = vset.pattern.permute.xlu0 1
    %1718 = vperm.xlu0 %1717, %v174
    %v1719 = vpop.permute.xlu0 %1718
    %1721 = vset.pattern.permute.xlu0 1
    %1722 = vperm.xlu0 %1721, %v175
    %v1723 = vpop.permute.xlu0 %1722
    %1725 = vset.pattern.permute.xlu0 1
    %1726 = vperm.xlu0 %1725, %v176
    %v1727 = vpop.permute.xlu0 %1726
    %1729 = vset.pattern.permute.xlu0 1
    %1730 = vperm.xlu0 %1729, %v177
    %v1731 = vpop.permute.xlu0 %1730
    %1733 = vset.pattern.permute.xlu0 1
    %1734 = vperm.xlu0 %1733, %v178
    %v1735 = vpop.permute.xlu0 %1734
    %1737 = vset.pattern.permute.xlu0 1
    %1738 = vperm.xlu0 %1737, %v179
    %v1739 = vpop.permute.xlu0 %1738
    %1741 = vset.pattern.permute.xlu0 1
    %1742 = vperm.xlu0 %1741, %v180
    %v1743 = vpop.permute.xlu0 %1742
    %1745 = vset.pattern.permute.xlu0 1
    %1746 = vperm.xlu0 %1745, %v181
    %v1747 = vpop.permute.xlu0 %1746
    %1749 = vset.pattern.permute.xlu0 1
    %1750 = vperm.xlu0 %1749, %v182
    %v1751 = vpop.permute.xlu0 %1750
    %1753 = vset.pattern.permute.xlu0 1
    %1754 = vperm.xlu0 %1753, %v183
    %v1755 = vpop.permute.xlu0 %1754
    %1757 = vset.pattern.permute.xlu0 1
    %1758 = vperm.xlu0 %1757, %v184
    %v1759 = vpop.permute.xlu0 %1758
    %1761 = vset.pattern.permute.xlu0 1
    %1762 = vperm.xlu0 %1761, %v185
    %v1763 = vpop.permute.xlu0 %1762
    %1765 = vset.pattern.permute.xlu0 1
    %1766 = vperm.xlu0 %1765, %v186
    %v1767 = vpop.permute.xlu0 %1766
    %1769 = vset.pattern.permute.xlu0 1
    %1770 = vperm.xlu0 %1769, %v187
    %v1771 = vpop.permute.xlu0 %1770
    %1773 = vset.pattern.permute.xlu0 1
    %1774 = vperm.xlu0 %1773, %v188
    %v1775 = vpop.permute.xlu0 %1774
    %1777 = vset.pattern.permute.xlu0 1
    %1778 = vperm.xlu0 %1777, %v189
    %v1779 = vpop.permute.xlu0 %1778
    %1781 = vset.pattern.permute.xlu0 1
    %1782 = vperm.xlu0 %1781, %v190
    %v1783 = vpop.permute.xlu0 %1782
    %1785 = vset.pattern.permute.xlu0 1
    %1786 = vperm.xlu0 %1785, %v191
    %v1787 = vpop.permute.xlu0 %1786
    %1789 = vset.pattern.permute.xlu0 1
    %1790 = vperm.xlu0 %1789, %v192
    %v1791 = vpop.permute.xlu0 %1790
    %1793 = vset.pattern.permute.xlu0 1
    %1794 = vperm.xlu0 %1793, %v193
    %v1795 = vpop.permute.xlu0 %1794
    %v1797 = vperm.slane %v1156, 0
    %v1798 = vmul.f32 %v1159, %v1797
    %v1799 = vmul.f32 %v1163, %v1797
    %v1800 = vmul.f32 %v1167, %v1797
    %v1801 = vmul.f32 %v1171, %v1797
    %v1802 = vmul.f32 %v1175, %v1797
    %v1803 = vmul.f32 %v1179, %v1797
    %v1804 = vmul.f32 %v1183, %v1797
    %v1805 = vmul.f32 %v1187, %v1797
    %v1806 = vmul.f32 %v1191, %v1797
    %v1807 = vmul.f32 %v1195, %v1797
    %v1808 = vmul.f32 %v1199, %v1797
    %v1809 = vmul.f32 %v1203, %v1797
    %v1810 = vmul.f32 %v1207, %v1797
    %v1811 = vmul.f32 %v1211, %v1797
    %v1812 = vmul.f32 %v1215, %v1797
    %v1813 = vmul.f32 %v1219, %v1797
    %v1814 = vmul.f32 %v1223, %v1797
    %v1815 = vmul.f32 %v1227, %v1797
    %v1816 = vmul.f32 %v1231, %v1797
    %v1817 = vmul.f32 %v1235, %v1797
    %v1818 = vmul.f32 %v1239, %v1797
    %v1819 = vmul.f32 %v1243, %v1797
    %v1820 = vmul.f32 %v1247, %v1797
    %v1821 = vmul.f32 %v1251, %v1797
    %v1822 = vmul.f32 %v1255, %v1797
    %v1823 = vmul.f32 %v1259, %v1797
    %v1824 = vmul.f32 %v1263, %v1797
    %v1825 = vmul.f32 %v1267, %v1797
    %v1826 = vmul.f32 %v1271, %v1797
    %v1827 = vmul.f32 %v1275, %v1797
    %v1828 = vmul.f32 %v1279, %v1797
    %v1829 = vmul.f32 %v1283, %v1797
    %v1830 = vmul.f32 %v1287, %v1797
    %v1831 = vmul.f32 %v1291, %v1797
    %v1832 = vmul.f32 %v1295, %v1797
    %v1833 = vmul.f32 %v1299, %v1797
    %v1834 = vmul.f32 %v1303, %v1797
    %v1835 = vmul.f32 %v1307, %v1797
    %v1836 = vmul.f32 %v1311, %v1797
    %v1837 = vmul.f32 %v1315, %v1797
    %v1838 = vmul.f32 %v1319, %v1797
    %v1839 = vmul.f32 %v1323, %v1797
    %v1840 = vmul.f32 %v1327, %v1797
    %v1841 = vmul.f32 %v1331, %v1797
    %v1842 = vmul.f32 %v1335, %v1797
    %v1843 = vmul.f32 %v1339, %v1797
    %v1844 = vmul.f32 %v1343, %v1797
    %v1845 = vmul.f32 %v1347, %v1797
    %v1846 = vmul.f32 %v1351, %v1797
    %v1847 = vmul.f32 %v1355, %v1797
    %v1848 = vmul.f32 %v1359, %v1797
    %v1849 = vmul.f32 %v1363, %v1797
    %v1850 = vmul.f32 %v1367, %v1797
    %v1851 = vmul.f32 %v1371, %v1797
    %v1852 = vmul.f32 %v1375, %v1797
    %v1853 = vmul.f32 %v1379, %v1797
    %v1854 = vmul.f32 %v1383, %v1797
    %v1855 = vmul.f32 %v1387, %v1797
    %v1856 = vmul.f32 %v1391, %v1797
    %v1857 = vmul.f32 %v1395, %v1797
    %v1858 = vmul.f32 %v1399, %v1797
    %v1859 = vmul.f32 %v1403, %v1797
    %v1860 = vmul.f32 %v1407, %v1797
    %v1861 = vmul.f32 %v1411, %v1797
    %v1862 = vmul.f32 %v1415, %v1797
    %v1863 = vmul.f32 %v1419, %v1797
    %v1864 = vmul.f32 %v1423, %v1797
    %v1865 = vmul.f32 %v1427, %v1797
    %v1866 = vmul.f32 %v1431, %v1797
    %v1867 = vmul.f32 %v1435, %v1797
    %v1868 = vmul.f32 %v1439, %v1797
    %v1869 = vmul.f32 %v1443, %v1797
    %v1870 = vmul.f32 %v1447, %v1797
    %v1871 = vmul.f32 %v1451, %v1797
    %v1872 = vmul.f32 %v1455, %v1797
    %v1873 = vmul.f32 %v1459, %v1797
    %v1874 = vmul.f32 %v1463, %v1797
    %v1875 = vmul.f32 %v1467, %v1797
    %v1876 = vmul.f32 %v1471, %v1797
    %v1877 = vmul.f32 %v1475, %v1797
    %v1878 = vmul.f32 %v1479, %v1797
    %v1879 = vmul.f32 %v1483, %v1797
    %v1880 = vmul.f32 %v1487, %v1797
    %v1881 = vmul.f32 %v1491, %v1797
    %v1882 = vmul.f32 %v1495, %v1797
    %v1883 = vmul.f32 %v1499, %v1797
    %v1884 = vmul.f32 %v1503, %v1797
    %v1885 = vmul.f32 %v1507, %v1797
    %v1886 = vmul.f32 %v1511, %v1797
    %v1887 = vmul.f32 %v1515, %v1797
    %v1888 = vmul.f32 %v1519, %v1797
    %v1889 = vmul.f32 %v1523, %v1797
    %v1890 = vmul.f32 %v1527, %v1797
    %v1891 = vmul.f32 %v1531, %v1797
    %v1892 = vmul.f32 %v1535, %v1797
    %v1893 = vmul.f32 %v1539, %v1797
    %v1894 = vmul.f32 %v1543, %v1797
    %v1895 = vmul.f32 %v1547, %v1797
    %v1896 = vmul.f32 %v1551, %v1797
    %v1897 = vmul.f32 %v1555, %v1797
    %v1898 = vmul.f32 %v1559, %v1797
    %v1899 = vmul.f32 %v1563, %v1797
    %v1900 = vmul.f32 %v1567, %v1797
    %v1901 = vmul.f32 %v1571, %v1797
    %v1902 = vmul.f32 %v1575, %v1797
    %v1903 = vmul.f32 %v1579, %v1797
    %v1904 = vmul.f32 %v1583, %v1797
    %v1905 = vmul.f32 %v1587, %v1797
    %v1906 = vmul.f32 %v1591, %v1797
    %v1907 = vmul.f32 %v1595, %v1797
    %v1908 = vmul.f32 %v1599, %v1797
    %v1909 = vmul.f32 %v1603, %v1797
    %v1910 = vmul.f32 %v1607, %v1797
    %v1911 = vmul.f32 %v1611, %v1797
    %v1912 = vmul.f32 %v1615, %v1797
    %v1913 = vmul.f32 %v1619, %v1797
    %v1914 = vmul.f32 %v1623, %v1797
    %v1915 = vmul.f32 %v1627, %v1797
    %v1916 = vmul.f32 %v1631, %v1797
    %v1917 = vmul.f32 %v1635, %v1797
    %v1918 = vmul.f32 %v1639, %v1797
    %v1919 = vmul.f32 %v1643, %v1797
    %v1920 = vmul.f32 %v1647, %v1797
    %v1921 = vmul.f32 %v1651, %v1797
    %v1922 = vmul.f32 %v1655, %v1797
    %v1923 = vmul.f32 %v1659, %v1797
    %v1924 = vmul.f32 %v1663, %v1797
    %v1925 = vmul.f32 %v1667, %v1797
    %v1926 = vmul.f32 %v1671, %v1797
    %v1927 = vmul.f32 %v1675, %v1797
    %v1928 = vmul.f32 %v1679, %v1797
    %v1929 = vmul.f32 %v1683, %v1797
    %v1930 = vmul.f32 %v1687, %v1797
    %v1931 = vmul.f32 %v1691, %v1797
    %v1932 = vmul.f32 %v1695, %v1797
    %v1933 = vmul.f32 %v1699, %v1797
    %v1934 = vmul.f32 %v1703, %v1797
    %v1935 = vmul.f32 %v1707, %v1797
    %v1936 = vmul.f32 %v1711, %v1797
    %v1937 = vmul.f32 %v1715, %v1797
    %v1938 = vmul.f32 %v1719, %v1797
    %v1939 = vmul.f32 %v1723, %v1797
    %v1940 = vmul.f32 %v1727, %v1797
    %v1941 = vmul.f32 %v1731, %v1797
    %v1942 = vmul.f32 %v1735, %v1797
    %v1943 = vmul.f32 %v1739, %v1797
    %v1944 = vmul.f32 %v1743, %v1797
    %v1945 = vmul.f32 %v1747, %v1797
    %v1946 = vmul.f32 %v1751, %v1797
    %v1947 = vmul.f32 %v1755, %v1797
    %v1948 = vmul.f32 %v1759, %v1797
    %v1949 = vmul.f32 %v1763, %v1797
    %v1950 = vmul.f32 %v1767, %v1797
    %v1951 = vmul.f32 %v1771, %v1797
    %v1952 = vmul.f32 %v1775, %v1797
    %v1953 = vmul.f32 %v1779, %v1797
    %v1954 = vmul.f32 %v1783, %v1797
    %v1955 = vmul.f32 %v1787, %v1797
    %v1956 = vmul.f32 %v1791, %v1797
    %v1957 = vmul.f32 %v1795, %v1797
    %v1958 = vadd.f32 %v996, %v1798
    %v1959 = vadd.f32 %v997, %v1799
    %v1960 = vadd.f32 %v998, %v1800
    %v1961 = vadd.f32 %v999, %v1801
    %v1962 = vadd.f32 %v1000, %v1802
    %v1963 = vadd.f32 %v1001, %v1803
    %v1964 = vadd.f32 %v1002, %v1804
    %v1965 = vadd.f32 %v1003, %v1805
    %v1966 = vadd.f32 %v1004, %v1806
    %v1967 = vadd.f32 %v1005, %v1807
    %v1968 = vadd.f32 %v1006, %v1808
    %v1969 = vadd.f32 %v1007, %v1809
    %v1970 = vadd.f32 %v1008, %v1810
    %v1971 = vadd.f32 %v1009, %v1811
    %v1972 = vadd.f32 %v1010, %v1812
    %v1973 = vadd.f32 %v1011, %v1813
    %v1974 = vadd.f32 %v1012, %v1814
    %v1975 = vadd.f32 %v1013, %v1815
    %v1976 = vadd.f32 %v1014, %v1816
    %v1977 = vadd.f32 %v1015, %v1817
    %v1978 = vadd.f32 %v1016, %v1818
    %v1979 = vadd.f32 %v1017, %v1819
    %v1980 = vadd.f32 %v1018, %v1820
    %v1981 = vadd.f32 %v1019, %v1821
    %v1982 = vadd.f32 %v1020, %v1822
    %v1983 = vadd.f32 %v1021, %v1823
    %v1984 = vadd.f32 %v1022, %v1824
    %v1985 = vadd.f32 %v1023, %v1825
    %v1986 = vadd.f32 %v1024, %v1826
    %v1987 = vadd.f32 %v1025, %v1827
    %v1988 = vadd.f32 %v1026, %v1828
    %v1989 = vadd.f32 %v1027, %v1829
    %v1990 = vadd.f32 %v1028, %v1830
    %v1991 = vadd.f32 %v1029, %v1831
    %v1992 = vadd.f32 %v1030, %v1832
    %v1993 = vadd.f32 %v1031, %v1833
    %v1994 = vadd.f32 %v1032, %v1834
    %v1995 = vadd.f32 %v1033, %v1835
    %v1996 = vadd.f32 %v1034, %v1836
    %v1997 = vadd.f32 %v1035, %v1837
    %v1998 = vadd.f32 %v1036, %v1838
    %v1999 = vadd.f32 %v1037, %v1839
    %v2000 = vadd.f32 %v1038, %v1840
    %v2001 = vadd.f32 %v1039, %v1841
    %v2002 = vadd.f32 %v1040, %v1842
    %v2003 = vadd.f32 %v1041, %v1843
    %v2004 = vadd.f32 %v1042, %v1844
    %v2005 = vadd.f32 %v1043, %v1845
    %v2006 = vadd.f32 %v1044, %v1846
    %v2007 = vadd.f32 %v1045, %v1847
    %v2008 = vadd.f32 %v1046, %v1848
    %v2009 = vadd.f32 %v1047, %v1849
    %v2010 = vadd.f32 %v1048, %v1850
    %v2011 = vadd.f32 %v1049, %v1851
    %v2012 = vadd.f32 %v1050, %v1852
    %v2013 = vadd.f32 %v1051, %v1853
    %v2014 = vadd.f32 %v1052, %v1854
    %v2015 = vadd.f32 %v1053, %v1855
    %v2016 = vadd.f32 %v1054, %v1856
    %v2017 = vadd.f32 %v1055, %v1857
    %v2018 = vadd.f32 %v1056, %v1858
    %v2019 = vadd.f32 %v1057, %v1859
    %v2020 = vadd.f32 %v1058, %v1860
    %v2021 = vadd.f32 %v1059, %v1861
    %v2022 = vadd.f32 %v1060, %v1862
    %v2023 = vadd.f32 %v1061, %v1863
    %v2024 = vadd.f32 %v1062, %v1864
    %v2025 = vadd.f32 %v1063, %v1865
    %v2026 = vadd.f32 %v1064, %v1866
    %v2027 = vadd.f32 %v1065, %v1867
    %v2028 = vadd.f32 %v1066, %v1868
    %v2029 = vadd.f32 %v1067, %v1869
    %v2030 = vadd.f32 %v1068, %v1870
    %v2031 = vadd.f32 %v1069, %v1871
    %v2032 = vadd.f32 %v1070, %v1872
    %v2033 = vadd.f32 %v1071, %v1873
    %v2034 = vadd.f32 %v1072, %v1874
    %v2035 = vadd.f32 %v1073, %v1875
    %v2036 = vadd.f32 %v1074, %v1876
    %v2037 = vadd.f32 %v1075, %v1877
    %v2038 = vadd.f32 %v1076, %v1878
    %v2039 = vadd.f32 %v1077, %v1879
    %v2040 = vadd.f32 %v1078, %v1880
    %v2041 = vadd.f32 %v1079, %v1881
    %v2042 = vadd.f32 %v1080, %v1882
    %v2043 = vadd.f32 %v1081, %v1883
    %v2044 = vadd.f32 %v1082, %v1884
    %v2045 = vadd.f32 %v1083, %v1885
    %v2046 = vadd.f32 %v1084, %v1886
    %v2047 = vadd.f32 %v1085, %v1887
    %v2048 = vadd.f32 %v1086, %v1888
    %v2049 = vadd.f32 %v1087, %v1889
    %v2050 = vadd.f32 %v1088, %v1890
    %v2051 = vadd.f32 %v1089, %v1891
    %v2052 = vadd.f32 %v1090, %v1892
    %v2053 = vadd.f32 %v1091, %v1893
    %v2054 = vadd.f32 %v1092, %v1894
    %v2055 = vadd.f32 %v1093, %v1895
    %v2056 = vadd.f32 %v1094, %v1896
    %v2057 = vadd.f32 %v1095, %v1897
    %v2058 = vadd.f32 %v1096, %v1898
    %v2059 = vadd.f32 %v1097, %v1899
    %v2060 = vadd.f32 %v1098, %v1900
    %v2061 = vadd.f32 %v1099, %v1901
    %v2062 = vadd.f32 %v1100, %v1902
    %v2063 = vadd.f32 %v1101, %v1903
    %v2064 = vadd.f32 %v1102, %v1904
    %v2065 = vadd.f32 %v1103, %v1905
    %v2066 = vadd.f32 %v1104, %v1906
    %v2067 = vadd.f32 %v1105, %v1907
    %v2068 = vadd.f32 %v1106, %v1908
    %v2069 = vadd.f32 %v1107, %v1909
    %v2070 = vadd.f32 %v1108, %v1910
    %v2071 = vadd.f32 %v1109, %v1911
    %v2072 = vadd.f32 %v1110, %v1912
    %v2073 = vadd.f32 %v1111, %v1913
    %v2074 = vadd.f32 %v1112, %v1914
    %v2075 = vadd.f32 %v1113, %v1915
    %v2076 = vadd.f32 %v1114, %v1916
    %v2077 = vadd.f32 %v1115, %v1917
    %v2078 = vadd.f32 %v1116, %v1918
    %v2079 = vadd.f32 %v1117, %v1919
    %v2080 = vadd.f32 %v1118, %v1920
    %v2081 = vadd.f32 %v1119, %v1921
    %v2082 = vadd.f32 %v1120, %v1922
    %v2083 = vadd.f32 %v1121, %v1923
    %v2084 = vadd.f32 %v1122, %v1924
    %v2085 = vadd.f32 %v1123, %v1925
    %v2086 = vadd.f32 %v1124, %v1926
    %v2087 = vadd.f32 %v1125, %v1927
    %v2088 = vadd.f32 %v1126, %v1928
    %v2089 = vadd.f32 %v1127, %v1929
    %v2090 = vadd.f32 %v1128, %v1930
    %v2091 = vadd.f32 %v1129, %v1931
    %v2092 = vadd.f32 %v1130, %v1932
    %v2093 = vadd.f32 %v1131, %v1933
    %v2094 = vadd.f32 %v1132, %v1934
    %v2095 = vadd.f32 %v1133, %v1935
    %v2096 = vadd.f32 %v1134, %v1936
    %v2097 = vadd.f32 %v1135, %v1937
    %v2098 = vadd.f32 %v1136, %v1938
    %v2099 = vadd.f32 %v1137, %v1939
    %v2100 = vadd.f32 %v1138, %v1940
    %v2101 = vadd.f32 %v1139, %v1941
    %v2102 = vadd.f32 %v1140, %v1942
    %v2103 = vadd.f32 %v1141, %v1943
    %v2104 = vadd.f32 %v1142, %v1944
    %v2105 = vadd.f32 %v1143, %v1945
    %v2106 = vadd.f32 %v1144, %v1946
    %v2107 = vadd.f32 %v1145, %v1947
    %v2108 = vadd.f32 %v1146, %v1948
    %v2109 = vadd.f32 %v1147, %v1949
    %v2110 = vadd.f32 %v1148, %v1950
    %v2111 = vadd.f32 %v1149, %v1951
    %v2112 = vadd.f32 %v1150, %v1952
    %v2113 = vadd.f32 %v1151, %v1953
    %v2114 = vadd.f32 %v1152, %v1954
    %v2115 = vadd.f32 %v1153, %v1955
    %v2116 = vadd.f32 %v1154, %v1956
    %v2117 = vadd.f32 %v1155, %v1957
    %v2118 = vld [vmem:[%s3] sm:$0x1]
    %v2120 = vperm.slane %v2118, 0
    %v2122 = vadd.f32 %v1958, %v2120
    %v2123 = vadd.f32 %v1959, %v2120
    %v2124 = vadd.f32 %v1960, %v2120
    %v2125 = vadd.f32 %v1961, %v2120
    %v2126 = vadd.f32 %v1962, %v2120
    %v2127 = vadd.f32 %v1963, %v2120
    %v2128 = vadd.f32 %v1964, %v2120
    %v2129 = vadd.f32 %v1965, %v2120
    %v2130 = vadd.f32 %v1966, %v2120
    %v2131 = vadd.f32 %v1967, %v2120
    %v2132 = vadd.f32 %v1968, %v2120
    %v2133 = vadd.f32 %v1969, %v2120
    %v2134 = vadd.f32 %v1970, %v2120
    %v2135 = vadd.f32 %v1971, %v2120
    %v2136 = vadd.f32 %v1972, %v2120
    %v2137 = vadd.f32 %v1973, %v2120
    %v2138 = vadd.f32 %v1974, %v2120
    %v2139 = vadd.f32 %v1975, %v2120
    %v2140 = vadd.f32 %v1976, %v2120
    %v2141 = vadd.f32 %v1977, %v2120
    %v2142 = vadd.f32 %v1978, %v2120
    %v2143 = vadd.f32 %v1979, %v2120
    %v2144 = vadd.f32 %v1980, %v2120
    %v2145 = vadd.f32 %v1981, %v2120
    %v2146 = vadd.f32 %v1982, %v2120
    %v2147 = vadd.f32 %v1983, %v2120
    %v2148 = vadd.f32 %v1984, %v2120
    %v2149 = vadd.f32 %v1985, %v2120
    %v2150 = vadd.f32 %v1986, %v2120
    %v2151 = vadd.f32 %v1987, %v2120
    %v2152 = vadd.f32 %v1988, %v2120
    %v2153 = vadd.f32 %v1989, %v2120
    %v2154 = vadd.f32 %v1990, %v2120
    %v2155 = vadd.f32 %v1991, %v2120
    %v2156 = vadd.f32 %v1992, %v2120
    %v2157 = vadd.f32 %v1993, %v2120
    %v2158 = vadd.f32 %v1994, %v2120
    %v2159 = vadd.f32 %v1995, %v2120
    %v2160 = vadd.f32 %v1996, %v2120
    %v2161 = vadd.f32 %v1997, %v2120
    %v2162 = vadd.f32 %v1998, %v2120
    %v2163 = vadd.f32 %v1999, %v2120
    %v2164 = vadd.f32 %v2000, %v2120
    %v2165 = vadd.f32 %v2001, %v2120
    %v2166 = vadd.f32 %v2002, %v2120
    %v2167 = vadd.f32 %v2003, %v2120
    %v2168 = vadd.f32 %v2004, %v2120
    %v2169 = vadd.f32 %v2005, %v2120
    %v2170 = vadd.f32 %v2006, %v2120
    %v2171 = vadd.f32 %v2007, %v2120
    %v2172 = vadd.f32 %v2008, %v2120
    %v2173 = vadd.f32 %v2009, %v2120
    %v2174 = vadd.f32 %v2010, %v2120
    %v2175 = vadd.f32 %v2011, %v2120
    %v2176 = vadd.f32 %v2012, %v2120
    %v2177 = vadd.f32 %v2013, %v2120
    %v2178 = vadd.f32 %v2014, %v2120
    %v2179 = vadd.f32 %v2015, %v2120
    %v2180 = vadd.f32 %v2016, %v2120
    %v2181 = vadd.f32 %v2017, %v2120
    %v2182 = vadd.f32 %v2018, %v2120
    %v2183 = vadd.f32 %v2019, %v2120
    %v2184 = vadd.f32 %v2020, %v2120
    %v2185 = vadd.f32 %v2021, %v2120
    %v2186 = vadd.f32 %v2022, %v2120
    %v2187 = vadd.f32 %v2023, %v2120
    %v2188 = vadd.f32 %v2024, %v2120
    %v2189 = vadd.f32 %v2025, %v2120
    %v2190 = vadd.f32 %v2026, %v2120
    %v2191 = vadd.f32 %v2027, %v2120
    %v2192 = vadd.f32 %v2028, %v2120
    %v2193 = vadd.f32 %v2029, %v2120
    %v2194 = vadd.f32 %v2030, %v2120
    %v2195 = vadd.f32 %v2031, %v2120
    %v2196 = vadd.f32 %v2032, %v2120
    %v2197 = vadd.f32 %v2033, %v2120
    %v2198 = vadd.f32 %v2034, %v2120
    %v2199 = vadd.f32 %v2035, %v2120
    %v2200 = vadd.f32 %v2036, %v2120
    %v2201 = vadd.f32 %v2037, %v2120
    %v2202 = vadd.f32 %v2038, %v2120
    %v2203 = vadd.f32 %v2039, %v2120
    %v2204 = vadd.f32 %v2040, %v2120
    %v2205 = vadd.f32 %v2041, %v2120
    %v2206 = vadd.f32 %v2042, %v2120
    %v2207 = vadd.f32 %v2043, %v2120
    %v2208 = vadd.f32 %v2044, %v2120
    %v2209 = vadd.f32 %v2045, %v2120
    %v2210 = vadd.f32 %v2046, %v2120
    %v2211 = vadd.f32 %v2047, %v2120
    %v2212 = vadd.f32 %v2048, %v2120
    %v2213 = vadd.f32 %v2049, %v2120
    %v2214 = vadd.f32 %v2050, %v2120
    %v2215 = vadd.f32 %v2051, %v2120
    %v2216 = vadd.f32 %v2052, %v2120
    %v2217 = vadd.f32 %v2053, %v2120
    %v2218 = vadd.f32 %v2054, %v2120
    %v2219 = vadd.f32 %v2055, %v2120
    %v2220 = vadd.f32 %v2056, %v2120
    %v2221 = vadd.f32 %v2057, %v2120
    %v2222 = vadd.f32 %v2058, %v2120
    %v2223 = vadd.f32 %v2059, %v2120
    %v2224 = vadd.f32 %v2060, %v2120
    %v2225 = vadd.f32 %v2061, %v2120
    %v2226 = vadd.f32 %v2062, %v2120
    %v2227 = vadd.f32 %v2063, %v2120
    %v2228 = vadd.f32 %v2064, %v2120
    %v2229 = vadd.f32 %v2065, %v2120
    %v2230 = vadd.f32 %v2066, %v2120
    %v2231 = vadd.f32 %v2067, %v2120
    %v2232 = vadd.f32 %v2068, %v2120
    %v2233 = vadd.f32 %v2069, %v2120
    %v2234 = vadd.f32 %v2070, %v2120
    %v2235 = vadd.f32 %v2071, %v2120
    %v2236 = vadd.f32 %v2072, %v2120
    %v2237 = vadd.f32 %v2073, %v2120
    %v2238 = vadd.f32 %v2074, %v2120
    %v2239 = vadd.f32 %v2075, %v2120
    %v2240 = vadd.f32 %v2076, %v2120
    %v2241 = vadd.f32 %v2077, %v2120
    %v2242 = vadd.f32 %v2078, %v2120
    %v2243 = vadd.f32 %v2079, %v2120
    %v2244 = vadd.f32 %v2080, %v2120
    %v2245 = vadd.f32 %v2081, %v2120
    %v2246 = vadd.f32 %v2082, %v2120
    %v2247 = vadd.f32 %v2083, %v2120
    %v2248 = vadd.f32 %v2084, %v2120
    %v2249 = vadd.f32 %v2085, %v2120
    %v2250 = vadd.f32 %v2086, %v2120
    %v2251 = vadd.f32 %v2087, %v2120
    %v2252 = vadd.f32 %v2088, %v2120
    %v2253 = vadd.f32 %v2089, %v2120
    %v2254 = vadd.f32 %v2090, %v2120
    %v2255 = vadd.f32 %v2091, %v2120
    %v2256 = vadd.f32 %v2092, %v2120
    %v2257 = vadd.f32 %v2093, %v2120
    %v2258 = vadd.f32 %v2094, %v2120
    %v2259 = vadd.f32 %v2095, %v2120
    %v2260 = vadd.f32 %v2096, %v2120
    %v2261 = vadd.f32 %v2097, %v2120
    %v2262 = vadd.f32 %v2098, %v2120
    %v2263 = vadd.f32 %v2099, %v2120
    %v2264 = vadd.f32 %v2100, %v2120
    %v2265 = vadd.f32 %v2101, %v2120
    %v2266 = vadd.f32 %v2102, %v2120
    %v2267 = vadd.f32 %v2103, %v2120
    %v2268 = vadd.f32 %v2104, %v2120
    %v2269 = vadd.f32 %v2105, %v2120
    %v2270 = vadd.f32 %v2106, %v2120
    %v2271 = vadd.f32 %v2107, %v2120
    %v2272 = vadd.f32 %v2108, %v2120
    %v2273 = vadd.f32 %v2109, %v2120
    %v2274 = vadd.f32 %v2110, %v2120
    %v2275 = vadd.f32 %v2111, %v2120
    %v2276 = vadd.f32 %v2112, %v2120
    %v2277 = vadd.f32 %v2113, %v2120
    %v2278 = vadd.f32 %v2114, %v2120
    %v2279 = vadd.f32 %v2115, %v2120
    %v2280 = vadd.f32 %v2116, %v2120
    %v2281 = vadd.f32 %v2117, %v2120
    %v2282 = vmax.f32 %v2122, 0.0
    %v2283 = vmax.f32 %v2123, 0.0
    %v2284 = vmax.f32 %v2124, 0.0
    %v2285 = vmax.f32 %v2125, 0.0
    %v2286 = vmax.f32 %v2126, 0.0
    %v2287 = vmax.f32 %v2127, 0.0
    %v2288 = vmax.f32 %v2128, 0.0
    %v2289 = vmax.f32 %v2129, 0.0
    %v2290 = vmax.f32 %v2130, 0.0
    %v2291 = vmax.f32 %v2131, 0.0
    %v2292 = vmax.f32 %v2132, 0.0
    %v2293 = vmax.f32 %v2133, 0.0
    %v2294 = vmax.f32 %v2134, 0.0
    %v2295 = vmax.f32 %v2135, 0.0
    %v2296 = vmax.f32 %v2136, 0.0
    %v2297 = vmax.f32 %v2137, 0.0
    %v2298 = vmax.f32 %v2138, 0.0
    %v2299 = vmax.f32 %v2139, 0.0
    %v2300 = vmax.f32 %v2140, 0.0
    %v2301 = vmax.f32 %v2141, 0.0
    %v2302 = vmax.f32 %v2142, 0.0
    %v2303 = vmax.f32 %v2143, 0.0
    %v2304 = vmax.f32 %v2144, 0.0
    %v2305 = vmax.f32 %v2145, 0.0
    %v2306 = vmax.f32 %v2146, 0.0
    %v2307 = vmax.f32 %v2147, 0.0
    %v2308 = vmax.f32 %v2148, 0.0
    %v2309 = vmax.f32 %v2149, 0.0
    %v2310 = vmax.f32 %v2150, 0.0
    %v2311 = vmax.f32 %v2151, 0.0
    %v2312 = vmax.f32 %v2152, 0.0
    %v2313 = vmax.f32 %v2153, 0.0
    %v2314 = vmax.f32 %v2154, 0.0
    %v2315 = vmax.f32 %v2155, 0.0
    %v2316 = vmax.f32 %v2156, 0.0
    %v2317 = vmax.f32 %v2157, 0.0
    %v2318 = vmax.f32 %v2158, 0.0
    %v2319 = vmax.f32 %v2159, 0.0
    %v2320 = vmax.f32 %v2160, 0.0
    %v2321 = vmax.f32 %v2161, 0.0
    %v2322 = vmax.f32 %v2162, 0.0
    %v2323 = vmax.f32 %v2163, 0.0
    %v2324 = vmax.f32 %v2164, 0.0
    %v2325 = vmax.f32 %v2165, 0.0
    %v2326 = vmax.f32 %v2166, 0.0
    %v2327 = vmax.f32 %v2167, 0.0
    %v2328 = vmax.f32 %v2168, 0.0
    %v2329 = vmax.f32 %v2169, 0.0
    %v2330 = vmax.f32 %v2170, 0.0
    %v2331 = vmax.f32 %v2171, 0.0
    %v2332 = vmax.f32 %v2172, 0.0
    %v2333 = vmax.f32 %v2173, 0.0
    %v2334 = vmax.f32 %v2174, 0.0
    %v2335 = vmax.f32 %v2175, 0.0
    %v2336 = vmax.f32 %v2176, 0.0
    %v2337 = vmax.f32 %v2177, 0.0
    %v2338 = vmax.f32 %v2178, 0.0
    %v2339 = vmax.f32 %v2179, 0.0
    %v2340 = vmax.f32 %v2180, 0.0
    %v2341 = vmax.f32 %v2181, 0.0
    %v2342 = vmax.f32 %v2182, 0.0
    %v2343 = vmax.f32 %v2183, 0.0
    %v2344 = vmax.f32 %v2184, 0.0
    %v2345 = vmax.f32 %v2185, 0.0
    %v2346 = vmax.f32 %v2186, 0.0
    %v2347 = vmax.f32 %v2187, 0.0
    %v2348 = vmax.f32 %v2188, 0.0
    %v2349 = vmax.f32 %v2189, 0.0
    %v2350 = vmax.f32 %v2190, 0.0
    %v2351 = vmax.f32 %v2191, 0.0
    %v2352 = vmax.f32 %v2192, 0.0
    %v2353 = vmax.f32 %v2193, 0.0
    %v2354 = vmax.f32 %v2194, 0.0
    %v2355 = vmax.f32 %v2195, 0.0
    %v2356 = vmax.f32 %v2196, 0.0
    %v2357 = vmax.f32 %v2197, 0.0
    %v2358 = vmax.f32 %v2198, 0.0
    %v2359 = vmax.f32 %v2199, 0.0
    %v2360 = vmax.f32 %v2200, 0.0
    %v2361 = vmax.f32 %v2201, 0.0
    %v2362 = vmax.f32 %v2202, 0.0
    %v2363 = vmax.f32 %v2203, 0.0
    %v2364 = vmax.f32 %v2204, 0.0
    %v2365 = vmax.f32 %v2205, 0.0
    %v2366 = vmax.f32 %v2206, 0.0
    %v2367 = vmax.f32 %v2207, 0.0
    %v2368 = vmax.f32 %v2208, 0.0
    %v2369 = vmax.f32 %v2209, 0.0
    %v2370 = vmax.f32 %v2210, 0.0
    %v2371 = vmax.f32 %v2211, 0.0
    %v2372 = vmax.f32 %v2212, 0.0
    %v2373 = vmax.f32 %v2213, 0.0
    %v2374 = vmax.f32 %v2214, 0.0
    %v2375 = vmax.f32 %v2215, 0.0
    %v2376 = vmax.f32 %v2216, 0.0
    %v2377 = vmax.f32 %v2217, 0.0
    %v2378 = vmax.f32 %v2218, 0.0
    %v2379 = vmax.f32 %v2219, 0.0
    %v2380 = vmax.f32 %v2220, 0.0
    %v2381 = vmax.f32 %v2221, 0.0
    %v2382 = vmax.f32 %v2222, 0.0
    %v2383 = vmax.f32 %v2223, 0.0
    %v2384 = vmax.f32 %v2224, 0.0
    %v2385 = vmax.f32 %v2225, 0.0
    %v2386 = vmax.f32 %v2226, 0.0
    %v2387 = vmax.f32 %v2227, 0.0
    %v2388 = vmax.f32 %v2228, 0.0
    %v2389 = vmax.f32 %v2229, 0.0
    %v2390 = vmax.f32 %v2230, 0.0
    %v2391 = vmax.f32 %v2231, 0.0
    %v2392 = vmax.f32 %v2232, 0.0
    %v2393 = vmax.f32 %v2233, 0.0
    %v2394 = vmax.f32 %v2234, 0.0
    %v2395 = vmax.f32 %v2235, 0.0
    %v2396 = vmax.f32 %v2236, 0.0
    %v2397 = vmax.f32 %v2237, 0.0
    %v2398 = vmax.f32 %v2238, 0.0
    %v2399 = vmax.f32 %v2239, 0.0
    %v2400 = vmax.f32 %v2240, 0.0
    %v2401 = vmax.f32 %v2241, 0.0
    %v2402 = vmax.f32 %v2242, 0.0
    %v2403 = vmax.f32 %v2243, 0.0
    %v2404 = vmax.f32 %v2244, 0.0
    %v2405 = vmax.f32 %v2245, 0.0
    %v2406 = vmax.f32 %v2246, 0.0
    %v2407 = vmax.f32 %v2247, 0.0
    %v2408 = vmax.f32 %v2248, 0.0
    %v2409 = vmax.f32 %v2249, 0.0
    %v2410 = vmax.f32 %v2250, 0.0
    %v2411 = vmax.f32 %v2251, 0.0
    %v2412 = vmax.f32 %v2252, 0.0
    %v2413 = vmax.f32 %v2253, 0.0
    %v2414 = vmax.f32 %v2254, 0.0
    %v2415 = vmax.f32 %v2255, 0.0
    %v2416 = vmax.f32 %v2256, 0.0
    %v2417 = vmax.f32 %v2257, 0.0
    %v2418 = vmax.f32 %v2258, 0.0
    %v2419 = vmax.f32 %v2259, 0.0
    %v2420 = vmax.f32 %v2260, 0.0
    %v2421 = vmax.f32 %v2261, 0.0
    %v2422 = vmax.f32 %v2262, 0.0
    %v2423 = vmax.f32 %v2263, 0.0
    %v2424 = vmax.f32 %v2264, 0.0
    %v2425 = vmax.f32 %v2265, 0.0
    %v2426 = vmax.f32 %v2266, 0.0
    %v2427 = vmax.f32 %v2267, 0.0
    %v2428 = vmax.f32 %v2268, 0.0
    %v2429 = vmax.f32 %v2269, 0.0
    %v2430 = vmax.f32 %v2270, 0.0
    %v2431 = vmax.f32 %v2271, 0.0
    %v2432 = vmax.f32 %v2272, 0.0
    %v2433 = vmax.f32 %v2273, 0.0
    %v2434 = vmax.f32 %v2274, 0.0
    %v2435 = vmax.f32 %v2275, 0.0
    %v2436 = vmax.f32 %v2276, 0.0
    %v2437 = vmax.f32 %v2277, 0.0
    %v2438 = vmax.f32 %v2278, 0.0
    %v2439 = vmax.f32 %v2279, 0.0
    %v2440 = vmax.f32 %v2280, 0.0
    %v2441 = vmax.f32 %v2281, 0.0
    %v2442 = vld [vmem:[%s1] sm:$0xff]
    %v2443 = vld [vmem:[%s1 + $0x8] sm:$0xff]
    %v2444 = vld [vmem:[%s1 + $0x10] sm:$0xff]
    %v2445 = vld [vmem:[%s1 + $0x18] sm:$0xff]
    %v2446 = vld [vmem:[%s1 + $0x20] sm:$0xff]
    %v2447 = vld [vmem:[%s1 + $0x28] sm:$0xff]
    %v2448 = vld [vmem:[%s1 + $0x30] sm:$0xff]
    %v2449 = vld [vmem:[%s1 + $0x38] sm:$0xff]
    %v2450 = vld [vmem:[%s1 + $0x40] sm:$0xff]
    %v2451 = vld [vmem:[%s1 + $0x48] sm:$0xff]
    %v2452 = vld [vmem:[%s1 + $0x50] sm:$0xff]
    %v2453 = vld [vmem:[%s1 + $0x58] sm:$0xff]
    %v2454 = vld [vmem:[%s1 + $0x60] sm:$0xff]
    %v2455 = vld [vmem:[%s1 + $0x68] sm:$0xff]
    %v2456 = vld [vmem:[%s1 + $0x70] sm:$0xff]
    %v2457 = vld [vmem:[%s1 + $0x78] sm:$0xff]
    %v2458 = vld [vmem:[%s1 + $0x80] sm:$0xff]
    %v2459 = vld [vmem:[%s1 + $0x88] sm:$0xff]
    %v2460 = vld [vmem:[%s1 + $0x90] sm:$0xff]
    %v2461 = vld [vmem:[%s1 + $0x98] sm:$0xff]
    %v2462 = vld [vmem:[%s1 + $0xa0] sm:$0xff]
    %v2463 = vld [vmem:[%s1 + $0xa8] sm:$0xff]
    %v2464 = vld [vmem:[%s1 + $0xb0] sm:$0xff]
    %v2465 = vld [vmem:[%s1 + $0xb8] sm:$0xff]
    %v2466 = vld [vmem:[%s1 + $0xc0] sm:$0xff]
    %v2467 = vld [vmem:[%s1 + $0xc8] sm:$0xff]
    %v2468 = vld [vmem:[%s1 + $0xd0] sm:$0xff]
    %v2469 = vld [vmem:[%s1 + $0xd8] sm:$0xff]
    %v2470 = vld [vmem:[%s1 + $0xe0] sm:$0xff]
    %v2471 = vld [vmem:[%s1 + $0xe8] sm:$0xff]
    %v2472 = vld [vmem:[%s1 + $0xf0] sm:$0xff]
    %v2473 = vld [vmem:[%s1 + $0xf8] sm:$0xff]
    %v2474 = vld [vmem:[%s1 + $0x100] sm:$0xff]
    %v2475 = vld [vmem:[%s1 + $0x108] sm:$0xff]
    %v2476 = vld [vmem:[%s1 + $0x110] sm:$0xff]
    %v2477 = vld [vmem:[%s1 + $0x118] sm:$0xff]
    %v2478 = vld [vmem:[%s1 + $0x120] sm:$0xff]
    %v2479 = vld [vmem:[%s1 + $0x128] sm:$0xff]
    %v2480 = vld [vmem:[%s1 + $0x130] sm:$0xff]
    %v2481 = vld [vmem:[%s1 + $0x138] sm:$0xff]
    %v2482 = vld [vmem:[%s1 + $0x140] sm:$0xff]
    %v2483 = vld [vmem:[%s1 + $0x148] sm:$0xff]
    %v2484 = vld [vmem:[%s1 + $0x150] sm:$0xff]
    %v2485 = vld [vmem:[%s1 + $0x158] sm:$0xff]
    %v2486 = vld [vmem:[%s1 + $0x160] sm:$0xff]
    %v2487 = vld [vmem:[%s1 + $0x168] sm:$0xff]
    %v2488 = vld [vmem:[%s1 + $0x170] sm:$0xff]
    %v2489 = vld [vmem:[%s1 + $0x178] sm:$0xff]
    %v2490 = vld [vmem:[%s1 + $0x180] sm:$0xff]
    %v2491 = vld [vmem:[%s1 + $0x188] sm:$0xff]
    %v2492 = vld [vmem:[%s1 + $0x190] sm:$0xff]
    %v2493 = vld [vmem:[%s1 + $0x198] sm:$0xff]
    %v2494 = vld [vmem:[%s1 + $0x1a0] sm:$0xff]
    %v2495 = vld [vmem:[%s1 + $0x1a8] sm:$0xff]
    %v2496 = vld [vmem:[%s1 + $0x1b0] sm:$0xff]
    %v2497 = vld [vmem:[%s1 + $0x1b8] sm:$0xff]
    %v2498 = vld [vmem:[%s1 + $0x1c0] sm:$0xff]
    %v2499 = vld [vmem:[%s1 + $0x1c8] sm:$0xff]
    %v2500 = vld [vmem:[%s1 + $0x1d0] sm:$0xff]
    %v2501 = vld [vmem:[%s1 + $0x1d8] sm:$0xff]
    %v2502 = vld [vmem:[%s1 + $0x1e0] sm:$0xff]
    %v2503 = vld [vmem:[%s1 + $0x1e8] sm:$0xff]
    %v2504 = vld [vmem:[%s1 + $0x1f0] sm:$0xff]
    %v2505 = vld [vmem:[%s1 + $0x1f8] sm:$0xff]
    %v2506 = vld [vmem:[%s1 + $0x200] sm:$0xff]
    %v2507 = vld [vmem:[%s1 + $0x208] sm:$0xff]
    %v2508 = vld [vmem:[%s1 + $0x210] sm:$0xff]
    %v2509 = vld [vmem:[%s1 + $0x218] sm:$0xff]
    %v2510 = vld [vmem:[%s1 + $0x220] sm:$0xff]
    %v2511 = vld [vmem:[%s1 + $0x228] sm:$0xff]
    %v2512 = vld [vmem:[%s1 + $0x230] sm:$0xff]
    %v2513 = vld [vmem:[%s1 + $0x238] sm:$0xff]
    %v2514 = vld [vmem:[%s1 + $0x240] sm:$0xff]
    %v2515 = vld [vmem:[%s1 + $0x248] sm:$0xff]
    %v2516 = vld [vmem:[%s1 + $0x250] sm:$0xff]
    %v2517 = vld [vmem:[%s1 + $0x258] sm:$0xff]
    %v2518 = vld [vmem:[%s1 + $0x260] sm:$0xff]
    %v2519 = vld [vmem:[%s1 + $0x268] sm:$0xff]
    %v2520 = vld [vmem:[%s1 + $0x270] sm:$0xff]
    %v2521 = vld [vmem:[%s1 + $0x278] sm:$0xff]
    %v2522 = vld [vmem:[%s1 + $0x280] sm:$0xff]
    %v2523 = vld [vmem:[%s1 + $0x288] sm:$0xff]
    %v2524 = vld [vmem:[%s1 + $0x290] sm:$0xff]
    %v2525 = vld [vmem:[%s1 + $0x298] sm:$0xff]
    %v2526 = vld [vmem:[%s1 + $0x2a0] sm:$0xff]
    %v2527 = vld [vmem:[%s1 + $0x2a8] sm:$0xff]
    %v2528 = vld [vmem:[%s1 + $0x2b0] sm:$0xff]
    %v2529 = vld [vmem:[%s1 + $0x2b8] sm:$0xff]
    %v2530 = vld [vmem:[%s1 + $0x2c0] sm:$0xff]
    %v2531 = vld [vmem:[%s1 + $0x2c8] sm:$0xff]
    %v2532 = vld [vmem:[%s1 + $0x2d0] sm:$0xff]
    %v2533 = vld [vmem:[%s1 + $0x2d8] sm:$0xff]
    %v2534 = vld [vmem:[%s1 + $0x2e0] sm:$0xff]
    %v2535 = vld [vmem:[%s1 + $0x2e8] sm:$0xff]
    %v2536 = vld [vmem:[%s1 + $0x2f0] sm:$0xff]
    %v2537 = vld [vmem:[%s1 + $0x2f8] sm:$0xff]
    %v2538 = vld [vmem:[%s1 + $0x300] sm:$0xff]
    %v2539 = vld [vmem:[%s1 + $0x308] sm:$0xff]
    %v2540 = vld [vmem:[%s1 + $0x310] sm:$0xff]
    %v2541 = vld [vmem:[%s1 + $0x318] sm:$0xff]
    %v2542 = vld [vmem:[%s1 + $0x320] sm:$0xff]
    %v2543 = vld [vmem:[%s1 + $0x328] sm:$0xff]
    %v2544 = vld [vmem:[%s1 + $0x330] sm:$0xff]
    %v2545 = vld [vmem:[%s1 + $0x338] sm:$0xff]
    %v2546 = vld [vmem:[%s1 + $0x340] sm:$0xff]
    %v2547 = vld [vmem:[%s1 + $0x348] sm:$0xff]
    %v2548 = vld [vmem:[%s1 + $0x350] sm:$0xff]
    %v2549 = vld [vmem:[%s1 + $0x358] sm:$0xff]
    %v2550 = vld [vmem:[%s1 + $0x360] sm:$0xff]
    %v2551 = vld [vmem:[%s1 + $0x368] sm:$0xff]
    %v2552 = vld [vmem:[%s1 + $0x370] sm:$0xff]
    %v2553 = vld [vmem:[%s1 + $0x378] sm:$0xff]
    %v2554 = vld [vmem:[%s1 + $0x380] sm:$0xff]
    %v2555 = vld [vmem:[%s1 + $0x388] sm:$0xff]
    %v2556 = vld [vmem:[%s1 + $0x390] sm:$0xff]
    %v2557 = vld [vmem:[%s1 + $0x398] sm:$0xff]
    %v2558 = vld [vmem:[%s1 + $0x3a0] sm:$0xff]
    %v2559 = vld [vmem:[%s1 + $0x3a8] sm:$0xff]
    %v2560 = vld [vmem:[%s1 + $0x3b0] sm:$0xff]
    %v2561 = vld [vmem:[%s1 + $0x3b8] sm:$0xff]
    %v2562 = vld [vmem:[%s1 + $0x3c0] sm:$0xff]
    %v2563 = vld [vmem:[%s1 + $0x3c8] sm:$0xff]
    %v2564 = vld [vmem:[%s1 + $0x3d0] sm:$0xff]
    %v2565 = vld [vmem:[%s1 + $0x3d8] sm:$0xff]
    %v2566 = vld [vmem:[%s1 + $0x3e0] sm:$0xff]
    %v2567 = vld [vmem:[%s1 + $0x3e8] sm:$0xff]
    %v2568 = vld [vmem:[%s1 + $0x3f0] sm:$0xff]
    %v2569 = vld [vmem:[%s1 + $0x3f8] sm:$0xff]
    %v2570 = vld [vmem:[%s1 + $0x400] sm:$0xff]
    %v2571 = vld [vmem:[%s1 + $0x408] sm:$0xff]
    %v2572 = vld [vmem:[%s1 + $0x410] sm:$0xff]
    %v2573 = vld [vmem:[%s1 + $0x418] sm:$0xff]
    %v2574 = vld [vmem:[%s1 + $0x420] sm:$0xff]
    %v2575 = vld [vmem:[%s1 + $0x428] sm:$0xff]
    %v2576 = vld [vmem:[%s1 + $0x430] sm:$0xff]
    %v2577 = vld [vmem:[%s1 + $0x438] sm:$0xff]
    %v2578 = vld [vmem:[%s1 + $0x440] sm:$0xff]
    %v2579 = vld [vmem:[%s1 + $0x448] sm:$0xff]
    %v2580 = vld [vmem:[%s1 + $0x450] sm:$0xff]
    %v2581 = vld [vmem:[%s1 + $0x458] sm:$0xff]
    %v2582 = vld [vmem:[%s1 + $0x460] sm:$0xff]
    %v2583 = vld [vmem:[%s1 + $0x468] sm:$0xff]
    %v2584 = vld [vmem:[%s1 + $0x470] sm:$0xff]
    %v2585 = vld [vmem:[%s1 + $0x478] sm:$0xff]
    %v2586 = vld [vmem:[%s1 + $0x480] sm:$0xff]
    %v2587 = vld [vmem:[%s1 + $0x488] sm:$0xff]
    %v2588 = vld [vmem:[%s1 + $0x490] sm:$0xff]
    %v2589 = vld [vmem:[%s1 + $0x498] sm:$0xff]
    %v2590 = vld [vmem:[%s1 + $0x4a0] sm:$0xff]
    %v2591 = vld [vmem:[%s1 + $0x4a8] sm:$0xff]
    %v2592 = vld [vmem:[%s1 + $0x4b0] sm:$0xff]
    %v2593 = vld [vmem:[%s1 + $0x4b8] sm:$0xff]
    %v2594 = vld [vmem:[%s1 + $0x4c0] sm:$0xff]
    %v2595 = vld [vmem:[%s1 + $0x4c8] sm:$0xff]
    %v2596 = vld [vmem:[%s1 + $0x4d0] sm:$0xff]
    %v2597 = vld [vmem:[%s1 + $0x4d8] sm:$0xff]
    %v2598 = vld [vmem:[%s1 + $0x4e0] sm:$0xff]
    %v2599 = vld [vmem:[%s1 + $0x4e8] sm:$0xff]
    %v2600 = vld [vmem:[%s1 + $0x4f0] sm:$0xff]
    %v2601 = vld [vmem:[%s1 + $0x4f8] sm:$0xff]
    %2603 = vset.pattern.permute.xlu0 0
    %2604 = vperm.xlu0 %2603, %v2442
    %v2605 = vpop.permute.xlu0 %2604
    %2608 = vset.pattern.permute.xlu0 0
    %2609 = vperm.xlu0 %2608, %v2443
    %v2610 = vpop.permute.xlu0 %2609
    %2613 = vset.pattern.permute.xlu0 0
    %2614 = vperm.xlu0 %2613, %v2444
    %v2615 = vpop.permute.xlu0 %2614
    %2618 = vset.pattern.permute.xlu0 0
    %2619 = vperm.xlu0 %2618, %v2445
    %v2620 = vpop.permute.xlu0 %2619
    %2623 = vset.pattern.permute.xlu0 0
    %2624 = vperm.xlu0 %2623, %v2446
    %v2625 = vpop.permute.xlu0 %2624
    %2628 = vset.pattern.permute.xlu0 0
    %2629 = vperm.xlu0 %2628, %v2447
    %v2630 = vpop.permute.xlu0 %2629
    %2633 = vset.pattern.permute.xlu0 0
    %2634 = vperm.xlu0 %2633, %v2448
    %v2635 = vpop.permute.xlu0 %2634
    %2638 = vset.pattern.permute.xlu0 0
    %2639 = vperm.xlu0 %2638, %v2449
    %v2640 = vpop.permute.xlu0 %2639
    %2643 = vset.pattern.permute.xlu0 0
    %2644 = vperm.xlu0 %2643, %v2450
    %v2645 = vpop.permute.xlu0 %2644
    %2648 = vset.pattern.permute.xlu0 0
    %2649 = vperm.xlu0 %2648, %v2451
    %v2650 = vpop.permute.xlu0 %2649
    %2653 = vset.pattern.permute.xlu0 0
    %2654 = vperm.xlu0 %2653, %v2452
    %v2655 = vpop.permute.xlu0 %2654
    %2658 = vset.pattern.permute.xlu0 0
    %2659 = vperm.xlu0 %2658, %v2453
    %v2660 = vpop.permute.xlu0 %2659
    %2663 = vset.pattern.permute.xlu0 0
    %2664 = vperm.xlu0 %2663, %v2454
    %v2665 = vpop.permute.xlu0 %2664
    %2668 = vset.pattern.permute.xlu0 0
    %2669 = vperm.xlu0 %2668, %v2455
    %v2670 = vpop.permute.xlu0 %2669
    %2673 = vset.pattern.permute.xlu0 0
    %2674 = vperm.xlu0 %2673, %v2456
    %v2675 = vpop.permute.xlu0 %2674
    %2678 = vset.pattern.permute.xlu0 0
    %2679 = vperm.xlu0 %2678, %v2457
    %v2680 = vpop.permute.xlu0 %2679
    %2683 = vset.pattern.permute.xlu0 0
    %2684 = vperm.xlu0 %2683, %v2458
    %v2685 = vpop.permute.xlu0 %2684
    %2688 = vset.pattern.permute.xlu0 0
    %2689 = vperm.xlu0 %2688, %v2459
    %v2690 = vpop.permute.xlu0 %2689
    %2693 = vset.pattern.permute.xlu0 0
    %2694 = vperm.xlu0 %2693, %v2460
    %v2695 = vpop.permute.xlu0 %2694
    %2698 = vset.pattern.permute.xlu0 0
    %2699 = vperm.xlu0 %2698, %v2461
    %v2700 = vpop.permute.xlu0 %2699
    %2703 = vset.pattern.permute.xlu0 0
    %2704 = vperm.xlu0 %2703, %v2462
    %v2705 = vpop.permute.xlu0 %2704
    %2708 = vset.pattern.permute.xlu0 0
    %2709 = vperm.xlu0 %2708, %v2463
    %v2710 = vpop.permute.xlu0 %2709
    %2713 = vset.pattern.permute.xlu0 0
    %2714 = vperm.xlu0 %2713, %v2464
    %v2715 = vpop.permute.xlu0 %2714
    %2718 = vset.pattern.permute.xlu0 0
    %2719 = vperm.xlu0 %2718, %v2465
    %v2720 = vpop.permute.xlu0 %2719
    %2723 = vset.pattern.permute.xlu0 0
    %2724 = vperm.xlu0 %2723, %v2466
    %v2725 = vpop.permute.xlu0 %2724
    %2728 = vset.pattern.permute.xlu0 0
    %2729 = vperm.xlu0 %2728, %v2467
    %v2730 = vpop.permute.xlu0 %2729
    %2733 = vset.pattern.permute.xlu0 0
    %2734 = vperm.xlu0 %2733, %v2468
    %v2735 = vpop.permute.xlu0 %2734
    %2738 = vset.pattern.permute.xlu0 0
    %2739 = vperm.xlu0 %2738, %v2469
    %v2740 = vpop.permute.xlu0 %2739
    %2743 = vset.pattern.permute.xlu0 0
    %2744 = vperm.xlu0 %2743, %v2470
    %v2745 = vpop.permute.xlu0 %2744
    %2748 = vset.pattern.permute.xlu0 0
    %2749 = vperm.xlu0 %2748, %v2471
    %v2750 = vpop.permute.xlu0 %2749
    %2753 = vset.pattern.permute.xlu0 0
    %2754 = vperm.xlu0 %2753, %v2472
    %v2755 = vpop.permute.xlu0 %2754
    %2758 = vset.pattern.permute.xlu0 0
    %2759 = vperm.xlu0 %2758, %v2473
    %v2760 = vpop.permute.xlu0 %2759
    %2763 = vset.pattern.permute.xlu0 0
    %2764 = vperm.xlu0 %2763, %v2474
    %v2765 = vpop.permute.xlu0 %2764
    %2768 = vset.pattern.permute.xlu0 0
    %2769 = vperm.xlu0 %2768, %v2475
    %v2770 = vpop.permute.xlu0 %2769
    %2773 = vset.pattern.permute.xlu0 0
    %2774 = vperm.xlu0 %2773, %v2476
    %v2775 = vpop.permute.xlu0 %2774
    %2778 = vset.pattern.permute.xlu0 0
    %2779 = vperm.xlu0 %2778, %v2477
    %v2780 = vpop.permute.xlu0 %2779
    %2783 = vset.pattern.permute.xlu0 0
    %2784 = vperm.xlu0 %2783, %v2478
    %v2785 = vpop.permute.xlu0 %2784
    %2788 = vset.pattern.permute.xlu0 0
    %2789 = vperm.xlu0 %2788, %v2479
    %v2790 = vpop.permute.xlu0 %2789
    %2793 = vset.pattern.permute.xlu0 0
    %2794 = vperm.xlu0 %2793, %v2480
    %v2795 = vpop.permute.xlu0 %2794
    %2798 = vset.pattern.permute.xlu0 0
    %2799 = vperm.xlu0 %2798, %v2481
    %v2800 = vpop.permute.xlu0 %2799
    %2803 = vset.pattern.permute.xlu0 0
    %2804 = vperm.xlu0 %2803, %v2482
    %v2805 = vpop.permute.xlu0 %2804
    %2808 = vset.pattern.permute.xlu0 0
    %2809 = vperm.xlu0 %2808, %v2483
    %v2810 = vpop.permute.xlu0 %2809
    %2813 = vset.pattern.permute.xlu0 0
    %2814 = vperm.xlu0 %2813, %v2484
    %v2815 = vpop.permute.xlu0 %2814
    %2818 = vset.pattern.permute.xlu0 0
    %2819 = vperm.xlu0 %2818, %v2485
    %v2820 = vpop.permute.xlu0 %2819
    %2823 = vset.pattern.permute.xlu0 0
    %2824 = vperm.xlu0 %2823, %v2486
    %v2825 = vpop.permute.xlu0 %2824
    %2828 = vset.pattern.permute.xlu0 0
    %2829 = vperm.xlu0 %2828, %v2487
    %v2830 = vpop.permute.xlu0 %2829
    %2833 = vset.pattern.permute.xlu0 0
    %2834 = vperm.xlu0 %2833, %v2488
    %v2835 = vpop.permute.xlu0 %2834
    %2838 = vset.pattern.permute.xlu0 0
    %2839 = vperm.xlu0 %2838, %v2489
    %v2840 = vpop.permute.xlu0 %2839
    %2843 = vset.pattern.permute.xlu0 0
    %2844 = vperm.xlu0 %2843, %v2490
    %v2845 = vpop.permute.xlu0 %2844
    %2848 = vset.pattern.permute.xlu0 0
    %2849 = vperm.xlu0 %2848, %v2491
    %v2850 = vpop.permute.xlu0 %2849
    %2853 = vset.pattern.permute.xlu0 0
    %2854 = vperm.xlu0 %2853, %v2492
    %v2855 = vpop.permute.xlu0 %2854
    %2858 = vset.pattern.permute.xlu0 0
    %2859 = vperm.xlu0 %2858, %v2493
    %v2860 = vpop.permute.xlu0 %2859
    %2863 = vset.pattern.permute.xlu0 0
    %2864 = vperm.xlu0 %2863, %v2494
    %v2865 = vpop.permute.xlu0 %2864
    %2868 = vset.pattern.permute.xlu0 0
    %2869 = vperm.xlu0 %2868, %v2495
    %v2870 = vpop.permute.xlu0 %2869
    %2873 = vset.pattern.permute.xlu0 0
    %2874 = vperm.xlu0 %2873, %v2496
    %v2875 = vpop.permute.xlu0 %2874
    %2878 = vset.pattern.permute.xlu0 0
    %2879 = vperm.xlu0 %2878, %v2497
    %v2880 = vpop.permute.xlu0 %2879
    %2883 = vset.pattern.permute.xlu0 0
    %2884 = vperm.xlu0 %2883, %v2498
    %v2885 = vpop.permute.xlu0 %2884
    %2888 = vset.pattern.permute.xlu0 0
    %2889 = vperm.xlu0 %2888, %v2499
    %v2890 = vpop.permute.xlu0 %2889
    %2893 = vset.pattern.permute.xlu0 0
    %2894 = vperm.xlu0 %2893, %v2500
    %v2895 = vpop.permute.xlu0 %2894
    %2898 = vset.pattern.permute.xlu0 0
    %2899 = vperm.xlu0 %2898, %v2501
    %v2900 = vpop.permute.xlu0 %2899
    %2903 = vset.pattern.permute.xlu0 0
    %2904 = vperm.xlu0 %2903, %v2502
    %v2905 = vpop.permute.xlu0 %2904
    %2908 = vset.pattern.permute.xlu0 0
    %2909 = vperm.xlu0 %2908, %v2503
    %v2910 = vpop.permute.xlu0 %2909
    %2913 = vset.pattern.permute.xlu0 0
    %2914 = vperm.xlu0 %2913, %v2504
    %v2915 = vpop.permute.xlu0 %2914
    %2918 = vset.pattern.permute.xlu0 0
    %2919 = vperm.xlu0 %2918, %v2505
    %v2920 = vpop.permute.xlu0 %2919
    %2923 = vset.pattern.permute.xlu0 0
    %2924 = vperm.xlu0 %2923, %v2506
    %v2925 = vpop.permute.xlu0 %2924
    %2928 = vset.pattern.permute.xlu0 0
    %2929 = vperm.xlu0 %2928, %v2507
    %v2930 = vpop.permute.xlu0 %2929
    %2933 = vset.pattern.permute.xlu0 0
    %2934 = vperm.xlu0 %2933, %v2508
    %v2935 = vpop.permute.xlu0 %2934
    %2938 = vset.pattern.permute.xlu0 0
    %2939 = vperm.xlu0 %2938, %v2509
    %v2940 = vpop.permute.xlu0 %2939
    %2943 = vset.pattern.permute.xlu0 0
    %2944 = vperm.xlu0 %2943, %v2510
    %v2945 = vpop.permute.xlu0 %2944
    %2948 = vset.pattern.permute.xlu0 0
    %2949 = vperm.xlu0 %2948, %v2511
    %v2950 = vpop.permute.xlu0 %2949
    %2953 = vset.pattern.permute.xlu0 0
    %2954 = vperm.xlu0 %2953, %v2512
    %v2955 = vpop.permute.xlu0 %2954
    %2958 = vset.pattern.permute.xlu0 0
    %2959 = vperm.xlu0 %2958, %v2513
    %v2960 = vpop.permute.xlu0 %2959
    %2963 = vset.pattern.permute.xlu0 0
    %2964 = vperm.xlu0 %2963, %v2514
    %v2965 = vpop.permute.xlu0 %2964
    %2968 = vset.pattern.permute.xlu0 0
    %2969 = vperm.xlu0 %2968, %v2515
    %v2970 = vpop.permute.xlu0 %2969
    %2973 = vset.pattern.permute.xlu0 0
    %2974 = vperm.xlu0 %2973, %v2516
    %v2975 = vpop.permute.xlu0 %2974
    %2978 = vset.pattern.permute.xlu0 0
    %2979 = vperm.xlu0 %2978, %v2517
    %v2980 = vpop.permute.xlu0 %2979
    %2983 = vset.pattern.permute.xlu0 0
    %2984 = vperm.xlu0 %2983, %v2518
    %v2985 = vpop.permute.xlu0 %2984
    %2988 = vset.pattern.permute.xlu0 0
    %2989 = vperm.xlu0 %2988, %v2519
    %v2990 = vpop.permute.xlu0 %2989
    %2993 = vset.pattern.permute.xlu0 0
    %2994 = vperm.xlu0 %2993, %v2520
    %v2995 = vpop.permute.xlu0 %2994
    %2998 = vset.pattern.permute.xlu0 0
    %2999 = vperm.xlu0 %2998, %v2521
    %v3000 = vpop.permute.xlu0 %2999
    %3003 = vset.pattern.permute.xlu0 0
    %3004 = vperm.xlu0 %3003, %v2522
    %v3005 = vpop.permute.xlu0 %3004
    %3008 = vset.pattern.permute.xlu0 0
    %3009 = vperm.xlu0 %3008, %v2523
    %v3010 = vpop.permute.xlu0 %3009
    %3013 = vset.pattern.permute.xlu0 0
    %3014 = vperm.xlu0 %3013, %v2524
    %v3015 = vpop.permute.xlu0 %3014
    %3018 = vset.pattern.permute.xlu0 0
    %3019 = vperm.xlu0 %3018, %v2525
    %v3020 = vpop.permute.xlu0 %3019
    %3023 = vset.pattern.permute.xlu0 0
    %3024 = vperm.xlu0 %3023, %v2526
    %v3025 = vpop.permute.xlu0 %3024
    %3028 = vset.pattern.permute.xlu0 0
    %3029 = vperm.xlu0 %3028, %v2527
    %v3030 = vpop.permute.xlu0 %3029
    %3033 = vset.pattern.permute.xlu0 0
    %3034 = vperm.xlu0 %3033, %v2528
    %v3035 = vpop.permute.xlu0 %3034
    %3038 = vset.pattern.permute.xlu0 0
    %3039 = vperm.xlu0 %3038, %v2529
    %v3040 = vpop.permute.xlu0 %3039
    %3043 = vset.pattern.permute.xlu0 0
    %3044 = vperm.xlu0 %3043, %v2530
    %v3045 = vpop.permute.xlu0 %3044
    %3048 = vset.pattern.permute.xlu0 0
    %3049 = vperm.xlu0 %3048, %v2531
    %v3050 = vpop.permute.xlu0 %3049
    %3053 = vset.pattern.permute.xlu0 0
    %3054 = vperm.xlu0 %3053, %v2532
    %v3055 = vpop.permute.xlu0 %3054
    %3058 = vset.pattern.permute.xlu0 0
    %3059 = vperm.xlu0 %3058, %v2533
    %v3060 = vpop.permute.xlu0 %3059
    %3063 = vset.pattern.permute.xlu0 0
    %3064 = vperm.xlu0 %3063, %v2534
    %v3065 = vpop.permute.xlu0 %3064
    %3068 = vset.pattern.permute.xlu0 0
    %3069 = vperm.xlu0 %3068, %v2535
    %v3070 = vpop.permute.xlu0 %3069
    %3073 = vset.pattern.permute.xlu0 0
    %3074 = vperm.xlu0 %3073, %v2536
    %v3075 = vpop.permute.xlu0 %3074
    %3078 = vset.pattern.permute.xlu0 0
    %3079 = vperm.xlu0 %3078, %v2537
    %v3080 = vpop.permute.xlu0 %3079
    %3083 = vset.pattern.permute.xlu0 0
    %3084 = vperm.xlu0 %3083, %v2538
    %v3085 = vpop.permute.xlu0 %3084
    %3088 = vset.pattern.permute.xlu0 0
    %3089 = vperm.xlu0 %3088, %v2539
    %v3090 = vpop.permute.xlu0 %3089
    %3093 = vset.pattern.permute.xlu0 0
    %3094 = vperm.xlu0 %3093, %v2540
    %v3095 = vpop.permute.xlu0 %3094
    %3098 = vset.pattern.permute.xlu0 0
    %3099 = vperm.xlu0 %3098, %v2541
    %v3100 = vpop.permute.xlu0 %3099
    %3103 = vset.pattern.permute.xlu0 0
    %3104 = vperm.xlu0 %3103, %v2542
    %v3105 = vpop.permute.xlu0 %3104
    %3108 = vset.pattern.permute.xlu0 0
    %3109 = vperm.xlu0 %3108, %v2543
    %v3110 = vpop.permute.xlu0 %3109
    %3113 = vset.pattern.permute.xlu0 0
    %3114 = vperm.xlu0 %3113, %v2544
    %v3115 = vpop.permute.xlu0 %3114
    %3118 = vset.pattern.permute.xlu0 0
    %3119 = vperm.xlu0 %3118, %v2545
    %v3120 = vpop.permute.xlu0 %3119
    %3123 = vset.pattern.permute.xlu0 0
    %3124 = vperm.xlu0 %3123, %v2546
    %v3125 = vpop.permute.xlu0 %3124
    %3128 = vset.pattern.permute.xlu0 0
    %3129 = vperm.xlu0 %3128, %v2547
    %v3130 = vpop.permute.xlu0 %3129
    %3133 = vset.pattern.permute.xlu0 0
    %3134 = vperm.xlu0 %3133, %v2548
    %v3135 = vpop.permute.xlu0 %3134
    %3138 = vset.pattern.permute.xlu0 0
    %3139 = vperm.xlu0 %3138, %v2549
    %v3140 = vpop.permute.xlu0 %3139
    %3143 = vset.pattern.permute.xlu0 0
    %3144 = vperm.xlu0 %3143, %v2550
    %v3145 = vpop.permute.xlu0 %3144
    %3148 = vset.pattern.permute.xlu0 0
    %3149 = vperm.xlu0 %3148, %v2551
    %v3150 = vpop.permute.xlu0 %3149
    %3153 = vset.pattern.permute.xlu0 0
    %3154 = vperm.xlu0 %3153, %v2552
    %v3155 = vpop.permute.xlu0 %3154
    %3158 = vset.pattern.permute.xlu0 0
    %3159 = vperm.xlu0 %3158, %v2553
    %v3160 = vpop.permute.xlu0 %3159
    %3163 = vset.pattern.permute.xlu0 0
    %3164 = vperm.xlu0 %3163, %v2554
    %v3165 = vpop.permute.xlu0 %3164
    %3168 = vset.pattern.permute.xlu0 0
    %3169 = vperm.xlu0 %3168, %v2555
    %v3170 = vpop.permute.xlu0 %3169
    %3173 = vset.pattern.permute.xlu0 0
    %3174 = vperm.xlu0 %3173, %v2556
    %v3175 = vpop.permute.xlu0 %3174
    %3178 = vset.pattern.permute.xlu0 0
    %3179 = vperm.xlu0 %3178, %v2557
    %v3180 = vpop.permute.xlu0 %3179
    %3183 = vset.pattern.permute.xlu0 0
    %3184 = vperm.xlu0 %3183, %v2558
    %v3185 = vpop.permute.xlu0 %3184
    %3188 = vset.pattern.permute.xlu0 0
    %3189 = vperm.xlu0 %3188, %v2559
    %v3190 = vpop.permute.xlu0 %3189
    %3193 = vset.pattern.permute.xlu0 0
    %3194 = vperm.xlu0 %3193, %v2560
    %v3195 = vpop.permute.xlu0 %3194
    %3198 = vset.pattern.permute.xlu0 0
    %3199 = vperm.xlu0 %3198, %v2561
    %v3200 = vpop.permute.xlu0 %3199
    %3203 = vset.pattern.permute.xlu0 0
    %3204 = vperm.xlu0 %3203, %v2562
    %v3205 = vpop.permute.xlu0 %3204
    %3208 = vset.pattern.permute.xlu0 0
    %3209 = vperm.xlu0 %3208, %v2563
    %v3210 = vpop.permute.xlu0 %3209
    %3213 = vset.pattern.permute.xlu0 0
    %3214 = vperm.xlu0 %3213, %v2564
    %v3215 = vpop.permute.xlu0 %3214
    %3218 = vset.pattern.permute.xlu0 0
    %3219 = vperm.xlu0 %3218, %v2565
    %v3220 = vpop.permute.xlu0 %3219
    %3223 = vset.pattern.permute.xlu0 0
    %3224 = vperm.xlu0 %3223, %v2566
    %v3225 = vpop.permute.xlu0 %3224
    %3228 = vset.pattern.permute.xlu0 0
    %3229 = vperm.xlu0 %3228, %v2567
    %v3230 = vpop.permute.xlu0 %3229
    %3233 = vset.pattern.permute.xlu0 0
    %3234 = vperm.xlu0 %3233, %v2568
    %v3235 = vpop.permute.xlu0 %3234
    %3238 = vset.pattern.permute.xlu0 0
    %3239 = vperm.xlu0 %3238, %v2569
    %v3240 = vpop.permute.xlu0 %3239
    %3243 = vset.pattern.permute.xlu0 0
    %3244 = vperm.xlu0 %3243, %v2570
    %v3245 = vpop.permute.xlu0 %3244
    %3248 = vset.pattern.permute.xlu0 0
    %3249 = vperm.xlu0 %3248, %v2571
    %v3250 = vpop.permute.xlu0 %3249
    %3253 = vset.pattern.permute.xlu0 0
    %3254 = vperm.xlu0 %3253, %v2572
    %v3255 = vpop.permute.xlu0 %3254
    %3258 = vset.pattern.permute.xlu0 0
    %3259 = vperm.xlu0 %3258, %v2573
    %v3260 = vpop.permute.xlu0 %3259
    %3263 = vset.pattern.permute.xlu0 0
    %3264 = vperm.xlu0 %3263, %v2574
    %v3265 = vpop.permute.xlu0 %3264
    %3268 = vset.pattern.permute.xlu0 0
    %3269 = vperm.xlu0 %3268, %v2575
    %v3270 = vpop.permute.xlu0 %3269
    %3273 = vset.pattern.permute.xlu0 0
    %3274 = vperm.xlu0 %3273, %v2576
    %v3275 = vpop.permute.xlu0 %3274
    %3278 = vset.pattern.permute.xlu0 0
    %3279 = vperm.xlu0 %3278, %v2577
    %v3280 = vpop.permute.xlu0 %3279
    %3283 = vset.pattern.permute.xlu0 0
    %3284 = vperm.xlu0 %3283, %v2578
    %v3285 = vpop.permute.xlu0 %3284
    %3288 = vset.pattern.permute.xlu0 0
    %3289 = vperm.xlu0 %3288, %v2579
    %v3290 = vpop.permute.xlu0 %3289
    %3293 = vset.pattern.permute.xlu0 0
    %3294 = vperm.xlu0 %3293, %v2580
    %v3295 = vpop.permute.xlu0 %3294
    %3298 = vset.pattern.permute.xlu0 0
    %3299 = vperm.xlu0 %3298, %v2581
    %v3300 = vpop.permute.xlu0 %3299
    %3303 = vset.pattern.permute.xlu0 0
    %3304 = vperm.xlu0 %3303, %v2582
    %v3305 = vpop.permute.xlu0 %3304
    %3308 = vset.pattern.permute.xlu0 0
    %3309 = vperm.xlu0 %3308, %v2583
    %v3310 = vpop.permute.xlu0 %3309
    %3313 = vset.pattern.permute.xlu0 0
    %3314 = vperm.xlu0 %3313, %v2584
    %v3315 = vpop.permute.xlu0 %3314
    %3318 = vset.pattern.permute.xlu0 0
    %3319 = vperm.xlu0 %3318, %v2585
    %v3320 = vpop.permute.xlu0 %3319
    %3323 = vset.pattern.permute.xlu0 0
    %3324 = vperm.xlu0 %3323, %v2586
    %v3325 = vpop.permute.xlu0 %3324
    %3328 = vset.pattern.permute.xlu0 0
    %3329 = vperm.xlu0 %3328, %v2587
    %v3330 = vpop.permute.xlu0 %3329
    %3333 = vset.pattern.permute.xlu0 0
    %3334 = vperm.xlu0 %3333, %v2588
    %v3335 = vpop.permute.xlu0 %3334
    %3338 = vset.pattern.permute.xlu0 0
    %3339 = vperm.xlu0 %3338, %v2589
    %v3340 = vpop.permute.xlu0 %3339
    %3343 = vset.pattern.permute.xlu0 0
    %3344 = vperm.xlu0 %3343, %v2590
    %v3345 = vpop.permute.xlu0 %3344
    %3348 = vset.pattern.permute.xlu0 0
    %3349 = vperm.xlu0 %3348, %v2591
    %v3350 = vpop.permute.xlu0 %3349
    %3353 = vset.pattern.permute.xlu0 0
    %3354 = vperm.xlu0 %3353, %v2592
    %v3355 = vpop.permute.xlu0 %3354
    %3358 = vset.pattern.permute.xlu0 0
    %3359 = vperm.xlu0 %3358, %v2593
    %v3360 = vpop.permute.xlu0 %3359
    %3363 = vset.pattern.permute.xlu0 0
    %3364 = vperm.xlu0 %3363, %v2594
    %v3365 = vpop.permute.xlu0 %3364
    %3368 = vset.pattern.permute.xlu0 0
    %3369 = vperm.xlu0 %3368, %v2595
    %v3370 = vpop.permute.xlu0 %3369
    %3373 = vset.pattern.permute.xlu0 0
    %3374 = vperm.xlu0 %3373, %v2596
    %v3375 = vpop.permute.xlu0 %3374
    %3378 = vset.pattern.permute.xlu0 0
    %3379 = vperm.xlu0 %3378, %v2597
    %v3380 = vpop.permute.xlu0 %3379
    %3383 = vset.pattern.permute.xlu0 0
    %3384 = vperm.xlu0 %3383, %v2598
    %v3385 = vpop.permute.xlu0 %3384
    %3388 = vset.pattern.permute.xlu0 0
    %3389 = vperm.xlu0 %3388, %v2599
    %v3390 = vpop.permute.xlu0 %3389
    %3393 = vset.pattern.permute.xlu0 0
    %3394 = vperm.xlu0 %3393, %v2600
    %v3395 = vpop.permute.xlu0 %3394
    %3398 = vset.pattern.permute.xlu0 0
    %3399 = vperm.xlu0 %3398, %v2601
    %v3400 = vpop.permute.xlu0 %3399
    %v3402 = vmul.f32 %v2605, %v995
    %v3403 = vmul.f32 %v2610, %v995
    %v3404 = vmul.f32 %v2615, %v995
    %v3405 = vmul.f32 %v2620, %v995
    %v3406 = vmul.f32 %v2625, %v995
    %v3407 = vmul.f32 %v2630, %v995
    %v3408 = vmul.f32 %v2635, %v995
    %v3409 = vmul.f32 %v2640, %v995
    %v3410 = vmul.f32 %v2645, %v995
    %v3411 = vmul.f32 %v2650, %v995
    %v3412 = vmul.f32 %v2655, %v995
    %v3413 = vmul.f32 %v2660, %v995
    %v3414 = vmul.f32 %v2665, %v995
    %v3415 = vmul.f32 %v2670, %v995
    %v3416 = vmul.f32 %v2675, %v995
    %v3417 = vmul.f32 %v2680, %v995
    %v3418 = vmul.f32 %v2685, %v995
    %v3419 = vmul.f32 %v2690, %v995
    %v3420 = vmul.f32 %v2695, %v995
    %v3421 = vmul.f32 %v2700, %v995
    %v3422 = vmul.f32 %v2705, %v995
    %v3423 = vmul.f32 %v2710, %v995
    %v3424 = vmul.f32 %v2715, %v995
    %v3425 = vmul.f32 %v2720, %v995
    %v3426 = vmul.f32 %v2725, %v995
    %v3427 = vmul.f32 %v2730, %v995
    %v3428 = vmul.f32 %v2735, %v995
    %v3429 = vmul.f32 %v2740, %v995
    %v3430 = vmul.f32 %v2745, %v995
    %v3431 = vmul.f32 %v2750, %v995
    %v3432 = vmul.f32 %v2755, %v995
    %v3433 = vmul.f32 %v2760, %v995
    %v3434 = vmul.f32 %v2765, %v995
    %v3435 = vmul.f32 %v2770, %v995
    %v3436 = vmul.f32 %v2775, %v995
    %v3437 = vmul.f32 %v2780, %v995
    %v3438 = vmul.f32 %v2785, %v995
    %v3439 = vmul.f32 %v2790, %v995
    %v3440 = vmul.f32 %v2795, %v995
    %v3441 = vmul.f32 %v2800, %v995
    %v3442 = vmul.f32 %v2805, %v995
    %v3443 = vmul.f32 %v2810, %v995
    %v3444 = vmul.f32 %v2815, %v995
    %v3445 = vmul.f32 %v2820, %v995
    %v3446 = vmul.f32 %v2825, %v995
    %v3447 = vmul.f32 %v2830, %v995
    %v3448 = vmul.f32 %v2835, %v995
    %v3449 = vmul.f32 %v2840, %v995
    %v3450 = vmul.f32 %v2845, %v995
    %v3451 = vmul.f32 %v2850, %v995
    %v3452 = vmul.f32 %v2855, %v995
    %v3453 = vmul.f32 %v2860, %v995
    %v3454 = vmul.f32 %v2865, %v995
    %v3455 = vmul.f32 %v2870, %v995
    %v3456 = vmul.f32 %v2875, %v995
    %v3457 = vmul.f32 %v2880, %v995
    %v3458 = vmul.f32 %v2885, %v995
    %v3459 = vmul.f32 %v2890, %v995
    %v3460 = vmul.f32 %v2895, %v995
    %v3461 = vmul.f32 %v2900, %v995
    %v3462 = vmul.f32 %v2905, %v995
    %v3463 = vmul.f32 %v2910, %v995
    %v3464 = vmul.f32 %v2915, %v995
    %v3465 = vmul.f32 %v2920, %v995
    %v3466 = vmul.f32 %v2925, %v995
    %v3467 = vmul.f32 %v2930, %v995
    %v3468 = vmul.f32 %v2935, %v995
    %v3469 = vmul.f32 %v2940, %v995
    %v3470 = vmul.f32 %v2945, %v995
    %v3471 = vmul.f32 %v2950, %v995
    %v3472 = vmul.f32 %v2955, %v995
    %v3473 = vmul.f32 %v2960, %v995
    %v3474 = vmul.f32 %v2965, %v995
    %v3475 = vmul.f32 %v2970, %v995
    %v3476 = vmul.f32 %v2975, %v995
    %v3477 = vmul.f32 %v2980, %v995
    %v3478 = vmul.f32 %v2985, %v995
    %v3479 = vmul.f32 %v2990, %v995
    %v3480 = vmul.f32 %v2995, %v995
    %v3481 = vmul.f32 %v3000, %v995
    %v3482 = vmul.f32 %v3005, %v995
    %v3483 = vmul.f32 %v3010, %v995
    %v3484 = vmul.f32 %v3015, %v995
    %v3485 = vmul.f32 %v3020, %v995
    %v3486 = vmul.f32 %v3025, %v995
    %v3487 = vmul.f32 %v3030, %v995
    %v3488 = vmul.f32 %v3035, %v995
    %v3489 = vmul.f32 %v3040, %v995
    %v3490 = vmul.f32 %v3045, %v995
    %v3491 = vmul.f32 %v3050, %v995
    %v3492 = vmul.f32 %v3055, %v995
    %v3493 = vmul.f32 %v3060, %v995
    %v3494 = vmul.f32 %v3065, %v995
    %v3495 = vmul.f32 %v3070, %v995
    %v3496 = vmul.f32 %v3075, %v995
    %v3497 = vmul.f32 %v3080, %v995
    %v3498 = vmul.f32 %v3085, %v995
    %v3499 = vmul.f32 %v3090, %v995
    %v3500 = vmul.f32 %v3095, %v995
    %v3501 = vmul.f32 %v3100, %v995
    %v3502 = vmul.f32 %v3105, %v995
    %v3503 = vmul.f32 %v3110, %v995
    %v3504 = vmul.f32 %v3115, %v995
    %v3505 = vmul.f32 %v3120, %v995
    %v3506 = vmul.f32 %v3125, %v995
    %v3507 = vmul.f32 %v3130, %v995
    %v3508 = vmul.f32 %v3135, %v995
    %v3509 = vmul.f32 %v3140, %v995
    %v3510 = vmul.f32 %v3145, %v995
    %v3511 = vmul.f32 %v3150, %v995
    %v3512 = vmul.f32 %v3155, %v995
    %v3513 = vmul.f32 %v3160, %v995
    %v3514 = vmul.f32 %v3165, %v995
    %v3515 = vmul.f32 %v3170, %v995
    %v3516 = vmul.f32 %v3175, %v995
    %v3517 = vmul.f32 %v3180, %v995
    %v3518 = vmul.f32 %v3185, %v995
    %v3519 = vmul.f32 %v3190, %v995
    %v3520 = vmul.f32 %v3195, %v995
    %v3521 = vmul.f32 %v3200, %v995
    %v3522 = vmul.f32 %v3205, %v995
    %v3523 = vmul.f32 %v3210, %v995
    %v3524 = vmul.f32 %v3215, %v995
    %v3525 = vmul.f32 %v3220, %v995
    %v3526 = vmul.f32 %v3225, %v995
    %v3527 = vmul.f32 %v3230, %v995
    %v3528 = vmul.f32 %v3235, %v995
    %v3529 = vmul.f32 %v3240, %v995
    %v3530 = vmul.f32 %v3245, %v995
    %v3531 = vmul.f32 %v3250, %v995
    %v3532 = vmul.f32 %v3255, %v995
    %v3533 = vmul.f32 %v3260, %v995
    %v3534 = vmul.f32 %v3265, %v995
    %v3535 = vmul.f32 %v3270, %v995
    %v3536 = vmul.f32 %v3275, %v995
    %v3537 = vmul.f32 %v3280, %v995
    %v3538 = vmul.f32 %v3285, %v995
    %v3539 = vmul.f32 %v3290, %v995
    %v3540 = vmul.f32 %v3295, %v995
    %v3541 = vmul.f32 %v3300, %v995
    %v3542 = vmul.f32 %v3305, %v995
    %v3543 = vmul.f32 %v3310, %v995
    %v3544 = vmul.f32 %v3315, %v995
    %v3545 = vmul.f32 %v3320, %v995
    %v3546 = vmul.f32 %v3325, %v995
    %v3547 = vmul.f32 %v3330, %v995
    %v3548 = vmul.f32 %v3335, %v995
    %v3549 = vmul.f32 %v3340, %v995
    %v3550 = vmul.f32 %v3345, %v995
    %v3551 = vmul.f32 %v3350, %v995
    %v3552 = vmul.f32 %v3355, %v995
    %v3553 = vmul.f32 %v3360, %v995
    %v3554 = vmul.f32 %v3365, %v995
    %v3555 = vmul.f32 %v3370, %v995
    %v3556 = vmul.f32 %v3375, %v995
    %v3557 = vmul.f32 %v3380, %v995
    %v3558 = vmul.f32 %v3385, %v995
    %v3559 = vmul.f32 %v3390, %v995
    %v3560 = vmul.f32 %v3395, %v995
    %v3561 = vmul.f32 %v3400, %v995
    %3562 = vset.pattern.permute.xlu0 1
    %3563 = vperm.xlu0 %3562, %v2442
    %v3564 = vpop.permute.xlu0 %3563
    %3566 = vset.pattern.permute.xlu0 1
    %3567 = vperm.xlu0 %3566, %v2443
    %v3568 = vpop.permute.xlu0 %3567
    %3570 = vset.pattern.permute.xlu0 1
    %3571 = vperm.xlu0 %3570, %v2444
    %v3572 = vpop.permute.xlu0 %3571
    %3574 = vset.pattern.permute.xlu0 1
    %3575 = vperm.xlu0 %3574, %v2445
    %v3576 = vpop.permute.xlu0 %3575
    %3578 = vset.pattern.permute.xlu0 1
    %3579 = vperm.xlu0 %3578, %v2446
    %v3580 = vpop.permute.xlu0 %3579
    %3582 = vset.pattern.permute.xlu0 1
    %3583 = vperm.xlu0 %3582, %v2447
    %v3584 = vpop.permute.xlu0 %3583
    %3586 = vset.pattern.permute.xlu0 1
    %3587 = vperm.xlu0 %3586, %v2448
    %v3588 = vpop.permute.xlu0 %3587
    %3590 = vset.pattern.permute.xlu0 1
    %3591 = vperm.xlu0 %3590, %v2449
    %v3592 = vpop.permute.xlu0 %3591
    %3594 = vset.pattern.permute.xlu0 1
    %3595 = vperm.xlu0 %3594, %v2450
    %v3596 = vpop.permute.xlu0 %3595
    %3598 = vset.pattern.permute.xlu0 1
    %3599 = vperm.xlu0 %3598, %v2451
    %v3600 = vpop.permute.xlu0 %3599
    %3602 = vset.pattern.permute.xlu0 1
    %3603 = vperm.xlu0 %3602, %v2452
    %v3604 = vpop.permute.xlu0 %3603
    %3606 = vset.pattern.permute.xlu0 1
    %3607 = vperm.xlu0 %3606, %v2453
    %v3608 = vpop.permute.xlu0 %3607
    %3610 = vset.pattern.permute.xlu0 1
    %3611 = vperm.xlu0 %3610, %v2454
    %v3612 = vpop.permute.xlu0 %3611
    %3614 = vset.pattern.permute.xlu0 1
    %3615 = vperm.xlu0 %3614, %v2455
    %v3616 = vpop.permute.xlu0 %3615
    %3618 = vset.pattern.permute.xlu0 1
    %3619 = vperm.xlu0 %3618, %v2456
    %v3620 = vpop.permute.xlu0 %3619
    %3622 = vset.pattern.permute.xlu0 1
    %3623 = vperm.xlu0 %3622, %v2457
    %v3624 = vpop.permute.xlu0 %3623
    %3626 = vset.pattern.permute.xlu0 1
    %3627 = vperm.xlu0 %3626, %v2458
    %v3628 = vpop.permute.xlu0 %3627
    %3630 = vset.pattern.permute.xlu0 1
    %3631 = vperm.xlu0 %3630, %v2459
    %v3632 = vpop.permute.xlu0 %3631
    %3634 = vset.pattern.permute.xlu0 1
    %3635 = vperm.xlu0 %3634, %v2460
    %v3636 = vpop.permute.xlu0 %3635
    %3638 = vset.pattern.permute.xlu0 1
    %3639 = vperm.xlu0 %3638, %v2461
    %v3640 = vpop.permute.xlu0 %3639
    %3642 = vset.pattern.permute.xlu0 1
    %3643 = vperm.xlu0 %3642, %v2462
    %v3644 = vpop.permute.xlu0 %3643
    %3646 = vset.pattern.permute.xlu0 1
    %3647 = vperm.xlu0 %3646, %v2463
    %v3648 = vpop.permute.xlu0 %3647
    %3650 = vset.pattern.permute.xlu0 1
    %3651 = vperm.xlu0 %3650, %v2464
    %v3652 = vpop.permute.xlu0 %3651
    %3654 = vset.pattern.permute.xlu0 1
    %3655 = vperm.xlu0 %3654, %v2465
    %v3656 = vpop.permute.xlu0 %3655
    %3658 = vset.pattern.permute.xlu0 1
    %3659 = vperm.xlu0 %3658, %v2466
    %v3660 = vpop.permute.xlu0 %3659
    %3662 = vset.pattern.permute.xlu0 1
    %3663 = vperm.xlu0 %3662, %v2467
    %v3664 = vpop.permute.xlu0 %3663
    %3666 = vset.pattern.permute.xlu0 1
    %3667 = vperm.xlu0 %3666, %v2468
    %v3668 = vpop.permute.xlu0 %3667
    %3670 = vset.pattern.permute.xlu0 1
    %3671 = vperm.xlu0 %3670, %v2469
    %v3672 = vpop.permute.xlu0 %3671
    %3674 = vset.pattern.permute.xlu0 1
    %3675 = vperm.xlu0 %3674, %v2470
    %v3676 = vpop.permute.xlu0 %3675
    %3678 = vset.pattern.permute.xlu0 1
    %3679 = vperm.xlu0 %3678, %v2471
    %v3680 = vpop.permute.xlu0 %3679
    %3682 = vset.pattern.permute.xlu0 1
    %3683 = vperm.xlu0 %3682, %v2472
    %v3684 = vpop.permute.xlu0 %3683
    %3686 = vset.pattern.permute.xlu0 1
    %3687 = vperm.xlu0 %3686, %v2473
    %v3688 = vpop.permute.xlu0 %3687
    %3690 = vset.pattern.permute.xlu0 1
    %3691 = vperm.xlu0 %3690, %v2474
    %v3692 = vpop.permute.xlu0 %3691
    %3694 = vset.pattern.permute.xlu0 1
    %3695 = vperm.xlu0 %3694, %v2475
    %v3696 = vpop.permute.xlu0 %3695
    %3698 = vset.pattern.permute.xlu0 1
    %3699 = vperm.xlu0 %3698, %v2476
    %v3700 = vpop.permute.xlu0 %3699
    %3702 = vset.pattern.permute.xlu0 1
    %3703 = vperm.xlu0 %3702, %v2477
    %v3704 = vpop.permute.xlu0 %3703
    %3706 = vset.pattern.permute.xlu0 1
    %3707 = vperm.xlu0 %3706, %v2478
    %v3708 = vpop.permute.xlu0 %3707
    %3710 = vset.pattern.permute.xlu0 1
    %3711 = vperm.xlu0 %3710, %v2479
    %v3712 = vpop.permute.xlu0 %3711
    %3714 = vset.pattern.permute.xlu0 1
    %3715 = vperm.xlu0 %3714, %v2480
    %v3716 = vpop.permute.xlu0 %3715
    %3718 = vset.pattern.permute.xlu0 1
    %3719 = vperm.xlu0 %3718, %v2481
    %v3720 = vpop.permute.xlu0 %3719
    %3722 = vset.pattern.permute.xlu0 1
    %3723 = vperm.xlu0 %3722, %v2482
    %v3724 = vpop.permute.xlu0 %3723
    %3726 = vset.pattern.permute.xlu0 1
    %3727 = vperm.xlu0 %3726, %v2483
    %v3728 = vpop.permute.xlu0 %3727
    %3730 = vset.pattern.permute.xlu0 1
    %3731 = vperm.xlu0 %3730, %v2484
    %v3732 = vpop.permute.xlu0 %3731
    %3734 = vset.pattern.permute.xlu0 1
    %3735 = vperm.xlu0 %3734, %v2485
    %v3736 = vpop.permute.xlu0 %3735
    %3738 = vset.pattern.permute.xlu0 1
    %3739 = vperm.xlu0 %3738, %v2486
    %v3740 = vpop.permute.xlu0 %3739
    %3742 = vset.pattern.permute.xlu0 1
    %3743 = vperm.xlu0 %3742, %v2487
    %v3744 = vpop.permute.xlu0 %3743
    %3746 = vset.pattern.permute.xlu0 1
    %3747 = vperm.xlu0 %3746, %v2488
    %v3748 = vpop.permute.xlu0 %3747
    %3750 = vset.pattern.permute.xlu0 1
    %3751 = vperm.xlu0 %3750, %v2489
    %v3752 = vpop.permute.xlu0 %3751
    %3754 = vset.pattern.permute.xlu0 1
    %3755 = vperm.xlu0 %3754, %v2490
    %v3756 = vpop.permute.xlu0 %3755
    %3758 = vset.pattern.permute.xlu0 1
    %3759 = vperm.xlu0 %3758, %v2491
    %v3760 = vpop.permute.xlu0 %3759
    %3762 = vset.pattern.permute.xlu0 1
    %3763 = vperm.xlu0 %3762, %v2492
    %v3764 = vpop.permute.xlu0 %3763
    %3766 = vset.pattern.permute.xlu0 1
    %3767 = vperm.xlu0 %3766, %v2493
    %v3768 = vpop.permute.xlu0 %3767
    %3770 = vset.pattern.permute.xlu0 1
    %3771 = vperm.xlu0 %3770, %v2494
    %v3772 = vpop.permute.xlu0 %3771
    %3774 = vset.pattern.permute.xlu0 1
    %3775 = vperm.xlu0 %3774, %v2495
    %v3776 = vpop.permute.xlu0 %3775
    %3778 = vset.pattern.permute.xlu0 1
    %3779 = vperm.xlu0 %3778, %v2496
    %v3780 = vpop.permute.xlu0 %3779
    %3782 = vset.pattern.permute.xlu0 1
    %3783 = vperm.xlu0 %3782, %v2497
    %v3784 = vpop.permute.xlu0 %3783
    %3786 = vset.pattern.permute.xlu0 1
    %3787 = vperm.xlu0 %3786, %v2498
    %v3788 = vpop.permute.xlu0 %3787
    %3790 = vset.pattern.permute.xlu0 1
    %3791 = vperm.xlu0 %3790, %v2499
    %v3792 = vpop.permute.xlu0 %3791
    %3794 = vset.pattern.permute.xlu0 1
    %3795 = vperm.xlu0 %3794, %v2500
    %v3796 = vpop.permute.xlu0 %3795
    %3798 = vset.pattern.permute.xlu0 1
    %3799 = vperm.xlu0 %3798, %v2501
    %v3800 = vpop.permute.xlu0 %3799
    %3802 = vset.pattern.permute.xlu0 1
    %3803 = vperm.xlu0 %3802, %v2502
    %v3804 = vpop.permute.xlu0 %3803
    %3806 = vset.pattern.permute.xlu0 1
    %3807 = vperm.xlu0 %3806, %v2503
    %v3808 = vpop.permute.xlu0 %3807
    %3810 = vset.pattern.permute.xlu0 1
    %3811 = vperm.xlu0 %3810, %v2504
    %v3812 = vpop.permute.xlu0 %3811
    %3814 = vset.pattern.permute.xlu0 1
    %3815 = vperm.xlu0 %3814, %v2505
    %v3816 = vpop.permute.xlu0 %3815
    %3818 = vset.pattern.permute.xlu0 1
    %3819 = vperm.xlu0 %3818, %v2506
    %v3820 = vpop.permute.xlu0 %3819
    %3822 = vset.pattern.permute.xlu0 1
    %3823 = vperm.xlu0 %3822, %v2507
    %v3824 = vpop.permute.xlu0 %3823
    %3826 = vset.pattern.permute.xlu0 1
    %3827 = vperm.xlu0 %3826, %v2508
    %v3828 = vpop.permute.xlu0 %3827
    %3830 = vset.pattern.permute.xlu0 1
    %3831 = vperm.xlu0 %3830, %v2509
    %v3832 = vpop.permute.xlu0 %3831
    %3834 = vset.pattern.permute.xlu0 1
    %3835 = vperm.xlu0 %3834, %v2510
    %v3836 = vpop.permute.xlu0 %3835
    %3838 = vset.pattern.permute.xlu0 1
    %3839 = vperm.xlu0 %3838, %v2511
    %v3840 = vpop.permute.xlu0 %3839
    %3842 = vset.pattern.permute.xlu0 1
    %3843 = vperm.xlu0 %3842, %v2512
    %v3844 = vpop.permute.xlu0 %3843
    %3846 = vset.pattern.permute.xlu0 1
    %3847 = vperm.xlu0 %3846, %v2513
    %v3848 = vpop.permute.xlu0 %3847
    %3850 = vset.pattern.permute.xlu0 1
    %3851 = vperm.xlu0 %3850, %v2514
    %v3852 = vpop.permute.xlu0 %3851
    %3854 = vset.pattern.permute.xlu0 1
    %3855 = vperm.xlu0 %3854, %v2515
    %v3856 = vpop.permute.xlu0 %3855
    %3858 = vset.pattern.permute.xlu0 1
    %3859 = vperm.xlu0 %3858, %v2516
    %v3860 = vpop.permute.xlu0 %3859
    %3862 = vset.pattern.permute.xlu0 1
    %3863 = vperm.xlu0 %3862, %v2517
    %v3864 = vpop.permute.xlu0 %3863
    %3866 = vset.pattern.permute.xlu0 1
    %3867 = vperm.xlu0 %3866, %v2518
    %v3868 = vpop.permute.xlu0 %3867
    %3870 = vset.pattern.permute.xlu0 1
    %3871 = vperm.xlu0 %3870, %v2519
    %v3872 = vpop.permute.xlu0 %3871
    %3874 = vset.pattern.permute.xlu0 1
    %3875 = vperm.xlu0 %3874, %v2520
    %v3876 = vpop.permute.xlu0 %3875
    %3878 = vset.pattern.permute.xlu0 1
    %3879 = vperm.xlu0 %3878, %v2521
    %v3880 = vpop.permute.xlu0 %3879
    %3882 = vset.pattern.permute.xlu0 1
    %3883 = vperm.xlu0 %3882, %v2522
    %v3884 = vpop.permute.xlu0 %3883
    %3886 = vset.pattern.permute.xlu0 1
    %3887 = vperm.xlu0 %3886, %v2523
    %v3888 = vpop.permute.xlu0 %3887
    %3890 = vset.pattern.permute.xlu0 1
    %3891 = vperm.xlu0 %3890, %v2524
    %v3892 = vpop.permute.xlu0 %3891
    %3894 = vset.pattern.permute.xlu0 1
    %3895 = vperm.xlu0 %3894, %v2525
    %v3896 = vpop.permute.xlu0 %3895
    %3898 = vset.pattern.permute.xlu0 1
    %3899 = vperm.xlu0 %3898, %v2526
    %v3900 = vpop.permute.xlu0 %3899
    %3902 = vset.pattern.permute.xlu0 1
    %3903 = vperm.xlu0 %3902, %v2527
    %v3904 = vpop.permute.xlu0 %3903
    %3906 = vset.pattern.permute.xlu0 1
    %3907 = vperm.xlu0 %3906, %v2528
    %v3908 = vpop.permute.xlu0 %3907
    %3910 = vset.pattern.permute.xlu0 1
    %3911 = vperm.xlu0 %3910, %v2529
    %v3912 = vpop.permute.xlu0 %3911
    %3914 = vset.pattern.permute.xlu0 1
    %3915 = vperm.xlu0 %3914, %v2530
    %v3916 = vpop.permute.xlu0 %3915
    %3918 = vset.pattern.permute.xlu0 1
    %3919 = vperm.xlu0 %3918, %v2531
    %v3920 = vpop.permute.xlu0 %3919
    %3922 = vset.pattern.permute.xlu0 1
    %3923 = vperm.xlu0 %3922, %v2532
    %v3924 = vpop.permute.xlu0 %3923
    %3926 = vset.pattern.permute.xlu0 1
    %3927 = vperm.xlu0 %3926, %v2533
    %v3928 = vpop.permute.xlu0 %3927
    %3930 = vset.pattern.permute.xlu0 1
    %3931 = vperm.xlu0 %3930, %v2534
    %v3932 = vpop.permute.xlu0 %3931
    %3934 = vset.pattern.permute.xlu0 1
    %3935 = vperm.xlu0 %3934, %v2535
    %v3936 = vpop.permute.xlu0 %3935
    %3938 = vset.pattern.permute.xlu0 1
    %3939 = vperm.xlu0 %3938, %v2536
    %v3940 = vpop.permute.xlu0 %3939
    %3942 = vset.pattern.permute.xlu0 1
    %3943 = vperm.xlu0 %3942, %v2537
    %v3944 = vpop.permute.xlu0 %3943
    %3946 = vset.pattern.permute.xlu0 1
    %3947 = vperm.xlu0 %3946, %v2538
    %v3948 = vpop.permute.xlu0 %3947
    %3950 = vset.pattern.permute.xlu0 1
    %3951 = vperm.xlu0 %3950, %v2539
    %v3952 = vpop.permute.xlu0 %3951
    %3954 = vset.pattern.permute.xlu0 1
    %3955 = vperm.xlu0 %3954, %v2540
    %v3956 = vpop.permute.xlu0 %3955
    %3958 = vset.pattern.permute.xlu0 1
    %3959 = vperm.xlu0 %3958, %v2541
    %v3960 = vpop.permute.xlu0 %3959
    %3962 = vset.pattern.permute.xlu0 1
    %3963 = vperm.xlu0 %3962, %v2542
    %v3964 = vpop.permute.xlu0 %3963
    %3966 = vset.pattern.permute.xlu0 1
    %3967 = vperm.xlu0 %3966, %v2543
    %v3968 = vpop.permute.xlu0 %3967
    %3970 = vset.pattern.permute.xlu0 1
    %3971 = vperm.xlu0 %3970, %v2544
    %v3972 = vpop.permute.xlu0 %3971
    %3974 = vset.pattern.permute.xlu0 1
    %3975 = vperm.xlu0 %3974, %v2545
    %v3976 = vpop.permute.xlu0 %3975
    %3978 = vset.pattern.permute.xlu0 1
    %3979 = vperm.xlu0 %3978, %v2546
    %v3980 = vpop.permute.xlu0 %3979
    %3982 = vset.pattern.permute.xlu0 1
    %3983 = vperm.xlu0 %3982, %v2547
    %v3984 = vpop.permute.xlu0 %3983
    %3986 = vset.pattern.permute.xlu0 1
    %3987 = vperm.xlu0 %3986, %v2548
    %v3988 = vpop.permute.xlu0 %3987
    %3990 = vset.pattern.permute.xlu0 1
    %3991 = vperm.xlu0 %3990, %v2549
    %v3992 = vpop.permute.xlu0 %3991
    %3994 = vset.pattern.permute.xlu0 1
    %3995 = vperm.xlu0 %3994, %v2550
    %v3996 = vpop.permute.xlu0 %3995
    %3998 = vset.pattern.permute.xlu0 1
    %3999 = vperm.xlu0 %3998, %v2551
    %v4000 = vpop.permute.xlu0 %3999
    %4002 = vset.pattern.permute.xlu0 1
    %4003 = vperm.xlu0 %4002, %v2552
    %v4004 = vpop.permute.xlu0 %4003
    %4006 = vset.pattern.permute.xlu0 1
    %4007 = vperm.xlu0 %4006, %v2553
    %v4008 = vpop.permute.xlu0 %4007
    %4010 = vset.pattern.permute.xlu0 1
    %4011 = vperm.xlu0 %4010, %v2554
    %v4012 = vpop.permute.xlu0 %4011
    %4014 = vset.pattern.permute.xlu0 1
    %4015 = vperm.xlu0 %4014, %v2555
    %v4016 = vpop.permute.xlu0 %4015
    %4018 = vset.pattern.permute.xlu0 1
    %4019 = vperm.xlu0 %4018, %v2556
    %v4020 = vpop.permute.xlu0 %4019
    %4022 = vset.pattern.permute.xlu0 1
    %4023 = vperm.xlu0 %4022, %v2557
    %v4024 = vpop.permute.xlu0 %4023
    %4026 = vset.pattern.permute.xlu0 1
    %4027 = vperm.xlu0 %4026, %v2558
    %v4028 = vpop.permute.xlu0 %4027
    %4030 = vset.pattern.permute.xlu0 1
    %4031 = vperm.xlu0 %4030, %v2559
    %v4032 = vpop.permute.xlu0 %4031
    %4034 = vset.pattern.permute.xlu0 1
    %4035 = vperm.xlu0 %4034, %v2560
    %v4036 = vpop.permute.xlu0 %4035
    %4038 = vset.pattern.permute.xlu0 1
    %4039 = vperm.xlu0 %4038, %v2561
    %v4040 = vpop.permute.xlu0 %4039
    %4042 = vset.pattern.permute.xlu0 1
    %4043 = vperm.xlu0 %4042, %v2562
    %v4044 = vpop.permute.xlu0 %4043
    %4046 = vset.pattern.permute.xlu0 1
    %4047 = vperm.xlu0 %4046, %v2563
    %v4048 = vpop.permute.xlu0 %4047
    %4050 = vset.pattern.permute.xlu0 1
    %4051 = vperm.xlu0 %4050, %v2564
    %v4052 = vpop.permute.xlu0 %4051
    %4054 = vset.pattern.permute.xlu0 1
    %4055 = vperm.xlu0 %4054, %v2565
    %v4056 = vpop.permute.xlu0 %4055
    %4058 = vset.pattern.permute.xlu0 1
    %4059 = vperm.xlu0 %4058, %v2566
    %v4060 = vpop.permute.xlu0 %4059
    %4062 = vset.pattern.permute.xlu0 1
    %4063 = vperm.xlu0 %4062, %v2567
    %v4064 = vpop.permute.xlu0 %4063
    %4066 = vset.pattern.permute.xlu0 1
    %4067 = vperm.xlu0 %4066, %v2568
    %v4068 = vpop.permute.xlu0 %4067
    %4070 = vset.pattern.permute.xlu0 1
    %4071 = vperm.xlu0 %4070, %v2569
    %v4072 = vpop.permute.xlu0 %4071
    %4074 = vset.pattern.permute.xlu0 1
    %4075 = vperm.xlu0 %4074, %v2570
    %v4076 = vpop.permute.xlu0 %4075
    %4078 = vset.pattern.permute.xlu0 1
    %4079 = vperm.xlu0 %4078, %v2571
    %v4080 = vpop.permute.xlu0 %4079
    %4082 = vset.pattern.permute.xlu0 1
    %4083 = vperm.xlu0 %4082, %v2572
    %v4084 = vpop.permute.xlu0 %4083
    %4086 = vset.pattern.permute.xlu0 1
    %4087 = vperm.xlu0 %4086, %v2573
    %v4088 = vpop.permute.xlu0 %4087
    %4090 = vset.pattern.permute.xlu0 1
    %4091 = vperm.xlu0 %4090, %v2574
    %v4092 = vpop.permute.xlu0 %4091
    %4094 = vset.pattern.permute.xlu0 1
    %4095 = vperm.xlu0 %4094, %v2575
    %v4096 = vpop.permute.xlu0 %4095
    %4098 = vset.pattern.permute.xlu0 1
    %4099 = vperm.xlu0 %4098, %v2576
    %v4100 = vpop.permute.xlu0 %4099
    %4102 = vset.pattern.permute.xlu0 1
    %4103 = vperm.xlu0 %4102, %v2577
    %v4104 = vpop.permute.xlu0 %4103
    %4106 = vset.pattern.permute.xlu0 1
    %4107 = vperm.xlu0 %4106, %v2578
    %v4108 = vpop.permute.xlu0 %4107
    %4110 = vset.pattern.permute.xlu0 1
    %4111 = vperm.xlu0 %4110, %v2579
    %v4112 = vpop.permute.xlu0 %4111
    %4114 = vset.pattern.permute.xlu0 1
    %4115 = vperm.xlu0 %4114, %v2580
    %v4116 = vpop.permute.xlu0 %4115
    %4118 = vset.pattern.permute.xlu0 1
    %4119 = vperm.xlu0 %4118, %v2581
    %v4120 = vpop.permute.xlu0 %4119
    %4122 = vset.pattern.permute.xlu0 1
    %4123 = vperm.xlu0 %4122, %v2582
    %v4124 = vpop.permute.xlu0 %4123
    %4126 = vset.pattern.permute.xlu0 1
    %4127 = vperm.xlu0 %4126, %v2583
    %v4128 = vpop.permute.xlu0 %4127
    %4130 = vset.pattern.permute.xlu0 1
    %4131 = vperm.xlu0 %4130, %v2584
    %v4132 = vpop.permute.xlu0 %4131
    %4134 = vset.pattern.permute.xlu0 1
    %4135 = vperm.xlu0 %4134, %v2585
    %v4136 = vpop.permute.xlu0 %4135
    %4138 = vset.pattern.permute.xlu0 1
    %4139 = vperm.xlu0 %4138, %v2586
    %v4140 = vpop.permute.xlu0 %4139
    %4142 = vset.pattern.permute.xlu0 1
    %4143 = vperm.xlu0 %4142, %v2587
    %v4144 = vpop.permute.xlu0 %4143
    %4146 = vset.pattern.permute.xlu0 1
    %4147 = vperm.xlu0 %4146, %v2588
    %v4148 = vpop.permute.xlu0 %4147
    %4150 = vset.pattern.permute.xlu0 1
    %4151 = vperm.xlu0 %4150, %v2589
    %v4152 = vpop.permute.xlu0 %4151
    %4154 = vset.pattern.permute.xlu0 1
    %4155 = vperm.xlu0 %4154, %v2590
    %v4156 = vpop.permute.xlu0 %4155
    %4158 = vset.pattern.permute.xlu0 1
    %4159 = vperm.xlu0 %4158, %v2591
    %v4160 = vpop.permute.xlu0 %4159
    %4162 = vset.pattern.permute.xlu0 1
    %4163 = vperm.xlu0 %4162, %v2592
    %v4164 = vpop.permute.xlu0 %4163
    %4166 = vset.pattern.permute.xlu0 1
    %4167 = vperm.xlu0 %4166, %v2593
    %v4168 = vpop.permute.xlu0 %4167
    %4170 = vset.pattern.permute.xlu0 1
    %4171 = vperm.xlu0 %4170, %v2594
    %v4172 = vpop.permute.xlu0 %4171
    %4174 = vset.pattern.permute.xlu0 1
    %4175 = vperm.xlu0 %4174, %v2595
    %v4176 = vpop.permute.xlu0 %4175
    %4178 = vset.pattern.permute.xlu0 1
    %4179 = vperm.xlu0 %4178, %v2596
    %v4180 = vpop.permute.xlu0 %4179
    %4182 = vset.pattern.permute.xlu0 1
    %4183 = vperm.xlu0 %4182, %v2597
    %v4184 = vpop.permute.xlu0 %4183
    %4186 = vset.pattern.permute.xlu0 1
    %4187 = vperm.xlu0 %4186, %v2598
    %v4188 = vpop.permute.xlu0 %4187
    %4190 = vset.pattern.permute.xlu0 1
    %4191 = vperm.xlu0 %4190, %v2599
    %v4192 = vpop.permute.xlu0 %4191
    %4194 = vset.pattern.permute.xlu0 1
    %4195 = vperm.xlu0 %4194, %v2600
    %v4196 = vpop.permute.xlu0 %4195
    %4198 = vset.pattern.permute.xlu0 1
    %4199 = vperm.xlu0 %4198, %v2601
    %v4200 = vpop.permute.xlu0 %4199
    %v4202 = vmul.f32 %v3564, %v1797
    %v4203 = vmul.f32 %v3568, %v1797
    %v4204 = vmul.f32 %v3572, %v1797
    %v4205 = vmul.f32 %v3576, %v1797
    %v4206 = vmul.f32 %v3580, %v1797
    %v4207 = vmul.f32 %v3584, %v1797
    %v4208 = vmul.f32 %v3588, %v1797
    %v4209 = vmul.f32 %v3592, %v1797
    %v4210 = vmul.f32 %v3596, %v1797
    %v4211 = vmul.f32 %v3600, %v1797
    %v4212 = vmul.f32 %v3604, %v1797
    %v4213 = vmul.f32 %v3608, %v1797
    %v4214 = vmul.f32 %v3612, %v1797
    %v4215 = vmul.f32 %v3616, %v1797
    %v4216 = vmul.f32 %v3620, %v1797
    %v4217 = vmul.f32 %v3624, %v1797
    %v4218 = vmul.f32 %v3628, %v1797
    %v4219 = vmul.f32 %v3632, %v1797
    %v4220 = vmul.f32 %v3636, %v1797
    %v4221 = vmul.f32 %v3640, %v1797
    %v4222 = vmul.f32 %v3644, %v1797
    %v4223 = vmul.f32 %v3648, %v1797
    %v4224 = vmul.f32 %v3652, %v1797
    %v4225 = vmul.f32 %v3656, %v1797
    %v4226 = vmul.f32 %v3660, %v1797
    %v4227 = vmul.f32 %v3664, %v1797
    %v4228 = vmul.f32 %v3668, %v1797
    %v4229 = vmul.f32 %v3672, %v1797
    %v4230 = vmul.f32 %v3676, %v1797
    %v4231 = vmul.f32 %v3680, %v1797
    %v4232 = vmul.f32 %v3684, %v1797
    %v4233 = vmul.f32 %v3688, %v1797
    %v4234 = vmul.f32 %v3692, %v1797
    %v4235 = vmul.f32 %v3696, %v1797
    %v4236 = vmul.f32 %v3700, %v1797
    %v4237 = vmul.f32 %v3704, %v1797
    %v4238 = vmul.f32 %v3708, %v1797
    %v4239 = vmul.f32 %v3712, %v1797
    %v4240 = vmul.f32 %v3716, %v1797
    %v4241 = vmul.f32 %v3720, %v1797
    %v4242 = vmul.f32 %v3724, %v1797
    %v4243 = vmul.f32 %v3728, %v1797
    %v4244 = vmul.f32 %v3732, %v1797
    %v4245 = vmul.f32 %v3736, %v1797
    %v4246 = vmul.f32 %v3740, %v1797
    %v4247 = vmul.f32 %v3744, %v1797
    %v4248 = vmul.f32 %v3748, %v1797
    %v4249 = vmul.f32 %v3752, %v1797
    %v4250 = vmul.f32 %v3756, %v1797
    %v4251 = vmul.f32 %v3760, %v1797
    %v4252 = vmul.f32 %v3764, %v1797
    %v4253 = vmul.f32 %v3768, %v1797
    %v4254 = vmul.f32 %v3772, %v1797
    %v4255 = vmul.f32 %v3776, %v1797
    %v4256 = vmul.f32 %v3780, %v1797
    %v4257 = vmul.f32 %v3784, %v1797
    %v4258 = vmul.f32 %v3788, %v1797
    %v4259 = vmul.f32 %v3792, %v1797
    %v4260 = vmul.f32 %v3796, %v1797
    %v4261 = vmul.f32 %v3800, %v1797
    %v4262 = vmul.f32 %v3804, %v1797
    %v4263 = vmul.f32 %v3808, %v1797
    %v4264 = vmul.f32 %v3812, %v1797
    %v4265 = vmul.f32 %v3816, %v1797
    %v4266 = vmul.f32 %v3820, %v1797
    %v4267 = vmul.f32 %v3824, %v1797
    %v4268 = vmul.f32 %v3828, %v1797
    %v4269 = vmul.f32 %v3832, %v1797
    %v4270 = vmul.f32 %v3836, %v1797
    %v4271 = vmul.f32 %v3840, %v1797
    %v4272 = vmul.f32 %v3844, %v1797
    %v4273 = vmul.f32 %v3848, %v1797
    %v4274 = vmul.f32 %v3852, %v1797
    %v4275 = vmul.f32 %v3856, %v1797
    %v4276 = vmul.f32 %v3860, %v1797
    %v4277 = vmul.f32 %v3864, %v1797
    %v4278 = vmul.f32 %v3868, %v1797
    %v4279 = vmul.f32 %v3872, %v1797
    %v4280 = vmul.f32 %v3876, %v1797
    %v4281 = vmul.f32 %v3880, %v1797
    %v4282 = vmul.f32 %v3884, %v1797
    %v4283 = vmul.f32 %v3888, %v1797
    %v4284 = vmul.f32 %v3892, %v1797
    %v4285 = vmul.f32 %v3896, %v1797
    %v4286 = vmul.f32 %v3900, %v1797
    %v4287 = vmul.f32 %v3904, %v1797
    %v4288 = vmul.f32 %v3908, %v1797
    %v4289 = vmul.f32 %v3912, %v1797
    %v4290 = vmul.f32 %v3916, %v1797
    %v4291 = vmul.f32 %v3920, %v1797
    %v4292 = vmul.f32 %v3924, %v1797
    %v4293 = vmul.f32 %v3928, %v1797
    %v4294 = vmul.f32 %v3932, %v1797
    %v4295 = vmul.f32 %v3936, %v1797
    %v4296 = vmul.f32 %v3940, %v1797
    %v4297 = vmul.f32 %v3944, %v1797
    %v4298 = vmul.f32 %v3948, %v1797
    %v4299 = vmul.f32 %v3952, %v1797
    %v4300 = vmul.f32 %v3956, %v1797
    %v4301 = vmul.f32 %v3960, %v1797
    %v4302 = vmul.f32 %v3964, %v1797
    %v4303 = vmul.f32 %v3968, %v1797
    %v4304 = vmul.f32 %v3972, %v1797
    %v4305 = vmul.f32 %v3976, %v1797
    %v4306 = vmul.f32 %v3980, %v1797
    %v4307 = vmul.f32 %v3984, %v1797
    %v4308 = vmul.f32 %v3988, %v1797
    %v4309 = vmul.f32 %v3992, %v1797
    %v4310 = vmul.f32 %v3996, %v1797
    %v4311 = vmul.f32 %v4000, %v1797
    %v4312 = vmul.f32 %v4004, %v1797
    %v4313 = vmul.f32 %v4008, %v1797
    %v4314 = vmul.f32 %v4012, %v1797
    %v4315 = vmul.f32 %v4016, %v1797
    %v4316 = vmul.f32 %v4020, %v1797
    %v4317 = vmul.f32 %v4024, %v1797
    %v4318 = vmul.f32 %v4028, %v1797
    %v4319 = vmul.f32 %v4032, %v1797
    %v4320 = vmul.f32 %v4036, %v1797
    %v4321 = vmul.f32 %v4040, %v1797
    %v4322 = vmul.f32 %v4044, %v1797
    %v4323 = vmul.f32 %v4048, %v1797
    %v4324 = vmul.f32 %v4052, %v1797
    %v4325 = vmul.f32 %v4056, %v1797
    %v4326 = vmul.f32 %v4060, %v1797
    %v4327 = vmul.f32 %v4064, %v1797
    %v4328 = vmul.f32 %v4068, %v1797
    %v4329 = vmul.f32 %v4072, %v1797
    %v4330 = vmul.f32 %v4076, %v1797
    %v4331 = vmul.f32 %v4080, %v1797
    %v4332 = vmul.f32 %v4084, %v1797
    %v4333 = vmul.f32 %v4088, %v1797
    %v4334 = vmul.f32 %v4092, %v1797
    %v4335 = vmul.f32 %v4096, %v1797
    %v4336 = vmul.f32 %v4100, %v1797
    %v4337 = vmul.f32 %v4104, %v1797
    %v4338 = vmul.f32 %v4108, %v1797
    %v4339 = vmul.f32 %v4112, %v1797
    %v4340 = vmul.f32 %v4116, %v1797
    %v4341 = vmul.f32 %v4120, %v1797
    %v4342 = vmul.f32 %v4124, %v1797
    %v4343 = vmul.f32 %v4128, %v1797
    %v4344 = vmul.f32 %v4132, %v1797
    %v4345 = vmul.f32 %v4136, %v1797
    %v4346 = vmul.f32 %v4140, %v1797
    %v4347 = vmul.f32 %v4144, %v1797
    %v4348 = vmul.f32 %v4148, %v1797
    %v4349 = vmul.f32 %v4152, %v1797
    %v4350 = vmul.f32 %v4156, %v1797
    %v4351 = vmul.f32 %v4160, %v1797
    %v4352 = vmul.f32 %v4164, %v1797
    %v4353 = vmul.f32 %v4168, %v1797
    %v4354 = vmul.f32 %v4172, %v1797
    %v4355 = vmul.f32 %v4176, %v1797
    %v4356 = vmul.f32 %v4180, %v1797
    %v4357 = vmul.f32 %v4184, %v1797
    %v4358 = vmul.f32 %v4188, %v1797
    %v4359 = vmul.f32 %v4192, %v1797
    %v4360 = vmul.f32 %v4196, %v1797
    %v4361 = vmul.f32 %v4200, %v1797
    %v4362 = vadd.f32 %v3402, %v4202
    %v4363 = vadd.f32 %v3403, %v4203
    %v4364 = vadd.f32 %v3404, %v4204
    %v4365 = vadd.f32 %v3405, %v4205
    %v4366 = vadd.f32 %v3406, %v4206
    %v4367 = vadd.f32 %v3407, %v4207
    %v4368 = vadd.f32 %v3408, %v4208
    %v4369 = vadd.f32 %v3409, %v4209
    %v4370 = vadd.f32 %v3410, %v4210
    %v4371 = vadd.f32 %v3411, %v4211
    %v4372 = vadd.f32 %v3412, %v4212
    %v4373 = vadd.f32 %v3413, %v4213
    %v4374 = vadd.f32 %v3414, %v4214
    %v4375 = vadd.f32 %v3415, %v4215
    %v4376 = vadd.f32 %v3416, %v4216
    %v4377 = vadd.f32 %v3417, %v4217
    %v4378 = vadd.f32 %v3418, %v4218
    %v4379 = vadd.f32 %v3419, %v4219
    %v4380 = vadd.f32 %v3420, %v4220
    %v4381 = vadd.f32 %v3421, %v4221
    %v4382 = vadd.f32 %v3422, %v4222
    %v4383 = vadd.f32 %v3423, %v4223
    %v4384 = vadd.f32 %v3424, %v4224
    %v4385 = vadd.f32 %v3425, %v4225
    %v4386 = vadd.f32 %v3426, %v4226
    %v4387 = vadd.f32 %v3427, %v4227
    %v4388 = vadd.f32 %v3428, %v4228
    %v4389 = vadd.f32 %v3429, %v4229
    %v4390 = vadd.f32 %v3430, %v4230
    %v4391 = vadd.f32 %v3431, %v4231
    %v4392 = vadd.f32 %v3432, %v4232
    %v4393 = vadd.f32 %v3433, %v4233
    %v4394 = vadd.f32 %v3434, %v4234
    %v4395 = vadd.f32 %v3435, %v4235
    %v4396 = vadd.f32 %v3436, %v4236
    %v4397 = vadd.f32 %v3437, %v4237
    %v4398 = vadd.f32 %v3438, %v4238
    %v4399 = vadd.f32 %v3439, %v4239
    %v4400 = vadd.f32 %v3440, %v4240
    %v4401 = vadd.f32 %v3441, %v4241
    %v4402 = vadd.f32 %v3442, %v4242
    %v4403 = vadd.f32 %v3443, %v4243
    %v4404 = vadd.f32 %v3444, %v4244
    %v4405 = vadd.f32 %v3445, %v4245
    %v4406 = vadd.f32 %v3446, %v4246
    %v4407 = vadd.f32 %v3447, %v4247
    %v4408 = vadd.f32 %v3448, %v4248
    %v4409 = vadd.f32 %v3449, %v4249
    %v4410 = vadd.f32 %v3450, %v4250
    %v4411 = vadd.f32 %v3451, %v4251
    %v4412 = vadd.f32 %v3452, %v4252
    %v4413 = vadd.f32 %v3453, %v4253
    %v4414 = vadd.f32 %v3454, %v4254
    %v4415 = vadd.f32 %v3455, %v4255
    %v4416 = vadd.f32 %v3456, %v4256
    %v4417 = vadd.f32 %v3457, %v4257
    %v4418 = vadd.f32 %v3458, %v4258
    %v4419 = vadd.f32 %v3459, %v4259
    %v4420 = vadd.f32 %v3460, %v4260
    %v4421 = vadd.f32 %v3461, %v4261
    %v4422 = vadd.f32 %v3462, %v4262
    %v4423 = vadd.f32 %v3463, %v4263
    %v4424 = vadd.f32 %v3464, %v4264
    %v4425 = vadd.f32 %v3465, %v4265
    %v4426 = vadd.f32 %v3466, %v4266
    %v4427 = vadd.f32 %v3467, %v4267
    %v4428 = vadd.f32 %v3468, %v4268
    %v4429 = vadd.f32 %v3469, %v4269
    %v4430 = vadd.f32 %v3470, %v4270
    %v4431 = vadd.f32 %v3471, %v4271
    %v4432 = vadd.f32 %v3472, %v4272
    %v4433 = vadd.f32 %v3473, %v4273
    %v4434 = vadd.f32 %v3474, %v4274
    %v4435 = vadd.f32 %v3475, %v4275
    %v4436 = vadd.f32 %v3476, %v4276
    %v4437 = vadd.f32 %v3477, %v4277
    %v4438 = vadd.f32 %v3478, %v4278
    %v4439 = vadd.f32 %v3479, %v4279
    %v4440 = vadd.f32 %v3480, %v4280
    %v4441 = vadd.f32 %v3481, %v4281
    %v4442 = vadd.f32 %v3482, %v4282
    %v4443 = vadd.f32 %v3483, %v4283
    %v4444 = vadd.f32 %v3484, %v4284
    %v4445 = vadd.f32 %v3485, %v4285
    %v4446 = vadd.f32 %v3486, %v4286
    %v4447 = vadd.f32 %v3487, %v4287
    %v4448 = vadd.f32 %v3488, %v4288
    %v4449 = vadd.f32 %v3489, %v4289
    %v4450 = vadd.f32 %v3490, %v4290
    %v4451 = vadd.f32 %v3491, %v4291
    %v4452 = vadd.f32 %v3492, %v4292
    %v4453 = vadd.f32 %v3493, %v4293
    %v4454 = vadd.f32 %v3494, %v4294
    %v4455 = vadd.f32 %v3495, %v4295
    %v4456 = vadd.f32 %v3496, %v4296
    %v4457 = vadd.f32 %v3497, %v4297
    %v4458 = vadd.f32 %v3498, %v4298
    %v4459 = vadd.f32 %v3499, %v4299
    %v4460 = vadd.f32 %v3500, %v4300
    %v4461 = vadd.f32 %v3501, %v4301
    %v4462 = vadd.f32 %v3502, %v4302
    %v4463 = vadd.f32 %v3503, %v4303
    %v4464 = vadd.f32 %v3504, %v4304
    %v4465 = vadd.f32 %v3505, %v4305
    %v4466 = vadd.f32 %v3506, %v4306
    %v4467 = vadd.f32 %v3507, %v4307
    %v4468 = vadd.f32 %v3508, %v4308
    %v4469 = vadd.f32 %v3509, %v4309
    %v4470 = vadd.f32 %v3510, %v4310
    %v4471 = vadd.f32 %v3511, %v4311
    %v4472 = vadd.f32 %v3512, %v4312
    %v4473 = vadd.f32 %v3513, %v4313
    %v4474 = vadd.f32 %v3514, %v4314
    %v4475 = vadd.f32 %v3515, %v4315
    %v4476 = vadd.f32 %v3516, %v4316
    %v4477 = vadd.f32 %v3517, %v4317
    %v4478 = vadd.f32 %v3518, %v4318
    %v4479 = vadd.f32 %v3519, %v4319
    %v4480 = vadd.f32 %v3520, %v4320
    %v4481 = vadd.f32 %v3521, %v4321
    %v4482 = vadd.f32 %v3522, %v4322
    %v4483 = vadd.f32 %v3523, %v4323
    %v4484 = vadd.f32 %v3524, %v4324
    %v4485 = vadd.f32 %v3525, %v4325
    %v4486 = vadd.f32 %v3526, %v4326
    %v4487 = vadd.f32 %v3527, %v4327
    %v4488 = vadd.f32 %v3528, %v4328
    %v4489 = vadd.f32 %v3529, %v4329
    %v4490 = vadd.f32 %v3530, %v4330
    %v4491 = vadd.f32 %v3531, %v4331
    %v4492 = vadd.f32 %v3532, %v4332
    %v4493 = vadd.f32 %v3533, %v4333
    %v4494 = vadd.f32 %v3534, %v4334
    %v4495 = vadd.f32 %v3535, %v4335
    %v4496 = vadd.f32 %v3536, %v4336
    %v4497 = vadd.f32 %v3537, %v4337
    %v4498 = vadd.f32 %v3538, %v4338
    %v4499 = vadd.f32 %v3539, %v4339
    %v4500 = vadd.f32 %v3540, %v4340
    %v4501 = vadd.f32 %v3541, %v4341
    %v4502 = vadd.f32 %v3542, %v4342
    %v4503 = vadd.f32 %v3543, %v4343
    %v4504 = vadd.f32 %v3544, %v4344
    %v4505 = vadd.f32 %v3545, %v4345
    %v4506 = vadd.f32 %v3546, %v4346
    %v4507 = vadd.f32 %v3547, %v4347
    %v4508 = vadd.f32 %v3548, %v4348
    %v4509 = vadd.f32 %v3549, %v4349
    %v4510 = vadd.f32 %v3550, %v4350
    %v4511 = vadd.f32 %v3551, %v4351
    %v4512 = vadd.f32 %v3552, %v4352
    %v4513 = vadd.f32 %v3553, %v4353
    %v4514 = vadd.f32 %v3554, %v4354
    %v4515 = vadd.f32 %v3555, %v4355
    %v4516 = vadd.f32 %v3556, %v4356
    %v4517 = vadd.f32 %v3557, %v4357
    %v4518 = vadd.f32 %v3558, %v4358
    %v4519 = vadd.f32 %v3559, %v4359
    %v4520 = vadd.f32 %v3560, %v4360
    %v4521 = vadd.f32 %v3561, %v4361
    %v4522 = vadd.f32 %v4362, %v2120
    %v4523 = vadd.f32 %v4363, %v2120
    %v4524 = vadd.f32 %v4364, %v2120
    %v4525 = vadd.f32 %v4365, %v2120
    %v4526 = vadd.f32 %v4366, %v2120
    %v4527 = vadd.f32 %v4367, %v2120
    %v4528 = vadd.f32 %v4368, %v2120
    %v4529 = vadd.f32 %v4369, %v2120
    %v4530 = vadd.f32 %v4370, %v2120
    %v4531 = vadd.f32 %v4371, %v2120
    %v4532 = vadd.f32 %v4372, %v2120
    %v4533 = vadd.f32 %v4373, %v2120
    %v4534 = vadd.f32 %v4374, %v2120
    %v4535 = vadd.f32 %v4375, %v2120
    %v4536 = vadd.f32 %v4376, %v2120
    %v4537 = vadd.f32 %v4377, %v2120
    %v4538 = vadd.f32 %v4378, %v2120
    %v4539 = vadd.f32 %v4379, %v2120
    %v4540 = vadd.f32 %v4380, %v2120
    %v4541 = vadd.f32 %v4381, %v2120
    %v4542 = vadd.f32 %v4382, %v2120
    %v4543 = vadd.f32 %v4383, %v2120
    %v4544 = vadd.f32 %v4384, %v2120
    %v4545 = vadd.f32 %v4385, %v2120
    %v4546 = vadd.f32 %v4386, %v2120
    %v4547 = vadd.f32 %v4387, %v2120
    %v4548 = vadd.f32 %v4388, %v2120
    %v4549 = vadd.f32 %v4389, %v2120
    %v4550 = vadd.f32 %v4390, %v2120
    %v4551 = vadd.f32 %v4391, %v2120
    %v4552 = vadd.f32 %v4392, %v2120
    %v4553 = vadd.f32 %v4393, %v2120
    %v4554 = vadd.f32 %v4394, %v2120
    %v4555 = vadd.f32 %v4395, %v2120
    %v4556 = vadd.f32 %v4396, %v2120
    %v4557 = vadd.f32 %v4397, %v2120
    %v4558 = vadd.f32 %v4398, %v2120
    %v4559 = vadd.f32 %v4399, %v2120
    %v4560 = vadd.f32 %v4400, %v2120
    %v4561 = vadd.f32 %v4401, %v2120
    %v4562 = vadd.f32 %v4402, %v2120
    %v4563 = vadd.f32 %v4403, %v2120
    %v4564 = vadd.f32 %v4404, %v2120
    %v4565 = vadd.f32 %v4405, %v2120
    %v4566 = vadd.f32 %v4406, %v2120
    %v4567 = vadd.f32 %v4407, %v2120
    %v4568 = vadd.f32 %v4408, %v2120
    %v4569 = vadd.f32 %v4409, %v2120
    %v4570 = vadd.f32 %v4410, %v2120
    %v4571 = vadd.f32 %v4411, %v2120
    %v4572 = vadd.f32 %v4412, %v2120
    %v4573 = vadd.f32 %v4413, %v2120
    %v4574 = vadd.f32 %v4414, %v2120
    %v4575 = vadd.f32 %v4415, %v2120
    %v4576 = vadd.f32 %v4416, %v2120
    %v4577 = vadd.f32 %v4417, %v2120
    %v4578 = vadd.f32 %v4418, %v2120
    %v4579 = vadd.f32 %v4419, %v2120
    %v4580 = vadd.f32 %v4420, %v2120
    %v4581 = vadd.f32 %v4421, %v2120
    %v4582 = vadd.f32 %v4422, %v2120
    %v4583 = vadd.f32 %v4423, %v2120
    %v4584 = vadd.f32 %v4424, %v2120
    %v4585 = vadd.f32 %v4425, %v2120
    %v4586 = vadd.f32 %v4426, %v2120
    %v4587 = vadd.f32 %v4427, %v2120
    %v4588 = vadd.f32 %v4428, %v2120
    %v4589 = vadd.f32 %v4429, %v2120
    %v4590 = vadd.f32 %v4430, %v2120
    %v4591 = vadd.f32 %v4431, %v2120
    %v4592 = vadd.f32 %v4432, %v2120
    %v4593 = vadd.f32 %v4433, %v2120
    %v4594 = vadd.f32 %v4434, %v2120
    %v4595 = vadd.f32 %v4435, %v2120
    %v4596 = vadd.f32 %v4436, %v2120
    %v4597 = vadd.f32 %v4437, %v2120
    %v4598 = vadd.f32 %v4438, %v2120
    %v4599 = vadd.f32 %v4439, %v2120
    %v4600 = vadd.f32 %v4440, %v2120
    %v4601 = vadd.f32 %v4441, %v2120
    %v4602 = vadd.f32 %v4442, %v2120
    %v4603 = vadd.f32 %v4443, %v2120
    %v4604 = vadd.f32 %v4444, %v2120
    %v4605 = vadd.f32 %v4445, %v2120
    %v4606 = vadd.f32 %v4446, %v2120
    %v4607 = vadd.f32 %v4447, %v2120
    %v4608 = vadd.f32 %v4448, %v2120
    %v4609 = vadd.f32 %v4449, %v2120
    %v4610 = vadd.f32 %v4450, %v2120
    %v4611 = vadd.f32 %v4451, %v2120
    %v4612 = vadd.f32 %v4452, %v2120
    %v4613 = vadd.f32 %v4453, %v2120
    %v4614 = vadd.f32 %v4454, %v2120
    %v4615 = vadd.f32 %v4455, %v2120
    %v4616 = vadd.f32 %v4456, %v2120
    %v4617 = vadd.f32 %v4457, %v2120
    %v4618 = vadd.f32 %v4458, %v2120
    %v4619 = vadd.f32 %v4459, %v2120
    %v4620 = vadd.f32 %v4460, %v2120
    %v4621 = vadd.f32 %v4461, %v2120
    %v4622 = vadd.f32 %v4462, %v2120
    %v4623 = vadd.f32 %v4463, %v2120
    %v4624 = vadd.f32 %v4464, %v2120
    %v4625 = vadd.f32 %v4465, %v2120
    %v4626 = vadd.f32 %v4466, %v2120
    %v4627 = vadd.f32 %v4467, %v2120
    %v4628 = vadd.f32 %v4468, %v2120
    %v4629 = vadd.f32 %v4469, %v2120
    %v4630 = vadd.f32 %v4470, %v2120
    %v4631 = vadd.f32 %v4471, %v2120
    %v4632 = vadd.f32 %v4472, %v2120
    %v4633 = vadd.f32 %v4473, %v2120
    %v4634 = vadd.f32 %v4474, %v2120
    %v4635 = vadd.f32 %v4475, %v2120
    %v4636 = vadd.f32 %v4476, %v2120
    %v4637 = vadd.f32 %v4477, %v2120
    %v4638 = vadd.f32 %v4478, %v2120
    %v4639 = vadd.f32 %v4479, %v2120
    %v4640 = vadd.f32 %v4480, %v2120
    %v4641 = vadd.f32 %v4481, %v2120
    %v4642 = vadd.f32 %v4482, %v2120
    %v4643 = vadd.f32 %v4483, %v2120
    %v4644 = vadd.f32 %v4484, %v2120
    %v4645 = vadd.f32 %v4485, %v2120
    %v4646 = vadd.f32 %v4486, %v2120
    %v4647 = vadd.f32 %v4487, %v2120
    %v4648 = vadd.f32 %v4488, %v2120
    %v4649 = vadd.f32 %v4489, %v2120
    %v4650 = vadd.f32 %v4490, %v2120
    %v4651 = vadd.f32 %v4491, %v2120
    %v4652 = vadd.f32 %v4492, %v2120
    %v4653 = vadd.f32 %v4493, %v2120
    %v4654 = vadd.f32 %v4494, %v2120
    %v4655 = vadd.f32 %v4495, %v2120
    %v4656 = vadd.f32 %v4496, %v2120
    %v4657 = vadd.f32 %v4497, %v2120
    %v4658 = vadd.f32 %v4498, %v2120
    %v4659 = vadd.f32 %v4499, %v2120
    %v4660 = vadd.f32 %v4500, %v2120
    %v4661 = vadd.f32 %v4501, %v2120
    %v4662 = vadd.f32 %v4502, %v2120
    %v4663 = vadd.f32 %v4503, %v2120
    %v4664 = vadd.f32 %v4504, %v2120
    %v4665 = vadd.f32 %v4505, %v2120
    %v4666 = vadd.f32 %v4506, %v2120
    %v4667 = vadd.f32 %v4507, %v2120
    %v4668 = vadd.f32 %v4508, %v2120
    %v4669 = vadd.f32 %v4509, %v2120
    %v4670 = vadd.f32 %v4510, %v2120
    %v4671 = vadd.f32 %v4511, %v2120
    %v4672 = vadd.f32 %v4512, %v2120
    %v4673 = vadd.f32 %v4513, %v2120
    %v4674 = vadd.f32 %v4514, %v2120
    %v4675 = vadd.f32 %v4515, %v2120
    %v4676 = vadd.f32 %v4516, %v2120
    %v4677 = vadd.f32 %v4517, %v2120
    %v4678 = vadd.f32 %v4518, %v2120
    %v4679 = vadd.f32 %v4519, %v2120
    %v4680 = vadd.f32 %v4520, %v2120
    %v4681 = vadd.f32 %v4521, %v2120
    %v4682 = vmax.f32 %v4522, 0.0
    %v4683 = vmax.f32 %v4523, 0.0
    %v4684 = vmax.f32 %v4524, 0.0
    %v4685 = vmax.f32 %v4525, 0.0
    %v4686 = vmax.f32 %v4526, 0.0
    %v4687 = vmax.f32 %v4527, 0.0
    %v4688 = vmax.f32 %v4528, 0.0
    %v4689 = vmax.f32 %v4529, 0.0
    %v4690 = vmax.f32 %v4530, 0.0
    %v4691 = vmax.f32 %v4531, 0.0
    %v4692 = vmax.f32 %v4532, 0.0
    %v4693 = vmax.f32 %v4533, 0.0
    %v4694 = vmax.f32 %v4534, 0.0
    %v4695 = vmax.f32 %v4535, 0.0
    %v4696 = vmax.f32 %v4536, 0.0
    %v4697 = vmax.f32 %v4537, 0.0
    %v4698 = vmax.f32 %v4538, 0.0
    %v4699 = vmax.f32 %v4539, 0.0
    %v4700 = vmax.f32 %v4540, 0.0
    %v4701 = vmax.f32 %v4541, 0.0
    %v4702 = vmax.f32 %v4542, 0.0
    %v4703 = vmax.f32 %v4543, 0.0
    %v4704 = vmax.f32 %v4544, 0.0
    %v4705 = vmax.f32 %v4545, 0.0
    %v4706 = vmax.f32 %v4546, 0.0
    %v4707 = vmax.f32 %v4547, 0.0
    %v4708 = vmax.f32 %v4548, 0.0
    %v4709 = vmax.f32 %v4549, 0.0
    %v4710 = vmax.f32 %v4550, 0.0
    %v4711 = vmax.f32 %v4551, 0.0
    %v4712 = vmax.f32 %v4552, 0.0
    %v4713 = vmax.f32 %v4553, 0.0
    %v4714 = vmax.f32 %v4554, 0.0
    %v4715 = vmax.f32 %v4555, 0.0
    %v4716 = vmax.f32 %v4556, 0.0
    %v4717 = vmax.f32 %v4557, 0.0
    %v4718 = vmax.f32 %v4558, 0.0
    %v4719 = vmax.f32 %v4559, 0.0
    %v4720 = vmax.f32 %v4560, 0.0
    %v4721 = vmax.f32 %v4561, 0.0
    %v4722 = vmax.f32 %v4562, 0.0
    %v4723 = vmax.f32 %v4563, 0.0
    %v4724 = vmax.f32 %v4564, 0.0
    %v4725 = vmax.f32 %v4565, 0.0
    %v4726 = vmax.f32 %v4566, 0.0
    %v4727 = vmax.f32 %v4567, 0.0
    %v4728 = vmax.f32 %v4568, 0.0
    %v4729 = vmax.f32 %v4569, 0.0
    %v4730 = vmax.f32 %v4570, 0.0
    %v4731 = vmax.f32 %v4571, 0.0
    %v4732 = vmax.f32 %v4572, 0.0
    %v4733 = vmax.f32 %v4573, 0.0
    %v4734 = vmax.f32 %v4574, 0.0
    %v4735 = vmax.f32 %v4575, 0.0
    %v4736 = vmax.f32 %v4576, 0.0
    %v4737 = vmax.f32 %v4577, 0.0
    %v4738 = vmax.f32 %v4578, 0.0
    %v4739 = vmax.f32 %v4579, 0.0
    %v4740 = vmax.f32 %v4580, 0.0
    %v4741 = vmax.f32 %v4581, 0.0
    %v4742 = vmax.f32 %v4582, 0.0
    %v4743 = vmax.f32 %v4583, 0.0
    %v4744 = vmax.f32 %v4584, 0.0
    %v4745 = vmax.f32 %v4585, 0.0
    %v4746 = vmax.f32 %v4586, 0.0
    %v4747 = vmax.f32 %v4587, 0.0
    %v4748 = vmax.f32 %v4588, 0.0
    %v4749 = vmax.f32 %v4589, 0.0
    %v4750 = vmax.f32 %v4590, 0.0
    %v4751 = vmax.f32 %v4591, 0.0
    %v4752 = vmax.f32 %v4592, 0.0
    %v4753 = vmax.f32 %v4593, 0.0
    %v4754 = vmax.f32 %v4594, 0.0
    %v4755 = vmax.f32 %v4595, 0.0
    %v4756 = vmax.f32 %v4596, 0.0
    %v4757 = vmax.f32 %v4597, 0.0
    %v4758 = vmax.f32 %v4598, 0.0
    %v4759 = vmax.f32 %v4599, 0.0
    %v4760 = vmax.f32 %v4600, 0.0
    %v4761 = vmax.f32 %v4601, 0.0
    %v4762 = vmax.f32 %v4602, 0.0
    %v4763 = vmax.f32 %v4603, 0.0
    %v4764 = vmax.f32 %v4604, 0.0
    %v4765 = vmax.f32 %v4605, 0.0
    %v4766 = vmax.f32 %v4606, 0.0
    %v4767 = vmax.f32 %v4607, 0.0
    %v4768 = vmax.f32 %v4608, 0.0
    %v4769 = vmax.f32 %v4609, 0.0
    %v4770 = vmax.f32 %v4610, 0.0
    %v4771 = vmax.f32 %v4611, 0.0
    %v4772 = vmax.f32 %v4612, 0.0
    %v4773 = vmax.f32 %v4613, 0.0
    %v4774 = vmax.f32 %v4614, 0.0
    %v4775 = vmax.f32 %v4615, 0.0
    %v4776 = vmax.f32 %v4616, 0.0
    %v4777 = vmax.f32 %v4617, 0.0
    %v4778 = vmax.f32 %v4618, 0.0
    %v4779 = vmax.f32 %v4619, 0.0
    %v4780 = vmax.f32 %v4620, 0.0
    %v4781 = vmax.f32 %v4621, 0.0
    %v4782 = vmax.f32 %v4622, 0.0
    %v4783 = vmax.f32 %v4623, 0.0
    %v4784 = vmax.f32 %v4624, 0.0
    %v4785 = vmax.f32 %v4625, 0.0
    %v4786 = vmax.f32 %v4626, 0.0
    %v4787 = vmax.f32 %v4627, 0.0
    %v4788 = vmax.f32 %v4628, 0.0
    %v4789 = vmax.f32 %v4629, 0.0
    %v4790 = vmax.f32 %v4630, 0.0
    %v4791 = vmax.f32 %v4631, 0.0
    %v4792 = vmax.f32 %v4632, 0.0
    %v4793 = vmax.f32 %v4633, 0.0
    %v4794 = vmax.f32 %v4634, 0.0
    %v4795 = vmax.f32 %v4635, 0.0
    %v4796 = vmax.f32 %v4636, 0.0
    %v4797 = vmax.f32 %v4637, 0.0
    %v4798 = vmax.f32 %v4638, 0.0
    %v4799 = vmax.f32 %v4639, 0.0
    %v4800 = vmax.f32 %v4640, 0.0
    %v4801 = vmax.f32 %v4641, 0.0
    %v4802 = vmax.f32 %v4642, 0.0
    %v4803 = vmax.f32 %v4643, 0.0
    %v4804 = vmax.f32 %v4644, 0.0
    %v4805 = vmax.f32 %v4645, 0.0
    %v4806 = vmax.f32 %v4646, 0.0
    %v4807 = vmax.f32 %v4647, 0.0
    %v4808 = vmax.f32 %v4648, 0.0
    %v4809 = vmax.f32 %v4649, 0.0
    %v4810 = vmax.f32 %v4650, 0.0
    %v4811 = vmax.f32 %v4651, 0.0
    %v4812 = vmax.f32 %v4652, 0.0
    %v4813 = vmax.f32 %v4653, 0.0
    %v4814 = vmax.f32 %v4654, 0.0
    %v4815 = vmax.f32 %v4655, 0.0
    %v4816 = vmax.f32 %v4656, 0.0
    %v4817 = vmax.f32 %v4657, 0.0
    %v4818 = vmax.f32 %v4658, 0.0
    %v4819 = vmax.f32 %v4659, 0.0
    %v4820 = vmax.f32 %v4660, 0.0
    %v4821 = vmax.f32 %v4661, 0.0
    %v4822 = vmax.f32 %v4662, 0.0
    %v4823 = vmax.f32 %v4663, 0.0
    %v4824 = vmax.f32 %v4664, 0.0
    %v4825 = vmax.f32 %v4665, 0.0
    %v4826 = vmax.f32 %v4666, 0.0
    %v4827 = vmax.f32 %v4667, 0.0
    %v4828 = vmax.f32 %v4668, 0.0
    %v4829 = vmax.f32 %v4669, 0.0
    %v4830 = vmax.f32 %v4670, 0.0
    %v4831 = vmax.f32 %v4671, 0.0
    %v4832 = vmax.f32 %v4672, 0.0
    %v4833 = vmax.f32 %v4673, 0.0
    %v4834 = vmax.f32 %v4674, 0.0
    %v4835 = vmax.f32 %v4675, 0.0
    %v4836 = vmax.f32 %v4676, 0.0
    %v4837 = vmax.f32 %v4677, 0.0
    %v4838 = vmax.f32 %v4678, 0.0
    %v4839 = vmax.f32 %v4679, 0.0
    %v4840 = vmax.f32 %v4680, 0.0
    %v4841 = vmax.f32 %v4681, 0.0
    %v4842 = vpack.c.bf16 %v2283, %v2282
    %v4843 = vpack.c.bf16 %v2285, %v2284
    %v4844 = vpack.c.bf16 %v2287, %v2286
    %v4845 = vpack.c.bf16 %v2289, %v2288
    %v4846 = vpack.c.bf16 %v2291, %v2290
    %v4847 = vpack.c.bf16 %v2293, %v2292
    %v4848 = vpack.c.bf16 %v2295, %v2294
    %v4849 = vpack.c.bf16 %v2297, %v2296
    %v4850 = vpack.c.bf16 %v2299, %v2298
    %v4851 = vpack.c.bf16 %v2301, %v2300
    %v4852 = vpack.c.bf16 %v2303, %v2302
    %v4853 = vpack.c.bf16 %v2305, %v2304
    %v4854 = vpack.c.bf16 %v2307, %v2306
    %v4855 = vpack.c.bf16 %v2309, %v2308
    %v4856 = vpack.c.bf16 %v2311, %v2310
    %v4857 = vpack.c.bf16 %v2313, %v2312
    %v4858 = vpack.c.bf16 %v2315, %v2314
    %v4859 = vpack.c.bf16 %v2317, %v2316
    %v4860 = vpack.c.bf16 %v2319, %v2318
    %v4861 = vpack.c.bf16 %v2321, %v2320
    %v4862 = vpack.c.bf16 %v2323, %v2322
    %v4863 = vpack.c.bf16 %v2325, %v2324
    %v4864 = vpack.c.bf16 %v2327, %v2326
    %v4865 = vpack.c.bf16 %v2329, %v2328
    %v4866 = vpack.c.bf16 %v2331, %v2330
    %v4867 = vpack.c.bf16 %v2333, %v2332
    %v4868 = vpack.c.bf16 %v2335, %v2334
    %v4869 = vpack.c.bf16 %v2337, %v2336
    %v4870 = vpack.c.bf16 %v2339, %v2338
    %v4871 = vpack.c.bf16 %v2341, %v2340
    %v4872 = vpack.c.bf16 %v2343, %v2342
    %v4873 = vpack.c.bf16 %v2345, %v2344
    %v4874 = vpack.c.bf16 %v2347, %v2346
    %v4875 = vpack.c.bf16 %v2349, %v2348
    %v4876 = vpack.c.bf16 %v2351, %v2350
    %v4877 = vpack.c.bf16 %v2353, %v2352
    %v4878 = vpack.c.bf16 %v2355, %v2354
    %v4879 = vpack.c.bf16 %v2357, %v2356
    %v4880 = vpack.c.bf16 %v2359, %v2358
    %v4881 = vpack.c.bf16 %v2361, %v2360
    %v4882 = vpack.c.bf16 %v2363, %v2362
    %v4883 = vpack.c.bf16 %v2365, %v2364
    %v4884 = vpack.c.bf16 %v2367, %v2366
    %v4885 = vpack.c.bf16 %v2369, %v2368
    %v4886 = vpack.c.bf16 %v2371, %v2370
    %v4887 = vpack.c.bf16 %v2373, %v2372
    %v4888 = vpack.c.bf16 %v2375, %v2374
    %v4889 = vpack.c.bf16 %v2377, %v2376
    %v4890 = vpack.c.bf16 %v2379, %v2378
    %v4891 = vpack.c.bf16 %v2381, %v2380
    %v4892 = vpack.c.bf16 %v2383, %v2382
    %v4893 = vpack.c.bf16 %v2385, %v2384
    %v4894 = vpack.c.bf16 %v2387, %v2386
    %v4895 = vpack.c.bf16 %v2389, %v2388
    %v4896 = vpack.c.bf16 %v2391, %v2390
    %v4897 = vpack.c.bf16 %v2393, %v2392
    %v4898 = vpack.c.bf16 %v2395, %v2394
    %v4899 = vpack.c.bf16 %v2397, %v2396
    %v4900 = vpack.c.bf16 %v2399, %v2398
    %v4901 = vpack.c.bf16 %v2401, %v2400
    %v4902 = vpack.c.bf16 %v2403, %v2402
    %v4903 = vpack.c.bf16 %v2405, %v2404
    %v4904 = vpack.c.bf16 %v2407, %v2406
    %v4905 = vpack.c.bf16 %v2409, %v2408
    %v4906 = vpack.c.bf16 %v2411, %v2410
    %v4907 = vpack.c.bf16 %v2413, %v2412
    %v4908 = vpack.c.bf16 %v2415, %v2414
    %v4909 = vpack.c.bf16 %v2417, %v2416
    %v4910 = vpack.c.bf16 %v2419, %v2418
    %v4911 = vpack.c.bf16 %v2421, %v2420
    %v4912 = vpack.c.bf16 %v2423, %v2422
    %v4913 = vpack.c.bf16 %v2425, %v2424
    %v4914 = vpack.c.bf16 %v2427, %v2426
    %v4915 = vpack.c.bf16 %v2429, %v2428
    %v4916 = vpack.c.bf16 %v2431, %v2430
    %v4917 = vpack.c.bf16 %v2433, %v2432
    %v4918 = vpack.c.bf16 %v2435, %v2434
    %v4919 = vpack.c.bf16 %v2437, %v2436
    %v4920 = vpack.c.bf16 %v2439, %v2438
    %v4921 = vpack.c.bf16 %v2441, %v2440
    %v4922 = vpack.c.bf16 %v4683, %v4682
    %v4923 = vpack.c.bf16 %v4685, %v4684
    %v4924 = vpack.c.bf16 %v4687, %v4686
    %v4925 = vpack.c.bf16 %v4689, %v4688
    %v4926 = vpack.c.bf16 %v4691, %v4690
    %v4927 = vpack.c.bf16 %v4693, %v4692
    %v4928 = vpack.c.bf16 %v4695, %v4694
    %v4929 = vpack.c.bf16 %v4697, %v4696
    %v4930 = vpack.c.bf16 %v4699, %v4698
    %v4931 = vpack.c.bf16 %v4701, %v4700
    %v4932 = vpack.c.bf16 %v4703, %v4702
    %v4933 = vpack.c.bf16 %v4705, %v4704
    %v4934 = vpack.c.bf16 %v4707, %v4706
    %v4935 = vpack.c.bf16 %v4709, %v4708
    %v4936 = vpack.c.bf16 %v4711, %v4710
    %v4937 = vpack.c.bf16 %v4713, %v4712
    %v4938 = vpack.c.bf16 %v4715, %v4714
    %v4939 = vpack.c.bf16 %v4717, %v4716
    %v4940 = vpack.c.bf16 %v4719, %v4718
    %v4941 = vpack.c.bf16 %v4721, %v4720
    %v4942 = vpack.c.bf16 %v4723, %v4722
    %v4943 = vpack.c.bf16 %v4725, %v4724
    %v4944 = vpack.c.bf16 %v4727, %v4726
    %v4945 = vpack.c.bf16 %v4729, %v4728
    %v4946 = vpack.c.bf16 %v4731, %v4730
    %v4947 = vpack.c.bf16 %v4733, %v4732
    %v4948 = vpack.c.bf16 %v4735, %v4734
    %v4949 = vpack.c.bf16 %v4737, %v4736
    %v4950 = vpack.c.bf16 %v4739, %v4738
    %v4951 = vpack.c.bf16 %v4741, %v4740
    %v4952 = vpack.c.bf16 %v4743, %v4742
    %v4953 = vpack.c.bf16 %v4745, %v4744
    %v4954 = vpack.c.bf16 %v4747, %v4746
    %v4955 = vpack.c.bf16 %v4749, %v4748
    %v4956 = vpack.c.bf16 %v4751, %v4750
    %v4957 = vpack.c.bf16 %v4753, %v4752
    %v4958 = vpack.c.bf16 %v4755, %v4754
    %v4959 = vpack.c.bf16 %v4757, %v4756
    %v4960 = vpack.c.bf16 %v4759, %v4758
    %v4961 = vpack.c.bf16 %v4761, %v4760
    %v4962 = vpack.c.bf16 %v4763, %v4762
    %v4963 = vpack.c.bf16 %v4765, %v4764
    %v4964 = vpack.c.bf16 %v4767, %v4766
    %v4965 = vpack.c.bf16 %v4769, %v4768
    %v4966 = vpack.c.bf16 %v4771, %v4770
    %v4967 = vpack.c.bf16 %v4773, %v4772
    %v4968 = vpack.c.bf16 %v4775, %v4774
    %v4969 = vpack.c.bf16 %v4777, %v4776
    %v4970 = vpack.c.bf16 %v4779, %v4778
    %v4971 = vpack.c.bf16 %v4781, %v4780
    %v4972 = vpack.c.bf16 %v4783, %v4782
    %v4973 = vpack.c.bf16 %v4785, %v4784
    %v4974 = vpack.c.bf16 %v4787, %v4786
    %v4975 = vpack.c.bf16 %v4789, %v4788
    %v4976 = vpack.c.bf16 %v4791, %v4790
    %v4977 = vpack.c.bf16 %v4793, %v4792
    %v4978 = vpack.c.bf16 %v4795, %v4794
    %v4979 = vpack.c.bf16 %v4797, %v4796
    %v4980 = vpack.c.bf16 %v4799, %v4798
    %v4981 = vpack.c.bf16 %v4801, %v4800
    %v4982 = vpack.c.bf16 %v4803, %v4802
    %v4983 = vpack.c.bf16 %v4805, %v4804
    %v4984 = vpack.c.bf16 %v4807, %v4806
    %v4985 = vpack.c.bf16 %v4809, %v4808
    %v4986 = vpack.c.bf16 %v4811, %v4810
    %v4987 = vpack.c.bf16 %v4813, %v4812
    %v4988 = vpack.c.bf16 %v4815, %v4814
    %v4989 = vpack.c.bf16 %v4817, %v4816
    %v4990 = vpack.c.bf16 %v4819, %v4818
    %v4991 = vpack.c.bf16 %v4821, %v4820
    %v4992 = vpack.c.bf16 %v4823, %v4822
    %v4993 = vpack.c.bf16 %v4825, %v4824
    %v4994 = vpack.c.bf16 %v4827, %v4826
    %v4995 = vpack.c.bf16 %v4829, %v4828
    %v4996 = vpack.c.bf16 %v4831, %v4830
    %v4997 = vpack.c.bf16 %v4833, %v4832
    %v4998 = vpack.c.bf16 %v4835, %v4834
    %v4999 = vpack.c.bf16 %v4837, %v4836
    %v5000 = vpack.c.bf16 %v4839, %v4838
    %v5001 = vpack.c.bf16 %v4841, %v4840
    %v5002 = vld [vmem:[%s4] sm:$0xff]
    %v5003 = vld [vmem:[%s4 + $0x8] sm:$0xff]
    %v5004 = vld [vmem:[%s4 + $0x10] sm:$0xff]
    %v5005 = vld [vmem:[%s4 + $0x18] sm:$0xff]
    %v5006 = vld [vmem:[%s4 + $0x20] sm:$0xff]
    %v5007 = vld [vmem:[%s4 + $0x28] sm:$0xff]
    %v5008 = vld [vmem:[%s4 + $0x30] sm:$0xff]
    %v5009 = vld [vmem:[%s4 + $0x38] sm:$0xff]
    %v5010 = vpack.c.bf16 %v5003, %v5002
    %v5011 = vpack.c.bf16 %v5005, %v5004
    %v5012 = vpack.c.bf16 %v5007, %v5006
    %v5013 = vpack.c.bf16 %v5009, %v5008
    %v5014 = vld [vmem:[%s5] sm:$0x1]
    %v5016 = vperm.slane %v5014, 0
    %vm5018 = vcmask 523264
    %v5020 = vsel %vm5018, %v4842, 0
    %v5023 = vsel %vm5018, %v4843, 0
    %v5026 = vsel %vm5018, %v4844, 0
    %v5029 = vsel %vm5018, %v4845, 0
    %v5032 = vsel %vm5018, %v4846, 0
    %v5035 = vsel %vm5018, %v4847, 0
    %v5038 = vsel %vm5018, %v4848, 0
    %v5041 = vsel %vm5018, %v4849, 0
    %v5044 = vsel %vm5018, %v4850, 0
    %v5047 = vsel %vm5018, %v4851, 0
    %v5050 = vsel %vm5018, %v4852, 0
    %v5053 = vsel %vm5018, %v4853, 0
    %v5056 = vsel %vm5018, %v4854, 0
    %v5059 = vsel %vm5018, %v4855, 0
    %v5062 = vsel %vm5018, %v4856, 0
    %v5065 = vsel %vm5018, %v4857, 0
    %v5068 = vsel %vm5018, %v4858, 0
    %v5071 = vsel %vm5018, %v4859, 0
    %v5074 = vsel %vm5018, %v4860, 0
    %v5077 = vsel %vm5018, %v4861, 0
    %v5080 = vsel %vm5018, %v4862, 0
    %v5083 = vsel %vm5018, %v4863, 0
    %v5086 = vsel %vm5018, %v4864, 0
    %v5089 = vsel %vm5018, %v4865, 0
    %v5092 = vsel %vm5018, %v4866, 0
    %v5095 = vsel %vm5018, %v4867, 0
    %v5098 = vsel %vm5018, %v4868, 0
    %v5101 = vsel %vm5018, %v4869, 0
    %v5104 = vsel %vm5018, %v4870, 0
    %v5107 = vsel %vm5018, %v4871, 0
    %v5110 = vsel %vm5018, %v4872, 0
    %v5113 = vsel %vm5018, %v4873, 0
    %v5116 = vsel %vm5018, %v4874, 0
    %v5119 = vsel %vm5018, %v4875, 0
    %v5122 = vsel %vm5018, %v4876, 0
    %v5125 = vsel %vm5018, %v4877, 0
    %v5128 = vsel %vm5018, %v4878, 0
    %v5131 = vsel %vm5018, %v4879, 0
    %v5134 = vsel %vm5018, %v4880, 0
    %v5137 = vsel %vm5018, %v4881, 0
    %v5140 = vsel %vm5018, %v4882, 0
    %v5143 = vsel %vm5018, %v4883, 0
    %v5146 = vsel %vm5018, %v4884, 0
    %v5149 = vsel %vm5018, %v4885, 0
    %v5152 = vsel %vm5018, %v4886, 0
    %v5155 = vsel %vm5018, %v4887, 0
    %v5158 = vsel %vm5018, %v4888, 0
    %v5161 = vsel %vm5018, %v4889, 0
    %v5164 = vsel %vm5018, %v4890, 0
    %v5167 = vsel %vm5018, %v4891, 0
    %v5170 = vsel %vm5018, %v4892, 0
    %v5173 = vsel %vm5018, %v4893, 0
    %v5176 = vsel %vm5018, %v4894, 0
    %v5179 = vsel %vm5018, %v4895, 0
    %v5182 = vsel %vm5018, %v4896, 0
    %v5185 = vsel %vm5018, %v4897, 0
    %v5188 = vsel %vm5018, %v4898, 0
    %v5191 = vsel %vm5018, %v4899, 0
    %v5194 = vsel %vm5018, %v4900, 0
    %v5197 = vsel %vm5018, %v4901, 0
    %v5200 = vsel %vm5018, %v4902, 0
    %v5203 = vsel %vm5018, %v4903, 0
    %v5206 = vsel %vm5018, %v4904, 0
    %v5209 = vsel %vm5018, %v4905, 0
    %v5212 = vsel %vm5018, %v4906, 0
    %v5215 = vsel %vm5018, %v4907, 0
    %v5218 = vsel %vm5018, %v4908, 0
    %v5221 = vsel %vm5018, %v4909, 0
    %v5224 = vsel %vm5018, %v4910, 0
    %v5227 = vsel %vm5018, %v4911, 0
    %v5230 = vsel %vm5018, %v4912, 0
    %v5233 = vsel %vm5018, %v4913, 0
    %v5236 = vsel %vm5018, %v4914, 0
    %v5239 = vsel %vm5018, %v4915, 0
    %v5242 = vsel %vm5018, %v4916, 0
    %v5245 = vsel %vm5018, %v4917, 0
    %v5248 = vsel %vm5018, %v4918, 0
    %v5251 = vsel %vm5018, %v4919, 0
    %v5254 = vsel %vm5018, %v4920, 0
    %v5257 = vsel %vm5018, %v4921, 0
    %v5260 = vsel %vm5018, %v4922, 0
    %v5263 = vsel %vm5018, %v4923, 0
    %v5266 = vsel %vm5018, %v4924, 0
    %v5269 = vsel %vm5018, %v4925, 0
    %v5272 = vsel %vm5018, %v4926, 0
    %v5275 = vsel %vm5018, %v4927, 0
    %v5278 = vsel %vm5018, %v4928, 0
    %v5281 = vsel %vm5018, %v4929, 0
    %v5284 = vsel %vm5018, %v4930, 0
    %v5287 = vsel %vm5018, %v4931, 0
    %v5290 = vsel %vm5018, %v4932, 0
    %v5293 = vsel %vm5018, %v4933, 0
    %v5296 = vsel %vm5018, %v4934, 0
    %v5299 = vsel %vm5018, %v4935, 0
    %v5302 = vsel %vm5018, %v4936, 0
    %v5305 = vsel %vm5018, %v4937, 0
    %v5308 = vsel %vm5018, %v4938, 0
    %v5311 = vsel %vm5018, %v4939, 0
    %v5314 = vsel %vm5018, %v4940, 0
    %v5317 = vsel %vm5018, %v4941, 0
    %v5320 = vsel %vm5018, %v4942, 0
    %v5323 = vsel %vm5018, %v4943, 0
    %v5326 = vsel %vm5018, %v4944, 0
    %v5329 = vsel %vm5018, %v4945, 0
    %v5332 = vsel %vm5018, %v4946, 0
    %v5335 = vsel %vm5018, %v4947, 0
    %v5338 = vsel %vm5018, %v4948, 0
    %v5341 = vsel %vm5018, %v4949, 0
    %v5344 = vsel %vm5018, %v4950, 0
    %v5347 = vsel %vm5018, %v4951, 0
    %v5350 = vsel %vm5018, %v4952, 0
    %v5353 = vsel %vm5018, %v4953, 0
    %v5356 = vsel %vm5018, %v4954, 0
    %v5359 = vsel %vm5018, %v4955, 0
    %v5362 = vsel %vm5018, %v4956, 0
    %v5365 = vsel %vm5018, %v4957, 0
    %v5368 = vsel %vm5018, %v4958, 0
    %v5371 = vsel %vm5018, %v4959, 0
    %v5374 = vsel %vm5018, %v4960, 0
    %v5377 = vsel %vm5018, %v4961, 0
    %v5380 = vsel %vm5018, %v4962, 0
    %v5383 = vsel %vm5018, %v4963, 0
    %v5386 = vsel %vm5018, %v4964, 0
    %v5389 = vsel %vm5018, %v4965, 0
    %v5392 = vsel %vm5018, %v4966, 0
    %v5395 = vsel %vm5018, %v4967, 0
    %v5398 = vsel %vm5018, %v4968, 0
    %v5401 = vsel %vm5018, %v4969, 0
    %v5404 = vsel %vm5018, %v4970, 0
    %v5407 = vsel %vm5018, %v4971, 0
    %v5410 = vsel %vm5018, %v4972, 0
    %v5413 = vsel %vm5018, %v4973, 0
    %v5416 = vsel %vm5018, %v4974, 0
    %v5419 = vsel %vm5018, %v4975, 0
    %v5422 = vsel %vm5018, %v4976, 0
    %v5425 = vsel %vm5018, %v4977, 0
    %v5428 = vsel %vm5018, %v4978, 0
    %v5431 = vsel %vm5018, %v4979, 0
    %v5434 = vsel %vm5018, %v4980, 0
    %v5437 = vsel %vm5018, %v4981, 0
    %v5440 = vsel %vm5018, %v4982, 0
    %v5443 = vsel %vm5018, %v4983, 0
    %v5446 = vsel %vm5018, %v4984, 0
    %v5449 = vsel %vm5018, %v4985, 0
    %v5452 = vsel %vm5018, %v4986, 0
    %v5455 = vsel %vm5018, %v4987, 0
    %v5458 = vsel %vm5018, %v4988, 0
    %v5461 = vsel %vm5018, %v4989, 0
    %v5464 = vsel %vm5018, %v4990, 0
    %v5467 = vsel %vm5018, %v4991, 0
    %v5470 = vsel %vm5018, %v4992, 0
    %v5473 = vsel %vm5018, %v4993, 0
    %v5476 = vsel %vm5018, %v4994, 0
    %v5479 = vsel %vm5018, %v4995, 0
    %v5482 = vsel %vm5018, %v4996, 0
    %v5485 = vsel %vm5018, %v4997, 0
    %v5488 = vsel %vm5018, %v4998, 0
    %v5491 = vsel %vm5018, %v4999, 0
    %v5494 = vsel %vm5018, %v5000, 0
    %v5497 = vsel %vm5018, %v5001, 0
    %5499 = vmatpush.bf16.msra.mxu0 0
    %5500 = vmatpush.bf16.msra.mxu0 0
    %5501 = vmatpush.bf16.msra.mxu0 0
    %5502 = vmatpush.bf16.msra.mxu0 0
    %5503 = vmatpush.bf16.msra.mxu0 %v5013
    %5504 = vmatpush.bf16.msra.mxu0 %v5012
    %5505 = vmatpush.bf16.msra.mxu0 %v5011
    %5506 = vmatpush.bf16.msra.mxu0 %v5010
    %5507 = vmatmul.bf16.gmra.mxu0 %v5020
    %v5508 = vpop.f32.mrf.mxu0
    %v5509 = vadd.f32 %v5016, %v5508
    %v5510 = vpop.f32.mrf.mxu0
    %v5511 = vadd.f32 %v5016, %v5510
    %5512 = vmatmul.bf16.gmra.mxu0 %v5023
    %v5513 = vpop.f32.mrf.mxu0
    %v5514 = vadd.f32 %v5016, %v5513
    %v5515 = vpop.f32.mrf.mxu0
    %v5516 = vadd.f32 %v5016, %v5515
    %5517 = vmatmul.bf16.gmra.mxu0 %v5026
    %v5518 = vpop.f32.mrf.mxu0
    %v5519 = vadd.f32 %v5016, %v5518
    %v5520 = vpop.f32.mrf.mxu0
    %v5521 = vadd.f32 %v5016, %v5520
    %5522 = vmatmul.bf16.gmra.mxu0 %v5029
    %v5523 = vpop.f32.mrf.mxu0
    %v5524 = vadd.f32 %v5016, %v5523
    %v5525 = vpop.f32.mrf.mxu0
    %v5526 = vadd.f32 %v5016, %v5525
    %5527 = vmatmul.bf16.gmra.mxu0 %v5032
    %v5528 = vpop.f32.mrf.mxu0
    %v5529 = vadd.f32 %v5016, %v5528
    %v5530 = vpop.f32.mrf.mxu0
    %v5531 = vadd.f32 %v5016, %v5530
    %5532 = vmatmul.bf16.gmra.mxu0 %v5035
    %v5533 = vpop.f32.mrf.mxu0
    %v5534 = vadd.f32 %v5016, %v5533
    %v5535 = vpop.f32.mrf.mxu0
    %v5536 = vadd.f32 %v5016, %v5535
    %5537 = vmatmul.bf16.gmra.mxu0 %v5038
    %v5538 = vpop.f32.mrf.mxu0
    %v5539 = vadd.f32 %v5016, %v5538
    %v5540 = vpop.f32.mrf.mxu0
    %v5541 = vadd.f32 %v5016, %v5540
    %5542 = vmatmul.bf16.gmra.mxu0 %v5041
    %v5543 = vpop.f32.mrf.mxu0
    %v5544 = vadd.f32 %v5016, %v5543
    %v5545 = vpop.f32.mrf.mxu0
    %v5546 = vadd.f32 %v5016, %v5545
    %5547 = vmatmul.bf16.gmra.mxu0 %v5044
    %v5548 = vpop.f32.mrf.mxu0
    %v5549 = vadd.f32 %v5016, %v5548
    %v5550 = vpop.f32.mrf.mxu0
    %v5551 = vadd.f32 %v5016, %v5550
    %5552 = vmatmul.bf16.gmra.mxu0 %v5047
    %v5553 = vpop.f32.mrf.mxu0
    %v5554 = vadd.f32 %v5016, %v5553
    %v5555 = vpop.f32.mrf.mxu0
    %v5556 = vadd.f32 %v5016, %v5555
    %5557 = vmatmul.bf16.gmra.mxu0 %v5050
    %v5558 = vpop.f32.mrf.mxu0
    %v5559 = vadd.f32 %v5016, %v5558
    %v5560 = vpop.f32.mrf.mxu0
    %v5561 = vadd.f32 %v5016, %v5560
    %5562 = vmatmul.bf16.gmra.mxu0 %v5053
    %v5563 = vpop.f32.mrf.mxu0
    %v5564 = vadd.f32 %v5016, %v5563
    %v5565 = vpop.f32.mrf.mxu0
    %v5566 = vadd.f32 %v5016, %v5565
    %5567 = vmatmul.bf16.gmra.mxu0 %v5056
    %v5568 = vpop.f32.mrf.mxu0
    %v5569 = vadd.f32 %v5016, %v5568
    %v5570 = vpop.f32.mrf.mxu0
    %v5571 = vadd.f32 %v5016, %v5570
    %5572 = vmatmul.bf16.gmra.mxu0 %v5059
    %v5573 = vpop.f32.mrf.mxu0
    %v5574 = vadd.f32 %v5016, %v5573
    %v5575 = vpop.f32.mrf.mxu0
    %v5576 = vadd.f32 %v5016, %v5575
    %5577 = vmatmul.bf16.gmra.mxu0 %v5062
    %v5578 = vpop.f32.mrf.mxu0
    %v5579 = vadd.f32 %v5016, %v5578
    %v5580 = vpop.f32.mrf.mxu0
    %v5581 = vadd.f32 %v5016, %v5580
    %5582 = vmatmul.bf16.gmra.mxu0 %v5065
    %v5583 = vpop.f32.mrf.mxu0
    %v5584 = vadd.f32 %v5016, %v5583
    %v5585 = vpop.f32.mrf.mxu0
    %v5586 = vadd.f32 %v5016, %v5585
    %5587 = vmatmul.bf16.gmra.mxu0 %v5068
    %v5588 = vpop.f32.mrf.mxu0
    %v5589 = vadd.f32 %v5016, %v5588
    %v5590 = vpop.f32.mrf.mxu0
    %v5591 = vadd.f32 %v5016, %v5590
    %5592 = vmatmul.bf16.gmra.mxu0 %v5071
    %v5593 = vpop.f32.mrf.mxu0
    %v5594 = vadd.f32 %v5016, %v5593
    %v5595 = vpop.f32.mrf.mxu0
    %v5596 = vadd.f32 %v5016, %v5595
    %5597 = vmatmul.bf16.gmra.mxu0 %v5074
    %v5598 = vpop.f32.mrf.mxu0
    %v5599 = vadd.f32 %v5016, %v5598
    %v5600 = vpop.f32.mrf.mxu0
    %v5601 = vadd.f32 %v5016, %v5600
    %5602 = vmatmul.bf16.gmra.mxu0 %v5077
    %v5603 = vpop.f32.mrf.mxu0
    %v5604 = vadd.f32 %v5016, %v5603
    %v5605 = vpop.f32.mrf.mxu0
    %v5606 = vadd.f32 %v5016, %v5605
    %5607 = vmatmul.bf16.gmra.mxu0 %v5080
    %v5608 = vpop.f32.mrf.mxu0
    %v5609 = vadd.f32 %v5016, %v5608
    %v5610 = vpop.f32.mrf.mxu0
    %v5611 = vadd.f32 %v5016, %v5610
    %5612 = vmatmul.bf16.gmra.mxu0 %v5083
    %v5613 = vpop.f32.mrf.mxu0
    %v5614 = vadd.f32 %v5016, %v5613
    %v5615 = vpop.f32.mrf.mxu0
    %v5616 = vadd.f32 %v5016, %v5615
    %5617 = vmatmul.bf16.gmra.mxu0 %v5086
    %v5618 = vpop.f32.mrf.mxu0
    %v5619 = vadd.f32 %v5016, %v5618
    %v5620 = vpop.f32.mrf.mxu0
    %v5621 = vadd.f32 %v5016, %v5620
    %5622 = vmatmul.bf16.gmra.mxu0 %v5089
    %v5623 = vpop.f32.mrf.mxu0
    %v5624 = vadd.f32 %v5016, %v5623
    %v5625 = vpop.f32.mrf.mxu0
    %v5626 = vadd.f32 %v5016, %v5625
    %5627 = vmatmul.bf16.gmra.mxu0 %v5092
    %v5628 = vpop.f32.mrf.mxu0
    %v5629 = vadd.f32 %v5016, %v5628
    %v5630 = vpop.f32.mrf.mxu0
    %v5631 = vadd.f32 %v5016, %v5630
    %5632 = vmatmul.bf16.gmra.mxu0 %v5095
    %v5633 = vpop.f32.mrf.mxu0
    %v5634 = vadd.f32 %v5016, %v5633
    %v5635 = vpop.f32.mrf.mxu0
    %v5636 = vadd.f32 %v5016, %v5635
    %5637 = vmatmul.bf16.gmra.mxu0 %v5098
    %v5638 = vpop.f32.mrf.mxu0
    %v5639 = vadd.f32 %v5016, %v5638
    %v5640 = vpop.f32.mrf.mxu0
    %v5641 = vadd.f32 %v5016, %v5640
    %5642 = vmatmul.bf16.gmra.mxu0 %v5101
    %v5643 = vpop.f32.mrf.mxu0
    %v5644 = vadd.f32 %v5016, %v5643
    %v5645 = vpop.f32.mrf.mxu0
    %v5646 = vadd.f32 %v5016, %v5645
    %5647 = vmatmul.bf16.gmra.mxu0 %v5104
    %v5648 = vpop.f32.mrf.mxu0
    %v5649 = vadd.f32 %v5016, %v5648
    %v5650 = vpop.f32.mrf.mxu0
    %v5651 = vadd.f32 %v5016, %v5650
    %5652 = vmatmul.bf16.gmra.mxu0 %v5107
    %v5653 = vpop.f32.mrf.mxu0
    %v5654 = vadd.f32 %v5016, %v5653
    %v5655 = vpop.f32.mrf.mxu0
    %v5656 = vadd.f32 %v5016, %v5655
    %5657 = vmatmul.bf16.gmra.mxu0 %v5110
    %v5658 = vpop.f32.mrf.mxu0
    %v5659 = vadd.f32 %v5016, %v5658
    %v5660 = vpop.f32.mrf.mxu0
    %v5661 = vadd.f32 %v5016, %v5660
    %5662 = vmatmul.bf16.gmra.mxu0 %v5113
    %v5663 = vpop.f32.mrf.mxu0
    %v5664 = vadd.f32 %v5016, %v5663
    %v5665 = vpop.f32.mrf.mxu0
    %v5666 = vadd.f32 %v5016, %v5665
    %5667 = vmatmul.bf16.gmra.mxu0 %v5116
    %v5668 = vpop.f32.mrf.mxu0
    %v5669 = vadd.f32 %v5016, %v5668
    %v5670 = vpop.f32.mrf.mxu0
    %v5671 = vadd.f32 %v5016, %v5670
    %5672 = vmatmul.bf16.gmra.mxu0 %v5119
    %v5673 = vpop.f32.mrf.mxu0
    %v5674 = vadd.f32 %v5016, %v5673
    %v5675 = vpop.f32.mrf.mxu0
    %v5676 = vadd.f32 %v5016, %v5675
    %5677 = vmatmul.bf16.gmra.mxu0 %v5122
    %v5678 = vpop.f32.mrf.mxu0
    %v5679 = vadd.f32 %v5016, %v5678
    %v5680 = vpop.f32.mrf.mxu0
    %v5681 = vadd.f32 %v5016, %v5680
    %5682 = vmatmul.bf16.gmra.mxu0 %v5125
    %v5683 = vpop.f32.mrf.mxu0
    %v5684 = vadd.f32 %v5016, %v5683
    %v5685 = vpop.f32.mrf.mxu0
    %v5686 = vadd.f32 %v5016, %v5685
    %5687 = vmatmul.bf16.gmra.mxu0 %v5128
    %v5688 = vpop.f32.mrf.mxu0
    %v5689 = vadd.f32 %v5016, %v5688
    %v5690 = vpop.f32.mrf.mxu0
    %v5691 = vadd.f32 %v5016, %v5690
    %5692 = vmatmul.bf16.gmra.mxu0 %v5131
    %v5693 = vpop.f32.mrf.mxu0
    %v5694 = vadd.f32 %v5016, %v5693
    %v5695 = vpop.f32.mrf.mxu0
    %v5696 = vadd.f32 %v5016, %v5695
    %5697 = vmatmul.bf16.gmra.mxu0 %v5134
    %v5698 = vpop.f32.mrf.mxu0
    %v5699 = vadd.f32 %v5016, %v5698
    %v5700 = vpop.f32.mrf.mxu0
    %v5701 = vadd.f32 %v5016, %v5700
    %5702 = vmatmul.bf16.gmra.mxu0 %v5137
    %v5703 = vpop.f32.mrf.mxu0
    %v5704 = vadd.f32 %v5016, %v5703
    %v5705 = vpop.f32.mrf.mxu0
    %v5706 = vadd.f32 %v5016, %v5705
    %5707 = vmatmul.bf16.gmra.mxu0 %v5140
    %v5708 = vpop.f32.mrf.mxu0
    %v5709 = vadd.f32 %v5016, %v5708
    %v5710 = vpop.f32.mrf.mxu0
    %v5711 = vadd.f32 %v5016, %v5710
    %5712 = vmatmul.bf16.gmra.mxu0 %v5143
    %v5713 = vpop.f32.mrf.mxu0
    %v5714 = vadd.f32 %v5016, %v5713
    %v5715 = vpop.f32.mrf.mxu0
    %v5716 = vadd.f32 %v5016, %v5715
    %5717 = vmatmul.bf16.gmra.mxu0 %v5146
    %v5718 = vpop.f32.mrf.mxu0
    %v5719 = vadd.f32 %v5016, %v5718
    %v5720 = vpop.f32.mrf.mxu0
    %v5721 = vadd.f32 %v5016, %v5720
    %5722 = vmatmul.bf16.gmra.mxu0 %v5149
    %v5723 = vpop.f32.mrf.mxu0
    %v5724 = vadd.f32 %v5016, %v5723
    %v5725 = vpop.f32.mrf.mxu0
    %v5726 = vadd.f32 %v5016, %v5725
    %5727 = vmatmul.bf16.gmra.mxu0 %v5152
    %v5728 = vpop.f32.mrf.mxu0
    %v5729 = vadd.f32 %v5016, %v5728
    %v5730 = vpop.f32.mrf.mxu0
    %v5731 = vadd.f32 %v5016, %v5730
    %5732 = vmatmul.bf16.gmra.mxu0 %v5155
    %v5733 = vpop.f32.mrf.mxu0
    %v5734 = vadd.f32 %v5016, %v5733
    %v5735 = vpop.f32.mrf.mxu0
    %v5736 = vadd.f32 %v5016, %v5735
    %5737 = vmatmul.bf16.gmra.mxu0 %v5158
    %v5738 = vpop.f32.mrf.mxu0
    %v5739 = vadd.f32 %v5016, %v5738
    %v5740 = vpop.f32.mrf.mxu0
    %v5741 = vadd.f32 %v5016, %v5740
    %5742 = vmatmul.bf16.gmra.mxu0 %v5161
    %v5743 = vpop.f32.mrf.mxu0
    %v5744 = vadd.f32 %v5016, %v5743
    %v5745 = vpop.f32.mrf.mxu0
    %v5746 = vadd.f32 %v5016, %v5745
    %5747 = vmatmul.bf16.gmra.mxu0 %v5164
    %v5748 = vpop.f32.mrf.mxu0
    %v5749 = vadd.f32 %v5016, %v5748
    %v5750 = vpop.f32.mrf.mxu0
    %v5751 = vadd.f32 %v5016, %v5750
    %5752 = vmatmul.bf16.gmra.mxu0 %v5167
    %v5753 = vpop.f32.mrf.mxu0
    %v5754 = vadd.f32 %v5016, %v5753
    %v5755 = vpop.f32.mrf.mxu0
    %v5756 = vadd.f32 %v5016, %v5755
    %5757 = vmatmul.bf16.gmra.mxu0 %v5170
    %v5758 = vpop.f32.mrf.mxu0
    %v5759 = vadd.f32 %v5016, %v5758
    %v5760 = vpop.f32.mrf.mxu0
    %v5761 = vadd.f32 %v5016, %v5760
    %5762 = vmatmul.bf16.gmra.mxu0 %v5173
    %v5763 = vpop.f32.mrf.mxu0
    %v5764 = vadd.f32 %v5016, %v5763
    %v5765 = vpop.f32.mrf.mxu0
    %v5766 = vadd.f32 %v5016, %v5765
    %5767 = vmatmul.bf16.gmra.mxu0 %v5176
    %v5768 = vpop.f32.mrf.mxu0
    %v5769 = vadd.f32 %v5016, %v5768
    %v5770 = vpop.f32.mrf.mxu0
    %v5771 = vadd.f32 %v5016, %v5770
    %5772 = vmatmul.bf16.gmra.mxu0 %v5179
    %v5773 = vpop.f32.mrf.mxu0
    %v5774 = vadd.f32 %v5016, %v5773
    %v5775 = vpop.f32.mrf.mxu0
    %v5776 = vadd.f32 %v5016, %v5775
    %5777 = vmatmul.bf16.gmra.mxu0 %v5182
    %v5778 = vpop.f32.mrf.mxu0
    %v5779 = vadd.f32 %v5016, %v5778
    %v5780 = vpop.f32.mrf.mxu0
    %v5781 = vadd.f32 %v5016, %v5780
    %5782 = vmatmul.bf16.gmra.mxu0 %v5185
    %v5783 = vpop.f32.mrf.mxu0
    %v5784 = vadd.f32 %v5016, %v5783
    %v5785 = vpop.f32.mrf.mxu0
    %v5786 = vadd.f32 %v5016, %v5785
    %5787 = vmatmul.bf16.gmra.mxu0 %v5188
    %v5788 = vpop.f32.mrf.mxu0
    %v5789 = vadd.f32 %v5016, %v5788
    %v5790 = vpop.f32.mrf.mxu0
    %v5791 = vadd.f32 %v5016, %v5790
    %5792 = vmatmul.bf16.gmra.mxu0 %v5191
    %v5793 = vpop.f32.mrf.mxu0
    %v5794 = vadd.f32 %v5016, %v5793
    %v5795 = vpop.f32.mrf.mxu0
    %v5796 = vadd.f32 %v5016, %v5795
    %5797 = vmatmul.bf16.gmra.mxu0 %v5194
    %v5798 = vpop.f32.mrf.mxu0
    %v5799 = vadd.f32 %v5016, %v5798
    %v5800 = vpop.f32.mrf.mxu0
    %v5801 = vadd.f32 %v5016, %v5800
    %5802 = vmatmul.bf16.gmra.mxu0 %v5197
    %v5803 = vpop.f32.mrf.mxu0
    %v5804 = vadd.f32 %v5016, %v5803
    %v5805 = vpop.f32.mrf.mxu0
    %v5806 = vadd.f32 %v5016, %v5805
    %5807 = vmatmul.bf16.gmra.mxu0 %v5200
    %v5808 = vpop.f32.mrf.mxu0
    %v5809 = vadd.f32 %v5016, %v5808
    %v5810 = vpop.f32.mrf.mxu0
    %v5811 = vadd.f32 %v5016, %v5810
    %5812 = vmatmul.bf16.gmra.mxu0 %v5203
    %v5813 = vpop.f32.mrf.mxu0
    %v5814 = vadd.f32 %v5016, %v5813
    %v5815 = vpop.f32.mrf.mxu0
    %v5816 = vadd.f32 %v5016, %v5815
    %5817 = vmatmul.bf16.gmra.mxu0 %v5206
    %v5818 = vpop.f32.mrf.mxu0
    %v5819 = vadd.f32 %v5016, %v5818
    %v5820 = vpop.f32.mrf.mxu0
    %v5821 = vadd.f32 %v5016, %v5820
    %5822 = vmatmul.bf16.gmra.mxu0 %v5209
    %v5823 = vpop.f32.mrf.mxu0
    %v5824 = vadd.f32 %v5016, %v5823
    %v5825 = vpop.f32.mrf.mxu0
    %v5826 = vadd.f32 %v5016, %v5825
    %5827 = vmatmul.bf16.gmra.mxu0 %v5212
    %v5828 = vpop.f32.mrf.mxu0
    %v5829 = vadd.f32 %v5016, %v5828
    %v5830 = vpop.f32.mrf.mxu0
    %v5831 = vadd.f32 %v5016, %v5830
    %5832 = vmatmul.bf16.gmra.mxu0 %v5215
    %v5833 = vpop.f32.mrf.mxu0
    %v5834 = vadd.f32 %v5016, %v5833
    %v5835 = vpop.f32.mrf.mxu0
    %v5836 = vadd.f32 %v5016, %v5835
    %5837 = vmatmul.bf16.gmra.mxu0 %v5218
    %v5838 = vpop.f32.mrf.mxu0
    %v5839 = vadd.f32 %v5016, %v5838
    %v5840 = vpop.f32.mrf.mxu0
    %v5841 = vadd.f32 %v5016, %v5840
    %5842 = vmatmul.bf16.gmra.mxu0 %v5221
    %v5843 = vpop.f32.mrf.mxu0
    %v5844 = vadd.f32 %v5016, %v5843
    %v5845 = vpop.f32.mrf.mxu0
    %v5846 = vadd.f32 %v5016, %v5845
    %5847 = vmatmul.bf16.gmra.mxu0 %v5224
    %v5848 = vpop.f32.mrf.mxu0
    %v5849 = vadd.f32 %v5016, %v5848
    %v5850 = vpop.f32.mrf.mxu0
    %v5851 = vadd.f32 %v5016, %v5850
    %5852 = vmatmul.bf16.gmra.mxu0 %v5227
    %v5853 = vpop.f32.mrf.mxu0
    %v5854 = vadd.f32 %v5016, %v5853
    %v5855 = vpop.f32.mrf.mxu0
    %v5856 = vadd.f32 %v5016, %v5855
    %5857 = vmatmul.bf16.gmra.mxu0 %v5230
    %v5858 = vpop.f32.mrf.mxu0
    %v5859 = vadd.f32 %v5016, %v5858
    %v5860 = vpop.f32.mrf.mxu0
    %v5861 = vadd.f32 %v5016, %v5860
    %5862 = vmatmul.bf16.gmra.mxu0 %v5233
    %v5863 = vpop.f32.mrf.mxu0
    %v5864 = vadd.f32 %v5016, %v5863
    %v5865 = vpop.f32.mrf.mxu0
    %v5866 = vadd.f32 %v5016, %v5865
    %5867 = vmatmul.bf16.gmra.mxu0 %v5236
    %v5868 = vpop.f32.mrf.mxu0
    %v5869 = vadd.f32 %v5016, %v5868
    %v5870 = vpop.f32.mrf.mxu0
    %v5871 = vadd.f32 %v5016, %v5870
    %5872 = vmatmul.bf16.gmra.mxu0 %v5239
    %v5873 = vpop.f32.mrf.mxu0
    %v5874 = vadd.f32 %v5016, %v5873
    %v5875 = vpop.f32.mrf.mxu0
    %v5876 = vadd.f32 %v5016, %v5875
    %5877 = vmatmul.bf16.gmra.mxu0 %v5242
    %v5878 = vpop.f32.mrf.mxu0
    %v5879 = vadd.f32 %v5016, %v5878
    %v5880 = vpop.f32.mrf.mxu0
    %v5881 = vadd.f32 %v5016, %v5880
    %5882 = vmatmul.bf16.gmra.mxu0 %v5245
    %v5883 = vpop.f32.mrf.mxu0
    %v5884 = vadd.f32 %v5016, %v5883
    %v5885 = vpop.f32.mrf.mxu0
    %v5886 = vadd.f32 %v5016, %v5885
    %5887 = vmatmul.bf16.gmra.mxu0 %v5248
    %v5888 = vpop.f32.mrf.mxu0
    %v5889 = vadd.f32 %v5016, %v5888
    %v5890 = vpop.f32.mrf.mxu0
    %v5891 = vadd.f32 %v5016, %v5890
    %5892 = vmatmul.bf16.gmra.mxu0 %v5251
    %v5893 = vpop.f32.mrf.mxu0
    %v5894 = vadd.f32 %v5016, %v5893
    %v5895 = vpop.f32.mrf.mxu0
    %v5896 = vadd.f32 %v5016, %v5895
    %5897 = vmatmul.bf16.gmra.mxu0 %v5254
    %v5898 = vpop.f32.mrf.mxu0
    %v5899 = vadd.f32 %v5016, %v5898
    %v5900 = vpop.f32.mrf.mxu0
    %v5901 = vadd.f32 %v5016, %v5900
    %5902 = vmatmul.bf16.gmra.mxu0 %v5257
    %v5903 = vpop.f32.mrf.mxu0
    %v5904 = vadd.f32 %v5016, %v5903
    %v5905 = vpop.f32.mrf.mxu0
    %v5906 = vadd.f32 %v5016, %v5905
    %5907 = vmatmul.bf16.gmra.mxu0 %v5260
    %v5908 = vpop.f32.mrf.mxu0
    %v5909 = vadd.f32 %v5016, %v5908
    %v5910 = vpop.f32.mrf.mxu0
    %v5911 = vadd.f32 %v5016, %v5910
    %5912 = vmatmul.bf16.gmra.mxu0 %v5263
    %v5913 = vpop.f32.mrf.mxu0
    %v5914 = vadd.f32 %v5016, %v5913
    %v5915 = vpop.f32.mrf.mxu0
    %v5916 = vadd.f32 %v5016, %v5915
    %5917 = vmatmul.bf16.gmra.mxu0 %v5266
    %v5918 = vpop.f32.mrf.mxu0
    %v5919 = vadd.f32 %v5016, %v5918
    %v5920 = vpop.f32.mrf.mxu0
    %v5921 = vadd.f32 %v5016, %v5920
    %5922 = vmatmul.bf16.gmra.mxu0 %v5269
    %v5923 = vpop.f32.mrf.mxu0
    %v5924 = vadd.f32 %v5016, %v5923
    %v5925 = vpop.f32.mrf.mxu0
    %v5926 = vadd.f32 %v5016, %v5925
    %5927 = vmatmul.bf16.gmra.mxu0 %v5272
    %v5928 = vpop.f32.mrf.mxu0
    %v5929 = vadd.f32 %v5016, %v5928
    %v5930 = vpop.f32.mrf.mxu0
    %v5931 = vadd.f32 %v5016, %v5930
    %5932 = vmatmul.bf16.gmra.mxu0 %v5275
    %v5933 = vpop.f32.mrf.mxu0
    %v5934 = vadd.f32 %v5016, %v5933
    %v5935 = vpop.f32.mrf.mxu0
    %v5936 = vadd.f32 %v5016, %v5935
    %5937 = vmatmul.bf16.gmra.mxu0 %v5278
    %v5938 = vpop.f32.mrf.mxu0
    %v5939 = vadd.f32 %v5016, %v5938
    %v5940 = vpop.f32.mrf.mxu0
    %v5941 = vadd.f32 %v5016, %v5940
    %5942 = vmatmul.bf16.gmra.mxu0 %v5281
    %v5943 = vpop.f32.mrf.mxu0
    %v5944 = vadd.f32 %v5016, %v5943
    %v5945 = vpop.f32.mrf.mxu0
    %v5946 = vadd.f32 %v5016, %v5945
    %5947 = vmatmul.bf16.gmra.mxu0 %v5284
    %v5948 = vpop.f32.mrf.mxu0
    %v5949 = vadd.f32 %v5016, %v5948
    %v5950 = vpop.f32.mrf.mxu0
    %v5951 = vadd.f32 %v5016, %v5950
    %5952 = vmatmul.bf16.gmra.mxu0 %v5287
    %v5953 = vpop.f32.mrf.mxu0
    %v5954 = vadd.f32 %v5016, %v5953
    %v5955 = vpop.f32.mrf.mxu0
    %v5956 = vadd.f32 %v5016, %v5955
    %5957 = vmatmul.bf16.gmra.mxu0 %v5290
    %v5958 = vpop.f32.mrf.mxu0
    %v5959 = vadd.f32 %v5016, %v5958
    %v5960 = vpop.f32.mrf.mxu0
    %v5961 = vadd.f32 %v5016, %v5960
    %5962 = vmatmul.bf16.gmra.mxu0 %v5293
    %v5963 = vpop.f32.mrf.mxu0
    %v5964 = vadd.f32 %v5016, %v5963
    %v5965 = vpop.f32.mrf.mxu0
    %v5966 = vadd.f32 %v5016, %v5965
    %5967 = vmatmul.bf16.gmra.mxu0 %v5296
    %v5968 = vpop.f32.mrf.mxu0
    %v5969 = vadd.f32 %v5016, %v5968
    %v5970 = vpop.f32.mrf.mxu0
    %v5971 = vadd.f32 %v5016, %v5970
    %5972 = vmatmul.bf16.gmra.mxu0 %v5299
    %v5973 = vpop.f32.mrf.mxu0
    %v5974 = vadd.f32 %v5016, %v5973
    %v5975 = vpop.f32.mrf.mxu0
    %v5976 = vadd.f32 %v5016, %v5975
    %5977 = vmatmul.bf16.gmra.mxu0 %v5302
    %v5978 = vpop.f32.mrf.mxu0
    %v5979 = vadd.f32 %v5016, %v5978
    %v5980 = vpop.f32.mrf.mxu0
    %v5981 = vadd.f32 %v5016, %v5980
    %5982 = vmatmul.bf16.gmra.mxu0 %v5305
    %v5983 = vpop.f32.mrf.mxu0
    %v5984 = vadd.f32 %v5016, %v5983
    %v5985 = vpop.f32.mrf.mxu0
    %v5986 = vadd.f32 %v5016, %v5985
    %5987 = vmatmul.bf16.gmra.mxu0 %v5308
    %v5988 = vpop.f32.mrf.mxu0
    %v5989 = vadd.f32 %v5016, %v5988
    %v5990 = vpop.f32.mrf.mxu0
    %v5991 = vadd.f32 %v5016, %v5990
    %5992 = vmatmul.bf16.gmra.mxu0 %v5311
    %v5993 = vpop.f32.mrf.mxu0
    %v5994 = vadd.f32 %v5016, %v5993
    %v5995 = vpop.f32.mrf.mxu0
    %v5996 = vadd.f32 %v5016, %v5995
    %5997 = vmatmul.bf16.gmra.mxu0 %v5314
    %v5998 = vpop.f32.mrf.mxu0
    %v5999 = vadd.f32 %v5016, %v5998
    %v6000 = vpop.f32.mrf.mxu0
    %v6001 = vadd.f32 %v5016, %v6000
    %6002 = vmatmul.bf16.gmra.mxu0 %v5317
    %v6003 = vpop.f32.mrf.mxu0
    %v6004 = vadd.f32 %v5016, %v6003
    %v6005 = vpop.f32.mrf.mxu0
    %v6006 = vadd.f32 %v5016, %v6005
    %6007 = vmatmul.bf16.gmra.mxu0 %v5320
    %v6008 = vpop.f32.mrf.mxu0
    %v6009 = vadd.f32 %v5016, %v6008
    %v6010 = vpop.f32.mrf.mxu0
    %v6011 = vadd.f32 %v5016, %v6010
    %6012 = vmatmul.bf16.gmra.mxu0 %v5323
    %v6013 = vpop.f32.mrf.mxu0
    %v6014 = vadd.f32 %v5016, %v6013
    %v6015 = vpop.f32.mrf.mxu0
    %v6016 = vadd.f32 %v5016, %v6015
    %6017 = vmatmul.bf16.gmra.mxu0 %v5326
    %v6018 = vpop.f32.mrf.mxu0
    %v6019 = vadd.f32 %v5016, %v6018
    %v6020 = vpop.f32.mrf.mxu0
    %v6021 = vadd.f32 %v5016, %v6020
    %6022 = vmatmul.bf16.gmra.mxu0 %v5329
    %v6023 = vpop.f32.mrf.mxu0
    %v6024 = vadd.f32 %v5016, %v6023
    %v6025 = vpop.f32.mrf.mxu0
    %v6026 = vadd.f32 %v5016, %v6025
    %6027 = vmatmul.bf16.gmra.mxu0 %v5332
    %v6028 = vpop.f32.mrf.mxu0
    %v6029 = vadd.f32 %v5016, %v6028
    %v6030 = vpop.f32.mrf.mxu0
    %v6031 = vadd.f32 %v5016, %v6030
    %6032 = vmatmul.bf16.gmra.mxu0 %v5335
    %v6033 = vpop.f32.mrf.mxu0
    %v6034 = vadd.f32 %v5016, %v6033
    %v6035 = vpop.f32.mrf.mxu0
    %v6036 = vadd.f32 %v5016, %v6035
    %6037 = vmatmul.bf16.gmra.mxu0 %v5338
    %v6038 = vpop.f32.mrf.mxu0
    %v6039 = vadd.f32 %v5016, %v6038
    %v6040 = vpop.f32.mrf.mxu0
    %v6041 = vadd.f32 %v5016, %v6040
    %6042 = vmatmul.bf16.gmra.mxu0 %v5341
    %v6043 = vpop.f32.mrf.mxu0
    %v6044 = vadd.f32 %v5016, %v6043
    %v6045 = vpop.f32.mrf.mxu0
    %v6046 = vadd.f32 %v5016, %v6045
    %6047 = vmatmul.bf16.gmra.mxu0 %v5344
    %v6048 = vpop.f32.mrf.mxu0
    %v6049 = vadd.f32 %v5016, %v6048
    %v6050 = vpop.f32.mrf.mxu0
    %v6051 = vadd.f32 %v5016, %v6050
    %6052 = vmatmul.bf16.gmra.mxu0 %v5347
    %v6053 = vpop.f32.mrf.mxu0
    %v6054 = vadd.f32 %v5016, %v6053
    %v6055 = vpop.f32.mrf.mxu0
    %v6056 = vadd.f32 %v5016, %v6055
    %6057 = vmatmul.bf16.gmra.mxu0 %v5350
    %v6058 = vpop.f32.mrf.mxu0
    %v6059 = vadd.f32 %v5016, %v6058
    %v6060 = vpop.f32.mrf.mxu0
    %v6061 = vadd.f32 %v5016, %v6060
    %6062 = vmatmul.bf16.gmra.mxu0 %v5353
    %v6063 = vpop.f32.mrf.mxu0
    %v6064 = vadd.f32 %v5016, %v6063
    %v6065 = vpop.f32.mrf.mxu0
    %v6066 = vadd.f32 %v5016, %v6065
    %6067 = vmatmul.bf16.gmra.mxu0 %v5356
    %v6068 = vpop.f32.mrf.mxu0
    %v6069 = vadd.f32 %v5016, %v6068
    %v6070 = vpop.f32.mrf.mxu0
    %v6071 = vadd.f32 %v5016, %v6070
    %6072 = vmatmul.bf16.gmra.mxu0 %v5359
    %v6073 = vpop.f32.mrf.mxu0
    %v6074 = vadd.f32 %v5016, %v6073
    %v6075 = vpop.f32.mrf.mxu0
    %v6076 = vadd.f32 %v5016, %v6075
    %6077 = vmatmul.bf16.gmra.mxu0 %v5362
    %v6078 = vpop.f32.mrf.mxu0
    %v6079 = vadd.f32 %v5016, %v6078
    %v6080 = vpop.f32.mrf.mxu0
    %v6081 = vadd.f32 %v5016, %v6080
    %6082 = vmatmul.bf16.gmra.mxu0 %v5365
    %v6083 = vpop.f32.mrf.mxu0
    %v6084 = vadd.f32 %v5016, %v6083
    %v6085 = vpop.f32.mrf.mxu0
    %v6086 = vadd.f32 %v5016, %v6085
    %6087 = vmatmul.bf16.gmra.mxu0 %v5368
    %v6088 = vpop.f32.mrf.mxu0
    %v6089 = vadd.f32 %v5016, %v6088
    %v6090 = vpop.f32.mrf.mxu0
    %v6091 = vadd.f32 %v5016, %v6090
    %6092 = vmatmul.bf16.gmra.mxu0 %v5371
    %v6093 = vpop.f32.mrf.mxu0
    %v6094 = vadd.f32 %v5016, %v6093
    %v6095 = vpop.f32.mrf.mxu0
    %v6096 = vadd.f32 %v5016, %v6095
    %6097 = vmatmul.bf16.gmra.mxu0 %v5374
    %v6098 = vpop.f32.mrf.mxu0
    %v6099 = vadd.f32 %v5016, %v6098
    %v6100 = vpop.f32.mrf.mxu0
    %v6101 = vadd.f32 %v5016, %v6100
    %6102 = vmatmul.bf16.gmra.mxu0 %v5377
    %v6103 = vpop.f32.mrf.mxu0
    %v6104 = vadd.f32 %v5016, %v6103
    %v6105 = vpop.f32.mrf.mxu0
    %v6106 = vadd.f32 %v5016, %v6105
    %6107 = vmatmul.bf16.gmra.mxu0 %v5380
    %v6108 = vpop.f32.mrf.mxu0
    %v6109 = vadd.f32 %v5016, %v6108
    %v6110 = vpop.f32.mrf.mxu0
    %v6111 = vadd.f32 %v5016, %v6110
    %6112 = vmatmul.bf16.gmra.mxu0 %v5383
    %v6113 = vpop.f32.mrf.mxu0
    %v6114 = vadd.f32 %v5016, %v6113
    %v6115 = vpop.f32.mrf.mxu0
    %v6116 = vadd.f32 %v5016, %v6115
    %6117 = vmatmul.bf16.gmra.mxu0 %v5386
    %v6118 = vpop.f32.mrf.mxu0
    %v6119 = vadd.f32 %v5016, %v6118
    %v6120 = vpop.f32.mrf.mxu0
    %v6121 = vadd.f32 %v5016, %v6120
    %6122 = vmatmul.bf16.gmra.mxu0 %v5389
    %v6123 = vpop.f32.mrf.mxu0
    %v6124 = vadd.f32 %v5016, %v6123
    %v6125 = vpop.f32.mrf.mxu0
    %v6126 = vadd.f32 %v5016, %v6125
    %6127 = vmatmul.bf16.gmra.mxu0 %v5392
    %v6128 = vpop.f32.mrf.mxu0
    %v6129 = vadd.f32 %v5016, %v6128
    %v6130 = vpop.f32.mrf.mxu0
    %v6131 = vadd.f32 %v5016, %v6130
    %6132 = vmatmul.bf16.gmra.mxu0 %v5395
    %v6133 = vpop.f32.mrf.mxu0
    %v6134 = vadd.f32 %v5016, %v6133
    %v6135 = vpop.f32.mrf.mxu0
    %v6136 = vadd.f32 %v5016, %v6135
    %6137 = vmatmul.bf16.gmra.mxu0 %v5398
    %v6138 = vpop.f32.mrf.mxu0
    %v6139 = vadd.f32 %v5016, %v6138
    %v6140 = vpop.f32.mrf.mxu0
    %v6141 = vadd.f32 %v5016, %v6140
    %6142 = vmatmul.bf16.gmra.mxu0 %v5401
    %v6143 = vpop.f32.mrf.mxu0
    %v6144 = vadd.f32 %v5016, %v6143
    %v6145 = vpop.f32.mrf.mxu0
    %v6146 = vadd.f32 %v5016, %v6145
    %6147 = vmatmul.bf16.gmra.mxu0 %v5404
    %v6148 = vpop.f32.mrf.mxu0
    %v6149 = vadd.f32 %v5016, %v6148
    %v6150 = vpop.f32.mrf.mxu0
    %v6151 = vadd.f32 %v5016, %v6150
    %6152 = vmatmul.bf16.gmra.mxu0 %v5407
    %v6153 = vpop.f32.mrf.mxu0
    %v6154 = vadd.f32 %v5016, %v6153
    %v6155 = vpop.f32.mrf.mxu0
    %v6156 = vadd.f32 %v5016, %v6155
    %6157 = vmatmul.bf16.gmra.mxu0 %v5410
    %v6158 = vpop.f32.mrf.mxu0
    %v6159 = vadd.f32 %v5016, %v6158
    %v6160 = vpop.f32.mrf.mxu0
    %v6161 = vadd.f32 %v5016, %v6160
    %6162 = vmatmul.bf16.gmra.mxu0 %v5413
    %v6163 = vpop.f32.mrf.mxu0
    %v6164 = vadd.f32 %v5016, %v6163
    %v6165 = vpop.f32.mrf.mxu0
    %v6166 = vadd.f32 %v5016, %v6165
    %6167 = vmatmul.bf16.gmra.mxu0 %v5416
    %v6168 = vpop.f32.mrf.mxu0
    %v6169 = vadd.f32 %v5016, %v6168
    %v6170 = vpop.f32.mrf.mxu0
    %v6171 = vadd.f32 %v5016, %v6170
    %6172 = vmatmul.bf16.gmra.mxu0 %v5419
    %v6173 = vpop.f32.mrf.mxu0
    %v6174 = vadd.f32 %v5016, %v6173
    %v6175 = vpop.f32.mrf.mxu0
    %v6176 = vadd.f32 %v5016, %v6175
    %6177 = vmatmul.bf16.gmra.mxu0 %v5422
    %v6178 = vpop.f32.mrf.mxu0
    %v6179 = vadd.f32 %v5016, %v6178
    %v6180 = vpop.f32.mrf.mxu0
    %v6181 = vadd.f32 %v5016, %v6180
    %6182 = vmatmul.bf16.gmra.mxu0 %v5425
    %v6183 = vpop.f32.mrf.mxu0
    %v6184 = vadd.f32 %v5016, %v6183
    %v6185 = vpop.f32.mrf.mxu0
    %v6186 = vadd.f32 %v5016, %v6185
    %6187 = vmatmul.bf16.gmra.mxu0 %v5428
    %v6188 = vpop.f32.mrf.mxu0
    %v6189 = vadd.f32 %v5016, %v6188
    %v6190 = vpop.f32.mrf.mxu0
    %v6191 = vadd.f32 %v5016, %v6190
    %6192 = vmatmul.bf16.gmra.mxu0 %v5431
    %v6193 = vpop.f32.mrf.mxu0
    %v6194 = vadd.f32 %v5016, %v6193
    %v6195 = vpop.f32.mrf.mxu0
    %v6196 = vadd.f32 %v5016, %v6195
    %6197 = vmatmul.bf16.gmra.mxu0 %v5434
    %v6198 = vpop.f32.mrf.mxu0
    %v6199 = vadd.f32 %v5016, %v6198
    %v6200 = vpop.f32.mrf.mxu0
    %v6201 = vadd.f32 %v5016, %v6200
    %6202 = vmatmul.bf16.gmra.mxu0 %v5437
    %v6203 = vpop.f32.mrf.mxu0
    %v6204 = vadd.f32 %v5016, %v6203
    %v6205 = vpop.f32.mrf.mxu0
    %v6206 = vadd.f32 %v5016, %v6205
    %6207 = vmatmul.bf16.gmra.mxu0 %v5440
    %v6208 = vpop.f32.mrf.mxu0
    %v6209 = vadd.f32 %v5016, %v6208
    %v6210 = vpop.f32.mrf.mxu0
    %v6211 = vadd.f32 %v5016, %v6210
    %6212 = vmatmul.bf16.gmra.mxu0 %v5443
    %v6213 = vpop.f32.mrf.mxu0
    %v6214 = vadd.f32 %v5016, %v6213
    %v6215 = vpop.f32.mrf.mxu0
    %v6216 = vadd.f32 %v5016, %v6215
    %6217 = vmatmul.bf16.gmra.mxu0 %v5446
    %v6218 = vpop.f32.mrf.mxu0
    %v6219 = vadd.f32 %v5016, %v6218
    %v6220 = vpop.f32.mrf.mxu0
    %v6221 = vadd.f32 %v5016, %v6220
    %6222 = vmatmul.bf16.gmra.mxu0 %v5449
    %v6223 = vpop.f32.mrf.mxu0
    %v6224 = vadd.f32 %v5016, %v6223
    %v6225 = vpop.f32.mrf.mxu0
    %v6226 = vadd.f32 %v5016, %v6225
    %6227 = vmatmul.bf16.gmra.mxu0 %v5452
    %v6228 = vpop.f32.mrf.mxu0
    %v6229 = vadd.f32 %v5016, %v6228
    %v6230 = vpop.f32.mrf.mxu0
    %v6231 = vadd.f32 %v5016, %v6230
    %6232 = vmatmul.bf16.gmra.mxu0 %v5455
    %v6233 = vpop.f32.mrf.mxu0
    %v6234 = vadd.f32 %v5016, %v6233
    %v6235 = vpop.f32.mrf.mxu0
    %v6236 = vadd.f32 %v5016, %v6235
    %6237 = vmatmul.bf16.gmra.mxu0 %v5458
    %v6238 = vpop.f32.mrf.mxu0
    %v6239 = vadd.f32 %v5016, %v6238
    %v6240 = vpop.f32.mrf.mxu0
    %v6241 = vadd.f32 %v5016, %v6240
    %6242 = vmatmul.bf16.gmra.mxu0 %v5461
    %v6243 = vpop.f32.mrf.mxu0
    %v6244 = vadd.f32 %v5016, %v6243
    %v6245 = vpop.f32.mrf.mxu0
    %v6246 = vadd.f32 %v5016, %v6245
    %6247 = vmatmul.bf16.gmra.mxu0 %v5464
    %v6248 = vpop.f32.mrf.mxu0
    %v6249 = vadd.f32 %v5016, %v6248
    %v6250 = vpop.f32.mrf.mxu0
    %v6251 = vadd.f32 %v5016, %v6250
    %6252 = vmatmul.bf16.gmra.mxu0 %v5467
    %v6253 = vpop.f32.mrf.mxu0
    %v6254 = vadd.f32 %v5016, %v6253
    %v6255 = vpop.f32.mrf.mxu0
    %v6256 = vadd.f32 %v5016, %v6255
    %6257 = vmatmul.bf16.gmra.mxu0 %v5470
    %v6258 = vpop.f32.mrf.mxu0
    %v6259 = vadd.f32 %v5016, %v6258
    %v6260 = vpop.f32.mrf.mxu0
    %v6261 = vadd.f32 %v5016, %v6260
    %6262 = vmatmul.bf16.gmra.mxu0 %v5473
    %v6263 = vpop.f32.mrf.mxu0
    %v6264 = vadd.f32 %v5016, %v6263
    %v6265 = vpop.f32.mrf.mxu0
    %v6266 = vadd.f32 %v5016, %v6265
    %6267 = vmatmul.bf16.gmra.mxu0 %v5476
    %v6268 = vpop.f32.mrf.mxu0
    %v6269 = vadd.f32 %v5016, %v6268
    %v6270 = vpop.f32.mrf.mxu0
    %v6271 = vadd.f32 %v5016, %v6270
    %6272 = vmatmul.bf16.gmra.mxu0 %v5479
    %v6273 = vpop.f32.mrf.mxu0
    %v6274 = vadd.f32 %v5016, %v6273
    %v6275 = vpop.f32.mrf.mxu0
    %v6276 = vadd.f32 %v5016, %v6275
    %6277 = vmatmul.bf16.gmra.mxu0 %v5482
    %v6278 = vpop.f32.mrf.mxu0
    %v6279 = vadd.f32 %v5016, %v6278
    %v6280 = vpop.f32.mrf.mxu0
    %v6281 = vadd.f32 %v5016, %v6280
    %6282 = vmatmul.bf16.gmra.mxu0 %v5485
    %v6283 = vpop.f32.mrf.mxu0
    %v6284 = vadd.f32 %v5016, %v6283
    %v6285 = vpop.f32.mrf.mxu0
    %v6286 = vadd.f32 %v5016, %v6285
    %6287 = vmatmul.bf16.gmra.mxu0 %v5488
    %v6288 = vpop.f32.mrf.mxu0
    %v6289 = vadd.f32 %v5016, %v6288
    %v6290 = vpop.f32.mrf.mxu0
    %v6291 = vadd.f32 %v5016, %v6290
    %6292 = vmatmul.bf16.gmra.mxu0 %v5491
    %v6293 = vpop.f32.mrf.mxu0
    %v6294 = vadd.f32 %v5016, %v6293
    %v6295 = vpop.f32.mrf.mxu0
    %v6296 = vadd.f32 %v5016, %v6295
    %6297 = vmatmul.bf16.gmra.mxu0 %v5494
    %v6298 = vpop.f32.mrf.mxu0
    %v6299 = vadd.f32 %v5016, %v6298
    %v6300 = vpop.f32.mrf.mxu0
    %v6301 = vadd.f32 %v5016, %v6300
    %6302 = vmatmul.bf16.gmra.mxu0 %v5497
    %v6303 = vpop.f32.mrf.mxu0
    %v6304 = vadd.f32 %v5016, %v6303
    %v6305 = vpop.f32.mrf.mxu0
    %v6306 = vadd.f32 %v5016, %v6305
    %6307 = vdwg.mxu0
    %v6308 = vmax.f32 %v5509, 0.0
    %v6309 = vmax.f32 %v5511, 0.0
    %v6310 = vmax.f32 %v5514, 0.0
    %v6311 = vmax.f32 %v5516, 0.0
    %v6312 = vmax.f32 %v5519, 0.0
    %v6313 = vmax.f32 %v5521, 0.0
    %v6314 = vmax.f32 %v5524, 0.0
    %v6315 = vmax.f32 %v5526, 0.0
    %v6316 = vmax.f32 %v5529, 0.0
    %v6317 = vmax.f32 %v5531, 0.0
    %v6318 = vmax.f32 %v5534, 0.0
    %v6319 = vmax.f32 %v5536, 0.0
    %v6320 = vmax.f32 %v5539, 0.0
    %v6321 = vmax.f32 %v5541, 0.0
    %v6322 = vmax.f32 %v5544, 0.0
    %v6323 = vmax.f32 %v5546, 0.0
    %v6324 = vmax.f32 %v5549, 0.0
    %v6325 = vmax.f32 %v5551, 0.0
    %v6326 = vmax.f32 %v5554, 0.0
    %v6327 = vmax.f32 %v5556, 0.0
    %v6328 = vmax.f32 %v5559, 0.0
    %v6329 = vmax.f32 %v5561, 0.0
    %v6330 = vmax.f32 %v5564, 0.0
    %v6331 = vmax.f32 %v5566, 0.0
    %v6332 = vmax.f32 %v5569, 0.0
    %v6333 = vmax.f32 %v5571, 0.0
    %v6334 = vmax.f32 %v5574, 0.0
    %v6335 = vmax.f32 %v5576, 0.0
    %v6336 = vmax.f32 %v5579, 0.0
    %v6337 = vmax.f32 %v5581, 0.0
    %v6338 = vmax.f32 %v5584, 0.0
    %v6339 = vmax.f32 %v5586, 0.0
    %v6340 = vmax.f32 %v5589, 0.0
    %v6341 = vmax.f32 %v5591, 0.0
    %v6342 = vmax.f32 %v5594, 0.0
    %v6343 = vmax.f32 %v5596, 0.0
    %v6344 = vmax.f32 %v5599, 0.0
    %v6345 = vmax.f32 %v5601, 0.0
    %v6346 = vmax.f32 %v5604, 0.0
    %v6347 = vmax.f32 %v5606, 0.0
    %v6348 = vmax.f32 %v5609, 0.0
    %v6349 = vmax.f32 %v5611, 0.0
    %v6350 = vmax.f32 %v5614, 0.0
    %v6351 = vmax.f32 %v5616, 0.0
    %v6352 = vmax.f32 %v5619, 0.0
    %v6353 = vmax.f32 %v5621, 0.0
    %v6354 = vmax.f32 %v5624, 0.0
    %v6355 = vmax.f32 %v5626, 0.0
    %v6356 = vmax.f32 %v5629, 0.0
    %v6357 = vmax.f32 %v5631, 0.0
    %v6358 = vmax.f32 %v5634, 0.0
    %v6359 = vmax.f32 %v5636, 0.0
    %v6360 = vmax.f32 %v5639, 0.0
    %v6361 = vmax.f32 %v5641, 0.0
    %v6362 = vmax.f32 %v5644, 0.0
    %v6363 = vmax.f32 %v5646, 0.0
    %v6364 = vmax.f32 %v5649, 0.0
    %v6365 = vmax.f32 %v5651, 0.0
    %v6366 = vmax.f32 %v5654, 0.0
    %v6367 = vmax.f32 %v5656, 0.0
    %v6368 = vmax.f32 %v5659, 0.0
    %v6369 = vmax.f32 %v5661, 0.0
    %v6370 = vmax.f32 %v5664, 0.0
    %v6371 = vmax.f32 %v5666, 0.0
    %v6372 = vmax.f32 %v5669, 0.0
    %v6373 = vmax.f32 %v5671, 0.0
    %v6374 = vmax.f32 %v5674, 0.0
    %v6375 = vmax.f32 %v5676, 0.0
    %v6376 = vmax.f32 %v5679, 0.0
    %v6377 = vmax.f32 %v5681, 0.0
    %v6378 = vmax.f32 %v5684, 0.0
    %v6379 = vmax.f32 %v5686, 0.0
    %v6380 = vmax.f32 %v5689, 0.0
    %v6381 = vmax.f32 %v5691, 0.0
    %v6382 = vmax.f32 %v5694, 0.0
    %v6383 = vmax.f32 %v5696, 0.0
    %v6384 = vmax.f32 %v5699, 0.0
    %v6385 = vmax.f32 %v5701, 0.0
    %v6386 = vmax.f32 %v5704, 0.0
    %v6387 = vmax.f32 %v5706, 0.0
    %v6388 = vmax.f32 %v5709, 0.0
    %v6389 = vmax.f32 %v5711, 0.0
    %v6390 = vmax.f32 %v5714, 0.0
    %v6391 = vmax.f32 %v5716, 0.0
    %v6392 = vmax.f32 %v5719, 0.0
    %v6393 = vmax.f32 %v5721, 0.0
    %v6394 = vmax.f32 %v5724, 0.0
    %v6395 = vmax.f32 %v5726, 0.0
    %v6396 = vmax.f32 %v5729, 0.0
    %v6397 = vmax.f32 %v5731, 0.0
    %v6398 = vmax.f32 %v5734, 0.0
    %v6399 = vmax.f32 %v5736, 0.0
    %v6400 = vmax.f32 %v5739, 0.0
    %v6401 = vmax.f32 %v5741, 0.0
    %v6402 = vmax.f32 %v5744, 0.0
    %v6403 = vmax.f32 %v5746, 0.0
    %v6404 = vmax.f32 %v5749, 0.0
    %v6405 = vmax.f32 %v5751, 0.0
    %v6406 = vmax.f32 %v5754, 0.0
    %v6407 = vmax.f32 %v5756, 0.0
    %v6408 = vmax.f32 %v5759, 0.0
    %v6409 = vmax.f32 %v5761, 0.0
    %v6410 = vmax.f32 %v5764, 0.0
    %v6411 = vmax.f32 %v5766, 0.0
    %v6412 = vmax.f32 %v5769, 0.0
    %v6413 = vmax.f32 %v5771, 0.0
    %v6414 = vmax.f32 %v5774, 0.0
    %v6415 = vmax.f32 %v5776, 0.0
    %v6416 = vmax.f32 %v5779, 0.0
    %v6417 = vmax.f32 %v5781, 0.0
    %v6418 = vmax.f32 %v5784, 0.0
    %v6419 = vmax.f32 %v5786, 0.0
    %v6420 = vmax.f32 %v5789, 0.0
    %v6421 = vmax.f32 %v5791, 0.0
    %v6422 = vmax.f32 %v5794, 0.0
    %v6423 = vmax.f32 %v5796, 0.0
    %v6424 = vmax.f32 %v5799, 0.0
    %v6425 = vmax.f32 %v5801, 0.0
    %v6426 = vmax.f32 %v5804, 0.0
    %v6427 = vmax.f32 %v5806, 0.0
    %v6428 = vmax.f32 %v5809, 0.0
    %v6429 = vmax.f32 %v5811, 0.0
    %v6430 = vmax.f32 %v5814, 0.0
    %v6431 = vmax.f32 %v5816, 0.0
    %v6432 = vmax.f32 %v5819, 0.0
    %v6433 = vmax.f32 %v5821, 0.0
    %v6434 = vmax.f32 %v5824, 0.0
    %v6435 = vmax.f32 %v5826, 0.0
    %v6436 = vmax.f32 %v5829, 0.0
    %v6437 = vmax.f32 %v5831, 0.0
    %v6438 = vmax.f32 %v5834, 0.0
    %v6439 = vmax.f32 %v5836, 0.0
    %v6440 = vmax.f32 %v5839, 0.0
    %v6441 = vmax.f32 %v5841, 0.0
    %v6442 = vmax.f32 %v5844, 0.0
    %v6443 = vmax.f32 %v5846, 0.0
    %v6444 = vmax.f32 %v5849, 0.0
    %v6445 = vmax.f32 %v5851, 0.0
    %v6446 = vmax.f32 %v5854, 0.0
    %v6447 = vmax.f32 %v5856, 0.0
    %v6448 = vmax.f32 %v5859, 0.0
    %v6449 = vmax.f32 %v5861, 0.0
    %v6450 = vmax.f32 %v5864, 0.0
    %v6451 = vmax.f32 %v5866, 0.0
    %v6452 = vmax.f32 %v5869, 0.0
    %v6453 = vmax.f32 %v5871, 0.0
    %v6454 = vmax.f32 %v5874, 0.0
    %v6455 = vmax.f32 %v5876, 0.0
    %v6456 = vmax.f32 %v5879, 0.0
    %v6457 = vmax.f32 %v5881, 0.0
    %v6458 = vmax.f32 %v5884, 0.0
    %v6459 = vmax.f32 %v5886, 0.0
    %v6460 = vmax.f32 %v5889, 0.0
    %v6461 = vmax.f32 %v5891, 0.0
    %v6462 = vmax.f32 %v5894, 0.0
    %v6463 = vmax.f32 %v5896, 0.0
    %v6464 = vmax.f32 %v5899, 0.0
    %v6465 = vmax.f32 %v5901, 0.0
    %v6466 = vmax.f32 %v5904, 0.0
    %v6467 = vmax.f32 %v5906, 0.0
    %v6468 = vmax.f32 %v5909, 0.0
    %v6469 = vmax.f32 %v5911, 0.0
    %v6470 = vmax.f32 %v5914, 0.0
    %v6471 = vmax.f32 %v5916, 0.0
    %v6472 = vmax.f32 %v5919, 0.0
    %v6473 = vmax.f32 %v5921, 0.0
    %v6474 = vmax.f32 %v5924, 0.0
    %v6475 = vmax.f32 %v5926, 0.0
    %v6476 = vmax.f32 %v5929, 0.0
    %v6477 = vmax.f32 %v5931, 0.0
    %v6478 = vmax.f32 %v5934, 0.0
    %v6479 = vmax.f32 %v5936, 0.0
    %v6480 = vmax.f32 %v5939, 0.0
    %v6481 = vmax.f32 %v5941, 0.0
    %v6482 = vmax.f32 %v5944, 0.0
    %v6483 = vmax.f32 %v5946, 0.0
    %v6484 = vmax.f32 %v5949, 0.0
    %v6485 = vmax.f32 %v5951, 0.0
    %v6486 = vmax.f32 %v5954, 0.0
    %v6487 = vmax.f32 %v5956, 0.0
    %v6488 = vmax.f32 %v5959, 0.0
    %v6489 = vmax.f32 %v5961, 0.0
    %v6490 = vmax.f32 %v5964, 0.0
    %v6491 = vmax.f32 %v5966, 0.0
    %v6492 = vmax.f32 %v5969, 0.0
    %v6493 = vmax.f32 %v5971, 0.0
    %v6494 = vmax.f32 %v5974, 0.0
    %v6495 = vmax.f32 %v5976, 0.0
    %v6496 = vmax.f32 %v5979, 0.0
    %v6497 = vmax.f32 %v5981, 0.0
    %v6498 = vmax.f32 %v5984, 0.0
    %v6499 = vmax.f32 %v5986, 0.0
    %v6500 = vmax.f32 %v5989, 0.0
    %v6501 = vmax.f32 %v5991, 0.0
    %v6502 = vmax.f32 %v5994, 0.0
    %v6503 = vmax.f32 %v5996, 0.0
    %v6504 = vmax.f32 %v5999, 0.0
    %v6505 = vmax.f32 %v6001, 0.0
    %v6506 = vmax.f32 %v6004, 0.0
    %v6507 = vmax.f32 %v6006, 0.0
    %v6508 = vmax.f32 %v6009, 0.0
    %v6509 = vmax.f32 %v6011, 0.0
    %v6510 = vmax.f32 %v6014, 0.0
    %v6511 = vmax.f32 %v6016, 0.0
    %v6512 = vmax.f32 %v6019, 0.0
    %v6513 = vmax.f32 %v6021, 0.0
    %v6514 = vmax.f32 %v6024, 0.0
    %v6515 = vmax.f32 %v6026, 0.0
    %v6516 = vmax.f32 %v6029, 0.0
    %v6517 = vmax.f32 %v6031, 0.0
    %v6518 = vmax.f32 %v6034, 0.0
    %v6519 = vmax.f32 %v6036, 0.0
    %v6520 = vmax.f32 %v6039, 0.0
    %v6521 = vmax.f32 %v6041, 0.0
    %v6522 = vmax.f32 %v6044, 0.0
    %v6523 = vmax.f32 %v6046, 0.0
    %v6524 = vmax.f32 %v6049, 0.0
    %v6525 = vmax.f32 %v6051, 0.0
    %v6526 = vmax.f32 %v6054, 0.0
    %v6527 = vmax.f32 %v6056, 0.0
    %v6528 = vmax.f32 %v6059, 0.0
    %v6529 = vmax.f32 %v6061, 0.0
    %v6530 = vmax.f32 %v6064, 0.0
    %v6531 = vmax.f32 %v6066, 0.0
    %v6532 = vmax.f32 %v6069, 0.0
    %v6533 = vmax.f32 %v6071, 0.0
    %v6534 = vmax.f32 %v6074, 0.0
    %v6535 = vmax.f32 %v6076, 0.0
    %v6536 = vmax.f32 %v6079, 0.0
    %v6537 = vmax.f32 %v6081, 0.0
    %v6538 = vmax.f32 %v6084, 0.0
    %v6539 = vmax.f32 %v6086, 0.0
    %v6540 = vmax.f32 %v6089, 0.0
    %v6541 = vmax.f32 %v6091, 0.0
    %v6542 = vmax.f32 %v6094, 0.0
    %v6543 = vmax.f32 %v6096, 0.0
    %v6544 = vmax.f32 %v6099, 0.0
    %v6545 = vmax.f32 %v6101, 0.0
    %v6546 = vmax.f32 %v6104, 0.0
    %v6547 = vmax.f32 %v6106, 0.0
    %v6548 = vmax.f32 %v6109, 0.0
    %v6549 = vmax.f32 %v6111, 0.0
    %v6550 = vmax.f32 %v6114, 0.0
    %v6551 = vmax.f32 %v6116, 0.0
    %v6552 = vmax.f32 %v6119, 0.0
    %v6553 = vmax.f32 %v6121, 0.0
    %v6554 = vmax.f32 %v6124, 0.0
    %v6555 = vmax.f32 %v6126, 0.0
    %v6556 = vmax.f32 %v6129, 0.0
    %v6557 = vmax.f32 %v6131, 0.0
    %v6558 = vmax.f32 %v6134, 0.0
    %v6559 = vmax.f32 %v6136, 0.0
    %v6560 = vmax.f32 %v6139, 0.0
    %v6561 = vmax.f32 %v6141, 0.0
    %v6562 = vmax.f32 %v6144, 0.0
    %v6563 = vmax.f32 %v6146, 0.0
    %v6564 = vmax.f32 %v6149, 0.0
    %v6565 = vmax.f32 %v6151, 0.0
    %v6566 = vmax.f32 %v6154, 0.0
    %v6567 = vmax.f32 %v6156, 0.0
    %v6568 = vmax.f32 %v6159, 0.0
    %v6569 = vmax.f32 %v6161, 0.0
    %v6570 = vmax.f32 %v6164, 0.0
    %v6571 = vmax.f32 %v6166, 0.0
    %v6572 = vmax.f32 %v6169, 0.0
    %v6573 = vmax.f32 %v6171, 0.0
    %v6574 = vmax.f32 %v6174, 0.0
    %v6575 = vmax.f32 %v6176, 0.0
    %v6576 = vmax.f32 %v6179, 0.0
    %v6577 = vmax.f32 %v6181, 0.0
    %v6578 = vmax.f32 %v6184, 0.0
    %v6579 = vmax.f32 %v6186, 0.0
    %v6580 = vmax.f32 %v6189, 0.0
    %v6581 = vmax.f32 %v6191, 0.0
    %v6582 = vmax.f32 %v6194, 0.0
    %v6583 = vmax.f32 %v6196, 0.0
    %v6584 = vmax.f32 %v6199, 0.0
    %v6585 = vmax.f32 %v6201, 0.0
    %v6586 = vmax.f32 %v6204, 0.0
    %v6587 = vmax.f32 %v6206, 0.0
    %v6588 = vmax.f32 %v6209, 0.0
    %v6589 = vmax.f32 %v6211, 0.0
    %v6590 = vmax.f32 %v6214, 0.0
    %v6591 = vmax.f32 %v6216, 0.0
    %v6592 = vmax.f32 %v6219, 0.0
    %v6593 = vmax.f32 %v6221, 0.0
    %v6594 = vmax.f32 %v6224, 0.0
    %v6595 = vmax.f32 %v6226, 0.0
    %v6596 = vmax.f32 %v6229, 0.0
    %v6597 = vmax.f32 %v6231, 0.0
    %v6598 = vmax.f32 %v6234, 0.0
    %v6599 = vmax.f32 %v6236, 0.0
    %v6600 = vmax.f32 %v6239, 0.0
    %v6601 = vmax.f32 %v6241, 0.0
    %v6602 = vmax.f32 %v6244, 0.0
    %v6603 = vmax.f32 %v6246, 0.0
    %v6604 = vmax.f32 %v6249, 0.0
    %v6605 = vmax.f32 %v6251, 0.0
    %v6606 = vmax.f32 %v6254, 0.0
    %v6607 = vmax.f32 %v6256, 0.0
    %v6608 = vmax.f32 %v6259, 0.0
    %v6609 = vmax.f32 %v6261, 0.0
    %v6610 = vmax.f32 %v6264, 0.0
    %v6611 = vmax.f32 %v6266, 0.0
    %v6612 = vmax.f32 %v6269, 0.0
    %v6613 = vmax.f32 %v6271, 0.0
    %v6614 = vmax.f32 %v6274, 0.0
    %v6615 = vmax.f32 %v6276, 0.0
    %v6616 = vmax.f32 %v6279, 0.0
    %v6617 = vmax.f32 %v6281, 0.0
    %v6618 = vmax.f32 %v6284, 0.0
    %v6619 = vmax.f32 %v6286, 0.0
    %v6620 = vmax.f32 %v6289, 0.0
    %v6621 = vmax.f32 %v6291, 0.0
    %v6622 = vmax.f32 %v6294, 0.0
    %v6623 = vmax.f32 %v6296, 0.0
    %v6624 = vmax.f32 %v6299, 0.0
    %v6625 = vmax.f32 %v6301, 0.0
    %v6626 = vmax.f32 %v6304, 0.0
    %v6627 = vmax.f32 %v6306, 0.0
    %v6628 = vpack.c.bf16 %v6309, %v6308
    %v6629 = vpack.c.bf16 %v6311, %v6310
    %v6630 = vpack.c.bf16 %v6313, %v6312
    %v6631 = vpack.c.bf16 %v6315, %v6314
    %v6632 = vpack.c.bf16 %v6317, %v6316
    %v6633 = vpack.c.bf16 %v6319, %v6318
    %v6634 = vpack.c.bf16 %v6321, %v6320
    %v6635 = vpack.c.bf16 %v6323, %v6322
    %v6636 = vpack.c.bf16 %v6325, %v6324
    %v6637 = vpack.c.bf16 %v6327, %v6326
    %v6638 = vpack.c.bf16 %v6329, %v6328
    %v6639 = vpack.c.bf16 %v6331, %v6330
    %v6640 = vpack.c.bf16 %v6333, %v6332
    %v6641 = vpack.c.bf16 %v6335, %v6334
    %v6642 = vpack.c.bf16 %v6337, %v6336
    %v6643 = vpack.c.bf16 %v6339, %v6338
    %v6644 = vpack.c.bf16 %v6341, %v6340
    %v6645 = vpack.c.bf16 %v6343, %v6342
    %v6646 = vpack.c.bf16 %v6345, %v6344
    %v6647 = vpack.c.bf16 %v6347, %v6346
    %v6648 = vpack.c.bf16 %v6349, %v6348
    %v6649 = vpack.c.bf16 %v6351, %v6350
    %v6650 = vpack.c.bf16 %v6353, %v6352
    %v6651 = vpack.c.bf16 %v6355, %v6354
    %v6652 = vpack.c.bf16 %v6357, %v6356
    %v6653 = vpack.c.bf16 %v6359, %v6358
    %v6654 = vpack.c.bf16 %v6361, %v6360
    %v6655 = vpack.c.bf16 %v6363, %v6362
    %v6656 = vpack.c.bf16 %v6365, %v6364
    %v6657 = vpack.c.bf16 %v6367, %v6366
    %v6658 = vpack.c.bf16 %v6369, %v6368
    %v6659 = vpack.c.bf16 %v6371, %v6370
    %v6660 = vpack.c.bf16 %v6373, %v6372
    %v6661 = vpack.c.bf16 %v6375, %v6374
    %v6662 = vpack.c.bf16 %v6377, %v6376
    %v6663 = vpack.c.bf16 %v6379, %v6378
    %v6664 = vpack.c.bf16 %v6381, %v6380
    %v6665 = vpack.c.bf16 %v6383, %v6382
    %v6666 = vpack.c.bf16 %v6385, %v6384
    %v6667 = vpack.c.bf16 %v6387, %v6386
    %v6668 = vpack.c.bf16 %v6389, %v6388
    %v6669 = vpack.c.bf16 %v6391, %v6390
    %v6670 = vpack.c.bf16 %v6393, %v6392
    %v6671 = vpack.c.bf16 %v6395, %v6394
    %v6672 = vpack.c.bf16 %v6397, %v6396
    %v6673 = vpack.c.bf16 %v6399, %v6398
    %v6674 = vpack.c.bf16 %v6401, %v6400
    %v6675 = vpack.c.bf16 %v6403, %v6402
    %v6676 = vpack.c.bf16 %v6405, %v6404
    %v6677 = vpack.c.bf16 %v6407, %v6406
    %v6678 = vpack.c.bf16 %v6409, %v6408
    %v6679 = vpack.c.bf16 %v6411, %v6410
    %v6680 = vpack.c.bf16 %v6413, %v6412
    %v6681 = vpack.c.bf16 %v6415, %v6414
    %v6682 = vpack.c.bf16 %v6417, %v6416
    %v6683 = vpack.c.bf16 %v6419, %v6418
    %v6684 = vpack.c.bf16 %v6421, %v6420
    %v6685 = vpack.c.bf16 %v6423, %v6422
    %v6686 = vpack.c.bf16 %v6425, %v6424
    %v6687 = vpack.c.bf16 %v6427, %v6426
    %v6688 = vpack.c.bf16 %v6429, %v6428
    %v6689 = vpack.c.bf16 %v6431, %v6430
    %v6690 = vpack.c.bf16 %v6433, %v6432
    %v6691 = vpack.c.bf16 %v6435, %v6434
    %v6692 = vpack.c.bf16 %v6437, %v6436
    %v6693 = vpack.c.bf16 %v6439, %v6438
    %v6694 = vpack.c.bf16 %v6441, %v6440
    %v6695 = vpack.c.bf16 %v6443, %v6442
    %v6696 = vpack.c.bf16 %v6445, %v6444
    %v6697 = vpack.c.bf16 %v6447, %v6446
    %v6698 = vpack.c.bf16 %v6449, %v6448
    %v6699 = vpack.c.bf16 %v6451, %v6450
    %v6700 = vpack.c.bf16 %v6453, %v6452
    %v6701 = vpack.c.bf16 %v6455, %v6454
    %v6702 = vpack.c.bf16 %v6457, %v6456
    %v6703 = vpack.c.bf16 %v6459, %v6458
    %v6704 = vpack.c.bf16 %v6461, %v6460
    %v6705 = vpack.c.bf16 %v6463, %v6462
    %v6706 = vpack.c.bf16 %v6465, %v6464
    %v6707 = vpack.c.bf16 %v6467, %v6466
    %v6708 = vpack.c.bf16 %v6469, %v6468
    %v6709 = vpack.c.bf16 %v6471, %v6470
    %v6710 = vpack.c.bf16 %v6473, %v6472
    %v6711 = vpack.c.bf16 %v6475, %v6474
    %v6712 = vpack.c.bf16 %v6477, %v6476
    %v6713 = vpack.c.bf16 %v6479, %v6478
    %v6714 = vpack.c.bf16 %v6481, %v6480
    %v6715 = vpack.c.bf16 %v6483, %v6482
    %v6716 = vpack.c.bf16 %v6485, %v6484
    %v6717 = vpack.c.bf16 %v6487, %v6486
    %v6718 = vpack.c.bf16 %v6489, %v6488
    %v6719 = vpack.c.bf16 %v6491, %v6490
    %v6720 = vpack.c.bf16 %v6493, %v6492
    %v6721 = vpack.c.bf16 %v6495, %v6494
    %v6722 = vpack.c.bf16 %v6497, %v6496
    %v6723 = vpack.c.bf16 %v6499, %v6498
    %v6724 = vpack.c.bf16 %v6501, %v6500
    %v6725 = vpack.c.bf16 %v6503, %v6502
    %v6726 = vpack.c.bf16 %v6505, %v6504
    %v6727 = vpack.c.bf16 %v6507, %v6506
    %v6728 = vpack.c.bf16 %v6509, %v6508
    %v6729 = vpack.c.bf16 %v6511, %v6510
    %v6730 = vpack.c.bf16 %v6513, %v6512
    %v6731 = vpack.c.bf16 %v6515, %v6514
    %v6732 = vpack.c.bf16 %v6517, %v6516
    %v6733 = vpack.c.bf16 %v6519, %v6518
    %v6734 = vpack.c.bf16 %v6521, %v6520
    %v6735 = vpack.c.bf16 %v6523, %v6522
    %v6736 = vpack.c.bf16 %v6525, %v6524
    %v6737 = vpack.c.bf16 %v6527, %v6526
    %v6738 = vpack.c.bf16 %v6529, %v6528
    %v6739 = vpack.c.bf16 %v6531, %v6530
    %v6740 = vpack.c.bf16 %v6533, %v6532
    %v6741 = vpack.c.bf16 %v6535, %v6534
    %v6742 = vpack.c.bf16 %v6537, %v6536
    %v6743 = vpack.c.bf16 %v6539, %v6538
    %v6744 = vpack.c.bf16 %v6541, %v6540
    %v6745 = vpack.c.bf16 %v6543, %v6542
    %v6746 = vpack.c.bf16 %v6545, %v6544
    %v6747 = vpack.c.bf16 %v6547, %v6546
    %v6748 = vpack.c.bf16 %v6549, %v6548
    %v6749 = vpack.c.bf16 %v6551, %v6550
    %v6750 = vpack.c.bf16 %v6553, %v6552
    %v6751 = vpack.c.bf16 %v6555, %v6554
    %v6752 = vpack.c.bf16 %v6557, %v6556
    %v6753 = vpack.c.bf16 %v6559, %v6558
    %v6754 = vpack.c.bf16 %v6561, %v6560
    %v6755 = vpack.c.bf16 %v6563, %v6562
    %v6756 = vpack.c.bf16 %v6565, %v6564
    %v6757 = vpack.c.bf16 %v6567, %v6566
    %v6758 = vpack.c.bf16 %v6569, %v6568
    %v6759 = vpack.c.bf16 %v6571, %v6570
    %v6760 = vpack.c.bf16 %v6573, %v6572
    %v6761 = vpack.c.bf16 %v6575, %v6574
    %v6762 = vpack.c.bf16 %v6577, %v6576
    %v6763 = vpack.c.bf16 %v6579, %v6578
    %v6764 = vpack.c.bf16 %v6581, %v6580
    %v6765 = vpack.c.bf16 %v6583, %v6582
    %v6766 = vpack.c.bf16 %v6585, %v6584
    %v6767 = vpack.c.bf16 %v6587, %v6586
    %v6768 = vpack.c.bf16 %v6589, %v6588
    %v6769 = vpack.c.bf16 %v6591, %v6590
    %v6770 = vpack.c.bf16 %v6593, %v6592
    %v6771 = vpack.c.bf16 %v6595, %v6594
    %v6772 = vpack.c.bf16 %v6597, %v6596
    %v6773 = vpack.c.bf16 %v6599, %v6598
    %v6774 = vpack.c.bf16 %v6601, %v6600
    %v6775 = vpack.c.bf16 %v6603, %v6602
    %v6776 = vpack.c.bf16 %v6605, %v6604
    %v6777 = vpack.c.bf16 %v6607, %v6606
    %v6778 = vpack.c.bf16 %v6609, %v6608
    %v6779 = vpack.c.bf16 %v6611, %v6610
    %v6780 = vpack.c.bf16 %v6613, %v6612
    %v6781 = vpack.c.bf16 %v6615, %v6614
    %v6782 = vpack.c.bf16 %v6617, %v6616
    %v6783 = vpack.c.bf16 %v6619, %v6618
    %v6784 = vpack.c.bf16 %v6621, %v6620
    %v6785 = vpack.c.bf16 %v6623, %v6622
    %v6786 = vpack.c.bf16 %v6625, %v6624
    %v6787 = vpack.c.bf16 %v6627, %v6626
    %v6788 = vld [vmem:[%s6] sm:$0xff]
    %v6789 = vld [vmem:[%s6 + $0x8] sm:$0xff]
    %v6790 = vld [vmem:[%s6 + $0x10] sm:$0xff]
    %v6791 = vld [vmem:[%s6 + $0x18] sm:$0xff]
    %v6792 = vld [vmem:[%s6 + $0x20] sm:$0xff]
    %v6793 = vld [vmem:[%s6 + $0x28] sm:$0xff]
    %v6794 = vld [vmem:[%s6 + $0x30] sm:$0xff]
    %v6795 = vld [vmem:[%s6 + $0x38] sm:$0xff]
    %v6796 = vld [vmem:[%s6 + $0x40] sm:$0xff]
    %v6797 = vld [vmem:[%s6 + $0x48] sm:$0xff]
    %v6798 = vld [vmem:[%s6 + $0x50] sm:$0xff]
    %v6799 = vld [vmem:[%s6 + $0x58] sm:$0xff]
    %v6800 = vld [vmem:[%s6 + $0x60] sm:$0xff]
    %v6801 = vld [vmem:[%s6 + $0x68] sm:$0xff]
    %v6802 = vld [vmem:[%s6 + $0x70] sm:$0xff]
    %v6803 = vld [vmem:[%s6 + $0x78] sm:$0xff]
    %v6804 = vpack.c.bf16 %v6789, %v6788
    %v6805 = vpack.c.bf16 %v6791, %v6790
    %v6806 = vpack.c.bf16 %v6793, %v6792
    %v6807 = vpack.c.bf16 %v6795, %v6794
    %v6808 = vpack.c.bf16 %v6797, %v6796
    %v6809 = vpack.c.bf16 %v6799, %v6798
    %v6810 = vpack.c.bf16 %v6801, %v6800
    %v6811 = vpack.c.bf16 %v6803, %v6802
    %6812 = vmatpush.bf16.msra.mxu0 %v6811
    %6813 = vmatpush.bf16.msra.mxu0 %v6810
    %6814 = vmatpush.bf16.msra.mxu0 %v6809
    %6815 = vmatpush.bf16.msra.mxu0 %v6808
    %6816 = vmatpush.bf16.msra.mxu0 %v6807
    %6817 = vmatpush.bf16.msra.mxu0 %v6806
    %6818 = vmatpush.bf16.msra.mxu0 %v6805
    %6819 = vmatpush.bf16.msra.mxu0 %v6804
    %6820 = vmatmul.bf16.gmra.mxu0 %v6628
    %v6821 = vpop.f32.mrf.mxu0
    %v6822 = vadd.f32 0.0, %v6821
    %v6823 = vpop.f32.mrf.mxu0
    %v6824 = vadd.f32 0.0, %v6823
    %6825 = vmatmul.bf16.gmra.mxu0 %v6629
    %v6826 = vpop.f32.mrf.mxu0
    %v6827 = vadd.f32 0.0, %v6826
    %v6828 = vpop.f32.mrf.mxu0
    %v6829 = vadd.f32 0.0, %v6828
    %6830 = vmatmul.bf16.gmra.mxu0 %v6630
    %v6831 = vpop.f32.mrf.mxu0
    %v6832 = vadd.f32 0.0, %v6831
    %v6833 = vpop.f32.mrf.mxu0
    %v6834 = vadd.f32 0.0, %v6833
    %6835 = vmatmul.bf16.gmra.mxu0 %v6631
    %v6836 = vpop.f32.mrf.mxu0
    %v6837 = vadd.f32 0.0, %v6836
    %v6838 = vpop.f32.mrf.mxu0
    %v6839 = vadd.f32 0.0, %v6838
    %6840 = vmatmul.bf16.gmra.mxu0 %v6632
    %v6841 = vpop.f32.mrf.mxu0
    %v6842 = vadd.f32 0.0, %v6841
    %v6843 = vpop.f32.mrf.mxu0
    %v6844 = vadd.f32 0.0, %v6843
    %6845 = vmatmul.bf16.gmra.mxu0 %v6633
    %v6846 = vpop.f32.mrf.mxu0
    %v6847 = vadd.f32 0.0, %v6846
    %v6848 = vpop.f32.mrf.mxu0
    %v6849 = vadd.f32 0.0, %v6848
    %6850 = vmatmul.bf16.gmra.mxu0 %v6634
    %v6851 = vpop.f32.mrf.mxu0
    %v6852 = vadd.f32 0.0, %v6851
    %v6853 = vpop.f32.mrf.mxu0
    %v6854 = vadd.f32 0.0, %v6853
    %6855 = vmatmul.bf16.gmra.mxu0 %v6635
    %v6856 = vpop.f32.mrf.mxu0
    %v6857 = vadd.f32 0.0, %v6856
    %v6858 = vpop.f32.mrf.mxu0
    %v6859 = vadd.f32 0.0, %v6858
    %6860 = vmatmul.bf16.gmra.mxu0 %v6636
    %v6861 = vpop.f32.mrf.mxu0
    %v6862 = vadd.f32 0.0, %v6861
    %v6863 = vpop.f32.mrf.mxu0
    %v6864 = vadd.f32 0.0, %v6863
    %6865 = vmatmul.bf16.gmra.mxu0 %v6637
    %v6866 = vpop.f32.mrf.mxu0
    %v6867 = vadd.f32 0.0, %v6866
    %v6868 = vpop.f32.mrf.mxu0
    %v6869 = vadd.f32 0.0, %v6868
    %6870 = vmatmul.bf16.gmra.mxu0 %v6638
    %v6871 = vpop.f32.mrf.mxu0
    %v6872 = vadd.f32 0.0, %v6871
    %v6873 = vpop.f32.mrf.mxu0
    %v6874 = vadd.f32 0.0, %v6873
    %6875 = vmatmul.bf16.gmra.mxu0 %v6639
    %v6876 = vpop.f32.mrf.mxu0
    %v6877 = vadd.f32 0.0, %v6876
    %v6878 = vpop.f32.mrf.mxu0
    %v6879 = vadd.f32 0.0, %v6878
    %6880 = vmatmul.bf16.gmra.mxu0 %v6640
    %v6881 = vpop.f32.mrf.mxu0
    %v6882 = vadd.f32 0.0, %v6881
    %v6883 = vpop.f32.mrf.mxu0
    %v6884 = vadd.f32 0.0, %v6883
    %6885 = vmatmul.bf16.gmra.mxu0 %v6641
    %v6886 = vpop.f32.mrf.mxu0
    %v6887 = vadd.f32 0.0, %v6886
    %v6888 = vpop.f32.mrf.mxu0
    %v6889 = vadd.f32 0.0, %v6888
    %6890 = vmatmul.bf16.gmra.mxu0 %v6642
    %v6891 = vpop.f32.mrf.mxu0
    %v6892 = vadd.f32 0.0, %v6891
    %v6893 = vpop.f32.mrf.mxu0
    %v6894 = vadd.f32 0.0, %v6893
    %6895 = vmatmul.bf16.gmra.mxu0 %v6643
    %v6896 = vpop.f32.mrf.mxu0
    %v6897 = vadd.f32 0.0, %v6896
    %v6898 = vpop.f32.mrf.mxu0
    %v6899 = vadd.f32 0.0, %v6898
    %6900 = vmatmul.bf16.gmra.mxu0 %v6644
    %v6901 = vpop.f32.mrf.mxu0
    %v6902 = vadd.f32 0.0, %v6901
    %v6903 = vpop.f32.mrf.mxu0
    %v6904 = vadd.f32 0.0, %v6903
    %6905 = vmatmul.bf16.gmra.mxu0 %v6645
    %v6906 = vpop.f32.mrf.mxu0
    %v6907 = vadd.f32 0.0, %v6906
    %v6908 = vpop.f32.mrf.mxu0
    %v6909 = vadd.f32 0.0, %v6908
    %6910 = vmatmul.bf16.gmra.mxu0 %v6646
    %v6911 = vpop.f32.mrf.mxu0
    %v6912 = vadd.f32 0.0, %v6911
    %v6913 = vpop.f32.mrf.mxu0
    %v6914 = vadd.f32 0.0, %v6913
    %6915 = vmatmul.bf16.gmra.mxu0 %v6647
    %v6916 = vpop.f32.mrf.mxu0
    %v6917 = vadd.f32 0.0, %v6916
    %v6918 = vpop.f32.mrf.mxu0
    %v6919 = vadd.f32 0.0, %v6918
    %6920 = vmatmul.bf16.gmra.mxu0 %v6648
    %v6921 = vpop.f32.mrf.mxu0
    %v6922 = vadd.f32 0.0, %v6921
    %v6923 = vpop.f32.mrf.mxu0
    %v6924 = vadd.f32 0.0, %v6923
    %6925 = vmatmul.bf16.gmra.mxu0 %v6649
    %v6926 = vpop.f32.mrf.mxu0
    %v6927 = vadd.f32 0.0, %v6926
    %v6928 = vpop.f32.mrf.mxu0
    %v6929 = vadd.f32 0.0, %v6928
    %6930 = vmatmul.bf16.gmra.mxu0 %v6650
    %v6931 = vpop.f32.mrf.mxu0
    %v6932 = vadd.f32 0.0, %v6931
    %v6933 = vpop.f32.mrf.mxu0
    %v6934 = vadd.f32 0.0, %v6933
    %6935 = vmatmul.bf16.gmra.mxu0 %v6651
    %v6936 = vpop.f32.mrf.mxu0
    %v6937 = vadd.f32 0.0, %v6936
    %v6938 = vpop.f32.mrf.mxu0
    %v6939 = vadd.f32 0.0, %v6938
    %6940 = vmatmul.bf16.gmra.mxu0 %v6652
    %v6941 = vpop.f32.mrf.mxu0
    %v6942 = vadd.f32 0.0, %v6941
    %v6943 = vpop.f32.mrf.mxu0
    %v6944 = vadd.f32 0.0, %v6943
    %6945 = vmatmul.bf16.gmra.mxu0 %v6653
    %v6946 = vpop.f32.mrf.mxu0
    %v6947 = vadd.f32 0.0, %v6946
    %v6948 = vpop.f32.mrf.mxu0
    %v6949 = vadd.f32 0.0, %v6948
    %6950 = vmatmul.bf16.gmra.mxu0 %v6654
    %v6951 = vpop.f32.mrf.mxu0
    %v6952 = vadd.f32 0.0, %v6951
    %v6953 = vpop.f32.mrf.mxu0
    %v6954 = vadd.f32 0.0, %v6953
    %6955 = vmatmul.bf16.gmra.mxu0 %v6655
    %v6956 = vpop.f32.mrf.mxu0
    %v6957 = vadd.f32 0.0, %v6956
    %v6958 = vpop.f32.mrf.mxu0
    %v6959 = vadd.f32 0.0, %v6958
    %6960 = vmatmul.bf16.gmra.mxu0 %v6656
    %v6961 = vpop.f32.mrf.mxu0
    %v6962 = vadd.f32 0.0, %v6961
    %v6963 = vpop.f32.mrf.mxu0
    %v6964 = vadd.f32 0.0, %v6963
    %6965 = vmatmul.bf16.gmra.mxu0 %v6657
    %v6966 = vpop.f32.mrf.mxu0
    %v6967 = vadd.f32 0.0, %v6966
    %v6968 = vpop.f32.mrf.mxu0
    %v6969 = vadd.f32 0.0, %v6968
    %6970 = vmatmul.bf16.gmra.mxu0 %v6658
    %v6971 = vpop.f32.mrf.mxu0
    %v6972 = vadd.f32 0.0, %v6971
    %v6973 = vpop.f32.mrf.mxu0
    %v6974 = vadd.f32 0.0, %v6973
    %6975 = vmatmul.bf16.gmra.mxu0 %v6659
    %v6976 = vpop.f32.mrf.mxu0
    %v6977 = vadd.f32 0.0, %v6976
    %v6978 = vpop.f32.mrf.mxu0
    %v6979 = vadd.f32 0.0, %v6978
    %6980 = vmatmul.bf16.gmra.mxu0 %v6660
    %v6981 = vpop.f32.mrf.mxu0
    %v6982 = vadd.f32 0.0, %v6981
    %v6983 = vpop.f32.mrf.mxu0
    %v6984 = vadd.f32 0.0, %v6983
    %6985 = vmatmul.bf16.gmra.mxu0 %v6661
    %v6986 = vpop.f32.mrf.mxu0
    %v6987 = vadd.f32 0.0, %v6986
    %v6988 = vpop.f32.mrf.mxu0
    %v6989 = vadd.f32 0.0, %v6988
    %6990 = vmatmul.bf16.gmra.mxu0 %v6662
    %v6991 = vpop.f32.mrf.mxu0
    %v6992 = vadd.f32 0.0, %v6991
    %v6993 = vpop.f32.mrf.mxu0
    %v6994 = vadd.f32 0.0, %v6993
    %6995 = vmatmul.bf16.gmra.mxu0 %v6663
    %v6996 = vpop.f32.mrf.mxu0
    %v6997 = vadd.f32 0.0, %v6996
    %v6998 = vpop.f32.mrf.mxu0
    %v6999 = vadd.f32 0.0, %v6998
    %7000 = vmatmul.bf16.gmra.mxu0 %v6664
    %v7001 = vpop.f32.mrf.mxu0
    %v7002 = vadd.f32 0.0, %v7001
    %v7003 = vpop.f32.mrf.mxu0
    %v7004 = vadd.f32 0.0, %v7003
    %7005 = vmatmul.bf16.gmra.mxu0 %v6665
    %v7006 = vpop.f32.mrf.mxu0
    %v7007 = vadd.f32 0.0, %v7006
    %v7008 = vpop.f32.mrf.mxu0
    %v7009 = vadd.f32 0.0, %v7008
    %7010 = vmatmul.bf16.gmra.mxu0 %v6666
    %v7011 = vpop.f32.mrf.mxu0
    %v7012 = vadd.f32 0.0, %v7011
    %v7013 = vpop.f32.mrf.mxu0
    %v7014 = vadd.f32 0.0, %v7013
    %7015 = vmatmul.bf16.gmra.mxu0 %v6667
    %v7016 = vpop.f32.mrf.mxu0
    %v7017 = vadd.f32 0.0, %v7016
    %v7018 = vpop.f32.mrf.mxu0
    %v7019 = vadd.f32 0.0, %v7018
    %7020 = vmatmul.bf16.gmra.mxu0 %v6668
    %v7021 = vpop.f32.mrf.mxu0
    %v7022 = vadd.f32 0.0, %v7021
    %v7023 = vpop.f32.mrf.mxu0
    %v7024 = vadd.f32 0.0, %v7023
    %7025 = vmatmul.bf16.gmra.mxu0 %v6669
    %v7026 = vpop.f32.mrf.mxu0
    %v7027 = vadd.f32 0.0, %v7026
    %v7028 = vpop.f32.mrf.mxu0
    %v7029 = vadd.f32 0.0, %v7028
    %7030 = vmatmul.bf16.gmra.mxu0 %v6670
    %v7031 = vpop.f32.mrf.mxu0
    %v7032 = vadd.f32 0.0, %v7031
    %v7033 = vpop.f32.mrf.mxu0
    %v7034 = vadd.f32 0.0, %v7033
    %7035 = vmatmul.bf16.gmra.mxu0 %v6671
    %v7036 = vpop.f32.mrf.mxu0
    %v7037 = vadd.f32 0.0, %v7036
    %v7038 = vpop.f32.mrf.mxu0
    %v7039 = vadd.f32 0.0, %v7038
    %7040 = vmatmul.bf16.gmra.mxu0 %v6672
    %v7041 = vpop.f32.mrf.mxu0
    %v7042 = vadd.f32 0.0, %v7041
    %v7043 = vpop.f32.mrf.mxu0
    %v7044 = vadd.f32 0.0, %v7043
    %7045 = vmatmul.bf16.gmra.mxu0 %v6673
    %v7046 = vpop.f32.mrf.mxu0
    %v7047 = vadd.f32 0.0, %v7046
    %v7048 = vpop.f32.mrf.mxu0
    %v7049 = vadd.f32 0.0, %v7048
    %7050 = vmatmul.bf16.gmra.mxu0 %v6674
    %v7051 = vpop.f32.mrf.mxu0
    %v7052 = vadd.f32 0.0, %v7051
    %v7053 = vpop.f32.mrf.mxu0
    %v7054 = vadd.f32 0.0, %v7053
    %7055 = vmatmul.bf16.gmra.mxu0 %v6675
    %v7056 = vpop.f32.mrf.mxu0
    %v7057 = vadd.f32 0.0, %v7056
    %v7058 = vpop.f32.mrf.mxu0
    %v7059 = vadd.f32 0.0, %v7058
    %7060 = vmatmul.bf16.gmra.mxu0 %v6676
    %v7061 = vpop.f32.mrf.mxu0
    %v7062 = vadd.f32 0.0, %v7061
    %v7063 = vpop.f32.mrf.mxu0
    %v7064 = vadd.f32 0.0, %v7063
    %7065 = vmatmul.bf16.gmra.mxu0 %v6677
    %v7066 = vpop.f32.mrf.mxu0
    %v7067 = vadd.f32 0.0, %v7066
    %v7068 = vpop.f32.mrf.mxu0
    %v7069 = vadd.f32 0.0, %v7068
    %7070 = vmatmul.bf16.gmra.mxu0 %v6678
    %v7071 = vpop.f32.mrf.mxu0
    %v7072 = vadd.f32 0.0, %v7071
    %v7073 = vpop.f32.mrf.mxu0
    %v7074 = vadd.f32 0.0, %v7073
    %7075 = vmatmul.bf16.gmra.mxu0 %v6679
    %v7076 = vpop.f32.mrf.mxu0
    %v7077 = vadd.f32 0.0, %v7076
    %v7078 = vpop.f32.mrf.mxu0
    %v7079 = vadd.f32 0.0, %v7078
    %7080 = vmatmul.bf16.gmra.mxu0 %v6680
    %v7081 = vpop.f32.mrf.mxu0
    %v7082 = vadd.f32 0.0, %v7081
    %v7083 = vpop.f32.mrf.mxu0
    %v7084 = vadd.f32 0.0, %v7083
    %7085 = vmatmul.bf16.gmra.mxu0 %v6681
    %v7086 = vpop.f32.mrf.mxu0
    %v7087 = vadd.f32 0.0, %v7086
    %v7088 = vpop.f32.mrf.mxu0
    %v7089 = vadd.f32 0.0, %v7088
    %7090 = vmatmul.bf16.gmra.mxu0 %v6682
    %v7091 = vpop.f32.mrf.mxu0
    %v7092 = vadd.f32 0.0, %v7091
    %v7093 = vpop.f32.mrf.mxu0
    %v7094 = vadd.f32 0.0, %v7093
    %7095 = vmatmul.bf16.gmra.mxu0 %v6683
    %v7096 = vpop.f32.mrf.mxu0
    %v7097 = vadd.f32 0.0, %v7096
    %v7098 = vpop.f32.mrf.mxu0
    %v7099 = vadd.f32 0.0, %v7098
    %7100 = vmatmul.bf16.gmra.mxu0 %v6684
    %v7101 = vpop.f32.mrf.mxu0
    %v7102 = vadd.f32 0.0, %v7101
    %v7103 = vpop.f32.mrf.mxu0
    %v7104 = vadd.f32 0.0, %v7103
    %7105 = vmatmul.bf16.gmra.mxu0 %v6685
    %v7106 = vpop.f32.mrf.mxu0
    %v7107 = vadd.f32 0.0, %v7106
    %v7108 = vpop.f32.mrf.mxu0
    %v7109 = vadd.f32 0.0, %v7108
    %7110 = vmatmul.bf16.gmra.mxu0 %v6686
    %v7111 = vpop.f32.mrf.mxu0
    %v7112 = vadd.f32 0.0, %v7111
    %v7113 = vpop.f32.mrf.mxu0
    %v7114 = vadd.f32 0.0, %v7113
    %7115 = vmatmul.bf16.gmra.mxu0 %v6687
    %v7116 = vpop.f32.mrf.mxu0
    %v7117 = vadd.f32 0.0, %v7116
    %v7118 = vpop.f32.mrf.mxu0
    %v7119 = vadd.f32 0.0, %v7118
    %7120 = vmatmul.bf16.gmra.mxu0 %v6688
    %v7121 = vpop.f32.mrf.mxu0
    %v7122 = vadd.f32 0.0, %v7121
    %v7123 = vpop.f32.mrf.mxu0
    %v7124 = vadd.f32 0.0, %v7123
    %7125 = vmatmul.bf16.gmra.mxu0 %v6689
    %v7126 = vpop.f32.mrf.mxu0
    %v7127 = vadd.f32 0.0, %v7126
    %v7128 = vpop.f32.mrf.mxu0
    %v7129 = vadd.f32 0.0, %v7128
    %7130 = vmatmul.bf16.gmra.mxu0 %v6690
    %v7131 = vpop.f32.mrf.mxu0
    %v7132 = vadd.f32 0.0, %v7131
    %v7133 = vpop.f32.mrf.mxu0
    %v7134 = vadd.f32 0.0, %v7133
    %7135 = vmatmul.bf16.gmra.mxu0 %v6691
    %v7136 = vpop.f32.mrf.mxu0
    %v7137 = vadd.f32 0.0, %v7136
    %v7138 = vpop.f32.mrf.mxu0
    %v7139 = vadd.f32 0.0, %v7138
    %7140 = vmatmul.bf16.gmra.mxu0 %v6692
    %v7141 = vpop.f32.mrf.mxu0
    %v7142 = vadd.f32 0.0, %v7141
    %v7143 = vpop.f32.mrf.mxu0
    %v7144 = vadd.f32 0.0, %v7143
    %7145 = vmatmul.bf16.gmra.mxu0 %v6693
    %v7146 = vpop.f32.mrf.mxu0
    %v7147 = vadd.f32 0.0, %v7146
    %v7148 = vpop.f32.mrf.mxu0
    %v7149 = vadd.f32 0.0, %v7148
    %7150 = vmatmul.bf16.gmra.mxu0 %v6694
    %v7151 = vpop.f32.mrf.mxu0
    %v7152 = vadd.f32 0.0, %v7151
    %v7153 = vpop.f32.mrf.mxu0
    %v7154 = vadd.f32 0.0, %v7153
    %7155 = vmatmul.bf16.gmra.mxu0 %v6695
    %v7156 = vpop.f32.mrf.mxu0
    %v7157 = vadd.f32 0.0, %v7156
    %v7158 = vpop.f32.mrf.mxu0
    %v7159 = vadd.f32 0.0, %v7158
    %7160 = vmatmul.bf16.gmra.mxu0 %v6696
    %v7161 = vpop.f32.mrf.mxu0
    %v7162 = vadd.f32 0.0, %v7161
    %v7163 = vpop.f32.mrf.mxu0
    %v7164 = vadd.f32 0.0, %v7163
    %7165 = vmatmul.bf16.gmra.mxu0 %v6697
    %v7166 = vpop.f32.mrf.mxu0
    %v7167 = vadd.f32 0.0, %v7166
    %v7168 = vpop.f32.mrf.mxu0
    %v7169 = vadd.f32 0.0, %v7168
    %7170 = vmatmul.bf16.gmra.mxu0 %v6698
    %v7171 = vpop.f32.mrf.mxu0
    %v7172 = vadd.f32 0.0, %v7171
    %v7173 = vpop.f32.mrf.mxu0
    %v7174 = vadd.f32 0.0, %v7173
    %7175 = vmatmul.bf16.gmra.mxu0 %v6699
    %v7176 = vpop.f32.mrf.mxu0
    %v7177 = vadd.f32 0.0, %v7176
    %v7178 = vpop.f32.mrf.mxu0
    %v7179 = vadd.f32 0.0, %v7178
    %7180 = vmatmul.bf16.gmra.mxu0 %v6700
    %v7181 = vpop.f32.mrf.mxu0
    %v7182 = vadd.f32 0.0, %v7181
    %v7183 = vpop.f32.mrf.mxu0
    %v7184 = vadd.f32 0.0, %v7183
    %7185 = vmatmul.bf16.gmra.mxu0 %v6701
    %v7186 = vpop.f32.mrf.mxu0
    %v7187 = vadd.f32 0.0, %v7186
    %v7188 = vpop.f32.mrf.mxu0
    %v7189 = vadd.f32 0.0, %v7188
    %7190 = vmatmul.bf16.gmra.mxu0 %v6702
    %v7191 = vpop.f32.mrf.mxu0
    %v7192 = vadd.f32 0.0, %v7191
    %v7193 = vpop.f32.mrf.mxu0
    %v7194 = vadd.f32 0.0, %v7193
    %7195 = vmatmul.bf16.gmra.mxu0 %v6703
    %v7196 = vpop.f32.mrf.mxu0
    %v7197 = vadd.f32 0.0, %v7196
    %v7198 = vpop.f32.mrf.mxu0
    %v7199 = vadd.f32 0.0, %v7198
    %7200 = vmatmul.bf16.gmra.mxu0 %v6704
    %v7201 = vpop.f32.mrf.mxu0
    %v7202 = vadd.f32 0.0, %v7201
    %v7203 = vpop.f32.mrf.mxu0
    %v7204 = vadd.f32 0.0, %v7203
    %7205 = vmatmul.bf16.gmra.mxu0 %v6705
    %v7206 = vpop.f32.mrf.mxu0
    %v7207 = vadd.f32 0.0, %v7206
    %v7208 = vpop.f32.mrf.mxu0
    %v7209 = vadd.f32 0.0, %v7208
    %7210 = vmatmul.bf16.gmra.mxu0 %v6706
    %v7211 = vpop.f32.mrf.mxu0
    %v7212 = vadd.f32 0.0, %v7211
    %v7213 = vpop.f32.mrf.mxu0
    %v7214 = vadd.f32 0.0, %v7213
    %7215 = vmatmul.bf16.gmra.mxu0 %v6707
    %v7216 = vpop.f32.mrf.mxu0
    %v7217 = vadd.f32 0.0, %v7216
    %v7218 = vpop.f32.mrf.mxu0
    %v7219 = vadd.f32 0.0, %v7218
    %7220 = vmatmul.bf16.gmra.mxu0 %v6708
    %v7221 = vpop.f32.mrf.mxu0
    %v7222 = vadd.f32 0.0, %v7221
    %v7223 = vpop.f32.mrf.mxu0
    %v7224 = vadd.f32 0.0, %v7223
    %7225 = vmatmul.bf16.gmra.mxu0 %v6709
    %v7226 = vpop.f32.mrf.mxu0
    %v7227 = vadd.f32 0.0, %v7226
    %v7228 = vpop.f32.mrf.mxu0
    %v7229 = vadd.f32 0.0, %v7228
    %7230 = vmatmul.bf16.gmra.mxu0 %v6710
    %v7231 = vpop.f32.mrf.mxu0
    %v7232 = vadd.f32 0.0, %v7231
    %v7233 = vpop.f32.mrf.mxu0
    %v7234 = vadd.f32 0.0, %v7233
    %7235 = vmatmul.bf16.gmra.mxu0 %v6711
    %v7236 = vpop.f32.mrf.mxu0
    %v7237 = vadd.f32 0.0, %v7236
    %v7238 = vpop.f32.mrf.mxu0
    %v7239 = vadd.f32 0.0, %v7238
    %7240 = vmatmul.bf16.gmra.mxu0 %v6712
    %v7241 = vpop.f32.mrf.mxu0
    %v7242 = vadd.f32 0.0, %v7241
    %v7243 = vpop.f32.mrf.mxu0
    %v7244 = vadd.f32 0.0, %v7243
    %7245 = vmatmul.bf16.gmra.mxu0 %v6713
    %v7246 = vpop.f32.mrf.mxu0
    %v7247 = vadd.f32 0.0, %v7246
    %v7248 = vpop.f32.mrf.mxu0
    %v7249 = vadd.f32 0.0, %v7248
    %7250 = vmatmul.bf16.gmra.mxu0 %v6714
    %v7251 = vpop.f32.mrf.mxu0
    %v7252 = vadd.f32 0.0, %v7251
    %v7253 = vpop.f32.mrf.mxu0
    %v7254 = vadd.f32 0.0, %v7253
    %7255 = vmatmul.bf16.gmra.mxu0 %v6715
    %v7256 = vpop.f32.mrf.mxu0
    %v7257 = vadd.f32 0.0, %v7256
    %v7258 = vpop.f32.mrf.mxu0
    %v7259 = vadd.f32 0.0, %v7258
    %7260 = vmatmul.bf16.gmra.mxu0 %v6716
    %v7261 = vpop.f32.mrf.mxu0
    %v7262 = vadd.f32 0.0, %v7261
    %v7263 = vpop.f32.mrf.mxu0
    %v7264 = vadd.f32 0.0, %v7263
    %7265 = vmatmul.bf16.gmra.mxu0 %v6717
    %v7266 = vpop.f32.mrf.mxu0
    %v7267 = vadd.f32 0.0, %v7266
    %v7268 = vpop.f32.mrf.mxu0
    %v7269 = vadd.f32 0.0, %v7268
    %7270 = vmatmul.bf16.gmra.mxu0 %v6718
    %v7271 = vpop.f32.mrf.mxu0
    %v7272 = vadd.f32 0.0, %v7271
    %v7273 = vpop.f32.mrf.mxu0
    %v7274 = vadd.f32 0.0, %v7273
    %7275 = vmatmul.bf16.gmra.mxu0 %v6719
    %v7276 = vpop.f32.mrf.mxu0
    %v7277 = vadd.f32 0.0, %v7276
    %v7278 = vpop.f32.mrf.mxu0
    %v7279 = vadd.f32 0.0, %v7278
    %7280 = vmatmul.bf16.gmra.mxu0 %v6720
    %v7281 = vpop.f32.mrf.mxu0
    %v7282 = vadd.f32 0.0, %v7281
    %v7283 = vpop.f32.mrf.mxu0
    %v7284 = vadd.f32 0.0, %v7283
    %7285 = vmatmul.bf16.gmra.mxu0 %v6721
    %v7286 = vpop.f32.mrf.mxu0
    %v7287 = vadd.f32 0.0, %v7286
    %v7288 = vpop.f32.mrf.mxu0
    %v7289 = vadd.f32 0.0, %v7288
    %7290 = vmatmul.bf16.gmra.mxu0 %v6722
    %v7291 = vpop.f32.mrf.mxu0
    %v7292 = vadd.f32 0.0, %v7291
    %v7293 = vpop.f32.mrf.mxu0
    %v7294 = vadd.f32 0.0, %v7293
    %7295 = vmatmul.bf16.gmra.mxu0 %v6723
    %v7296 = vpop.f32.mrf.mxu0
    %v7297 = vadd.f32 0.0, %v7296
    %v7298 = vpop.f32.mrf.mxu0
    %v7299 = vadd.f32 0.0, %v7298
    %7300 = vmatmul.bf16.gmra.mxu0 %v6724
    %v7301 = vpop.f32.mrf.mxu0
    %v7302 = vadd.f32 0.0, %v7301
    %v7303 = vpop.f32.mrf.mxu0
    %v7304 = vadd.f32 0.0, %v7303
    %7305 = vmatmul.bf16.gmra.mxu0 %v6725
    %v7306 = vpop.f32.mrf.mxu0
    %v7307 = vadd.f32 0.0, %v7306
    %v7308 = vpop.f32.mrf.mxu0
    %v7309 = vadd.f32 0.0, %v7308
    %7310 = vmatmul.bf16.gmra.mxu0 %v6726
    %v7311 = vpop.f32.mrf.mxu0
    %v7312 = vadd.f32 0.0, %v7311
    %v7313 = vpop.f32.mrf.mxu0
    %v7314 = vadd.f32 0.0, %v7313
    %7315 = vmatmul.bf16.gmra.mxu0 %v6727
    %v7316 = vpop.f32.mrf.mxu0
    %v7317 = vadd.f32 0.0, %v7316
    %v7318 = vpop.f32.mrf.mxu0
    %v7319 = vadd.f32 0.0, %v7318
    %7320 = vmatmul.bf16.gmra.mxu0 %v6728
    %v7321 = vpop.f32.mrf.mxu0
    %v7322 = vadd.f32 0.0, %v7321
    %v7323 = vpop.f32.mrf.mxu0
    %v7324 = vadd.f32 0.0, %v7323
    %7325 = vmatmul.bf16.gmra.mxu0 %v6729
    %v7326 = vpop.f32.mrf.mxu0
    %v7327 = vadd.f32 0.0, %v7326
    %v7328 = vpop.f32.mrf.mxu0
    %v7329 = vadd.f32 0.0, %v7328
    %7330 = vmatmul.bf16.gmra.mxu0 %v6730
    %v7331 = vpop.f32.mrf.mxu0
    %v7332 = vadd.f32 0.0, %v7331
    %v7333 = vpop.f32.mrf.mxu0
    %v7334 = vadd.f32 0.0, %v7333
    %7335 = vmatmul.bf16.gmra.mxu0 %v6731
    %v7336 = vpop.f32.mrf.mxu0
    %v7337 = vadd.f32 0.0, %v7336
    %v7338 = vpop.f32.mrf.mxu0
    %v7339 = vadd.f32 0.0, %v7338
    %7340 = vmatmul.bf16.gmra.mxu0 %v6732
    %v7341 = vpop.f32.mrf.mxu0
    %v7342 = vadd.f32 0.0, %v7341
    %v7343 = vpop.f32.mrf.mxu0
    %v7344 = vadd.f32 0.0, %v7343
    %7345 = vmatmul.bf16.gmra.mxu0 %v6733
    %v7346 = vpop.f32.mrf.mxu0
    %v7347 = vadd.f32 0.0, %v7346
    %v7348 = vpop.f32.mrf.mxu0
    %v7349 = vadd.f32 0.0, %v7348
    %7350 = vmatmul.bf16.gmra.mxu0 %v6734
    %v7351 = vpop.f32.mrf.mxu0
    %v7352 = vadd.f32 0.0, %v7351
    %v7353 = vpop.f32.mrf.mxu0
    %v7354 = vadd.f32 0.0, %v7353
    %7355 = vmatmul.bf16.gmra.mxu0 %v6735
    %v7356 = vpop.f32.mrf.mxu0
    %v7357 = vadd.f32 0.0, %v7356
    %v7358 = vpop.f32.mrf.mxu0
    %v7359 = vadd.f32 0.0, %v7358
    %7360 = vmatmul.bf16.gmra.mxu0 %v6736
    %v7361 = vpop.f32.mrf.mxu0
    %v7362 = vadd.f32 0.0, %v7361
    %v7363 = vpop.f32.mrf.mxu0
    %v7364 = vadd.f32 0.0, %v7363
    %7365 = vmatmul.bf16.gmra.mxu0 %v6737
    %v7366 = vpop.f32.mrf.mxu0
    %v7367 = vadd.f32 0.0, %v7366
    %v7368 = vpop.f32.mrf.mxu0
    %v7369 = vadd.f32 0.0, %v7368
    %7370 = vmatmul.bf16.gmra.mxu0 %v6738
    %v7371 = vpop.f32.mrf.mxu0
    %v7372 = vadd.f32 0.0, %v7371
    %v7373 = vpop.f32.mrf.mxu0
    %v7374 = vadd.f32 0.0, %v7373
    %7375 = vmatmul.bf16.gmra.mxu0 %v6739
    %v7376 = vpop.f32.mrf.mxu0
    %v7377 = vadd.f32 0.0, %v7376
    %v7378 = vpop.f32.mrf.mxu0
    %v7379 = vadd.f32 0.0, %v7378
    %7380 = vmatmul.bf16.gmra.mxu0 %v6740
    %v7381 = vpop.f32.mrf.mxu0
    %v7382 = vadd.f32 0.0, %v7381
    %v7383 = vpop.f32.mrf.mxu0
    %v7384 = vadd.f32 0.0, %v7383
    %7385 = vmatmul.bf16.gmra.mxu0 %v6741
    %v7386 = vpop.f32.mrf.mxu0
    %v7387 = vadd.f32 0.0, %v7386
    %v7388 = vpop.f32.mrf.mxu0
    %v7389 = vadd.f32 0.0, %v7388
    %7390 = vmatmul.bf16.gmra.mxu0 %v6742
    %v7391 = vpop.f32.mrf.mxu0
    %v7392 = vadd.f32 0.0, %v7391
    %v7393 = vpop.f32.mrf.mxu0
    %v7394 = vadd.f32 0.0, %v7393
    %7395 = vmatmul.bf16.gmra.mxu0 %v6743
    %v7396 = vpop.f32.mrf.mxu0
    %v7397 = vadd.f32 0.0, %v7396
    %v7398 = vpop.f32.mrf.mxu0
    %v7399 = vadd.f32 0.0, %v7398
    %7400 = vmatmul.bf16.gmra.mxu0 %v6744
    %v7401 = vpop.f32.mrf.mxu0
    %v7402 = vadd.f32 0.0, %v7401
    %v7403 = vpop.f32.mrf.mxu0
    %v7404 = vadd.f32 0.0, %v7403
    %7405 = vmatmul.bf16.gmra.mxu0 %v6745
    %v7406 = vpop.f32.mrf.mxu0
    %v7407 = vadd.f32 0.0, %v7406
    %v7408 = vpop.f32.mrf.mxu0
    %v7409 = vadd.f32 0.0, %v7408
    %7410 = vmatmul.bf16.gmra.mxu0 %v6746
    %v7411 = vpop.f32.mrf.mxu0
    %v7412 = vadd.f32 0.0, %v7411
    %v7413 = vpop.f32.mrf.mxu0
    %v7414 = vadd.f32 0.0, %v7413
    %7415 = vmatmul.bf16.gmra.mxu0 %v6747
    %v7416 = vpop.f32.mrf.mxu0
    %v7417 = vadd.f32 0.0, %v7416
    %v7418 = vpop.f32.mrf.mxu0
    %v7419 = vadd.f32 0.0, %v7418
    %7420 = vmatmul.bf16.gmra.mxu0 %v6748
    %v7421 = vpop.f32.mrf.mxu0
    %v7422 = vadd.f32 0.0, %v7421
    %v7423 = vpop.f32.mrf.mxu0
    %v7424 = vadd.f32 0.0, %v7423
    %7425 = vmatmul.bf16.gmra.mxu0 %v6749
    %v7426 = vpop.f32.mrf.mxu0
    %v7427 = vadd.f32 0.0, %v7426
    %v7428 = vpop.f32.mrf.mxu0
    %v7429 = vadd.f32 0.0, %v7428
    %7430 = vmatmul.bf16.gmra.mxu0 %v6750
    %v7431 = vpop.f32.mrf.mxu0
    %v7432 = vadd.f32 0.0, %v7431
    %v7433 = vpop.f32.mrf.mxu0
    %v7434 = vadd.f32 0.0, %v7433
    %7435 = vmatmul.bf16.gmra.mxu0 %v6751
    %v7436 = vpop.f32.mrf.mxu0
    %v7437 = vadd.f32 0.0, %v7436
    %v7438 = vpop.f32.mrf.mxu0
    %v7439 = vadd.f32 0.0, %v7438
    %7440 = vmatmul.bf16.gmra.mxu0 %v6752
    %v7441 = vpop.f32.mrf.mxu0
    %v7442 = vadd.f32 0.0, %v7441
    %v7443 = vpop.f32.mrf.mxu0
    %v7444 = vadd.f32 0.0, %v7443
    %7445 = vmatmul.bf16.gmra.mxu0 %v6753
    %v7446 = vpop.f32.mrf.mxu0
    %v7447 = vadd.f32 0.0, %v7446
    %v7448 = vpop.f32.mrf.mxu0
    %v7449 = vadd.f32 0.0, %v7448
    %7450 = vmatmul.bf16.gmra.mxu0 %v6754
    %v7451 = vpop.f32.mrf.mxu0
    %v7452 = vadd.f32 0.0, %v7451
    %v7453 = vpop.f32.mrf.mxu0
    %v7454 = vadd.f32 0.0, %v7453
    %7455 = vmatmul.bf16.gmra.mxu0 %v6755
    %v7456 = vpop.f32.mrf.mxu0
    %v7457 = vadd.f32 0.0, %v7456
    %v7458 = vpop.f32.mrf.mxu0
    %v7459 = vadd.f32 0.0, %v7458
    %7460 = vmatmul.bf16.gmra.mxu0 %v6756
    %v7461 = vpop.f32.mrf.mxu0
    %v7462 = vadd.f32 0.0, %v7461
    %v7463 = vpop.f32.mrf.mxu0
    %v7464 = vadd.f32 0.0, %v7463
    %7465 = vmatmul.bf16.gmra.mxu0 %v6757
    %v7466 = vpop.f32.mrf.mxu0
    %v7467 = vadd.f32 0.0, %v7466
    %v7468 = vpop.f32.mrf.mxu0
    %v7469 = vadd.f32 0.0, %v7468
    %7470 = vmatmul.bf16.gmra.mxu0 %v6758
    %v7471 = vpop.f32.mrf.mxu0
    %v7472 = vadd.f32 0.0, %v7471
    %v7473 = vpop.f32.mrf.mxu0
    %v7474 = vadd.f32 0.0, %v7473
    %7475 = vmatmul.bf16.gmra.mxu0 %v6759
    %v7476 = vpop.f32.mrf.mxu0
    %v7477 = vadd.f32 0.0, %v7476
    %v7478 = vpop.f32.mrf.mxu0
    %v7479 = vadd.f32 0.0, %v7478
    %7480 = vmatmul.bf16.gmra.mxu0 %v6760
    %v7481 = vpop.f32.mrf.mxu0
    %v7482 = vadd.f32 0.0, %v7481
    %v7483 = vpop.f32.mrf.mxu0
    %v7484 = vadd.f32 0.0, %v7483
    %7485 = vmatmul.bf16.gmra.mxu0 %v6761
    %v7486 = vpop.f32.mrf.mxu0
    %v7487 = vadd.f32 0.0, %v7486
    %v7488 = vpop.f32.mrf.mxu0
    %v7489 = vadd.f32 0.0, %v7488
    %7490 = vmatmul.bf16.gmra.mxu0 %v6762
    %v7491 = vpop.f32.mrf.mxu0
    %v7492 = vadd.f32 0.0, %v7491
    %v7493 = vpop.f32.mrf.mxu0
    %v7494 = vadd.f32 0.0, %v7493
    %7495 = vmatmul.bf16.gmra.mxu0 %v6763
    %v7496 = vpop.f32.mrf.mxu0
    %v7497 = vadd.f32 0.0, %v7496
    %v7498 = vpop.f32.mrf.mxu0
    %v7499 = vadd.f32 0.0, %v7498
    %7500 = vmatmul.bf16.gmra.mxu0 %v6764
    %v7501 = vpop.f32.mrf.mxu0
    %v7502 = vadd.f32 0.0, %v7501
    %v7503 = vpop.f32.mrf.mxu0
    %v7504 = vadd.f32 0.0, %v7503
    %7505 = vmatmul.bf16.gmra.mxu0 %v6765
    %v7506 = vpop.f32.mrf.mxu0
    %v7507 = vadd.f32 0.0, %v7506
    %v7508 = vpop.f32.mrf.mxu0
    %v7509 = vadd.f32 0.0, %v7508
    %7510 = vmatmul.bf16.gmra.mxu0 %v6766
    %v7511 = vpop.f32.mrf.mxu0
    %v7512 = vadd.f32 0.0, %v7511
    %v7513 = vpop.f32.mrf.mxu0
    %v7514 = vadd.f32 0.0, %v7513
    %7515 = vmatmul.bf16.gmra.mxu0 %v6767
    %v7516 = vpop.f32.mrf.mxu0
    %v7517 = vadd.f32 0.0, %v7516
    %v7518 = vpop.f32.mrf.mxu0
    %v7519 = vadd.f32 0.0, %v7518
    %7520 = vmatmul.bf16.gmra.mxu0 %v6768
    %v7521 = vpop.f32.mrf.mxu0
    %v7522 = vadd.f32 0.0, %v7521
    %v7523 = vpop.f32.mrf.mxu0
    %v7524 = vadd.f32 0.0, %v7523
    %7525 = vmatmul.bf16.gmra.mxu0 %v6769
    %v7526 = vpop.f32.mrf.mxu0
    %v7527 = vadd.f32 0.0, %v7526
    %v7528 = vpop.f32.mrf.mxu0
    %v7529 = vadd.f32 0.0, %v7528
    %7530 = vmatmul.bf16.gmra.mxu0 %v6770
    %v7531 = vpop.f32.mrf.mxu0
    %v7532 = vadd.f32 0.0, %v7531
    %v7533 = vpop.f32.mrf.mxu0
    %v7534 = vadd.f32 0.0, %v7533
    %7535 = vmatmul.bf16.gmra.mxu0 %v6771
    %v7536 = vpop.f32.mrf.mxu0
    %v7537 = vadd.f32 0.0, %v7536
    %v7538 = vpop.f32.mrf.mxu0
    %v7539 = vadd.f32 0.0, %v7538
    %7540 = vmatmul.bf16.gmra.mxu0 %v6772
    %v7541 = vpop.f32.mrf.mxu0
    %v7542 = vadd.f32 0.0, %v7541
    %v7543 = vpop.f32.mrf.mxu0
    %v7544 = vadd.f32 0.0, %v7543
    %7545 = vmatmul.bf16.gmra.mxu0 %v6773
    %v7546 = vpop.f32.mrf.mxu0
    %v7547 = vadd.f32 0.0, %v7546
    %v7548 = vpop.f32.mrf.mxu0
    %v7549 = vadd.f32 0.0, %v7548
    %7550 = vmatmul.bf16.gmra.mxu0 %v6774
    %v7551 = vpop.f32.mrf.mxu0
    %v7552 = vadd.f32 0.0, %v7551
    %v7553 = vpop.f32.mrf.mxu0
    %v7554 = vadd.f32 0.0, %v7553
    %7555 = vmatmul.bf16.gmra.mxu0 %v6775
    %v7556 = vpop.f32.mrf.mxu0
    %v7557 = vadd.f32 0.0, %v7556
    %v7558 = vpop.f32.mrf.mxu0
    %v7559 = vadd.f32 0.0, %v7558
    %7560 = vmatmul.bf16.gmra.mxu0 %v6776
    %v7561 = vpop.f32.mrf.mxu0
    %v7562 = vadd.f32 0.0, %v7561
    %v7563 = vpop.f32.mrf.mxu0
    %v7564 = vadd.f32 0.0, %v7563
    %7565 = vmatmul.bf16.gmra.mxu0 %v6777
    %v7566 = vpop.f32.mrf.mxu0
    %v7567 = vadd.f32 0.0, %v7566
    %v7568 = vpop.f32.mrf.mxu0
    %v7569 = vadd.f32 0.0, %v7568
    %7570 = vmatmul.bf16.gmra.mxu0 %v6778
    %v7571 = vpop.f32.mrf.mxu0
    %v7572 = vadd.f32 0.0, %v7571
    %v7573 = vpop.f32.mrf.mxu0
    %v7574 = vadd.f32 0.0, %v7573
    %7575 = vmatmul.bf16.gmra.mxu0 %v6779
    %v7576 = vpop.f32.mrf.mxu0
    %v7577 = vadd.f32 0.0, %v7576
    %v7578 = vpop.f32.mrf.mxu0
    %v7579 = vadd.f32 0.0, %v7578
    %7580 = vmatmul.bf16.gmra.mxu0 %v6780
    %v7581 = vpop.f32.mrf.mxu0
    %v7582 = vadd.f32 0.0, %v7581
    %v7583 = vpop.f32.mrf.mxu0
    %v7584 = vadd.f32 0.0, %v7583
    %7585 = vmatmul.bf16.gmra.mxu0 %v6781
    %v7586 = vpop.f32.mrf.mxu0
    %v7587 = vadd.f32 0.0, %v7586
    %v7588 = vpop.f32.mrf.mxu0
    %v7589 = vadd.f32 0.0, %v7588
    %7590 = vmatmul.bf16.gmra.mxu0 %v6782
    %v7591 = vpop.f32.mrf.mxu0
    %v7592 = vadd.f32 0.0, %v7591
    %v7593 = vpop.f32.mrf.mxu0
    %v7594 = vadd.f32 0.0, %v7593
    %7595 = vmatmul.bf16.gmra.mxu0 %v6783
    %v7596 = vpop.f32.mrf.mxu0
    %v7597 = vadd.f32 0.0, %v7596
    %v7598 = vpop.f32.mrf.mxu0
    %v7599 = vadd.f32 0.0, %v7598
    %7600 = vmatmul.bf16.gmra.mxu0 %v6784
    %v7601 = vpop.f32.mrf.mxu0
    %v7602 = vadd.f32 0.0, %v7601
    %v7603 = vpop.f32.mrf.mxu0
    %v7604 = vadd.f32 0.0, %v7603
    %7605 = vmatmul.bf16.gmra.mxu0 %v6785
    %v7606 = vpop.f32.mrf.mxu0
    %v7607 = vadd.f32 0.0, %v7606
    %v7608 = vpop.f32.mrf.mxu0
    %v7609 = vadd.f32 0.0, %v7608
    %7610 = vmatmul.bf16.gmra.mxu0 %v6786
    %v7611 = vpop.f32.mrf.mxu0
    %v7612 = vadd.f32 0.0, %v7611
    %v7613 = vpop.f32.mrf.mxu0
    %v7614 = vadd.f32 0.0, %v7613
    %7615 = vmatmul.bf16.gmra.mxu0 %v6787
    %v7616 = vpop.f32.mrf.mxu0
    %v7617 = vadd.f32 0.0, %v7616
    %v7618 = vpop.f32.mrf.mxu0
    %v7619 = vadd.f32 0.0, %v7618
    %7620 = vdwg.mxu0
    %v7621 = vmax.f32 %v6822, %v6824
    %v7622 = vmax.f32 %v7621, %v6827
    %v7623 = vmax.f32 %v7622, %v6829
    %v7624 = vmax.f32 %v7623, %v6832
    %v7625 = vmax.f32 %v7624, %v6834
    %v7626 = vmax.f32 %v7625, %v6837
    %v7627 = vmax.f32 %v7626, %v6839
    %v7628 = vmax.f32 %v7627, %v6842
    %v7629 = vmax.f32 %v7628, %v6844
    %v7630 = vmax.f32 %v7629, %v6847
    %v7631 = vmax.f32 %v7630, %v6849
    %v7632 = vmax.f32 %v7631, %v6852
    %v7633 = vmax.f32 %v7632, %v6854
    %v7634 = vmax.f32 %v7633, %v6857
    %v7635 = vmax.f32 %v7634, %v6859
    %v7636 = vrot.slane %v7635, 4
    %v7637 = vmax.f32 %v7635, %v7636
    %v7638 = vrot.slane %v7637, 2
    %v7639 = vmax.f32 %v7637, %v7638
    %v7640 = vrot.slane %v7639, 1
    %v7641 = vmax.f32 %v7639, %v7640
    %v7642 = vmax.f32 %v6862, %v6864
    %v7643 = vmax.f32 %v7642, %v6867
    %v7644 = vmax.f32 %v7643, %v6869
    %v7645 = vmax.f32 %v7644, %v6872
    %v7646 = vmax.f32 %v7645, %v6874
    %v7647 = vmax.f32 %v7646, %v6877
    %v7648 = vmax.f32 %v7647, %v6879
    %v7649 = vmax.f32 %v7648, %v6882
    %v7650 = vmax.f32 %v7649, %v6884
    %v7651 = vmax.f32 %v7650, %v6887
    %v7652 = vmax.f32 %v7651, %v6889
    %v7653 = vmax.f32 %v7652, %v6892
    %v7654 = vmax.f32 %v7653, %v6894
    %v7655 = vmax.f32 %v7654, %v6897
    %v7656 = vmax.f32 %v7655, %v6899
    %v7657 = vrot.slane %v7656, 4
    %v7658 = vmax.f32 %v7656, %v7657
    %v7659 = vrot.slane %v7658, 2
    %v7660 = vmax.f32 %v7658, %v7659
    %v7661 = vrot.slane %v7660, 1
    %v7662 = vmax.f32 %v7660, %v7661
    %v7663 = vmax.f32 %v6902, %v6904
    %v7664 = vmax.f32 %v7663, %v6907
    %v7665 = vmax.f32 %v7664, %v6909
    %v7666 = vmax.f32 %v7665, %v6912
    %v7667 = vmax.f32 %v7666, %v6914
    %v7668 = vmax.f32 %v7667, %v6917
    %v7669 = vmax.f32 %v7668, %v6919
    %v7670 = vmax.f32 %v7669, %v6922
    %v7671 = vmax.f32 %v7670, %v6924
    %v7672 = vmax.f32 %v7671, %v6927
    %v7673 = vmax.f32 %v7672, %v6929
    %v7674 = vmax.f32 %v7673, %v6932
    %v7675 = vmax.f32 %v7674, %v6934
    %v7676 = vmax.f32 %v7675, %v6937
    %v7677 = vmax.f32 %v7676, %v6939
    %v7678 = vrot.slane %v7677, 4
    %v7679 = vmax.f32 %v7677, %v7678
    %v7680 = vrot.slane %v7679, 2
    %v7681 = vmax.f32 %v7679, %v7680
    %v7682 = vrot.slane %v7681, 1
    %v7683 = vmax.f32 %v7681, %v7682
    %v7684 = vmax.f32 %v6942, %v6944
    %v7685 = vmax.f32 %v7684, %v6947
    %v7686 = vmax.f32 %v7685, %v6949
    %v7687 = vmax.f32 %v7686, %v6952
    %v7688 = vmax.f32 %v7687, %v6954
    %v7689 = vmax.f32 %v7688, %v6957
    %v7690 = vmax.f32 %v7689, %v6959
    %v7691 = vmax.f32 %v7690, %v6962
    %v7692 = vmax.f32 %v7691, %v6964
    %v7693 = vmax.f32 %v7692, %v6967
    %v7694 = vmax.f32 %v7693, %v6969
    %v7695 = vmax.f32 %v7694, %v6972
    %v7696 = vmax.f32 %v7695, %v6974
    %v7697 = vmax.f32 %v7696, %v6977
    %v7698 = vmax.f32 %v7697, %v6979
    %v7699 = vrot.slane %v7698, 4
    %v7700 = vmax.f32 %v7698, %v7699
    %v7701 = vrot.slane %v7700, 2
    %v7702 = vmax.f32 %v7700, %v7701
    %v7703 = vrot.slane %v7702, 1
    %v7704 = vmax.f32 %v7702, %v7703
    %v7705 = vmax.f32 %v6982, %v6984
    %v7706 = vmax.f32 %v7705, %v6987
    %v7707 = vmax.f32 %v7706, %v6989
    %v7708 = vmax.f32 %v7707, %v6992
    %v7709 = vmax.f32 %v7708, %v6994
    %v7710 = vmax.f32 %v7709, %v6997
    %v7711 = vmax.f32 %v7710, %v6999
    %v7712 = vmax.f32 %v7711, %v7002
    %v7713 = vmax.f32 %v7712, %v7004
    %v7714 = vmax.f32 %v7713, %v7007
    %v7715 = vmax.f32 %v7714, %v7009
    %v7716 = vmax.f32 %v7715, %v7012
    %v7717 = vmax.f32 %v7716, %v7014
    %v7718 = vmax.f32 %v7717, %v7017
    %v7719 = vmax.f32 %v7718, %v7019
    %v7720 = vrot.slane %v7719, 4
    %v7721 = vmax.f32 %v7719, %v7720
    %v7722 = vrot.slane %v7721, 2
    %v7723 = vmax.f32 %v7721, %v7722
    %v7724 = vrot.slane %v7723, 1
    %v7725 = vmax.f32 %v7723, %v7724
    %v7726 = vmax.f32 %v7022, %v7024
    %v7727 = vmax.f32 %v7726, %v7027
    %v7728 = vmax.f32 %v7727, %v7029
    %v7729 = vmax.f32 %v7728, %v7032
    %v7730 = vmax.f32 %v7729, %v7034
    %v7731 = vmax.f32 %v7730, %v7037
    %v7732 = vmax.f32 %v7731, %v7039
    %v7733 = vmax.f32 %v7732, %v7042
    %v7734 = vmax.f32 %v7733, %v7044
    %v7735 = vmax.f32 %v7734, %v7047
    %v7736 = vmax.f32 %v7735, %v7049
    %v7737 = vmax.f32 %v7736, %v7052
    %v7738 = vmax.f32 %v7737, %v7054
    %v7739 = vmax.f32 %v7738, %v7057
    %v7740 = vmax.f32 %v7739, %v7059
    %v7741 = vrot.slane %v7740, 4
    %v7742 = vmax.f32 %v7740, %v7741
    %v7743 = vrot.slane %v7742, 2
    %v7744 = vmax.f32 %v7742, %v7743
    %v7745 = vrot.slane %v7744, 1
    %v7746 = vmax.f32 %v7744, %v7745
    %v7747 = vmax.f32 %v7062, %v7064
    %v7748 = vmax.f32 %v7747, %v7067
    %v7749 = vmax.f32 %v7748, %v7069
    %v7750 = vmax.f32 %v7749, %v7072
    %v7751 = vmax.f32 %v7750, %v7074
    %v7752 = vmax.f32 %v7751, %v7077
    %v7753 = vmax.f32 %v7752, %v7079
    %v7754 = vmax.f32 %v7753, %v7082
    %v7755 = vmax.f32 %v7754, %v7084
    %v7756 = vmax.f32 %v7755, %v7087
    %v7757 = vmax.f32 %v7756, %v7089
    %v7758 = vmax.f32 %v7757, %v7092
    %v7759 = vmax.f32 %v7758, %v7094
    %v7760 = vmax.f32 %v7759, %v7097
    %v7761 = vmax.f32 %v7760, %v7099
    %v7762 = vrot.slane %v7761, 4
    %v7763 = vmax.f32 %v7761, %v7762
    %v7764 = vrot.slane %v7763, 2
    %v7765 = vmax.f32 %v7763, %v7764
    %v7766 = vrot.slane %v7765, 1
    %v7767 = vmax.f32 %v7765, %v7766
    %v7768 = vmax.f32 %v7102, %v7104
    %v7769 = vmax.f32 %v7768, %v7107
    %v7770 = vmax.f32 %v7769, %v7109
    %v7771 = vmax.f32 %v7770, %v7112
    %v7772 = vmax.f32 %v7771, %v7114
    %v7773 = vmax.f32 %v7772, %v7117
    %v7774 = vmax.f32 %v7773, %v7119
    %v7775 = vmax.f32 %v7774, %v7122
    %v7776 = vmax.f32 %v7775, %v7124
    %v7777 = vmax.f32 %v7776, %v7127
    %v7778 = vmax.f32 %v7777, %v7129
    %v7779 = vmax.f32 %v7778, %v7132
    %v7780 = vmax.f32 %v7779, %v7134
    %v7781 = vmax.f32 %v7780, %v7137
    %v7782 = vmax.f32 %v7781, %v7139
    %v7783 = vrot.slane %v7782, 4
    %v7784 = vmax.f32 %v7782, %v7783
    %v7785 = vrot.slane %v7784, 2
    %v7786 = vmax.f32 %v7784, %v7785
    %v7787 = vrot.slane %v7786, 1
    %v7788 = vmax.f32 %v7786, %v7787
    %v7789 = vmax.f32 %v7142, %v7144
    %v7790 = vmax.f32 %v7789, %v7147
    %v7791 = vmax.f32 %v7790, %v7149
    %v7792 = vmax.f32 %v7791, %v7152
    %v7793 = vmax.f32 %v7792, %v7154
    %v7794 = vmax.f32 %v7793, %v7157
    %v7795 = vmax.f32 %v7794, %v7159
    %v7796 = vmax.f32 %v7795, %v7162
    %v7797 = vmax.f32 %v7796, %v7164
    %v7798 = vmax.f32 %v7797, %v7167
    %v7799 = vmax.f32 %v7798, %v7169
    %v7800 = vmax.f32 %v7799, %v7172
    %v7801 = vmax.f32 %v7800, %v7174
    %v7802 = vmax.f32 %v7801, %v7177
    %v7803 = vmax.f32 %v7802, %v7179
    %v7804 = vrot.slane %v7803, 4
    %v7805 = vmax.f32 %v7803, %v7804
    %v7806 = vrot.slane %v7805, 2
    %v7807 = vmax.f32 %v7805, %v7806
    %v7808 = vrot.slane %v7807, 1
    %v7809 = vmax.f32 %v7807, %v7808
    %v7810 = vmax.f32 %v7182, %v7184
    %v7811 = vmax.f32 %v7810, %v7187
    %v7812 = vmax.f32 %v7811, %v7189
    %v7813 = vmax.f32 %v7812, %v7192
    %v7814 = vmax.f32 %v7813, %v7194
    %v7815 = vmax.f32 %v7814, %v7197
    %v7816 = vmax.f32 %v7815, %v7199
    %v7817 = vmax.f32 %v7816, %v7202
    %v7818 = vmax.f32 %v7817, %v7204
    %v7819 = vmax.f32 %v7818, %v7207
    %v7820 = vmax.f32 %v7819, %v7209
    %v7821 = vmax.f32 %v7820, %v7212
    %v7822 = vmax.f32 %v7821, %v7214
    %v7823 = vmax.f32 %v7822, %v7217
    %v7824 = vmax.f32 %v7823, %v7219
    %v7825 = vrot.slane %v7824, 4
    %v7826 = vmax.f32 %v7824, %v7825
    %v7827 = vrot.slane %v7826, 2
    %v7828 = vmax.f32 %v7826, %v7827
    %v7829 = vrot.slane %v7828, 1
    %v7830 = vmax.f32 %v7828, %v7829
    %v7831 = vmax.f32 %v7222, %v7224
    %v7832 = vmax.f32 %v7831, %v7227
    %v7833 = vmax.f32 %v7832, %v7229
    %v7834 = vmax.f32 %v7833, %v7232
    %v7835 = vmax.f32 %v7834, %v7234
    %v7836 = vmax.f32 %v7835, %v7237
    %v7837 = vmax.f32 %v7836, %v7239
    %v7838 = vmax.f32 %v7837, %v7242
    %v7839 = vmax.f32 %v7838, %v7244
    %v7840 = vmax.f32 %v7839, %v7247
    %v7841 = vmax.f32 %v7840, %v7249
    %v7842 = vmax.f32 %v7841, %v7252
    %v7843 = vmax.f32 %v7842, %v7254
    %v7844 = vmax.f32 %v7843, %v7257
    %v7845 = vmax.f32 %v7844, %v7259
    %v7846 = vrot.slane %v7845, 4
    %v7847 = vmax.f32 %v7845, %v7846
    %v7848 = vrot.slane %v7847, 2
    %v7849 = vmax.f32 %v7847, %v7848
    %v7850 = vrot.slane %v7849, 1
    %v7851 = vmax.f32 %v7849, %v7850
    %v7852 = vmax.f32 %v7262, %v7264
    %v7853 = vmax.f32 %v7852, %v7267
    %v7854 = vmax.f32 %v7853, %v7269
    %v7855 = vmax.f32 %v7854, %v7272
    %v7856 = vmax.f32 %v7855, %v7274
    %v7857 = vmax.f32 %v7856, %v7277
    %v7858 = vmax.f32 %v7857, %v7279
    %v7859 = vmax.f32 %v7858, %v7282
    %v7860 = vmax.f32 %v7859, %v7284
    %v7861 = vmax.f32 %v7860, %v7287
    %v7862 = vmax.f32 %v7861, %v7289
    %v7863 = vmax.f32 %v7862, %v7292
    %v7864 = vmax.f32 %v7863, %v7294
    %v7865 = vmax.f32 %v7864, %v7297
    %v7866 = vmax.f32 %v7865, %v7299
    %v7867 = vrot.slane %v7866, 4
    %v7868 = vmax.f32 %v7866, %v7867
    %v7869 = vrot.slane %v7868, 2
    %v7870 = vmax.f32 %v7868, %v7869
    %v7871 = vrot.slane %v7870, 1
    %v7872 = vmax.f32 %v7870, %v7871
    %v7873 = vmax.f32 %v7302, %v7304
    %v7874 = vmax.f32 %v7873, %v7307
    %v7875 = vmax.f32 %v7874, %v7309
    %v7876 = vmax.f32 %v7875, %v7312
    %v7877 = vmax.f32 %v7876, %v7314
    %v7878 = vmax.f32 %v7877, %v7317
    %v7879 = vmax.f32 %v7878, %v7319
    %v7880 = vmax.f32 %v7879, %v7322
    %v7881 = vmax.f32 %v7880, %v7324
    %v7882 = vmax.f32 %v7881, %v7327
    %v7883 = vmax.f32 %v7882, %v7329
    %v7884 = vmax.f32 %v7883, %v7332
    %v7885 = vmax.f32 %v7884, %v7334
    %v7886 = vmax.f32 %v7885, %v7337
    %v7887 = vmax.f32 %v7886, %v7339
    %v7888 = vrot.slane %v7887, 4
    %v7889 = vmax.f32 %v7887, %v7888
    %v7890 = vrot.slane %v7889, 2
    %v7891 = vmax.f32 %v7889, %v7890
    %v7892 = vrot.slane %v7891, 1
    %v7893 = vmax.f32 %v7891, %v7892
    %v7894 = vmax.f32 %v7342, %v7344
    %v7895 = vmax.f32 %v7894, %v7347
    %v7896 = vmax.f32 %v7895, %v7349
    %v7897 = vmax.f32 %v7896, %v7352
    %v7898 = vmax.f32 %v7897, %v7354
    %v7899 = vmax.f32 %v7898, %v7357
    %v7900 = vmax.f32 %v7899, %v7359
    %v7901 = vmax.f32 %v7900, %v7362
    %v7902 = vmax.f32 %v7901, %v7364
    %v7903 = vmax.f32 %v7902, %v7367
    %v7904 = vmax.f32 %v7903, %v7369
    %v7905 = vmax.f32 %v7904, %v7372
    %v7906 = vmax.f32 %v7905, %v7374
    %v7907 = vmax.f32 %v7906, %v7377
    %v7908 = vmax.f32 %v7907, %v7379
    %v7909 = vrot.slane %v7908, 4
    %v7910 = vmax.f32 %v7908, %v7909
    %v7911 = vrot.slane %v7910, 2
    %v7912 = vmax.f32 %v7910, %v7911
    %v7913 = vrot.slane %v7912, 1
    %v7914 = vmax.f32 %v7912, %v7913
    %v7915 = vmax.f32 %v7382, %v7384
    %v7916 = vmax.f32 %v7915, %v7387
    %v7917 = vmax.f32 %v7916, %v7389
    %v7918 = vmax.f32 %v7917, %v7392
    %v7919 = vmax.f32 %v7918, %v7394
    %v7920 = vmax.f32 %v7919, %v7397
    %v7921 = vmax.f32 %v7920, %v7399
    %v7922 = vmax.f32 %v7921, %v7402
    %v7923 = vmax.f32 %v7922, %v7404
    %v7924 = vmax.f32 %v7923, %v7407
    %v7925 = vmax.f32 %v7924, %v7409
    %v7926 = vmax.f32 %v7925, %v7412
    %v7927 = vmax.f32 %v7926, %v7414
    %v7928 = vmax.f32 %v7927, %v7417
    %v7929 = vmax.f32 %v7928, %v7419
    %v7930 = vrot.slane %v7929, 4
    %v7931 = vmax.f32 %v7929, %v7930
    %v7932 = vrot.slane %v7931, 2
    %v7933 = vmax.f32 %v7931, %v7932
    %v7934 = vrot.slane %v7933, 1
    %v7935 = vmax.f32 %v7933, %v7934
    %v7936 = vmax.f32 %v7422, %v7424
    %v7937 = vmax.f32 %v7936, %v7427
    %v7938 = vmax.f32 %v7937, %v7429
    %v7939 = vmax.f32 %v7938, %v7432
    %v7940 = vmax.f32 %v7939, %v7434
    %v7941 = vmax.f32 %v7940, %v7437
    %v7942 = vmax.f32 %v7941, %v7439
    %v7943 = vmax.f32 %v7942, %v7442
    %v7944 = vmax.f32 %v7943, %v7444
    %v7945 = vmax.f32 %v7944, %v7447
    %v7946 = vmax.f32 %v7945, %v7449
    %v7947 = vmax.f32 %v7946, %v7452
    %v7948 = vmax.f32 %v7947, %v7454
    %v7949 = vmax.f32 %v7948, %v7457
    %v7950 = vmax.f32 %v7949, %v7459
    %v7951 = vrot.slane %v7950, 4
    %v7952 = vmax.f32 %v7950, %v7951
    %v7953 = vrot.slane %v7952, 2
    %v7954 = vmax.f32 %v7952, %v7953
    %v7955 = vrot.slane %v7954, 1
    %v7956 = vmax.f32 %v7954, %v7955
    %v7957 = vmax.f32 %v7462, %v7464
    %v7958 = vmax.f32 %v7957, %v7467
    %v7959 = vmax.f32 %v7958, %v7469
    %v7960 = vmax.f32 %v7959, %v7472
    %v7961 = vmax.f32 %v7960, %v7474
    %v7962 = vmax.f32 %v7961, %v7477
    %v7963 = vmax.f32 %v7962, %v7479
    %v7964 = vmax.f32 %v7963, %v7482
    %v7965 = vmax.f32 %v7964, %v7484
    %v7966 = vmax.f32 %v7965, %v7487
    %v7967 = vmax.f32 %v7966, %v7489
    %v7968 = vmax.f32 %v7967, %v7492
    %v7969 = vmax.f32 %v7968, %v7494
    %v7970 = vmax.f32 %v7969, %v7497
    %v7971 = vmax.f32 %v7970, %v7499
    %v7972 = vrot.slane %v7971, 4
    %v7973 = vmax.f32 %v7971, %v7972
    %v7974 = vrot.slane %v7973, 2
    %v7975 = vmax.f32 %v7973, %v7974
    %v7976 = vrot.slane %v7975, 1
    %v7977 = vmax.f32 %v7975, %v7976
    %v7978 = vmax.f32 %v7502, %v7504
    %v7979 = vmax.f32 %v7978, %v7507
    %v7980 = vmax.f32 %v7979, %v7509
    %v7981 = vmax.f32 %v7980, %v7512
    %v7982 = vmax.f32 %v7981, %v7514
    %v7983 = vmax.f32 %v7982, %v7517
    %v7984 = vmax.f32 %v7983, %v7519
    %v7985 = vmax.f32 %v7984, %v7522
    %v7986 = vmax.f32 %v7985, %v7524
    %v7987 = vmax.f32 %v7986, %v7527
    %v7988 = vmax.f32 %v7987, %v7529
    %v7989 = vmax.f32 %v7988, %v7532
    %v7990 = vmax.f32 %v7989, %v7534
    %v7991 = vmax.f32 %v7990, %v7537
    %v7992 = vmax.f32 %v7991, %v7539
    %v7993 = vrot.slane %v7992, 4
    %v7994 = vmax.f32 %v7992, %v7993
    %v7995 = vrot.slane %v7994, 2
    %v7996 = vmax.f32 %v7994, %v7995
    %v7997 = vrot.slane %v7996, 1
    %v7998 = vmax.f32 %v7996, %v7997
    %v7999 = vmax.f32 %v7542, %v7544
    %v8000 = vmax.f32 %v7999, %v7547
    %v8001 = vmax.f32 %v8000, %v7549
    %v8002 = vmax.f32 %v8001, %v7552
    %v8003 = vmax.f32 %v8002, %v7554
    %v8004 = vmax.f32 %v8003, %v7557
    %v8005 = vmax.f32 %v8004, %v7559
    %v8006 = vmax.f32 %v8005, %v7562
    %v8007 = vmax.f32 %v8006, %v7564
    %v8008 = vmax.f32 %v8007, %v7567
    %v8009 = vmax.f32 %v8008, %v7569
    %v8010 = vmax.f32 %v8009, %v7572
    %v8011 = vmax.f32 %v8010, %v7574
    %v8012 = vmax.f32 %v8011, %v7577
    %v8013 = vmax.f32 %v8012, %v7579
    %v8014 = vrot.slane %v8013, 4
    %v8015 = vmax.f32 %v8013, %v8014
    %v8016 = vrot.slane %v8015, 2
    %v8017 = vmax.f32 %v8015, %v8016
    %v8018 = vrot.slane %v8017, 1
    %v8019 = vmax.f32 %v8017, %v8018
    %v8020 = vmax.f32 %v7582, %v7584
    %v8021 = vmax.f32 %v8020, %v7587
    %v8022 = vmax.f32 %v8021, %v7589
    %v8023 = vmax.f32 %v8022, %v7592
    %v8024 = vmax.f32 %v8023, %v7594
    %v8025 = vmax.f32 %v8024, %v7597
    %v8026 = vmax.f32 %v8025, %v7599
    %v8027 = vmax.f32 %v8026, %v7602
    %v8028 = vmax.f32 %v8027, %v7604
    %v8029 = vmax.f32 %v8028, %v7607
    %v8030 = vmax.f32 %v8029, %v7609
    %v8031 = vmax.f32 %v8030, %v7612
    %v8032 = vmax.f32 %v8031, %v7614
    %v8033 = vmax.f32 %v8032, %v7617
    %v8034 = vmax.f32 %v8033, %v7619
    %v8035 = vrot.slane %v8034, 4
    %v8036 = vmax.f32 %v8034, %v8035
    %v8037 = vrot.slane %v8036, 2
    %v8038 = vmax.f32 %v8036, %v8037
    %v8039 = vrot.slane %v8038, 1
    %v8040 = vmax.f32 %v8038, %v8039
    %v8041 = vld [vmem:[%s7] sm:$0x1]
    %v8043 = vperm.slane %v8041, 0
    %v8045 = vadd.f32 %v7641, %v8043
    %v8046 = vadd.f32 %v7662, %v8043
    %v8047 = vadd.f32 %v7683, %v8043
    %v8048 = vadd.f32 %v7704, %v8043
    %v8049 = vadd.f32 %v7725, %v8043
    %v8050 = vadd.f32 %v7746, %v8043
    %v8051 = vadd.f32 %v7767, %v8043
    %v8052 = vadd.f32 %v7788, %v8043
    %v8053 = vadd.f32 %v7809, %v8043
    %v8054 = vadd.f32 %v7830, %v8043
    %v8055 = vadd.f32 %v7851, %v8043
    %v8056 = vadd.f32 %v7872, %v8043
    %v8057 = vadd.f32 %v7893, %v8043
    %v8058 = vadd.f32 %v7914, %v8043
    %v8059 = vadd.f32 %v7935, %v8043
    %v8060 = vadd.f32 %v7956, %v8043
    %v8061 = vadd.f32 %v7977, %v8043
    %v8062 = vadd.f32 %v7998, %v8043
    %v8063 = vadd.f32 %v8019, %v8043
    %v8064 = vadd.f32 %v8040, %v8043
    %v8065 = vmax.f32 %v8045, 0.0
    %v8066 = vmax.f32 %v8046, 0.0
    %v8067 = vmax.f32 %v8047, 0.0
    %v8068 = vmax.f32 %v8048, 0.0
    %v8069 = vmax.f32 %v8049, 0.0
    %v8070 = vmax.f32 %v8050, 0.0
    %v8071 = vmax.f32 %v8051, 0.0
    %v8072 = vmax.f32 %v8052, 0.0
    %v8073 = vmax.f32 %v8053, 0.0
    %v8074 = vmax.f32 %v8054, 0.0
    %v8075 = vmax.f32 %v8055, 0.0
    %v8076 = vmax.f32 %v8056, 0.0
    %v8077 = vmax.f32 %v8057, 0.0
    %v8078 = vmax.f32 %v8058, 0.0
    %v8079 = vmax.f32 %v8059, 0.0
    %v8080 = vmax.f32 %v8060, 0.0
    %v8081 = vmax.f32 %v8061, 0.0
    %v8082 = vmax.f32 %v8062, 0.0
    %v8083 = vmax.f32 %v8063, 0.0
    %v8084 = vmax.f32 %v8064, 0.0
    %v8095 = vrot.slane %v8066, 7
    %vm8096 = vcmask 1041409
    %v8097 = vsel %vm8096, %v8095, %v8065
    %v8098 = vrot.slane %v8067, 6
    %vm8099 = vcmask 1042434
    %v8100 = vsel %vm8099, %v8098, %v8097
    %v8101 = vrot.slane %v8068, 5
    %vm8102 = vcmask 1043459
    %v8103 = vsel %vm8102, %v8101, %v8100
    %v8104 = vrot.slane %v8069, 4
    %vm8105 = vcmask 1044484
    %v8106 = vsel %vm8105, %v8104, %v8103
    %v8107 = vrot.slane %v8070, 3
    %vm8108 = vcmask 1045509
    %v8109 = vsel %vm8108, %v8107, %v8106
    %v8110 = vrot.slane %v8071, 2
    %vm8111 = vcmask 1046534
    %v8112 = vsel %vm8111, %v8110, %v8109
    %v8113 = vrot.slane %v8072, 1
    %vm8114 = vcmask 1047559
    %v8115 = vsel %vm8114, %v8113, %v8112
    %v8116 = vrot.slane %v8074, 7
    %v8117 = vsel %vm8096, %v8116, %v8073
    %v8130 = vrot.slane %v8076, 7
    %v8131 = vsel %vm8096, %v8130, %v8075
    %v8132 = vrot.slane %v8077, 6
    %v8133 = vsel %vm8099, %v8132, %v8131
    %v8134 = vrot.slane %v8078, 5
    %v8135 = vsel %vm8102, %v8134, %v8133
    %v8136 = vrot.slane %v8079, 4
    %v8137 = vsel %vm8105, %v8136, %v8135
    %v8138 = vrot.slane %v8080, 3
    %v8139 = vsel %vm8108, %v8138, %v8137
    %v8140 = vrot.slane %v8081, 2
    %v8141 = vsel %vm8111, %v8140, %v8139
    %v8142 = vrot.slane %v8082, 1
    %v8143 = vsel %vm8114, %v8142, %v8141
    %v8144 = vrot.slane %v8084, 7
    %v8145 = vsel %vm8096, %v8144, %v8083
    %8148 = vst [vmem:[#allocation2] sm:$0xff] %v8115
    %8149 = vst [vmem:[#allocation2 + $0x8] sm:$0xff] %v8143
    %8150 = vst [vmem:[#allocation2 + $0x10] sm:$0x3] %v8117
    %8151 = vst [vmem:[#allocation2 + $0x18] sm:$0x3] %v8145
    %8152 = vst [vmem:[#allocation4] sm:$0xff] %v8143
    %8153 = vst [vmem:[#allocation4 + $0x8] sm:$0x3] %v8145
    // Predicated region
    $region34: #{tpu_custom_call.1} parent=1 // pred_check
      _
    $region35: #{tpu_custom_call.1} parent=1 // pred_check_branch
      %8155 = sbr.rel (0) target = $region37
    $region36: #{tpu_custom_call.1} parent=1 // pred_region
      %8157 = vsyncadd [#allocation3], 0
      %s8158 = sshll.u32 [#allocation2], 4
      %s8159 = int_to_ptr.vmem [resolvable:$true] %s8158
      %s8160 = sshll.u32 %s8, 4
      %s8161 = int_to_ptr.hbm [resolvable:$true] %s8160
      %8166 = dma.vmem_to_hbm [thread:$0]  %s8159, 512, %s8161, [#allocation3], 256, 256, 16
    $region37: #{tpu_custom_call.1} parent=1 // pred_fallthru
      _
    // Predicated region
    $region38: #{tpu_custom_call.1} parent=1 // pred_check
      _
    $region39: #{tpu_custom_call.1} parent=1 // pred_check_branch
      %8168 = sbr.rel (0) target = $region41
    $region40: #{tpu_custom_call.1} parent=1 // pred_region
      %8170 = vsyncadd [#allocation5], 0
      %s8171 = sshll.u32 [#allocation4], 4
      %s8172 = int_to_ptr.vmem [resolvable:$true] %s8171
      %s8173 = sshll.u32 %s9, 4
      %s8174 = int_to_ptr.hbm [resolvable:$true] %s8173
      %8179 = dma.vmem_to_hbm [thread:$0]  %s8172, 256, %s8174, [#allocation5], 128, 128, 8
    $region41: #{tpu_custom_call.1} parent=1 // pred_fallthru
      _
    // Predicated region
    $region42: #{tpu_custom_call.1} parent=1 // pred_check
      _
    $region43: #{tpu_custom_call.1} parent=1 // pred_check_branch
      %8181 = sbr.rel (0) target = $region45
    $region44: #{tpu_custom_call.1} parent=1 // pred_region
      %8183 = dma.done [#allocation3], 512
    $region45: #{tpu_custom_call.1} parent=1 // pred_fallthru
      _
    // Predicated region
    $region46: #{tpu_custom_call.1} parent=1 // pred_check
      _
    $region47: #{tpu_custom_call.1} parent=1 // pred_check_branch
      %8185 = sbr.rel (0) target = $region49
    $region48: #{tpu_custom_call.1} parent=1 // pred_region
      %8187 = dma.done [#allocation5], 256
    $region49: #{tpu_custom_call.1} parent=1 // pred_fallthru
      _
    %8188 = vsyncpa [#allocation3], 1
    %8189 = vsyncpa [#allocation5], 1

</llo_original>
